<compile_context>
chip_gen: v7x
topology: tpu7x:2x2x1
jax: 0.10.0
libtpu: 0.0.40
codegen_flags: <defaults>
</compile_context>

<pallas_src>
import functools

import jax
import jax.numpy as jnp
from jax.experimental import pallas as pl
from jax.experimental.pallas import tpu as pltpu

_EPS = 1e-5
_ALPHA = 0.2
_VMEM_CAP = 48 * 1024 * 1024      # stay well under v7x's 64 MiB physical VMEM


def _round_up(x, m):
    return (x + m - 1) // m * m


def _pick_tile(m):
    # Rows per grid step: 512 (multiple of 256 for the 256-wide MXU on
    # v6e/v7x, still fine on v5e); if the whole problem is smaller, take it
    # in one sublane-aligned block.
    return min(512, _round_up(m, 8))


def _vmem_limit(bytes_per_step):
    # Every blocked operand is double-buffered by the pipeline; add headroom
    # and clamp so the request exists on every generation (v7x: 64 MiB).
    return int(min(_VMEM_CAP,
                   max(4 * 1024 * 1024, 2 * bytes_per_step + 2 * 1024 * 1024)))


# ---------------------------------------------------------------------------
# Kernels
# ---------------------------------------------------------------------------
def _conv_act_kernel(x_ref, w_ref, b_ref, o_ref, *, apply_lrelu, apply_sigmoid):
    """y = patches @ W + b, then LeakyReLU or Sigmoid. Tiled over M."""
    y = jnp.dot(x_ref[...], w_ref[...], preferred_element_type=jnp.float32)
    y = y + b_ref[...]
    if apply_lrelu:
        y = jnp.where(y >= 0.0, y, _ALPHA * y)
    if apply_sigmoid:
        # exp on the EUP; approx reciprocal also on the EUP (free slot).
        # Clamp to 1.0 so the approx path cannot overshoot the sigmoid range.
        y = jnp.minimum(pl.reciprocal(1.0 + jnp.exp(-y), approx=True), 1.0)
    o_ref[...] = y


def _conv_stats_kernel(x_ref, w_ref, y_ref, s_ref):
    """Pass 1 of BN layers: y = patches @ W (no bias: cancelled by BN mean),
    plus per-tile per-channel sum and sum-of-squares."""
    y = jnp.dot(x_ref[...], w_ref[...], preferred_element_type=jnp.float32)
    y_ref[...] = y
    # Channel reductions pushed onto the MXU (ones-matmul) instead of the XLU.
    # 8 identical rows keep the operand sublane-aligned; MXU has plenty of
    # slack at these K/C so the redundancy is free.
    ones = jnp.ones((8, y.shape[0]), jnp.float32)
    s1 = jnp.dot(ones, y, preferred_element_type=jnp.float32)[0:1, :]
    s2 = jnp.dot(ones, y * y, preferred_element_type=jnp.float32)[0:1, :]
    s_ref[...] = jnp.concatenate([s1, s2], axis=0)[None, :, :]


def _bn_lrelu_kernel(y_ref, scale_ref, shift_ref, o_ref):
    """Pass 2 of BN layers: y * scale + shift, then LeakyReLU(0.2)."""
    y = y_ref[...] * scale_ref[...] + shift_ref[...]
    o_ref[...] = jnp.where(y >= 0.0, y, _ALPHA * y)


# ---------------------------------------------------------------------------
# Per-layer wrappers
# ---------------------------------------------------------------------------
def _pad_rows(patches, m, tm):
    mp = _round_up(m, tm)
    if mp != m:
        patches = jnp.pad(patches, ((0, mp - m), (0, 0)))
    return patches, mp


def conv_act_pallas(patches, w2d, bias, *, apply_lrelu, apply_sigmoid):
    """Conv (im2col matmul) + bias + activation, no BN. M-tiled, parallel."""
    M, K = patches.shape
    _, C = w2d.shape
    TM = _pick_tile(M)
    patches, Mp = _pad_rows(patches, M, TM)
    grid = (Mp // TM,)
    step_bytes = TM * K * 2 + K * C * 2 + C * 4 + TM * C * 4
    out = pl.pallas_call(
        functools.partial(_conv_act_kernel,
                          apply_lrelu=apply_lrelu, apply_sigmoid=apply_sigmoid),
        out_shape=jax.ShapeDtypeStruct((Mp, C), jnp.float32),
        grid=grid,
        in_specs=[
            pl.BlockSpec((TM, K), lambda i: (i, 0)),
            pl.BlockSpec((K, C), lambda i: (0, 0)),
            pl.BlockSpec((1, C), lambda i: (0, 0)),
        ],
        out_specs=pl.BlockSpec((TM, C), lambda i: (i, 0)),
        compiler_params=pltpu.CompilerParams(
            dimension_semantics=("parallel",),
            vmem_limit_bytes=_vmem_limit(step_bytes)),
    )(patches, w2d, bias)
    return out[:M]


def conv_bn_lrelu_pallas(patches, w2d, gamma, beta):
    """Conv (im2col matmul) + train-mode BatchNorm + LeakyReLU(0.2).

    Two M-tiled passes: (1) matmul + per-tile sum/sumsq, (2) normalize+act.
    BN statistics are accumulated over the FULL M axis, so results match the
    monolithic formulation. The conv bias is skipped (cancelled by BN mean).
    """
    M, K = patches.shape
    _, C = w2d.shape
    TM = _pick_tile(M)
    patches, Mp = _pad_rows(patches, M, TM)   # zero rows: contribute 0 to sums
    nt = Mp // TM

    step1_bytes = TM * K * 2 + K * C * 2 + TM * C * 4 + 2 * C * 4
    y, part = pl.pallas_call(
        _conv_stats_kernel,
        out_shape=(jax.ShapeDtypeStruct((Mp, C), jnp.float32),
                   jax.ShapeDtypeStruct((nt, 2, C), jnp.float32)),
        grid=(nt,),
        in_specs=[
            pl.BlockSpec((TM, K), lambda i: (i, 0)),
            pl.BlockSpec((K, C), lambda i: (0, 0)),
        ],
        out_specs=(pl.BlockSpec((TM, C), lambda i: (i, 0)),
                   pl.BlockSpec((1, 2, C), lambda i: (i, 0, 0))),
        compiler_params=pltpu.CompilerParams(
            dimension_semantics=("parallel",),
            vmem_limit_bytes=_vmem_limit(step1_bytes)),
    )(patches, w2d)

    # Fold partial sums into per-channel scale/shift (tiny [C]-sized XLA ops).
    stats = jnp.sum(part, axis=0)                       # [2, C]
    mean = stats[0] / M                                 # true M, not padded
    var = stats[1] / M - mean * mean                    # biased (train-mode)
    scale = gamma * jax.lax.rsqrt(var + _EPS)
    shift = beta - mean * scale

    step2_bytes = 2 * TM * C * 4 + 2 * C * 4
    out = pl.pallas_call(
        _bn_lrelu_kernel,
        out_shape=jax.ShapeDtypeStruct((Mp, C), jnp.float32),
        grid=(nt,),
        in_specs=[
            pl.BlockSpec((TM, C), lambda i: (i, 0)),
            pl.BlockSpec((1, C), lambda i: (0, 0)),
            pl.BlockSpec((1, C), lambda i: (0, 0)),
        ],
        out_specs=pl.BlockSpec((TM, C), lambda i: (i, 0)),
        compiler_params=pltpu.CompilerParams(
            dimension_semantics=("parallel",),
            vmem_limit_bytes=_vmem_limit(step2_bytes)),
    )(y, scale.reshape(1, C), shift.reshape(1, C))
    return out[:M]


# ---------------------------------------------------------------------------
# JAX glue: im2col, weight reshaping, layer loop
# ---------------------------------------------------------------------------
def im2col_nhwc(x, k, s):
    """x: [N, H, W, C] -> patches [N*Ho*Wo, k*k*C], feature order (kh, kw, cin)."""
    N, H, W, C = x.shape
    Ho = (H - k) // s + 1
    Wo = (W - k) // s + 1
    cols = []
    for i in range(k):
        for j in range(k):
            cols.append(x[:, i:i + (Ho - 1) * s + 1:s,
                           j:j + (Wo - 1) * s + 1:s, :])
    patches = jnp.concatenate(cols, axis=-1)            # [N, Ho, Wo, k*k*C]
    return patches.reshape(N * Ho * Wo, k * k * C), (N, Ho, Wo)


# (ksize, stride, apply_bn, apply_lrelu, apply_sigmoid) per layer
_LAYER_SPECS = [
    (4, 2, False, True, False),   # Conv(3,64,4,2)    + LeakyReLU
    (2, 2, True,  True, False),   # Conv(64,128,2,2)  + BN + LeakyReLU
    (2, 2, True,  True, False),   # Conv(128,256,2,2) + BN + LeakyReLU
    (2, 2, True,  True, False),   # Conv(256,512,2,2) + BN + LeakyReLU
    (4, 2, False, False, True),   # Conv(512,1,4,2)   + Sigmoid
]

_LAYER_DIMS = [(3, 64, 4), (64, 128, 2), (128, 256, 2), (256, 512, 2), (512, 1, 4)]


def init_params(key):
    """Deterministic PyTorch-default-style init (uniform +/- 1/sqrt(fan_in))."""
    params = []
    for (cin, cout, k) in _LAYER_DIMS:
        key, kw, kb = jax.random.split(key, 3)
        fan_in = cin * k * k
        bound = 1.0 / (fan_in ** 0.5)
        w = jax.random.uniform(kw, (cout, cin, k, k), jnp.float32, -bound, bound)
        b = jax.random.uniform(kb, (cout,), jnp.float32, -bound, bound)
        params.append(dict(
            w=w, b=b,
            gamma=jnp.ones((cout,), jnp.float32),    # BN affine init (weight=1)
            beta=jnp.zeros((cout,), jnp.float32),    # BN affine init (bias=0)
        ))
    return params


def patch_discriminator_forward(x_nchw, params):
    x = jnp.transpose(x_nchw, (0, 2, 3, 1)).astype(jnp.float32)   # NCHW -> NHWC
    for (k, s, bn, lrelu, sig), p in zip(_LAYER_SPECS, params):
        cout = p['w'].shape[0]
        # bf16 MXU operands (halves patch DMA bytes); epilogue stays f32.
        patches, (N, Ho, Wo) = im2col_nhwc(x.astype(jnp.bfloat16), k, s)
        # [Cout, Cin, kh, kw] -> [kh, kw, Cin, Cout] -> [kh*kw*Cin, Cout]
        w2d = jnp.transpose(p['w'], (2, 3, 1, 0)).reshape(-1, cout)
        w2d = w2d.astype(jnp.bfloat16)
        if bn:
            # Conv bias skipped: exactly cancelled by train-mode BN mean.
            out = conv_bn_lrelu_pallas(patches, w2d, p['gamma'], p['beta'])
        else:
            out = conv_act_pallas(patches, w2d, p['b'].reshape(1, cout),
                                  apply_lrelu=lrelu, apply_sigmoid=sig)
        x = out.reshape(N, Ho, Wo, cout)
    return jnp.transpose(x, (0, 3, 1, 2))                         # NHWC -> NCHW


if __name__ == "__main__":
    key = jax.random.PRNGKey(0)
    key_p, key_x = jax.random.split(key)
    params = init_params(key_p)

    # Smallest spatial size that is valid for this conv stack is 66.
    x = jax.random.normal(key_x, (2, 3, 66, 66), jnp.float32)

    fwd = jax.jit(lambda xx: patch_discriminator_forward(xx, params))
    out = jax.block_until_ready(fwd(x))

    assert out.shape == (2, 1, 1, 1), out.shape
    assert bool(jnp.all(jnp.isfinite(out)))
    assert bool(jnp.all((out >= 0.0) & (out <= 1.0)))
    print("KERNEL_OK")
</pallas_src>

<mosaic_0001>
module attributes {stable_mosaic.version = 11 : i64} {
  func.func @_conv_act_kernel(%arg0: i32, %arg1: memref<512x48xbf16, #tpu.memory_space<vmem>>, %arg2: memref<48x64xbf16, #tpu.memory_space<vmem>>, %arg3: memref<1x64xf32, #tpu.memory_space<vmem>>, %arg4: memref<512x64xf32, #tpu.memory_space<vmem>>) attributes {dimension_semantics = [#tpu.dimension_semantics<parallel>], iteration_bounds = array<i64: 4>, scalar_prefetch = 0 : i64, scratch_operands = 0 : i64, tpu.core_type = #tpu.core_type<tc>, window_params = [{transform_indices = @transform_0, window_bounds = array<i64: 512, 48>}, {pipeline_mode = #tpu.pipeline_mode<synchronous>, transform_indices = @transform_1, window_bounds = array<i64: 48, 64>}, {pipeline_mode = #tpu.pipeline_mode<synchronous>, transform_indices = @transform_2, window_bounds = array<i64: 1, 64>}, {transform_indices = @transform_3, window_bounds = array<i64: 512, 64>}]} {
    %c0 = arith.constant 0 : index
    %c0_0 = arith.constant 0 : index
    %0 = vector.load %arg1[%c0, %c0_0] : memref<512x48xbf16, #tpu.memory_space<vmem>>, vector<512x48xbf16>
    %c0_1 = arith.constant 0 : index
    %c0_2 = arith.constant 0 : index
    %1 = vector.load %arg2[%c0_1, %c0_2] : memref<48x64xbf16, #tpu.memory_space<vmem>>, vector<48x64xbf16>
    %cst = arith.constant dense<0.000000e+00> : vector<512x64xf32>
    %2 = tpu.matmul %0, %1, %cst {dimension_numbers = #tpu.dot_dimension_numbers<[1], [0], [0], [1], [0, 0, 1, 1], [], []>} : vector<512x48xbf16>, vector<48x64xbf16>, vector<512x64xf32> -> vector<512x64xf32>
    %c0_3 = arith.constant 0 : index
    %c0_4 = arith.constant 0 : index
    %3 = vector.load %arg3[%c0_3, %c0_4] : memref<1x64xf32, #tpu.memory_space<vmem>>, vector<1x64xf32>
    %4 = vector.broadcast %3 : vector<1x64xf32> to vector<512x64xf32>
    %5 = arith.addf %2, %4 : vector<512x64xf32>
    %cst_5 = arith.constant 0.000000e+00 : f32
    %6 = vector.broadcast %cst_5 : f32 to vector<512x64xf32>
    %7 = arith.cmpf oge, %5, %6 : vector<512x64xf32>
    %cst_6 = arith.constant 2.000000e-01 : f32
    %8 = vector.broadcast %cst_6 : f32 to vector<512x64xf32>
    %9 = arith.mulf %8, %5 : vector<512x64xf32>
    %10 = arith.select %7, %5, %9 : vector<512x64xi1>, vector<512x64xf32>
    %c0_7 = arith.constant 0 : index
    %c0_8 = arith.constant 0 : index
    %11 = vector.load %arg4[%c0_7, %c0_8] : memref<512x64xf32, #tpu.memory_space<vmem>>, vector<512x64xf32>
    tpu.vector_store %arg4[%c0_7, %c0_8], %10 {strides = array<i32>} : memref<512x64xf32, #tpu.memory_space<vmem>>, vector<512x64xf32>,
    return
  }
  func.func @transform_0(%arg0: i32) -> (i32, i32) {
    %c0_i32 = arith.constant 0 : i32
    %c0_i32_0 = arith.constant 0 : i32
    return %arg0, %c0_i32 : i32, i32
  }
  func.func @transform_1(%arg0: i32) -> (i32, i32) {
    %c0_i32 = arith.constant 0 : i32
    %c0_i32_0 = arith.constant 0 : i32
    %c0_i32_1 = arith.constant 0 : i32
    return %c0_i32, %c0_i32_0 : i32, i32
  }
  func.func @transform_2(%arg0: i32) -> (i32, i32) {
    %c0_i32 = arith.constant 0 : i32
    %c0_i32_0 = arith.constant 0 : i32
    %c0_i32_1 = arith.constant 0 : i32
    return %c0_i32, %c0_i32_0 : i32, i32
  }
  func.func @transform_3(%arg0: i32) -> (i32, i32) {
    %c0_i32 = arith.constant 0 : i32
    %c0_i32_0 = arith.constant 0 : i32
    return %arg0, %c0_i32 : i32, i32
  }
}

module attributes {stable_mosaic.version = 11 : i64} {
  func.func @_conv_stats_kernel(%arg0: i32, %arg1: memref<512x256xbf16, #tpu.memory_space<vmem>>, %arg2: memref<256x128xbf16, #tpu.memory_space<vmem>>, %arg3: memref<512x128xf32, #tpu.memory_space<vmem>>, %arg4: memref<1x2x128xf32, #tpu.memory_space<vmem>>) attributes {dimension_semantics = [#tpu.dimension_semantics<parallel>], iteration_bounds = array<i64: 1>, scalar_prefetch = 0 : i64, scratch_operands = 0 : i64, tpu.core_type = #tpu.core_type<tc>, window_params = [{transform_indices = @transform_0, window_bounds = array<i64: 512, 256>}, {pipeline_mode = #tpu.pipeline_mode<synchronous>, transform_indices = @transform_1, window_bounds = array<i64: 256, 128>}, {transform_indices = @transform_2, window_bounds = array<i64: 512, 128>}, {transform_indices = @transform_3, window_bounds = array<i64: 1, 2, 128>}]} {
    %c0 = arith.constant 0 : index
    %c0_0 = arith.constant 0 : index
    %0 = vector.load %arg1[%c0, %c0_0] : memref<512x256xbf16, #tpu.memory_space<vmem>>, vector<512x256xbf16>
    %c0_1 = arith.constant 0 : index
    %c0_2 = arith.constant 0 : index
    %1 = vector.load %arg2[%c0_1, %c0_2] : memref<256x128xbf16, #tpu.memory_space<vmem>>, vector<256x128xbf16>
    %cst = arith.constant dense<0.000000e+00> : vector<512x128xf32>
    %2 = tpu.matmul %0, %1, %cst {dimension_numbers = #tpu.dot_dimension_numbers<[1], [0], [0], [1], [0, 0, 1, 1], [], []>} : vector<512x256xbf16>, vector<256x128xbf16>, vector<512x128xf32> -> vector<512x128xf32>
    %c0_3 = arith.constant 0 : index
    %c0_4 = arith.constant 0 : index
    %3 = vector.load %arg3[%c0_3, %c0_4] : memref<512x128xf32, #tpu.memory_space<vmem>>, vector<512x128xf32>
    tpu.vector_store %arg3[%c0_3, %c0_4], %2 {strides = array<i32>} : memref<512x128xf32, #tpu.memory_space<vmem>>, vector<512x128xf32>,
    %cst_5 = arith.constant 1.000000e+00 : f32
    %4 = vector.broadcast %cst_5 : f32 to vector<8x512xf32>
    %cst_6 = arith.constant dense<0.000000e+00> : vector<8x128xf32>
    %5 = tpu.matmul %4, %2, %cst_6 {dimension_numbers = #tpu.dot_dimension_numbers<[1], [0], [0], [1], [0, 0, 1, 1], [], []>} : vector<8x512xf32>, vector<512x128xf32>, vector<8x128xf32> -> vector<8x128xf32>
    %6 = vector.extract_strided_slice %5 {offsets = [0, 0], sizes = [1, 128], strides = [1, 1]} : vector<8x128xf32> to vector<1x128xf32>
    %7 = arith.mulf %2, %2 : vector<512x128xf32>
    %cst_7 = arith.constant dense<0.000000e+00> : vector<8x128xf32>
    %8 = tpu.matmul %4, %7, %cst_7 {dimension_numbers = #tpu.dot_dimension_numbers<[1], [0], [0], [1], [0, 0, 1, 1], [], []>} : vector<8x512xf32>, vector<512x128xf32>, vector<8x128xf32> -> vector<8x128xf32>
    %9 = vector.extract_strided_slice %8 {offsets = [0, 0], sizes = [1, 128], strides = [1, 1]} : vector<8x128xf32> to vector<1x128xf32>
    %10 = tpu.concatenate %6, %9 in 0 : vector<1x128xf32>, vector<1x128xf32> -> vector<2x128xf32>
    %11 = vector.shape_cast %10 : vector<2x128xf32> to vector<1x2x128xf32>
    %c0_8 = arith.constant 0 : index
    %c0_9 = arith.constant 0 : index
    %c0_10 = arith.constant 0 : index
    %12 = vector.load %arg4[%c0_8, %c0_9, %c0_10] : memref<1x2x128xf32, #tpu.memory_space<vmem>>, vector<1x2x128xf32>
    tpu.vector_store %arg4[%c0_8, %c0_9, %c0_10], %11 {strides = array<i32>} : memref<1x2x128xf32, #tpu.memory_space<vmem>>, vector<1x2x128xf32>,
    return
  }
  func.func @transform_0(%arg0: i32) -> (i32, i32) {
    %c0_i32 = arith.constant 0 : i32
    %c0_i32_0 = arith.constant 0 : i32
    return %arg0, %c0_i32 : i32, i32
  }
  func.func @transform_1(%arg0: i32) -> (i32, i32) {
    %c0_i32 = arith.constant 0 : i32
    %c0_i32_0 = arith.constant 0 : i32
    %c0_i32_1 = arith.constant 0 : i32
    return %c0_i32, %c0_i32_0 : i32, i32
  }
  func.func @transform_2(%arg0: i32) -> (i32, i32) {
    %c0_i32 = arith.constant 0 : i32
    %c0_i32_0 = arith.constant 0 : i32
    return %arg0, %c0_i32 : i32, i32
  }
  func.func @transform_3(%arg0: i32) -> (i32, i32, i32) {
    %c0_i32 = arith.constant 0 : i32
    %c0_i32_0 = arith.constant 0 : i32
    %c0_i32_1 = arith.constant 0 : i32
    return %arg0, %c0_i32, %c0_i32_0 : i32, i32, i32
  }
}

module attributes {stable_mosaic.version = 11 : i64} {
  func.func @_bn_lrelu_kernel(%arg0: i32, %arg1: memref<512x128xf32, #tpu.memory_space<vmem>>, %arg2: memref<1x128xf32, #tpu.memory_space<vmem>>, %arg3: memref<1x128xf32, #tpu.memory_space<vmem>>, %arg4: memref<512x128xf32, #tpu.memory_space<vmem>>) attributes {dimension_semantics = [#tpu.dimension_semantics<parallel>], iteration_bounds = array<i64: 1>, scalar_prefetch = 0 : i64, scratch_operands = 0 : i64, tpu.core_type = #tpu.core_type<tc>, window_params = [{transform_indices = @transform_0, window_bounds = array<i64: 512, 128>}, {pipeline_mode = #tpu.pipeline_mode<synchronous>, transform_indices = @transform_1, window_bounds = array<i64: 1, 128>}, {pipeline_mode = #tpu.pipeline_mode<synchronous>, transform_indices = @transform_2, window_bounds = array<i64: 1, 128>}, {transform_indices = @transform_3, window_bounds = array<i64: 512, 128>}]} {
    %c0 = arith.constant 0 : index
    %c0_0 = arith.constant 0 : index
    %0 = vector.load %arg1[%c0, %c0_0] : memref<512x128xf32, #tpu.memory_space<vmem>>, vector<512x128xf32>
    %c0_1 = arith.constant 0 : index
    %c0_2 = arith.constant 0 : index
    %1 = vector.load %arg2[%c0_1, %c0_2] : memref<1x128xf32, #tpu.memory_space<vmem>>, vector<1x128xf32>
    %2 = vector.broadcast %1 : vector<1x128xf32> to vector<512x128xf32>
    %3 = arith.mulf %0, %2 : vector<512x128xf32>
    %c0_3 = arith.constant 0 : index
    %c0_4 = arith.constant 0 : index
    %4 = vector.load %arg3[%c0_3, %c0_4] : memref<1x128xf32, #tpu.memory_space<vmem>>, vector<1x128xf32>
    %5 = vector.broadcast %4 : vector<1x128xf32> to vector<512x128xf32>
    %6 = arith.addf %3, %5 : vector<512x128xf32>
    %cst = arith.constant 0.000000e+00 : f32
    %7 = vector.broadcast %cst : f32 to vector<512x128xf32>
    %8 = arith.cmpf oge, %6, %7 : vector<512x128xf32>
    %cst_5 = arith.constant 2.000000e-01 : f32
    %9 = vector.broadcast %cst_5 : f32 to vector<512x128xf32>
    %10 = arith.mulf %9, %6 : vector<512x128xf32>
    %11 = arith.select %8, %6, %10 : vector<512x128xi1>, vector<512x128xf32>
    %c0_6 = arith.constant 0 : index
    %c0_7 = arith.constant 0 : index
    %12 = vector.load %arg4[%c0_6, %c0_7] : memref<512x128xf32, #tpu.memory_space<vmem>>, vector<512x128xf32>
    tpu.vector_store %arg4[%c0_6, %c0_7], %11 {strides = array<i32>} : memref<512x128xf32, #tpu.memory_space<vmem>>, vector<512x128xf32>,
    return
  }
  func.func @transform_0(%arg0: i32) -> (i32, i32) {
    %c0_i32 = arith.constant 0 : i32
    %c0_i32_0 = arith.constant 0 : i32
    return %arg0, %c0_i32 : i32, i32
  }
  func.func @transform_1(%arg0: i32) -> (i32, i32) {
    %c0_i32 = arith.constant 0 : i32
    %c0_i32_0 = arith.constant 0 : i32
    %c0_i32_1 = arith.constant 0 : i32
    return %c0_i32, %c0_i32_0 : i32, i32
  }
  func.func @transform_2(%arg0: i32) -> (i32, i32) {
    %c0_i32 = arith.constant 0 : i32
    %c0_i32_0 = arith.constant 0 : i32
    %c0_i32_1 = arith.constant 0 : i32
    return %c0_i32, %c0_i32_0 : i32, i32
  }
  func.func @transform_3(%arg0: i32) -> (i32, i32) {
    %c0_i32 = arith.constant 0 : i32
    %c0_i32_0 = arith.constant 0 : i32
    return %arg0, %c0_i32 : i32, i32
  }
}

module attributes {stable_mosaic.version = 11 : i64} {
  func.func @_bn_lrelu_kernel(%arg0: i32, %arg1: memref<128x256xf32, #tpu.memory_space<vmem>>, %arg2: memref<1x256xf32, #tpu.memory_space<vmem>>, %arg3: memref<1x256xf32, #tpu.memory_space<vmem>>, %arg4: memref<128x256xf32, #tpu.memory_space<vmem>>) attributes {dimension_semantics = [#tpu.dimension_semantics<parallel>], iteration_bounds = array<i64: 1>, scalar_prefetch = 0 : i64, scratch_operands = 0 : i64, tpu.core_type = #tpu.core_type<tc>, window_params = [{transform_indices = @transform_0, window_bounds = array<i64: 128, 256>}, {pipeline_mode = #tpu.pipeline_mode<synchronous>, transform_indices = @transform_1, window_bounds = array<i64: 1, 256>}, {pipeline_mode = #tpu.pipeline_mode<synchronous>, transform_indices = @transform_2, window_bounds = array<i64: 1, 256>}, {transform_indices = @transform_3, window_bounds = array<i64: 128, 256>}]} {
    %c0 = arith.constant 0 : index
    %c0_0 = arith.constant 0 : index
    %0 = vector.load %arg1[%c0, %c0_0] : memref<128x256xf32, #tpu.memory_space<vmem>>, vector<128x256xf32>
    %c0_1 = arith.constant 0 : index
    %c0_2 = arith.constant 0 : index
    %1 = vector.load %arg2[%c0_1, %c0_2] : memref<1x256xf32, #tpu.memory_space<vmem>>, vector<1x256xf32>
    %2 = vector.broadcast %1 : vector<1x256xf32> to vector<128x256xf32>
    %3 = arith.mulf %0, %2 : vector<128x256xf32>
    %c0_3 = arith.constant 0 : index
    %c0_4 = arith.constant 0 : index
    %4 = vector.load %arg3[%c0_3, %c0_4] : memref<1x256xf32, #tpu.memory_space<vmem>>, vector<1x256xf32>
    %5 = vector.broadcast %4 : vector<1x256xf32> to vector<128x256xf32>
    %6 = arith.addf %3, %5 : vector<128x256xf32>
    %cst = arith.constant 0.000000e+00 : f32
    %7 = vector.broadcast %cst : f32 to vector<128x256xf32>
    %8 = arith.cmpf oge, %6, %7 : vector<128x256xf32>
    %cst_5 = arith.constant 2.000000e-01 : f32
    %9 = vector.broadcast %cst_5 : f32 to vector<128x256xf32>
    %10 = arith.mulf %9, %6 : vector<128x256xf32>
    %11 = arith.select %8, %6, %10 : vector<128x256xi1>, vector<128x256xf32>
    %c0_6 = arith.constant 0 : index
    %c0_7 = arith.constant 0 : index
    %12 = vector.load %arg4[%c0_6, %c0_7] : memref<128x256xf32, #tpu.memory_space<vmem>>, vector<128x256xf32>
    tpu.vector_store %arg4[%c0_6, %c0_7], %11 {strides = array<i32>} : memref<128x256xf32, #tpu.memory_space<vmem>>, vector<128x256xf32>,
    return
  }
  func.func @transform_0(%arg0: i32) -> (i32, i32) {
    %c0_i32 = arith.constant 0 : i32
    %c0_i32_0 = arith.constant 0 : i32
    return %arg0, %c0_i32 : i32, i32
  }
  func.func @transform_1(%arg0: i32) -> (i32, i32) {
    %c0_i32 = arith.constant 0 : i32
    %c0_i32_0 = arith.constant 0 : i32
    %c0_i32_1 = arith.constant 0 : i32
    return %c0_i32, %c0_i32_0 : i32, i32
  }
  func.func @transform_2(%arg0: i32) -> (i32, i32) {
    %c0_i32 = arith.constant 0 : i32
    %c0_i32_0 = arith.constant 0 : i32
    %c0_i32_1 = arith.constant 0 : i32
    return %c0_i32, %c0_i32_0 : i32, i32
  }
  func.func @transform_3(%arg0: i32) -> (i32, i32) {
    %c0_i32 = arith.constant 0 : i32
    %c0_i32_0 = arith.constant 0 : i32
    return %arg0, %c0_i32 : i32, i32
  }
}

module attributes {stable_mosaic.version = 11 : i64} {
  func.func @_conv_stats_kernel(%arg0: i32, %arg1: memref<128x512xbf16, #tpu.memory_space<vmem>>, %arg2: memref<512x256xbf16, #tpu.memory_space<vmem>>, %arg3: memref<128x256xf32, #tpu.memory_space<vmem>>, %arg4: memref<1x2x256xf32, #tpu.memory_space<vmem>>) attributes {dimension_semantics = [#tpu.dimension_semantics<parallel>], iteration_bounds = array<i64: 1>, scalar_prefetch = 0 : i64, scratch_operands = 0 : i64, tpu.core_type = #tpu.core_type<tc>, window_params = [{transform_indices = @transform_0, window_bounds = array<i64: 128, 512>}, {pipeline_mode = #tpu.pipeline_mode<synchronous>, transform_indices = @transform_1, window_bounds = array<i64: 512, 256>}, {transform_indices = @transform_2, window_bounds = array<i64: 128, 256>}, {transform_indices = @transform_3, window_bounds = array<i64: 1, 2, 256>}]} {
    %c0 = arith.constant 0 : index
    %c0_0 = arith.constant 0 : index
    %0 = vector.load %arg1[%c0, %c0_0] : memref<128x512xbf16, #tpu.memory_space<vmem>>, vector<128x512xbf16>
    %c0_1 = arith.constant 0 : index
    %c0_2 = arith.constant 0 : index
    %1 = vector.load %arg2[%c0_1, %c0_2] : memref<512x256xbf16, #tpu.memory_space<vmem>>, vector<512x256xbf16>
    %cst = arith.constant dense<0.000000e+00> : vector<128x256xf32>
    %2 = tpu.matmul %0, %1, %cst {dimension_numbers = #tpu.dot_dimension_numbers<[1], [0], [0], [1], [0, 0, 1, 1], [], []>} : vector<128x512xbf16>, vector<512x256xbf16>, vector<128x256xf32> -> vector<128x256xf32>
    %c0_3 = arith.constant 0 : index
    %c0_4 = arith.constant 0 : index
    %3 = vector.load %arg3[%c0_3, %c0_4] : memref<128x256xf32, #tpu.memory_space<vmem>>, vector<128x256xf32>
    tpu.vector_store %arg3[%c0_3, %c0_4], %2 {strides = array<i32>} : memref<128x256xf32, #tpu.memory_space<vmem>>, vector<128x256xf32>,
    %cst_5 = arith.constant 1.000000e+00 : f32
    %4 = vector.broadcast %cst_5 : f32 to vector<8x128xf32>
    %cst_6 = arith.constant dense<0.000000e+00> : vector<8x256xf32>
    %5 = tpu.matmul %4, %2, %cst_6 {dimension_numbers = #tpu.dot_dimension_numbers<[1], [0], [0], [1], [0, 0, 1, 1], [], []>} : vector<8x128xf32>, vector<128x256xf32>, vector<8x256xf32> -> vector<8x256xf32>
    %6 = vector.extract_strided_slice %5 {offsets = [0, 0], sizes = [1, 256], strides = [1, 1]} : vector<8x256xf32> to vector<1x256xf32>
    %7 = arith.mulf %2, %2 : vector<128x256xf32>
    %cst_7 = arith.constant dense<0.000000e+00> : vector<8x256xf32>
    %8 = tpu.matmul %4, %7, %cst_7 {dimension_numbers = #tpu.dot_dimension_numbers<[1], [0], [0], [1], [0, 0, 1, 1], [], []>} : vector<8x128xf32>, vector<128x256xf32>, vector<8x256xf32> -> vector<8x256xf32>
    %9 = vector.extract_strided_slice %8 {offsets = [0, 0], sizes = [1, 256], strides = [1, 1]} : vector<8x256xf32> to vector<1x256xf32>
    %10 = tpu.concatenate %6, %9 in 0 : vector<1x256xf32>, vector<1x256xf32> -> vector<2x256xf32>
    %11 = vector.shape_cast %10 : vector<2x256xf32> to vector<1x2x256xf32>
    %c0_8 = arith.constant 0 : index
    %c0_9 = arith.constant 0 : index
    %c0_10 = arith.constant 0 : index
    %12 = vector.load %arg4[%c0_8, %c0_9, %c0_10] : memref<1x2x256xf32, #tpu.memory_space<vmem>>, vector<1x2x256xf32>
    tpu.vector_store %arg4[%c0_8, %c0_9, %c0_10], %11 {strides = array<i32>} : memref<1x2x256xf32, #tpu.memory_space<vmem>>, vector<1x2x256xf32>,
    return
  }
  func.func @transform_0(%arg0: i32) -> (i32, i32) {
    %c0_i32 = arith.constant 0 : i32
    %c0_i32_0 = arith.constant 0 : i32
    return %arg0, %c0_i32 : i32, i32
  }
  func.func @transform_1(%arg0: i32) -> (i32, i32) {
    %c0_i32 = arith.constant 0 : i32
    %c0_i32_0 = arith.constant 0 : i32
    %c0_i32_1 = arith.constant 0 : i32
    return %c0_i32, %c0_i32_0 : i32, i32
  }
  func.func @transform_2(%arg0: i32) -> (i32, i32) {
    %c0_i32 = arith.constant 0 : i32
    %c0_i32_0 = arith.constant 0 : i32
    return %arg0, %c0_i32 : i32, i32
  }
  func.func @transform_3(%arg0: i32) -> (i32, i32, i32) {
    %c0_i32 = arith.constant 0 : i32
    %c0_i32_0 = arith.constant 0 : i32
    %c0_i32_1 = arith.constant 0 : i32
    return %arg0, %c0_i32, %c0_i32_0 : i32, i32, i32
  }
}

module attributes {stable_mosaic.version = 11 : i64} {
  func.func @_conv_stats_kernel(%arg0: i32, %arg1: memref<32x1024xbf16, #tpu.memory_space<vmem>>, %arg2: memref<1024x512xbf16, #tpu.memory_space<vmem>>, %arg3: memref<32x512xf32, #tpu.memory_space<vmem>>, %arg4: memref<1x2x512xf32, #tpu.memory_space<vmem>>) attributes {dimension_semantics = [#tpu.dimension_semantics<parallel>], iteration_bounds = array<i64: 1>, scalar_prefetch = 0 : i64, scratch_operands = 0 : i64, tpu.core_type = #tpu.core_type<tc>, window_params = [{transform_indices = @transform_0, window_bounds = array<i64: 32, 1024>}, {pipeline_mode = #tpu.pipeline_mode<synchronous>, transform_indices = @transform_1, window_bounds = array<i64: 1024, 512>}, {transform_indices = @transform_2, window_bounds = array<i64: 32, 512>}, {transform_indices = @transform_3, window_bounds = array<i64: 1, 2, 512>}]} {
    %c0 = arith.constant 0 : index
    %c0_0 = arith.constant 0 : index
    %0 = vector.load %arg1[%c0, %c0_0] : memref<32x1024xbf16, #tpu.memory_space<vmem>>, vector<32x1024xbf16>
    %c0_1 = arith.constant 0 : index
    %c0_2 = arith.constant 0 : index
    %1 = vector.load %arg2[%c0_1, %c0_2] : memref<1024x512xbf16, #tpu.memory_space<vmem>>, vector<1024x512xbf16>
    %cst = arith.constant dense<0.000000e+00> : vector<32x512xf32>
    %2 = tpu.matmul %0, %1, %cst {dimension_numbers = #tpu.dot_dimension_numbers<[1], [0], [0], [1], [0, 0, 1, 1], [], []>} : vector<32x1024xbf16>, vector<1024x512xbf16>, vector<32x512xf32> -> vector<32x512xf32>
    %c0_3 = arith.constant 0 : index
    %c0_4 = arith.constant 0 : index
    %3 = vector.load %arg3[%c0_3, %c0_4] : memref<32x512xf32, #tpu.memory_space<vmem>>, vector<32x512xf32>
    tpu.vector_store %arg3[%c0_3, %c0_4], %2 {strides = array<i32>} : memref<32x512xf32, #tpu.memory_space<vmem>>, vector<32x512xf32>,
    %cst_5 = arith.constant 1.000000e+00 : f32
    %4 = vector.broadcast %cst_5 : f32 to vector<8x32xf32>
    %cst_6 = arith.constant dense<0.000000e+00> : vector<8x512xf32>
    %5 = tpu.matmul %4, %2, %cst_6 {dimension_numbers = #tpu.dot_dimension_numbers<[1], [0], [0], [1], [0, 0, 1, 1], [], []>} : vector<8x32xf32>, vector<32x512xf32>, vector<8x512xf32> -> vector<8x512xf32>
    %6 = vector.extract_strided_slice %5 {offsets = [0, 0], sizes = [1, 512], strides = [1, 1]} : vector<8x512xf32> to vector<1x512xf32>
    %7 = arith.mulf %2, %2 : vector<32x512xf32>
    %cst_7 = arith.constant dense<0.000000e+00> : vector<8x512xf32>
    %8 = tpu.matmul %4, %7, %cst_7 {dimension_numbers = #tpu.dot_dimension_numbers<[1], [0], [0], [1], [0, 0, 1, 1], [], []>} : vector<8x32xf32>, vector<32x512xf32>, vector<8x512xf32> -> vector<8x512xf32>
    %9 = vector.extract_strided_slice %8 {offsets = [0, 0], sizes = [1, 512], strides = [1, 1]} : vector<8x512xf32> to vector<1x512xf32>
    %10 = tpu.concatenate %6, %9 in 0 : vector<1x512xf32>, vector<1x512xf32> -> vector<2x512xf32>
    %11 = vector.shape_cast %10 : vector<2x512xf32> to vector<1x2x512xf32>
    %c0_8 = arith.constant 0 : index
    %c0_9 = arith.constant 0 : index
    %c0_10 = arith.constant 0 : index
    %12 = vector.load %arg4[%c0_8, %c0_9, %c0_10] : memref<1x2x512xf32, #tpu.memory_space<vmem>>, vector<1x2x512xf32>
    tpu.vector_store %arg4[%c0_8, %c0_9, %c0_10], %11 {strides = array<i32>} : memref<1x2x512xf32, #tpu.memory_space<vmem>>, vector<1x2x512xf32>,
    return
  }
  func.func @transform_0(%arg0: i32) -> (i32, i32) {
    %c0_i32 = arith.constant 0 : i32
    %c0_i32_0 = arith.constant 0 : i32
    return %arg0, %c0_i32 : i32, i32
  }
  func.func @transform_1(%arg0: i32) -> (i32, i32) {
    %c0_i32 = arith.constant 0 : i32
    %c0_i32_0 = arith.constant 0 : i32
    %c0_i32_1 = arith.constant 0 : i32
    return %c0_i32, %c0_i32_0 : i32, i32
  }
  func.func @transform_2(%arg0: i32) -> (i32, i32) {
    %c0_i32 = arith.constant 0 : i32
    %c0_i32_0 = arith.constant 0 : i32
    return %arg0, %c0_i32 : i32, i32
  }
  func.func @transform_3(%arg0: i32) -> (i32, i32, i32) {
    %c0_i32 = arith.constant 0 : i32
    %c0_i32_0 = arith.constant 0 : i32
    %c0_i32_1 = arith.constant 0 : i32
    return %arg0, %c0_i32, %c0_i32_0 : i32, i32, i32
  }
}

module attributes {stable_mosaic.version = 11 : i64} {
  func.func @_bn_lrelu_kernel(%arg0: i32, %arg1: memref<32x512xf32, #tpu.memory_space<vmem>>, %arg2: memref<1x512xf32, #tpu.memory_space<vmem>>, %arg3: memref<1x512xf32, #tpu.memory_space<vmem>>, %arg4: memref<32x512xf32, #tpu.memory_space<vmem>>) attributes {dimension_semantics = [#tpu.dimension_semantics<parallel>], iteration_bounds = array<i64: 1>, scalar_prefetch = 0 : i64, scratch_operands = 0 : i64, tpu.core_type = #tpu.core_type<tc>, window_params = [{transform_indices = @transform_0, window_bounds = array<i64: 32, 512>}, {pipeline_mode = #tpu.pipeline_mode<synchronous>, transform_indices = @transform_1, window_bounds = array<i64: 1, 512>}, {pipeline_mode = #tpu.pipeline_mode<synchronous>, transform_indices = @transform_2, window_bounds = array<i64: 1, 512>}, {transform_indices = @transform_3, window_bounds = array<i64: 32, 512>}]} {
    %c0 = arith.constant 0 : index
    %c0_0 = arith.constant 0 : index
    %0 = vector.load %arg1[%c0, %c0_0] : memref<32x512xf32, #tpu.memory_space<vmem>>, vector<32x512xf32>
    %c0_1 = arith.constant 0 : index
    %c0_2 = arith.constant 0 : index
    %1 = vector.load %arg2[%c0_1, %c0_2] : memref<1x512xf32, #tpu.memory_space<vmem>>, vector<1x512xf32>
    %2 = vector.broadcast %1 : vector<1x512xf32> to vector<32x512xf32>
    %3 = arith.mulf %0, %2 : vector<32x512xf32>
    %c0_3 = arith.constant 0 : index
    %c0_4 = arith.constant 0 : index
    %4 = vector.load %arg3[%c0_3, %c0_4] : memref<1x512xf32, #tpu.memory_space<vmem>>, vector<1x512xf32>
    %5 = vector.broadcast %4 : vector<1x512xf32> to vector<32x512xf32>
    %6 = arith.addf %3, %5 : vector<32x512xf32>
    %cst = arith.constant 0.000000e+00 : f32
    %7 = vector.broadcast %cst : f32 to vector<32x512xf32>
    %8 = arith.cmpf oge, %6, %7 : vector<32x512xf32>
    %cst_5 = arith.constant 2.000000e-01 : f32
    %9 = vector.broadcast %cst_5 : f32 to vector<32x512xf32>
    %10 = arith.mulf %9, %6 : vector<32x512xf32>
    %11 = arith.select %8, %6, %10 : vector<32x512xi1>, vector<32x512xf32>
    %c0_6 = arith.constant 0 : index
    %c0_7 = arith.constant 0 : index
    %12 = vector.load %arg4[%c0_6, %c0_7] : memref<32x512xf32, #tpu.memory_space<vmem>>, vector<32x512xf32>
    tpu.vector_store %arg4[%c0_6, %c0_7], %11 {strides = array<i32>} : memref<32x512xf32, #tpu.memory_space<vmem>>, vector<32x512xf32>,
    return
  }
  func.func @transform_0(%arg0: i32) -> (i32, i32) {
    %c0_i32 = arith.constant 0 : i32
    %c0_i32_0 = arith.constant 0 : i32
    return %arg0, %c0_i32 : i32, i32
  }
  func.func @transform_1(%arg0: i32) -> (i32, i32) {
    %c0_i32 = arith.constant 0 : i32
    %c0_i32_0 = arith.constant 0 : i32
    %c0_i32_1 = arith.constant 0 : i32
    return %c0_i32, %c0_i32_0 : i32, i32
  }
  func.func @transform_2(%arg0: i32) -> (i32, i32) {
    %c0_i32 = arith.constant 0 : i32
    %c0_i32_0 = arith.constant 0 : i32
    %c0_i32_1 = arith.constant 0 : i32
    return %c0_i32, %c0_i32_0 : i32, i32
  }
  func.func @transform_3(%arg0: i32) -> (i32, i32) {
    %c0_i32 = arith.constant 0 : i32
    %c0_i32_0 = arith.constant 0 : i32
    return %arg0, %c0_i32 : i32, i32
  }
}

module attributes {stable_mosaic.version = 11 : i64} {
  func.func @_conv_act_kernel(%arg0: i32, %arg1: memref<8x8192xbf16, #tpu.memory_space<vmem>>, %arg2: memref<8192x1xbf16, #tpu.memory_space<vmem>>, %arg3: memref<1x1xf32, #tpu.memory_space<vmem>>, %arg4: memref<8x1xf32, #tpu.memory_space<vmem>>) attributes {dimension_semantics = [#tpu.dimension_semantics<parallel>], iteration_bounds = array<i64: 1>, scalar_prefetch = 0 : i64, scratch_operands = 0 : i64, tpu.core_type = #tpu.core_type<tc>, window_params = [{transform_indices = @transform_0, window_bounds = array<i64: 8, 8192>}, {pipeline_mode = #tpu.pipeline_mode<synchronous>, transform_indices = @transform_1, window_bounds = array<i64: 8192, 1>}, {pipeline_mode = #tpu.pipeline_mode<synchronous>, transform_indices = @transform_2, window_bounds = array<i64: 1, 1>}, {transform_indices = @transform_3, window_bounds = array<i64: 8, 1>}]} {
    %c0 = arith.constant 0 : index
    %c0_0 = arith.constant 0 : index
    %0 = vector.load %arg1[%c0, %c0_0] : memref<8x8192xbf16, #tpu.memory_space<vmem>>, vector<8x8192xbf16>
    %c0_1 = arith.constant 0 : index
    %c0_2 = arith.constant 0 : index
    %1 = vector.load %arg2[%c0_1, %c0_2] : memref<8192x1xbf16, #tpu.memory_space<vmem>>, vector<8192x1xbf16>
    %cst = arith.constant dense<0.000000e+00> : vector<8x1xf32>
    %2 = tpu.matmul %0, %1, %cst {dimension_numbers = #tpu.dot_dimension_numbers<[1], [0], [0], [1], [0, 0, 1, 1], [], []>} : vector<8x8192xbf16>, vector<8192x1xbf16>, vector<8x1xf32> -> vector<8x1xf32>
    %c0_3 = arith.constant 0 : index
    %c0_4 = arith.constant 0 : index
    %3 = vector.load %arg3[%c0_3, %c0_4] : memref<1x1xf32, #tpu.memory_space<vmem>>, vector<1x1xf32>
    %4 = vector.broadcast %3 : vector<1x1xf32> to vector<8x1xf32>
    %5 = arith.addf %2, %4 : vector<8x1xf32>
    %cst_5 = arith.constant 0.000000e+00 : f32
    %6 = vector.broadcast %cst_5 : f32 to vector<8x1xf32>
    %7 = arith.subf %6, %5 : vector<8x1xf32>
    %8 = math.exp %7 : vector<8x1xf32>
    %cst_6 = arith.constant 1.000000e+00 : f32
    %9 = vector.broadcast %cst_6 : f32 to vector<8x1xf32>
    %10 = arith.addf %9, %8 : vector<8x1xf32>
    %11 = tpu.reciprocal %10 {approx = true} : vector<8x1xf32> -> vector<8x1xf32>
    %cst_7 = arith.constant 1.000000e+00 : f32
    %12 = vector.broadcast %cst_7 : f32 to vector<8x1xf32>
    %13 = arith.minimumf %11, %12 : vector<8x1xf32>
    %c0_8 = arith.constant 0 : index
    %c0_9 = arith.constant 0 : index
    %14 = vector.load %arg4[%c0_8, %c0_9] : memref<8x1xf32, #tpu.memory_space<vmem>>, vector<8x1xf32>
    tpu.vector_store %arg4[%c0_8, %c0_9], %13 {strides = array<i32>} : memref<8x1xf32, #tpu.memory_space<vmem>>, vector<8x1xf32>,
    return
  }
  func.func @transform_0(%arg0: i32) -> (i32, i32) {
    %c0_i32 = arith.constant 0 : i32
    %c0_i32_0 = arith.constant 0 : i32
    return %arg0, %c0_i32 : i32, i32
  }
  func.func @transform_1(%arg0: i32) -> (i32, i32) {
    %c0_i32 = arith.constant 0 : i32
    %c0_i32_0 = arith.constant 0 : i32
    %c0_i32_1 = arith.constant 0 : i32
    return %c0_i32, %c0_i32_0 : i32, i32
  }
  func.func @transform_2(%arg0: i32) -> (i32, i32) {
    %c0_i32 = arith.constant 0 : i32
    %c0_i32_0 = arith.constant 0 : i32
    %c0_i32_1 = arith.constant 0 : i32
    return %c0_i32, %c0_i32_0 : i32, i32
  }
  func.func @transform_3(%arg0: i32) -> (i32, i32) {
    %c0_i32 = arith.constant 0 : i32
    %c0_i32_0 = arith.constant 0 : i32
    return %arg0, %c0_i32 : i32, i32
  }
}

</mosaic_0001>

<llo_original>
// kernel: _lambda_.8
$region0: #{_lambda_.8}
  #allocation0 [shape = 'u32[]', space=smem, size = 0x4, offset = 0x4, fixed_abs, tag = 'smem constant byte address 0x4 - core index']
  #allocation1 [shape = 'u32[144,128]{1,0:T(1,128)}', space=vmem, size = 0x12000, scoped, tag = 'internal scratch']
  %s0 = inlined_call_operand.vmem [shape: bf16[2048,48], index: 0, kind: input, shape index: {}]
  %s1 = inlined_call_operand.vmem [shape: bf16[48,64], index: 1, kind: input, shape index: {}]
  %s2 = inlined_call_operand.vmem [shape: f32[1,64], index: 2, kind: input, shape index: {}]
  %s3 = inlined_call_operand.vmem [shape: f32[2048,64], index: 3, kind: output, shape index: {}]
  %s4 = sld [smem:[#allocation0]]
  $region45: #{_lambda_.8} parent=0
    _
  %s6 = ssub.s32 1, %s4
  %s7 = scalar_select 0, %s6, %s4
  loop: start=0, step=1, limit=6
  $region2: #{_lambda_.8} parent=0 // loop_pre_header
    _
  $region3: #{_lambda_.8} parent=0 // loop_header
    %s9 = sphi 0, %s13
    %p10 = scmp.ge.s32.totalorder %s9, 6
    %s19 = sphi 0, %s21
    %s22 = sphi 0, %s19
    %s23 = sphi 0, %s22
    %s39 = sphi 0, %s23
    %s43 = sphi 0, %s43
    %s45 = sphi 0, %s43
    %s46 = sphi 0, %s45
    %s60 = sphi 0, %s46
    %s64 = sphi 0, %s64
    %s66 = sphi 0, %s64
    %s67 = sphi 0, %s66
    %s81 = sphi 0, %s67
    %s87 = sphi 0, %s89
    %s90 = sphi 0, %s87
    %s91 = sphi 0, %s90
    %s107 = sphi 0, %s91
  $region4: #{_lambda_.8} parent=0 // loop_header_branch
    %12 = sbr.rel (%p10) target = $region8
  $region5: #{_lambda_.8} parent=0 // loop_body
    %s14 = ssub.s32 %s9, 1
    %s15 = ssub.s32 %s9, 2
    %s16 = sadd.s32 %s9, 1
    %s17 = ssub.s32 %s9, %s16
    %p18 = scmp.eq.s32.totalorder %s17, 0
    %s20 = sadd.s32 %s19, 1
    %s21 = scalar_select %p18, %s19, %s20
    %p24 = pneg %p18
    %p25 = scmp.eq.s32.totalorder %s9, 3
    %p26 = por %p24, %p25
    %p27 = scmp.ne.s32.totalorder %s19, %s22
    %p28 = scmp.eq.s32.totalorder %s9, 0
    %p29 = por %p27, %p28
    %p30 = scmp.ne.s32.totalorder %s19, %s22
    %p31 = scmp.eq.s32.totalorder %s14, 3
    %p32 = por %p30, %p31
    %p33 = scmp.ne.s32.totalorder %s22, %s23
    %p34 = scmp.eq.s32.totalorder %s14, 0
    %p35 = por %p33, %p34
    %p36 = scmp.ne.s32.totalorder %s22, %s23
    %p37 = scmp.eq.s32.totalorder %s15, 3
    %p38 = por %p36, %p37
    %p40 = scmp.ne.s32.totalorder %s23, %s39
    %p41 = scmp.eq.s32.totalorder %s15, 0
    %p42 = por %p40, %p41
    %s44 = sadd.s32 %s43, 1
    %p47 = scmp.eq.s32.totalorder %s9, 3
    %p48 = scmp.ne.s32.totalorder %s43, %s45
    %p49 = scmp.eq.s32.totalorder %s9, 0
    %p50 = por %p48, %p49
    %p51 = scmp.ne.s32.totalorder %s43, %s45
    %p52 = scmp.eq.s32.totalorder %s14, 3
    %p53 = por %p51, %p52
    %p54 = scmp.ne.s32.totalorder %s45, %s46
    %p55 = scmp.eq.s32.totalorder %s14, 0
    %p56 = por %p54, %p55
    %p57 = scmp.ne.s32.totalorder %s45, %s46
    %p58 = scmp.eq.s32.totalorder %s15, 3
    %p59 = por %p57, %p58
    %p61 = scmp.ne.s32.totalorder %s46, %s60
    %p62 = scmp.eq.s32.totalorder %s15, 0
    %p63 = por %p61, %p62
    %s65 = sadd.s32 %s64, 1
    %p68 = scmp.eq.s32.totalorder %s9, 3
    %p69 = scmp.ne.s32.totalorder %s64, %s66
    %p70 = scmp.eq.s32.totalorder %s9, 0
    %p71 = por %p69, %p70
    %p72 = scmp.ne.s32.totalorder %s64, %s66
    %p73 = scmp.eq.s32.totalorder %s14, 3
    %p74 = por %p72, %p73
    %p75 = scmp.ne.s32.totalorder %s66, %s67
    %p76 = scmp.eq.s32.totalorder %s14, 0
    %p77 = por %p75, %p76
    %p78 = scmp.ne.s32.totalorder %s66, %s67
    %p79 = scmp.eq.s32.totalorder %s15, 3
    %p80 = por %p78, %p79
    %p82 = scmp.ne.s32.totalorder %s67, %s81
    %p83 = scmp.eq.s32.totalorder %s15, 0
    %p84 = por %p82, %p83
    %s85 = ssub.s32 %s9, %s16
    %p86 = scmp.eq.s32.totalorder %s85, 0
    %s88 = sadd.s32 %s87, 1
    %s89 = scalar_select %p86, %s87, %s88
    %p92 = pneg %p86
    %p93 = scmp.eq.s32.totalorder %s9, 3
    %p94 = por %p92, %p93
    %p95 = scmp.ne.s32.totalorder %s87, %s90
    %p96 = scmp.eq.s32.totalorder %s9, 0
    %p97 = por %p95, %p96
    %p98 = scmp.ne.s32.totalorder %s87, %s90
    %p99 = scmp.eq.s32.totalorder %s14, 3
    %p100 = por %p98, %p99
    %p101 = scmp.ne.s32.totalorder %s90, %s91
    %p102 = scmp.eq.s32.totalorder %s14, 0
    %p103 = por %p101, %p102
    %p104 = scmp.ne.s32.totalorder %s90, %s91
    %p105 = scmp.eq.s32.totalorder %s15, 3
    %p106 = por %p104, %p105
    %p108 = scmp.ne.s32.totalorder %s91, %s107
    %p109 = scmp.eq.s32.totalorder %s15, 0
    %p110 = por %p108, %p109
    %p111 = scmp.le.s32.totalorder 1, %s9
    %p112 = scmp.lt.s32.totalorder %s9, 5
    %p113 = pnand %p111, %p112
    %p114 = pneg %p113
    // Predicated region
    $region9: #{_lambda_.8} parent=5 // pred_check
      _
    $region10: #{_lambda_.8} parent=5 // pred_check_branch
      %116 = sbr.rel (%p113) target = $region12
    $region11: #{_lambda_.8} parent=5 // pred_region
      %s117 = ssub.s32 %s9, 1
      // Predicated region
      $region13: #{_lambda_.8} parent=11 // pred_check
        %p118 = pneg %p56
      $region14: #{_lambda_.8} parent=11 // pred_check_branch
        %120 = sbr.rel (%p118) target = $region16
      $region15: #{_lambda_.8} parent=11 // pred_region
        _
      $region16: #{_lambda_.8} parent=11 // pred_fallthru
        _
      // Predicated region
      $region17: #{_lambda_.8} parent=11 // pred_check
        %p121 = pneg %p77
      $region18: #{_lambda_.8} parent=11 // pred_check_branch
        %123 = sbr.rel (%p121) target = $region20
      $region19: #{_lambda_.8} parent=11 // pred_region
        _
      $region20: #{_lambda_.8} parent=11 // pred_fallthru
        _
    $region12: #{_lambda_.8} parent=5 // pred_fallthru
      _
    %p124 = scmp.lt.s32.totalorder %s9, 4
    // Predicated region
    $region21: #{_lambda_.8} parent=5 // pred_check
      %p125 = pneg %p124
    $region22: #{_lambda_.8} parent=5 // pred_check_branch
      %127 = sbr.rel (%p125) target = $region24
    $region23: #{_lambda_.8} parent=5 // pred_region
      // Predicated region
      $region25: #{_lambda_.8} parent=23 // pred_check
        %p128 = pneg %p29
      $region26: #{_lambda_.8} parent=23 // pred_check_branch
        %130 = sbr.rel (%p128) target = $region28
      $region27: #{_lambda_.8} parent=23 // pred_region
        %s131 = smul.u32 64, %s9
        %p132 = scmp.lt.s32.totalorder %s131, 255
        %s133 = scalar_select %p132, %s131, 255
        %s134 = smul.addr %s133, 4
        %s135 = scalar_lea.vmem %s0, %s134
        %s136 = smul.u32 64, %s9
      $region28: #{_lambda_.8} parent=23 // pred_fallthru
        _
    $region24: #{_lambda_.8} parent=5 // pred_fallthru
      _
    %p137 = scmp.le.s32.totalorder 1, %s9
    %p138 = scmp.lt.s32.totalorder %s9, 5
    %p139 = pnand %p137, %p138
    %p140 = pneg %p139
    // Predicated region
    $region29: #{_lambda_.8} parent=5 // pred_check
      _
    $region30: #{_lambda_.8} parent=5 // pred_check_branch
      %142 = sbr.rel (%p139) target = $region32
    $region31: #{_lambda_.8} parent=5 // pred_region
      %s143 = ssub.s32 %s9, 1
      %s144 = smul.u32 64, %s14
      %p145 = scmp.lt.s32.totalorder %s144, 255
      %s146 = scalar_select %p145, %s144, 255
      %s147 = smul.addr %s146, 4
      %s148 = scalar_lea.vmem %s0, %s147
      %p149 = pneg %p35
      %p150 = pneg %p32
      %p151 = pneg %p56
      %p152 = pneg %p53
      %p153 = pneg %p77
      %p154 = pneg %p74
      %p155 = pneg %p103
      %p156 = pneg %p100
      %s157 = smul.u32 64, %s14
      %p158 = scmp.lt.s32.totalorder %s157, 255
      %s159 = scalar_select %p158, %s157, 255
      %s160 = smul.addr %s159, 8
      %s161 = scalar_lea.vmem %s3, %s160
      %s162 = smul.u32 64, %s14
      %p163 = scmp.lt.s32.totalorder %s162, 255
      %s164 = scalar_select %p163, %s162, 255
      %s165 = smul.addr %s164, 4
      %s166 = scalar_lea.vmem %s0, %s165
      %s167 = smul.u32 64, %s14
      %s168 = smul.u32 64, %s14
      %p169 = scmp.lt.s32.totalorder %s168, 255
      %s170 = scalar_select %p169, %s168, 255
      %s171 = smul.addr %s170, 8
      %s172 = scalar_lea.vmem %s3, %s171
      %s173 = smul.u32 64, %s14
      %v175 = vld [vmem:[%s166] sm:$0xf]
      %v176 = vld [vmem:[%s166 + $0x4] sm:$0xf]
      %v177 = vld [vmem:[%s166 + $0x8] sm:$0xf]
      %v178 = vld [vmem:[%s166 + $0xc] sm:$0xf]
      %v179 = vld [vmem:[%s166 + $0x10] sm:$0xf]
      %v180 = vld [vmem:[%s166 + $0x14] sm:$0xf]
      %v181 = vld [vmem:[%s166 + $0x18] sm:$0xf]
      %v182 = vld [vmem:[%s166 + $0x1c] sm:$0xf]
      %v183 = vld [vmem:[%s166 + $0x20] sm:$0xf]
      %v184 = vld [vmem:[%s166 + $0x24] sm:$0xf]
      %v185 = vld [vmem:[%s166 + $0x28] sm:$0xf]
      %v186 = vld [vmem:[%s166 + $0x2c] sm:$0xf]
      %v187 = vld [vmem:[%s166 + $0x30] sm:$0xf]
      %v188 = vld [vmem:[%s166 + $0x34] sm:$0xf]
      %v189 = vld [vmem:[%s166 + $0x38] sm:$0xf]
      %v190 = vld [vmem:[%s166 + $0x3c] sm:$0xf]
      %v191 = vld [vmem:[%s166 + $0x40] sm:$0xf]
      %v192 = vld [vmem:[%s166 + $0x44] sm:$0xf]
      %v193 = vld [vmem:[%s166 + $0x48] sm:$0xf]
      %v194 = vld [vmem:[%s166 + $0x4c] sm:$0xf]
      %v195 = vld [vmem:[%s166 + $0x50] sm:$0xf]
      %v196 = vld [vmem:[%s166 + $0x54] sm:$0xf]
      %v197 = vld [vmem:[%s166 + $0x58] sm:$0xf]
      %v198 = vld [vmem:[%s166 + $0x5c] sm:$0xf]
      %v199 = vld [vmem:[%s166 + $0x60] sm:$0xf]
      %v200 = vld [vmem:[%s166 + $0x64] sm:$0xf]
      %v201 = vld [vmem:[%s166 + $0x68] sm:$0xf]
      %v202 = vld [vmem:[%s166 + $0x6c] sm:$0xf]
      %v203 = vld [vmem:[%s166 + $0x70] sm:$0xf]
      %v204 = vld [vmem:[%s166 + $0x74] sm:$0xf]
      %v205 = vld [vmem:[%s166 + $0x78] sm:$0xf]
      %v206 = vld [vmem:[%s166 + $0x7c] sm:$0xf]
      %v207 = vld [vmem:[%s166 + $0x80] sm:$0xf]
      %v208 = vld [vmem:[%s166 + $0x84] sm:$0xf]
      %v209 = vld [vmem:[%s166 + $0x88] sm:$0xf]
      %v210 = vld [vmem:[%s166 + $0x8c] sm:$0xf]
      %v211 = vld [vmem:[%s166 + $0x90] sm:$0xf]
      %v212 = vld [vmem:[%s166 + $0x94] sm:$0xf]
      %v213 = vld [vmem:[%s166 + $0x98] sm:$0xf]
      %v214 = vld [vmem:[%s166 + $0x9c] sm:$0xf]
      %v215 = vld [vmem:[%s166 + $0xa0] sm:$0xf]
      %v216 = vld [vmem:[%s166 + $0xa4] sm:$0xf]
      %v217 = vld [vmem:[%s166 + $0xa8] sm:$0xf]
      %v218 = vld [vmem:[%s166 + $0xac] sm:$0xf]
      %v219 = vld [vmem:[%s166 + $0xb0] sm:$0xf]
      %v220 = vld [vmem:[%s166 + $0xb4] sm:$0xf]
      %v221 = vld [vmem:[%s166 + $0xb8] sm:$0xf]
      %v222 = vld [vmem:[%s166 + $0xbc] sm:$0xf]
      %v223 = vld [vmem:[%s166 + $0xc0] sm:$0xf]
      %v224 = vld [vmem:[%s166 + $0xc4] sm:$0xf]
      %v225 = vld [vmem:[%s166 + $0xc8] sm:$0xf]
      %v226 = vld [vmem:[%s166 + $0xcc] sm:$0xf]
      %v227 = vld [vmem:[%s166 + $0xd0] sm:$0xf]
      %v228 = vld [vmem:[%s166 + $0xd4] sm:$0xf]
      %v229 = vld [vmem:[%s166 + $0xd8] sm:$0xf]
      %v230 = vld [vmem:[%s166 + $0xdc] sm:$0xf]
      %v231 = vld [vmem:[%s166 + $0xe0] sm:$0xf]
      %v232 = vld [vmem:[%s166 + $0xe4] sm:$0xf]
      %v233 = vld [vmem:[%s166 + $0xe8] sm:$0xf]
      %v234 = vld [vmem:[%s166 + $0xec] sm:$0xf]
      %v235 = vld [vmem:[%s166 + $0xf0] sm:$0xf]
      %v236 = vld [vmem:[%s166 + $0xf4] sm:$0xf]
      %v237 = vld [vmem:[%s166 + $0xf8] sm:$0xf]
      %v238 = vld [vmem:[%s166 + $0xfc] sm:$0xf]
      %v239 = vld [vmem:[%s1] sm:$0xf]
      %v240 = vld [vmem:[%s1 + $0x4] sm:$0xf]
      %v241 = vld [vmem:[%s1 + $0x8] sm:$0xf]
      %v242 = vld [vmem:[%s1 + $0xc] sm:$0xf]
      %v243 = vld [vmem:[%s1 + $0x10] sm:$0xf]
      %v244 = vld [vmem:[%s1 + $0x14] sm:$0xf]
      %v245 = vld [vmem:[%s2] sm:$0x1]
      %v247 = vlaneseq
      %v248 = vshrl.u32 %v247, 7
      %v249 = vsub.s32 0, %v248
      %v250 = vrot.slane %v245, %v249
      %v316 = vunpack.c.l.b16 %v175
      %v317 = vunpack.c.l.b16 %v176
      %v318 = vunpack.c.l.b16 %v177
      %v319 = vunpack.c.l.b16 %v178
      %v320 = vunpack.c.l.b16 %v179
      %v321 = vunpack.c.l.b16 %v180
      %v322 = vunpack.c.l.b16 %v181
      %v323 = vunpack.c.l.b16 %v182
      %v324 = vunpack.c.l.b16 %v183
      %v325 = vunpack.c.l.b16 %v184
      %v326 = vunpack.c.l.b16 %v185
      %v327 = vunpack.c.l.b16 %v186
      %v328 = vunpack.c.l.b16 %v187
      %v329 = vunpack.c.l.b16 %v188
      %v330 = vunpack.c.l.b16 %v189
      %v331 = vunpack.c.l.b16 %v190
      %v332 = vunpack.c.l.b16 %v191
      %v333 = vunpack.c.l.b16 %v192
      %v334 = vunpack.c.l.b16 %v193
      %v335 = vunpack.c.l.b16 %v194
      %v336 = vunpack.c.l.b16 %v195
      %v337 = vunpack.c.l.b16 %v196
      %v338 = vunpack.c.l.b16 %v197
      %v339 = vunpack.c.l.b16 %v198
      %v340 = vunpack.c.l.b16 %v199
      %v341 = vunpack.c.l.b16 %v200
      %v342 = vunpack.c.l.b16 %v201
      %v343 = vunpack.c.l.b16 %v202
      %v344 = vunpack.c.l.b16 %v203
      %v345 = vunpack.c.l.b16 %v204
      %v346 = vunpack.c.l.b16 %v205
      %v347 = vunpack.c.l.b16 %v206
      %v348 = vunpack.c.l.b16 %v207
      %v349 = vunpack.c.l.b16 %v208
      %v350 = vunpack.c.l.b16 %v209
      %v351 = vunpack.c.l.b16 %v210
      %v352 = vunpack.c.l.b16 %v211
      %v353 = vunpack.c.l.b16 %v212
      %v354 = vunpack.c.l.b16 %v213
      %v355 = vunpack.c.l.b16 %v214
      %v356 = vunpack.c.l.b16 %v215
      %v357 = vunpack.c.l.b16 %v216
      %v358 = vunpack.c.l.b16 %v217
      %v359 = vunpack.c.l.b16 %v218
      %v360 = vunpack.c.l.b16 %v219
      %v361 = vunpack.c.l.b16 %v220
      %v362 = vunpack.c.l.b16 %v221
      %v363 = vunpack.c.l.b16 %v222
      %v364 = vunpack.c.l.b16 %v223
      %v365 = vunpack.c.l.b16 %v224
      %v366 = vunpack.c.l.b16 %v225
      %v367 = vunpack.c.l.b16 %v226
      %v368 = vunpack.c.l.b16 %v227
      %v369 = vunpack.c.l.b16 %v228
      %v370 = vunpack.c.l.b16 %v229
      %v371 = vunpack.c.l.b16 %v230
      %v372 = vunpack.c.l.b16 %v231
      %v373 = vunpack.c.l.b16 %v232
      %v374 = vunpack.c.l.b16 %v233
      %v375 = vunpack.c.l.b16 %v234
      %v376 = vunpack.c.l.b16 %v235
      %v377 = vunpack.c.l.b16 %v236
      %v378 = vunpack.c.l.b16 %v237
      %v379 = vunpack.c.l.b16 %v238
      %v380 = vpack.c.b16 %v317, %v316
      %v381 = vpack.c.b16 %v319, %v318
      %v382 = vpack.c.b16 %v321, %v320
      %v383 = vpack.c.b16 %v323, %v322
      %v384 = vpack.c.b16 %v325, %v324
      %v385 = vpack.c.b16 %v327, %v326
      %v386 = vpack.c.b16 %v329, %v328
      %v387 = vpack.c.b16 %v331, %v330
      %v388 = vpack.c.b16 %v333, %v332
      %v389 = vpack.c.b16 %v335, %v334
      %v390 = vpack.c.b16 %v337, %v336
      %v391 = vpack.c.b16 %v339, %v338
      %v392 = vpack.c.b16 %v341, %v340
      %v393 = vpack.c.b16 %v343, %v342
      %v394 = vpack.c.b16 %v345, %v344
      %v395 = vpack.c.b16 %v347, %v346
      %v396 = vpack.c.b16 %v349, %v348
      %v397 = vpack.c.b16 %v351, %v350
      %v398 = vpack.c.b16 %v353, %v352
      %v399 = vpack.c.b16 %v355, %v354
      %v400 = vpack.c.b16 %v357, %v356
      %v401 = vpack.c.b16 %v359, %v358
      %v402 = vpack.c.b16 %v361, %v360
      %v403 = vpack.c.b16 %v363, %v362
      %v404 = vpack.c.b16 %v365, %v364
      %v405 = vpack.c.b16 %v367, %v366
      %v406 = vpack.c.b16 %v369, %v368
      %v407 = vpack.c.b16 %v371, %v370
      %v408 = vpack.c.b16 %v373, %v372
      %v409 = vpack.c.b16 %v375, %v374
      %v410 = vpack.c.b16 %v377, %v376
      %v411 = vpack.c.b16 %v379, %v378
      %v418 = vunpack.c.l.b16 %v239
      %v419 = vunpack.c.l.b16 %v240
      %v420 = vunpack.c.l.b16 %v241
      %v421 = vunpack.c.l.b16 %v242
      %v422 = vunpack.c.l.b16 %v243
      %v423 = vunpack.c.l.b16 %v244
      %v424 = vpack.c.b16 %v419, %v418
      %v425 = vpack.c.b16 %v421, %v420
      %v426 = vpack.c.b16 %v423, %v422
      %vm430 = vcmask 392192
      %v432 = vsel %vm430, %v380, 0
      %v435 = vsel %vm430, %v381, 0
      %v438 = vsel %vm430, %v382, 0
      %v441 = vsel %vm430, %v383, 0
      %v444 = vsel %vm430, %v384, 0
      %v447 = vsel %vm430, %v385, 0
      %v450 = vsel %vm430, %v386, 0
      %v453 = vsel %vm430, %v387, 0
      %v456 = vsel %vm430, %v388, 0
      %v459 = vsel %vm430, %v389, 0
      %v462 = vsel %vm430, %v390, 0
      %v465 = vsel %vm430, %v391, 0
      %v468 = vsel %vm430, %v392, 0
      %v471 = vsel %vm430, %v393, 0
      %v474 = vsel %vm430, %v394, 0
      %v477 = vsel %vm430, %v395, 0
      %v480 = vsel %vm430, %v396, 0
      %v483 = vsel %vm430, %v397, 0
      %v486 = vsel %vm430, %v398, 0
      %v489 = vsel %vm430, %v399, 0
      %v492 = vsel %vm430, %v400, 0
      %v495 = vsel %vm430, %v401, 0
      %v498 = vsel %vm430, %v402, 0
      %v501 = vsel %vm430, %v403, 0
      %v504 = vsel %vm430, %v404, 0
      %v507 = vsel %vm430, %v405, 0
      %v510 = vsel %vm430, %v406, 0
      %v513 = vsel %vm430, %v407, 0
      %v516 = vsel %vm430, %v408, 0
      %v519 = vsel %vm430, %v409, 0
      %v522 = vsel %vm430, %v410, 0
      %v525 = vsel %vm430, %v411, 0
      %527 = vmatprep.subr.bf16.mxu0 0
      %528 = vmatpush1.bf16.msra.mxu0 %v424
      %529 = vmatprep.subr.bf16.mxu0 0
      %530 = vmatpush1.bf16.msra.mxu0 %v425
      %531 = vmatprep.subr.bf16.mxu0 0
      %532 = vmatpush1.bf16.msra.mxu0 %v426
      %533 = vmatprep.subr.bf16.mxu0 0
      %534 = vmatpush1.bf16.msra.mxu0 0
      %535 = vmatprep.subr.bf16.mxu0 0
      %536 = vmatpush1.bf16.msra.mxu0 0
      %537 = vmatprep.subr.bf16.mxu0 0
      %538 = vmatpush1.bf16.msra.mxu0 0
      %539 = vmatprep.subr.bf16.mxu0 0
      %540 = vmatpush1.bf16.msra.mxu0 0
      %541 = vmatprep.subr.bf16.mxu0 0
      %542 = vmatpush1.bf16.msra.mxu0 0
      %543 = vmatprep.subr.bf16.mxu0 0
      %544 = vmatpush1.bf16.msra.mxu0 0
      %545 = vmatprep.subr.bf16.mxu0 0
      %546 = vmatpush1.bf16.msra.mxu0 0
      %547 = vmatprep.subr.bf16.mxu0 0
      %548 = vmatpush1.bf16.msra.mxu0 0
      %549 = vmatprep.subr.bf16.mxu0 0
      %550 = vmatpush1.bf16.msra.mxu0 0
      %551 = vmatprep.subr.bf16.mxu0 0
      %552 = vmatpush1.bf16.msra.mxu0 0
      %553 = vmatprep.subr.bf16.mxu0 0
      %554 = vmatpush1.bf16.msra.mxu0 0
      %555 = vmatprep.subr.bf16.mxu0 0
      %556 = vmatpush1.bf16.msra.mxu0 0
      %557 = vmatprep.subr.bf16.mxu0 0
      %558 = vmatpush1.bf16.msra.mxu0 0
      %559 = vmatprep.mubr.bf16.mxu0 0
      %560 = vmatmul.mubr.bf16.gmra.mrb[0].mxu0 %v432
      %v561 = vpop.f32.mrb[0].mxu0
      %v562 = vadd.f32 %v250, %v561
      %v563 = vpop.f32.mrb[0].mxu0
      %v564 = vpop.f32.mrb[0].mxu0
      %v565 = vadd.f32 %v250, %v564
      %v566 = vpop.f32.mrb[0].mxu0
      %567 = vmatprep.mubr.bf16.mxu0 0
      %568 = vmatmul.mubr.bf16.gmra.mrb[0].mxu0 %v435
      %v569 = vpop.f32.mrb[0].mxu0
      %v570 = vadd.f32 %v250, %v569
      %v571 = vpop.f32.mrb[0].mxu0
      %v572 = vpop.f32.mrb[0].mxu0
      %v573 = vadd.f32 %v250, %v572
      %v574 = vpop.f32.mrb[0].mxu0
      %575 = vmatprep.mubr.bf16.mxu0 0
      %576 = vmatmul.mubr.bf16.gmra.mrb[0].mxu0 %v438
      %v577 = vpop.f32.mrb[0].mxu0
      %v578 = vadd.f32 %v250, %v577
      %v579 = vpop.f32.mrb[0].mxu0
      %v580 = vpop.f32.mrb[0].mxu0
      %v581 = vadd.f32 %v250, %v580
      %v582 = vpop.f32.mrb[0].mxu0
      %583 = vmatprep.mubr.bf16.mxu0 0
      %584 = vmatmul.mubr.bf16.gmra.mrb[0].mxu0 %v441
      %v585 = vpop.f32.mrb[0].mxu0
      %v586 = vadd.f32 %v250, %v585
      %v587 = vpop.f32.mrb[0].mxu0
      %v588 = vpop.f32.mrb[0].mxu0
      %v589 = vadd.f32 %v250, %v588
      %v590 = vpop.f32.mrb[0].mxu0
      %591 = vmatprep.mubr.bf16.mxu0 0
      %592 = vmatmul.mubr.bf16.gmra.mrb[0].mxu0 %v444
      %v593 = vpop.f32.mrb[0].mxu0
      %v594 = vadd.f32 %v250, %v593
      %v595 = vpop.f32.mrb[0].mxu0
      %v596 = vpop.f32.mrb[0].mxu0
      %v597 = vadd.f32 %v250, %v596
      %v598 = vpop.f32.mrb[0].mxu0
      %599 = vmatprep.mubr.bf16.mxu0 0
      %600 = vmatmul.mubr.bf16.gmra.mrb[0].mxu0 %v447
      %v601 = vpop.f32.mrb[0].mxu0
      %v602 = vadd.f32 %v250, %v601
      %v603 = vpop.f32.mrb[0].mxu0
      %v604 = vpop.f32.mrb[0].mxu0
      %v605 = vadd.f32 %v250, %v604
      %v606 = vpop.f32.mrb[0].mxu0
      %607 = vmatprep.mubr.bf16.mxu0 0
      %608 = vmatmul.mubr.bf16.gmra.mrb[0].mxu0 %v450
      %v609 = vpop.f32.mrb[0].mxu0
      %v610 = vadd.f32 %v250, %v609
      %v611 = vpop.f32.mrb[0].mxu0
      %v612 = vpop.f32.mrb[0].mxu0
      %v613 = vadd.f32 %v250, %v612
      %v614 = vpop.f32.mrb[0].mxu0
      %615 = vmatprep.mubr.bf16.mxu0 0
      %616 = vmatmul.mubr.bf16.gmra.mrb[0].mxu0 %v453
      %v617 = vpop.f32.mrb[0].mxu0
      %v618 = vadd.f32 %v250, %v617
      %v619 = vpop.f32.mrb[0].mxu0
      %v620 = vpop.f32.mrb[0].mxu0
      %v621 = vadd.f32 %v250, %v620
      %v622 = vpop.f32.mrb[0].mxu0
      %623 = vmatprep.mubr.bf16.mxu0 0
      %624 = vmatmul.mubr.bf16.gmra.mrb[0].mxu0 %v456
      %v625 = vpop.f32.mrb[0].mxu0
      %v626 = vadd.f32 %v250, %v625
      %v627 = vpop.f32.mrb[0].mxu0
      %v628 = vpop.f32.mrb[0].mxu0
      %v629 = vadd.f32 %v250, %v628
      %v630 = vpop.f32.mrb[0].mxu0
      %631 = vmatprep.mubr.bf16.mxu0 0
      %632 = vmatmul.mubr.bf16.gmra.mrb[0].mxu0 %v459
      %v633 = vpop.f32.mrb[0].mxu0
      %v634 = vadd.f32 %v250, %v633
      %v635 = vpop.f32.mrb[0].mxu0
      %v636 = vpop.f32.mrb[0].mxu0
      %v637 = vadd.f32 %v250, %v636
      %v638 = vpop.f32.mrb[0].mxu0
      %639 = vmatprep.mubr.bf16.mxu0 0
      %640 = vmatmul.mubr.bf16.gmra.mrb[0].mxu0 %v462
      %v641 = vpop.f32.mrb[0].mxu0
      %v642 = vadd.f32 %v250, %v641
      %v643 = vpop.f32.mrb[0].mxu0
      %v644 = vpop.f32.mrb[0].mxu0
      %v645 = vadd.f32 %v250, %v644
      %v646 = vpop.f32.mrb[0].mxu0
      %647 = vmatprep.mubr.bf16.mxu0 0
      %648 = vmatmul.mubr.bf16.gmra.mrb[0].mxu0 %v465
      %v649 = vpop.f32.mrb[0].mxu0
      %v650 = vadd.f32 %v250, %v649
      %v651 = vpop.f32.mrb[0].mxu0
      %v652 = vpop.f32.mrb[0].mxu0
      %v653 = vadd.f32 %v250, %v652
      %v654 = vpop.f32.mrb[0].mxu0
      %655 = vmatprep.mubr.bf16.mxu0 0
      %656 = vmatmul.mubr.bf16.gmra.mrb[0].mxu0 %v468
      %v657 = vpop.f32.mrb[0].mxu0
      %v658 = vadd.f32 %v250, %v657
      %v659 = vpop.f32.mrb[0].mxu0
      %v660 = vpop.f32.mrb[0].mxu0
      %v661 = vadd.f32 %v250, %v660
      %v662 = vpop.f32.mrb[0].mxu0
      %663 = vmatprep.mubr.bf16.mxu0 0
      %664 = vmatmul.mubr.bf16.gmra.mrb[0].mxu0 %v471
      %v665 = vpop.f32.mrb[0].mxu0
      %v666 = vadd.f32 %v250, %v665
      %v667 = vpop.f32.mrb[0].mxu0
      %v668 = vpop.f32.mrb[0].mxu0
      %v669 = vadd.f32 %v250, %v668
      %v670 = vpop.f32.mrb[0].mxu0
      %671 = vmatprep.mubr.bf16.mxu0 0
      %672 = vmatmul.mubr.bf16.gmra.mrb[0].mxu0 %v474
      %v673 = vpop.f32.mrb[0].mxu0
      %v674 = vadd.f32 %v250, %v673
      %v675 = vpop.f32.mrb[0].mxu0
      %v676 = vpop.f32.mrb[0].mxu0
      %v677 = vadd.f32 %v250, %v676
      %v678 = vpop.f32.mrb[0].mxu0
      %679 = vmatprep.mubr.bf16.mxu0 0
      %680 = vmatmul.mubr.bf16.gmra.mrb[0].mxu0 %v477
      %v681 = vpop.f32.mrb[0].mxu0
      %v682 = vadd.f32 %v250, %v681
      %v683 = vpop.f32.mrb[0].mxu0
      %v684 = vpop.f32.mrb[0].mxu0
      %v685 = vadd.f32 %v250, %v684
      %v686 = vpop.f32.mrb[0].mxu0
      %687 = vmatprep.mubr.bf16.mxu0 0
      %688 = vmatmul.mubr.bf16.gmra.mrb[0].mxu0 %v480
      %v689 = vpop.f32.mrb[0].mxu0
      %v690 = vadd.f32 %v250, %v689
      %v691 = vpop.f32.mrb[0].mxu0
      %v692 = vpop.f32.mrb[0].mxu0
      %v693 = vadd.f32 %v250, %v692
      %v694 = vpop.f32.mrb[0].mxu0
      %695 = vmatprep.mubr.bf16.mxu0 0
      %696 = vmatmul.mubr.bf16.gmra.mrb[0].mxu0 %v483
      %v697 = vpop.f32.mrb[0].mxu0
      %v698 = vadd.f32 %v250, %v697
      %v699 = vpop.f32.mrb[0].mxu0
      %v700 = vpop.f32.mrb[0].mxu0
      %v701 = vadd.f32 %v250, %v700
      %v702 = vpop.f32.mrb[0].mxu0
      %703 = vmatprep.mubr.bf16.mxu0 0
      %704 = vmatmul.mubr.bf16.gmra.mrb[0].mxu0 %v486
      %v705 = vpop.f32.mrb[0].mxu0
      %v706 = vadd.f32 %v250, %v705
      %v707 = vpop.f32.mrb[0].mxu0
      %v708 = vpop.f32.mrb[0].mxu0
      %v709 = vadd.f32 %v250, %v708
      %v710 = vpop.f32.mrb[0].mxu0
      %711 = vmatprep.mubr.bf16.mxu0 0
      %712 = vmatmul.mubr.bf16.gmra.mrb[0].mxu0 %v489
      %v713 = vpop.f32.mrb[0].mxu0
      %v714 = vadd.f32 %v250, %v713
      %v715 = vpop.f32.mrb[0].mxu0
      %v716 = vpop.f32.mrb[0].mxu0
      %v717 = vadd.f32 %v250, %v716
      %v718 = vpop.f32.mrb[0].mxu0
      %719 = vmatprep.mubr.bf16.mxu0 0
      %720 = vmatmul.mubr.bf16.gmra.mrb[0].mxu0 %v492
      %v721 = vpop.f32.mrb[0].mxu0
      %v722 = vadd.f32 %v250, %v721
      %v723 = vpop.f32.mrb[0].mxu0
      %v724 = vpop.f32.mrb[0].mxu0
      %v725 = vadd.f32 %v250, %v724
      %v726 = vpop.f32.mrb[0].mxu0
      %727 = vmatprep.mubr.bf16.mxu0 0
      %728 = vmatmul.mubr.bf16.gmra.mrb[0].mxu0 %v495
      %v729 = vpop.f32.mrb[0].mxu0
      %v730 = vadd.f32 %v250, %v729
      %v731 = vpop.f32.mrb[0].mxu0
      %v732 = vpop.f32.mrb[0].mxu0
      %v733 = vadd.f32 %v250, %v732
      %v734 = vpop.f32.mrb[0].mxu0
      %735 = vmatprep.mubr.bf16.mxu0 0
      %736 = vmatmul.mubr.bf16.gmra.mrb[0].mxu0 %v498
      %v737 = vpop.f32.mrb[0].mxu0
      %v738 = vadd.f32 %v250, %v737
      %v739 = vpop.f32.mrb[0].mxu0
      %v740 = vpop.f32.mrb[0].mxu0
      %v741 = vadd.f32 %v250, %v740
      %v742 = vpop.f32.mrb[0].mxu0
      %743 = vmatprep.mubr.bf16.mxu0 0
      %744 = vmatmul.mubr.bf16.gmra.mrb[0].mxu0 %v501
      %v745 = vpop.f32.mrb[0].mxu0
      %v746 = vadd.f32 %v250, %v745
      %v747 = vpop.f32.mrb[0].mxu0
      %v748 = vpop.f32.mrb[0].mxu0
      %v749 = vadd.f32 %v250, %v748
      %v750 = vpop.f32.mrb[0].mxu0
      %751 = vmatprep.mubr.bf16.mxu0 0
      %752 = vmatmul.mubr.bf16.gmra.mrb[0].mxu0 %v504
      %v753 = vpop.f32.mrb[0].mxu0
      %v754 = vadd.f32 %v250, %v753
      %v755 = vpop.f32.mrb[0].mxu0
      %v756 = vpop.f32.mrb[0].mxu0
      %v757 = vadd.f32 %v250, %v756
      %v758 = vpop.f32.mrb[0].mxu0
      %759 = vmatprep.mubr.bf16.mxu0 0
      %760 = vmatmul.mubr.bf16.gmra.mrb[0].mxu0 %v507
      %v761 = vpop.f32.mrb[0].mxu0
      %v762 = vadd.f32 %v250, %v761
      %v763 = vpop.f32.mrb[0].mxu0
      %v764 = vpop.f32.mrb[0].mxu0
      %v765 = vadd.f32 %v250, %v764
      %v766 = vpop.f32.mrb[0].mxu0
      %767 = vmatprep.mubr.bf16.mxu0 0
      %768 = vmatmul.mubr.bf16.gmra.mrb[0].mxu0 %v510
      %v769 = vpop.f32.mrb[0].mxu0
      %v770 = vadd.f32 %v250, %v769
      %v771 = vpop.f32.mrb[0].mxu0
      %v772 = vpop.f32.mrb[0].mxu0
      %v773 = vadd.f32 %v250, %v772
      %v774 = vpop.f32.mrb[0].mxu0
      %775 = vmatprep.mubr.bf16.mxu0 0
      %776 = vmatmul.mubr.bf16.gmra.mrb[0].mxu0 %v513
      %v777 = vpop.f32.mrb[0].mxu0
      %v778 = vadd.f32 %v250, %v777
      %v779 = vpop.f32.mrb[0].mxu0
      %v780 = vpop.f32.mrb[0].mxu0
      %v781 = vadd.f32 %v250, %v780
      %v782 = vpop.f32.mrb[0].mxu0
      %783 = vmatprep.mubr.bf16.mxu0 0
      %784 = vmatmul.mubr.bf16.gmra.mrb[0].mxu0 %v516
      %v785 = vpop.f32.mrb[0].mxu0
      %v786 = vadd.f32 %v250, %v785
      %v787 = vpop.f32.mrb[0].mxu0
      %v788 = vpop.f32.mrb[0].mxu0
      %v789 = vadd.f32 %v250, %v788
      %v790 = vpop.f32.mrb[0].mxu0
      %791 = vmatprep.mubr.bf16.mxu0 0
      %792 = vmatmul.mubr.bf16.gmra.mrb[0].mxu0 %v519
      %v793 = vpop.f32.mrb[0].mxu0
      %v794 = vadd.f32 %v250, %v793
      %v795 = vpop.f32.mrb[0].mxu0
      %v796 = vpop.f32.mrb[0].mxu0
      %v797 = vadd.f32 %v250, %v796
      %v798 = vpop.f32.mrb[0].mxu0
      %799 = vmatprep.mubr.bf16.mxu0 0
      %800 = vmatmul.mubr.bf16.gmra.mrb[0].mxu0 %v522
      %v801 = vpop.f32.mrb[0].mxu0
      %v802 = vadd.f32 %v250, %v801
      %v803 = vpop.f32.mrb[0].mxu0
      %v804 = vpop.f32.mrb[0].mxu0
      %v805 = vadd.f32 %v250, %v804
      %v806 = vpop.f32.mrb[0].mxu0
      %807 = vmatprep.mubr.bf16.mxu0 0
      %808 = vmatmul.mubr.bf16.gmra.mrb[0].mxu0 %v525
      %v809 = vpop.f32.mrb[0].mxu0
      %v810 = vadd.f32 %v250, %v809
      %v811 = vpop.f32.mrb[0].mxu0
      %v812 = vpop.f32.mrb[0].mxu0
      %v813 = vadd.f32 %v250, %v812
      %v814 = vpop.f32.mrb[0].mxu0
      %815 = vdwg.mxu0
      %vm816 = vcmp.ge.f32.partialorder %v562, 0.0
      %vm817 = vcmp.ge.f32.partialorder %v565, 0.0
      %vm818 = vcmp.ge.f32.partialorder %v570, 0.0
      %vm819 = vcmp.ge.f32.partialorder %v573, 0.0
      %vm820 = vcmp.ge.f32.partialorder %v578, 0.0
      %vm821 = vcmp.ge.f32.partialorder %v581, 0.0
      %vm822 = vcmp.ge.f32.partialorder %v586, 0.0
      %vm823 = vcmp.ge.f32.partialorder %v589, 0.0
      %vm824 = vcmp.ge.f32.partialorder %v594, 0.0
      %vm825 = vcmp.ge.f32.partialorder %v597, 0.0
      %vm826 = vcmp.ge.f32.partialorder %v602, 0.0
      %vm827 = vcmp.ge.f32.partialorder %v605, 0.0
      %vm828 = vcmp.ge.f32.partialorder %v610, 0.0
      %vm829 = vcmp.ge.f32.partialorder %v613, 0.0
      %vm830 = vcmp.ge.f32.partialorder %v618, 0.0
      %vm831 = vcmp.ge.f32.partialorder %v621, 0.0
      %vm832 = vcmp.ge.f32.partialorder %v626, 0.0
      %vm833 = vcmp.ge.f32.partialorder %v629, 0.0
      %vm834 = vcmp.ge.f32.partialorder %v634, 0.0
      %vm835 = vcmp.ge.f32.partialorder %v637, 0.0
      %vm836 = vcmp.ge.f32.partialorder %v642, 0.0
      %vm837 = vcmp.ge.f32.partialorder %v645, 0.0
      %vm838 = vcmp.ge.f32.partialorder %v650, 0.0
      %vm839 = vcmp.ge.f32.partialorder %v653, 0.0
      %vm840 = vcmp.ge.f32.partialorder %v658, 0.0
      %vm841 = vcmp.ge.f32.partialorder %v661, 0.0
      %vm842 = vcmp.ge.f32.partialorder %v666, 0.0
      %vm843 = vcmp.ge.f32.partialorder %v669, 0.0
      %vm844 = vcmp.ge.f32.partialorder %v674, 0.0
      %vm845 = vcmp.ge.f32.partialorder %v677, 0.0
      %vm846 = vcmp.ge.f32.partialorder %v682, 0.0
      %vm847 = vcmp.ge.f32.partialorder %v685, 0.0
      %vm848 = vcmp.ge.f32.partialorder %v690, 0.0
      %vm849 = vcmp.ge.f32.partialorder %v693, 0.0
      %vm850 = vcmp.ge.f32.partialorder %v698, 0.0
      %vm851 = vcmp.ge.f32.partialorder %v701, 0.0
      %vm852 = vcmp.ge.f32.partialorder %v706, 0.0
      %vm853 = vcmp.ge.f32.partialorder %v709, 0.0
      %vm854 = vcmp.ge.f32.partialorder %v714, 0.0
      %vm855 = vcmp.ge.f32.partialorder %v717, 0.0
      %vm856 = vcmp.ge.f32.partialorder %v722, 0.0
      %vm857 = vcmp.ge.f32.partialorder %v725, 0.0
      %vm858 = vcmp.ge.f32.partialorder %v730, 0.0
      %vm859 = vcmp.ge.f32.partialorder %v733, 0.0
      %vm860 = vcmp.ge.f32.partialorder %v738, 0.0
      %vm861 = vcmp.ge.f32.partialorder %v741, 0.0
      %vm862 = vcmp.ge.f32.partialorder %v746, 0.0
      %vm863 = vcmp.ge.f32.partialorder %v749, 0.0
      %vm864 = vcmp.ge.f32.partialorder %v754, 0.0
      %vm865 = vcmp.ge.f32.partialorder %v757, 0.0
      %vm866 = vcmp.ge.f32.partialorder %v762, 0.0
      %vm867 = vcmp.ge.f32.partialorder %v765, 0.0
      %vm868 = vcmp.ge.f32.partialorder %v770, 0.0
      %vm869 = vcmp.ge.f32.partialorder %v773, 0.0
      %vm870 = vcmp.ge.f32.partialorder %v778, 0.0
      %vm871 = vcmp.ge.f32.partialorder %v781, 0.0
      %vm872 = vcmp.ge.f32.partialorder %v786, 0.0
      %vm873 = vcmp.ge.f32.partialorder %v789, 0.0
      %vm874 = vcmp.ge.f32.partialorder %v794, 0.0
      %vm875 = vcmp.ge.f32.partialorder %v797, 0.0
      %vm876 = vcmp.ge.f32.partialorder %v802, 0.0
      %vm877 = vcmp.ge.f32.partialorder %v805, 0.0
      %vm878 = vcmp.ge.f32.partialorder %v810, 0.0
      %vm879 = vcmp.ge.f32.partialorder %v813, 0.0
      %v880 = vmul.f32 %v562, 0.2
      %v881 = vmul.f32 %v565, 0.2
      %v882 = vmul.f32 %v570, 0.2
      %v883 = vmul.f32 %v573, 0.2
      %v884 = vmul.f32 %v578, 0.2
      %v885 = vmul.f32 %v581, 0.2
      %v886 = vmul.f32 %v586, 0.2
      %v887 = vmul.f32 %v589, 0.2
      %v888 = vmul.f32 %v594, 0.2
      %v889 = vmul.f32 %v597, 0.2
      %v890 = vmul.f32 %v602, 0.2
      %v891 = vmul.f32 %v605, 0.2
      %v892 = vmul.f32 %v610, 0.2
      %v893 = vmul.f32 %v613, 0.2
      %v894 = vmul.f32 %v618, 0.2
      %v895 = vmul.f32 %v621, 0.2
      %v896 = vmul.f32 %v626, 0.2
      %v897 = vmul.f32 %v629, 0.2
      %v898 = vmul.f32 %v634, 0.2
      %v899 = vmul.f32 %v637, 0.2
      %v900 = vmul.f32 %v642, 0.2
      %v901 = vmul.f32 %v645, 0.2
      %v902 = vmul.f32 %v650, 0.2
      %v903 = vmul.f32 %v653, 0.2
      %v904 = vmul.f32 %v658, 0.2
      %v905 = vmul.f32 %v661, 0.2
      %v906 = vmul.f32 %v666, 0.2
      %v907 = vmul.f32 %v669, 0.2
      %v908 = vmul.f32 %v674, 0.2
      %v909 = vmul.f32 %v677, 0.2
      %v910 = vmul.f32 %v682, 0.2
      %v911 = vmul.f32 %v685, 0.2
      %v912 = vmul.f32 %v690, 0.2
      %v913 = vmul.f32 %v693, 0.2
      %v914 = vmul.f32 %v698, 0.2
      %v915 = vmul.f32 %v701, 0.2
      %v916 = vmul.f32 %v706, 0.2
      %v917 = vmul.f32 %v709, 0.2
      %v918 = vmul.f32 %v714, 0.2
      %v919 = vmul.f32 %v717, 0.2
      %v920 = vmul.f32 %v722, 0.2
      %v921 = vmul.f32 %v725, 0.2
      %v922 = vmul.f32 %v730, 0.2
      %v923 = vmul.f32 %v733, 0.2
      %v924 = vmul.f32 %v738, 0.2
      %v925 = vmul.f32 %v741, 0.2
      %v926 = vmul.f32 %v746, 0.2
      %v927 = vmul.f32 %v749, 0.2
      %v928 = vmul.f32 %v754, 0.2
      %v929 = vmul.f32 %v757, 0.2
      %v930 = vmul.f32 %v762, 0.2
      %v931 = vmul.f32 %v765, 0.2
      %v932 = vmul.f32 %v770, 0.2
      %v933 = vmul.f32 %v773, 0.2
      %v934 = vmul.f32 %v778, 0.2
      %v935 = vmul.f32 %v781, 0.2
      %v936 = vmul.f32 %v786, 0.2
      %v937 = vmul.f32 %v789, 0.2
      %v938 = vmul.f32 %v794, 0.2
      %v939 = vmul.f32 %v797, 0.2
      %v940 = vmul.f32 %v802, 0.2
      %v941 = vmul.f32 %v805, 0.2
      %v942 = vmul.f32 %v810, 0.2
      %v943 = vmul.f32 %v813, 0.2
      %v944 = vsel %vm816, %v562, %v880
      %v945 = vsel %vm817, %v565, %v881
      %v946 = vsel %vm818, %v570, %v882
      %v947 = vsel %vm819, %v573, %v883
      %v948 = vsel %vm820, %v578, %v884
      %v949 = vsel %vm821, %v581, %v885
      %v950 = vsel %vm822, %v586, %v886
      %v951 = vsel %vm823, %v589, %v887
      %v952 = vsel %vm824, %v594, %v888
      %v953 = vsel %vm825, %v597, %v889
      %v954 = vsel %vm826, %v602, %v890
      %v955 = vsel %vm827, %v605, %v891
      %v956 = vsel %vm828, %v610, %v892
      %v957 = vsel %vm829, %v613, %v893
      %v958 = vsel %vm830, %v618, %v894
      %v959 = vsel %vm831, %v621, %v895
      %v960 = vsel %vm832, %v626, %v896
      %v961 = vsel %vm833, %v629, %v897
      %v962 = vsel %vm834, %v634, %v898
      %v963 = vsel %vm835, %v637, %v899
      %v964 = vsel %vm836, %v642, %v900
      %v965 = vsel %vm837, %v645, %v901
      %v966 = vsel %vm838, %v650, %v902
      %v967 = vsel %vm839, %v653, %v903
      %v968 = vsel %vm840, %v658, %v904
      %v969 = vsel %vm841, %v661, %v905
      %v970 = vsel %vm842, %v666, %v906
      %v971 = vsel %vm843, %v669, %v907
      %v972 = vsel %vm844, %v674, %v908
      %v973 = vsel %vm845, %v677, %v909
      %v974 = vsel %vm846, %v682, %v910
      %v975 = vsel %vm847, %v685, %v911
      %v976 = vsel %vm848, %v690, %v912
      %v977 = vsel %vm849, %v693, %v913
      %v978 = vsel %vm850, %v698, %v914
      %v979 = vsel %vm851, %v701, %v915
      %v980 = vsel %vm852, %v706, %v916
      %v981 = vsel %vm853, %v709, %v917
      %v982 = vsel %vm854, %v714, %v918
      %v983 = vsel %vm855, %v717, %v919
      %v984 = vsel %vm856, %v722, %v920
      %v985 = vsel %vm857, %v725, %v921
      %v986 = vsel %vm858, %v730, %v922
      %v987 = vsel %vm859, %v733, %v923
      %v988 = vsel %vm860, %v738, %v924
      %v989 = vsel %vm861, %v741, %v925
      %v990 = vsel %vm862, %v746, %v926
      %v991 = vsel %vm863, %v749, %v927
      %v992 = vsel %vm864, %v754, %v928
      %v993 = vsel %vm865, %v757, %v929
      %v994 = vsel %vm866, %v762, %v930
      %v995 = vsel %vm867, %v765, %v931
      %v996 = vsel %vm868, %v770, %v932
      %v997 = vsel %vm869, %v773, %v933
      %v998 = vsel %vm870, %v778, %v934
      %v999 = vsel %vm871, %v781, %v935
      %v1000 = vsel %vm872, %v786, %v936
      %v1001 = vsel %vm873, %v789, %v937
      %v1002 = vsel %vm874, %v794, %v938
      %v1003 = vsel %vm875, %v797, %v939
      %v1004 = vsel %vm876, %v802, %v940
      %v1005 = vsel %vm877, %v805, %v941
      %v1006 = vsel %vm878, %v810, %v942
      %v1007 = vsel %vm879, %v813, %v943
      %vm1008 = vcmask 523264
      %1009 = vst.msk [vmem:[%s172] sm:$0xff] %vm1008, %v944
      %1010 = vst.msk [vmem:[%s172 + $0x8] sm:$0xff] %vm1008, %v945
      %1011 = vst.msk [vmem:[%s172 + $0x10] sm:$0xff] %vm1008, %v946
      %1012 = vst.msk [vmem:[%s172 + $0x18] sm:$0xff] %vm1008, %v947
      %1013 = vst.msk [vmem:[%s172 + $0x20] sm:$0xff] %vm1008, %v948
      %1014 = vst.msk [vmem:[%s172 + $0x28] sm:$0xff] %vm1008, %v949
      %1015 = vst.msk [vmem:[%s172 + $0x30] sm:$0xff] %vm1008, %v950
      %1016 = vst.msk [vmem:[%s172 + $0x38] sm:$0xff] %vm1008, %v951
      %1017 = vst.msk [vmem:[%s172 + $0x40] sm:$0xff] %vm1008, %v952
      %1018 = vst.msk [vmem:[%s172 + $0x48] sm:$0xff] %vm1008, %v953
      %1019 = vst.msk [vmem:[%s172 + $0x50] sm:$0xff] %vm1008, %v954
      %1020 = vst.msk [vmem:[%s172 + $0x58] sm:$0xff] %vm1008, %v955
      %1021 = vst.msk [vmem:[%s172 + $0x60] sm:$0xff] %vm1008, %v956
      %1022 = vst.msk [vmem:[%s172 + $0x68] sm:$0xff] %vm1008, %v957
      %1023 = vst.msk [vmem:[%s172 + $0x70] sm:$0xff] %vm1008, %v958
      %1024 = vst.msk [vmem:[%s172 + $0x78] sm:$0xff] %vm1008, %v959
      %1025 = vst.msk [vmem:[%s172 + $0x80] sm:$0xff] %vm1008, %v960
      %1026 = vst.msk [vmem:[%s172 + $0x88] sm:$0xff] %vm1008, %v961
      %1027 = vst.msk [vmem:[%s172 + $0x90] sm:$0xff] %vm1008, %v962
      %1028 = vst.msk [vmem:[%s172 + $0x98] sm:$0xff] %vm1008, %v963
      %1029 = vst.msk [vmem:[%s172 + $0xa0] sm:$0xff] %vm1008, %v964
      %1030 = vst.msk [vmem:[%s172 + $0xa8] sm:$0xff] %vm1008, %v965
      %1031 = vst.msk [vmem:[%s172 + $0xb0] sm:$0xff] %vm1008, %v966
      %1032 = vst.msk [vmem:[%s172 + $0xb8] sm:$0xff] %vm1008, %v967
      %1033 = vst.msk [vmem:[%s172 + $0xc0] sm:$0xff] %vm1008, %v968
      %1034 = vst.msk [vmem:[%s172 + $0xc8] sm:$0xff] %vm1008, %v969
      %1035 = vst.msk [vmem:[%s172 + $0xd0] sm:$0xff] %vm1008, %v970
      %1036 = vst.msk [vmem:[%s172 + $0xd8] sm:$0xff] %vm1008, %v971
      %1037 = vst.msk [vmem:[%s172 + $0xe0] sm:$0xff] %vm1008, %v972
      %1038 = vst.msk [vmem:[%s172 + $0xe8] sm:$0xff] %vm1008, %v973
      %1039 = vst.msk [vmem:[%s172 + $0xf0] sm:$0xff] %vm1008, %v974
      %1040 = vst.msk [vmem:[%s172 + $0xf8] sm:$0xff] %vm1008, %v975
      %1041 = vst.msk [vmem:[%s172 + $0x100] sm:$0xff] %vm1008, %v976
      %1042 = vst.msk [vmem:[%s172 + $0x108] sm:$0xff] %vm1008, %v977
      %1043 = vst.msk [vmem:[%s172 + $0x110] sm:$0xff] %vm1008, %v978
      %1044 = vst.msk [vmem:[%s172 + $0x118] sm:$0xff] %vm1008, %v979
      %1045 = vst.msk [vmem:[%s172 + $0x120] sm:$0xff] %vm1008, %v980
      %1046 = vst.msk [vmem:[%s172 + $0x128] sm:$0xff] %vm1008, %v981
      %1047 = vst.msk [vmem:[%s172 + $0x130] sm:$0xff] %vm1008, %v982
      %1048 = vst.msk [vmem:[%s172 + $0x138] sm:$0xff] %vm1008, %v983
      %1049 = vst.msk [vmem:[%s172 + $0x140] sm:$0xff] %vm1008, %v984
      %1050 = vst.msk [vmem:[%s172 + $0x148] sm:$0xff] %vm1008, %v985
      %1051 = vst.msk [vmem:[%s172 + $0x150] sm:$0xff] %vm1008, %v986
      %1052 = vst.msk [vmem:[%s172 + $0x158] sm:$0xff] %vm1008, %v987
      %1053 = vst.msk [vmem:[%s172 + $0x160] sm:$0xff] %vm1008, %v988
      %1054 = vst.msk [vmem:[%s172 + $0x168] sm:$0xff] %vm1008, %v989
      %1055 = vst.msk [vmem:[%s172 + $0x170] sm:$0xff] %vm1008, %v990
      %1056 = vst.msk [vmem:[%s172 + $0x178] sm:$0xff] %vm1008, %v991
      %1057 = vst.msk [vmem:[%s172 + $0x180] sm:$0xff] %vm1008, %v992
      %1058 = vst.msk [vmem:[%s172 + $0x188] sm:$0xff] %vm1008, %v993
      %1059 = vst.msk [vmem:[%s172 + $0x190] sm:$0xff] %vm1008, %v994
      %1060 = vst.msk [vmem:[%s172 + $0x198] sm:$0xff] %vm1008, %v995
      %1061 = vst.msk [vmem:[%s172 + $0x1a0] sm:$0xff] %vm1008, %v996
      %1062 = vst.msk [vmem:[%s172 + $0x1a8] sm:$0xff] %vm1008, %v997
      %1063 = vst.msk [vmem:[%s172 + $0x1b0] sm:$0xff] %vm1008, %v998
      %1064 = vst.msk [vmem:[%s172 + $0x1b8] sm:$0xff] %vm1008, %v999
      %1065 = vst.msk [vmem:[%s172 + $0x1c0] sm:$0xff] %vm1008, %v1000
      %1066 = vst.msk [vmem:[%s172 + $0x1c8] sm:$0xff] %vm1008, %v1001
      %1067 = vst.msk [vmem:[%s172 + $0x1d0] sm:$0xff] %vm1008, %v1002
      %1068 = vst.msk [vmem:[%s172 + $0x1d8] sm:$0xff] %vm1008, %v1003
      %1069 = vst.msk [vmem:[%s172 + $0x1e0] sm:$0xff] %vm1008, %v1004
      %1070 = vst.msk [vmem:[%s172 + $0x1e8] sm:$0xff] %vm1008, %v1005
      %1071 = vst.msk [vmem:[%s172 + $0x1f0] sm:$0xff] %vm1008, %v1006
      %1072 = vst.msk [vmem:[%s172 + $0x1f8] sm:$0xff] %vm1008, %v1007
      %s1073 = smul.u32 64, %s14
      %p1074 = scmp.lt.s32.totalorder %s1073, 255
      %s1075 = scalar_select %p1074, %s1073, 255
      %s1076 = smul.addr %s1075, 8
      %s1077 = scalar_lea.vmem %s3, %s1076
      // Predicated region
      $region33: #{_lambda_.8} parent=31 // pred_check
        %p1078 = pneg %p100
      $region34: #{_lambda_.8} parent=31 // pred_check_branch
        %1080 = sbr.rel (%p1078) target = $region36
      $region35: #{_lambda_.8} parent=31 // pred_region
        %s1081 = smul.u32 64, %s14
      $region36: #{_lambda_.8} parent=31 // pred_fallthru
        _
    $region32: #{_lambda_.8} parent=5 // pred_fallthru
      _
    %p1082 = scmp.le.s32.totalorder 2, %s9
    // Predicated region
    $region37: #{_lambda_.8} parent=5 // pred_check
      %p1083 = pneg %p1082
    $region38: #{_lambda_.8} parent=5 // pred_check_branch
      %1085 = sbr.rel (%p1083) target = $region40
    $region39: #{_lambda_.8} parent=5 // pred_region
      %s1086 = ssub.s32 %s9, 2
      // Predicated region
      $region41: #{_lambda_.8} parent=39 // pred_check
        %p1087 = pneg %p106
      $region42: #{_lambda_.8} parent=39 // pred_check_branch
        %1089 = sbr.rel (%p1087) target = $region44
      $region43: #{_lambda_.8} parent=39 // pred_region
        %s1090 = smul.u32 64, %s15
        %p1091 = scmp.lt.s32.totalorder %s1090, 255
        %s1092 = scalar_select %p1091, %s1090, 255
        %s1093 = smul.addr %s1092, 8
        %s1094 = scalar_lea.vmem %s3, %s1093
      $region44: #{_lambda_.8} parent=39 // pred_fallthru
        _
    $region40: #{_lambda_.8} parent=5 // pred_fallthru
      _
  $region6: #{_lambda_.8} parent=0 // loop_footer
    %s13 = sadd.s32 1, %s9
  $region7: #{_lambda_.8} parent=0 // loop_footer_branch
    %8 = sbr.rel target = $region3
  $region8: #{_lambda_.8} parent=0 // loop_exit
    _

// kernel: _lambda_.9
$region0: #{_lambda_.9}
  #allocation0 [shape = 'u32[]', space=smem, size = 0x4, offset = 0x4, fixed_abs, tag = 'smem constant byte address 0x4 - core index']
  #allocation1 [shape = 'u32[144,128]{1,0:T(1,128)}', space=vmem, size = 0x12000, scoped, tag = 'internal scratch']
  %s0 = inlined_call_operand.vmem [shape: bf16[512,256], index: 0, kind: input, shape index: {}]
  %s1 = inlined_call_operand.vmem [shape: bf16[256,128], index: 1, kind: input, shape index: {}]
  %s2 = inlined_call_operand.vmem [shape: f32[512,128], index: 2, kind: output, shape index: {0}]
  %s3 = inlined_call_operand.vmem [shape: f32[1,2,128], index: 3, kind: output, shape index: {1}]
  %4 = xla_tuple %s2, %s3
  %s5 = sld [smem:[#allocation0]]
  $region26: #{_lambda_.9} parent=0
    _
  %s7 = ssub.s32 1, %s5
  %s8 = scalar_select 0, %s7, %s5
  // Predicated region
  $region2: #{_lambda_.9} parent=0 // pred_check
    _
  $region3: #{_lambda_.9} parent=0 // pred_check_branch
    %10 = sbr.rel (0) target = $region5
  $region4: #{_lambda_.9} parent=0 // pred_region
    _
  $region5: #{_lambda_.9} parent=0 // pred_fallthru
    _
  // Predicated region
  $region6: #{_lambda_.9} parent=0 // pred_check
    _
  $region7: #{_lambda_.9} parent=0 // pred_check_branch
    %12 = sbr.rel (0) target = $region9
  $region8: #{_lambda_.9} parent=0 // pred_region
    _
  $region9: #{_lambda_.9} parent=0 // pred_fallthru
    _
  %v14 = vld [vmem:[%s0] sm:$0xff]
  %v15 = vld [vmem:[%s0 + $0x8] sm:$0xff]
  %v16 = vld [vmem:[%s0 + $0x10] sm:$0xff]
  %v17 = vld [vmem:[%s0 + $0x18] sm:$0xff]
  %v18 = vld [vmem:[%s0 + $0x20] sm:$0xff]
  %v19 = vld [vmem:[%s0 + $0x28] sm:$0xff]
  %v20 = vld [vmem:[%s0 + $0x30] sm:$0xff]
  %v21 = vld [vmem:[%s0 + $0x38] sm:$0xff]
  %v22 = vld [vmem:[%s0 + $0x40] sm:$0xff]
  %v23 = vld [vmem:[%s0 + $0x48] sm:$0xff]
  %v24 = vld [vmem:[%s0 + $0x50] sm:$0xff]
  %v25 = vld [vmem:[%s0 + $0x58] sm:$0xff]
  %v26 = vld [vmem:[%s0 + $0x60] sm:$0xff]
  %v27 = vld [vmem:[%s0 + $0x68] sm:$0xff]
  %v28 = vld [vmem:[%s0 + $0x70] sm:$0xff]
  %v29 = vld [vmem:[%s0 + $0x78] sm:$0xff]
  %v30 = vld [vmem:[%s0 + $0x80] sm:$0xff]
  %v31 = vld [vmem:[%s0 + $0x88] sm:$0xff]
  %v32 = vld [vmem:[%s0 + $0x90] sm:$0xff]
  %v33 = vld [vmem:[%s0 + $0x98] sm:$0xff]
  %v34 = vld [vmem:[%s0 + $0xa0] sm:$0xff]
  %v35 = vld [vmem:[%s0 + $0xa8] sm:$0xff]
  %v36 = vld [vmem:[%s0 + $0xb0] sm:$0xff]
  %v37 = vld [vmem:[%s0 + $0xb8] sm:$0xff]
  %v38 = vld [vmem:[%s0 + $0xc0] sm:$0xff]
  %v39 = vld [vmem:[%s0 + $0xc8] sm:$0xff]
  %v40 = vld [vmem:[%s0 + $0xd0] sm:$0xff]
  %v41 = vld [vmem:[%s0 + $0xd8] sm:$0xff]
  %v42 = vld [vmem:[%s0 + $0xe0] sm:$0xff]
  %v43 = vld [vmem:[%s0 + $0xe8] sm:$0xff]
  %v44 = vld [vmem:[%s0 + $0xf0] sm:$0xff]
  %v45 = vld [vmem:[%s0 + $0xf8] sm:$0xff]
  %v46 = vld [vmem:[%s0 + $0x100] sm:$0xff]
  %v47 = vld [vmem:[%s0 + $0x108] sm:$0xff]
  %v48 = vld [vmem:[%s0 + $0x110] sm:$0xff]
  %v49 = vld [vmem:[%s0 + $0x118] sm:$0xff]
  %v50 = vld [vmem:[%s0 + $0x120] sm:$0xff]
  %v51 = vld [vmem:[%s0 + $0x128] sm:$0xff]
  %v52 = vld [vmem:[%s0 + $0x130] sm:$0xff]
  %v53 = vld [vmem:[%s0 + $0x138] sm:$0xff]
  %v54 = vld [vmem:[%s0 + $0x140] sm:$0xff]
  %v55 = vld [vmem:[%s0 + $0x148] sm:$0xff]
  %v56 = vld [vmem:[%s0 + $0x150] sm:$0xff]
  %v57 = vld [vmem:[%s0 + $0x158] sm:$0xff]
  %v58 = vld [vmem:[%s0 + $0x160] sm:$0xff]
  %v59 = vld [vmem:[%s0 + $0x168] sm:$0xff]
  %v60 = vld [vmem:[%s0 + $0x170] sm:$0xff]
  %v61 = vld [vmem:[%s0 + $0x178] sm:$0xff]
  %v62 = vld [vmem:[%s0 + $0x180] sm:$0xff]
  %v63 = vld [vmem:[%s0 + $0x188] sm:$0xff]
  %v64 = vld [vmem:[%s0 + $0x190] sm:$0xff]
  %v65 = vld [vmem:[%s0 + $0x198] sm:$0xff]
  %v66 = vld [vmem:[%s0 + $0x1a0] sm:$0xff]
  %v67 = vld [vmem:[%s0 + $0x1a8] sm:$0xff]
  %v68 = vld [vmem:[%s0 + $0x1b0] sm:$0xff]
  %v69 = vld [vmem:[%s0 + $0x1b8] sm:$0xff]
  %v70 = vld [vmem:[%s0 + $0x1c0] sm:$0xff]
  %v71 = vld [vmem:[%s0 + $0x1c8] sm:$0xff]
  %v72 = vld [vmem:[%s0 + $0x1d0] sm:$0xff]
  %v73 = vld [vmem:[%s0 + $0x1d8] sm:$0xff]
  %v74 = vld [vmem:[%s0 + $0x1e0] sm:$0xff]
  %v75 = vld [vmem:[%s0 + $0x1e8] sm:$0xff]
  %v76 = vld [vmem:[%s0 + $0x1f0] sm:$0xff]
  %v77 = vld [vmem:[%s0 + $0x1f8] sm:$0xff]
  %v78 = vld [vmem:[%s1] sm:$0xf]
  %v79 = vld [vmem:[%s1 + $0x4] sm:$0xf]
  %v80 = vld [vmem:[%s1 + $0x8] sm:$0xf]
  %v81 = vld [vmem:[%s1 + $0xc] sm:$0xf]
  %v82 = vld [vmem:[%s1 + $0x10] sm:$0xf]
  %v83 = vld [vmem:[%s1 + $0x14] sm:$0xf]
  %v84 = vld [vmem:[%s1 + $0x18] sm:$0xf]
  %v85 = vld [vmem:[%s1 + $0x1c] sm:$0xf]
  %v86 = vld [vmem:[%s1 + $0x20] sm:$0xf]
  %v87 = vld [vmem:[%s1 + $0x24] sm:$0xf]
  %v88 = vld [vmem:[%s1 + $0x28] sm:$0xf]
  %v89 = vld [vmem:[%s1 + $0x2c] sm:$0xf]
  %v90 = vld [vmem:[%s1 + $0x30] sm:$0xf]
  %v91 = vld [vmem:[%s1 + $0x34] sm:$0xf]
  %v92 = vld [vmem:[%s1 + $0x38] sm:$0xf]
  %v93 = vld [vmem:[%s1 + $0x3c] sm:$0xf]
  %v94 = vld [vmem:[%s1 + $0x40] sm:$0xf]
  %v95 = vld [vmem:[%s1 + $0x44] sm:$0xf]
  %v96 = vld [vmem:[%s1 + $0x48] sm:$0xf]
  %v97 = vld [vmem:[%s1 + $0x4c] sm:$0xf]
  %v98 = vld [vmem:[%s1 + $0x50] sm:$0xf]
  %v99 = vld [vmem:[%s1 + $0x54] sm:$0xf]
  %v100 = vld [vmem:[%s1 + $0x58] sm:$0xf]
  %v101 = vld [vmem:[%s1 + $0x5c] sm:$0xf]
  %v102 = vld [vmem:[%s1 + $0x60] sm:$0xf]
  %v103 = vld [vmem:[%s1 + $0x64] sm:$0xf]
  %v104 = vld [vmem:[%s1 + $0x68] sm:$0xf]
  %v105 = vld [vmem:[%s1 + $0x6c] sm:$0xf]
  %v106 = vld [vmem:[%s1 + $0x70] sm:$0xf]
  %v107 = vld [vmem:[%s1 + $0x74] sm:$0xf]
  %v108 = vld [vmem:[%s1 + $0x78] sm:$0xf]
  %v109 = vld [vmem:[%s1 + $0x7c] sm:$0xf]
  %v174 = vunpack.c.l.b16 %v14
  %v175 = vunpack.c.h.b16 %v14
  %v176 = vunpack.c.l.b16 %v15
  %v177 = vunpack.c.h.b16 %v15
  %v178 = vunpack.c.l.b16 %v16
  %v179 = vunpack.c.h.b16 %v16
  %v180 = vunpack.c.l.b16 %v17
  %v181 = vunpack.c.h.b16 %v17
  %v182 = vunpack.c.l.b16 %v18
  %v183 = vunpack.c.h.b16 %v18
  %v184 = vunpack.c.l.b16 %v19
  %v185 = vunpack.c.h.b16 %v19
  %v186 = vunpack.c.l.b16 %v20
  %v187 = vunpack.c.h.b16 %v20
  %v188 = vunpack.c.l.b16 %v21
  %v189 = vunpack.c.h.b16 %v21
  %v190 = vunpack.c.l.b16 %v22
  %v191 = vunpack.c.h.b16 %v22
  %v192 = vunpack.c.l.b16 %v23
  %v193 = vunpack.c.h.b16 %v23
  %v194 = vunpack.c.l.b16 %v24
  %v195 = vunpack.c.h.b16 %v24
  %v196 = vunpack.c.l.b16 %v25
  %v197 = vunpack.c.h.b16 %v25
  %v198 = vunpack.c.l.b16 %v26
  %v199 = vunpack.c.h.b16 %v26
  %v200 = vunpack.c.l.b16 %v27
  %v201 = vunpack.c.h.b16 %v27
  %v202 = vunpack.c.l.b16 %v28
  %v203 = vunpack.c.h.b16 %v28
  %v204 = vunpack.c.l.b16 %v29
  %v205 = vunpack.c.h.b16 %v29
  %v206 = vunpack.c.l.b16 %v30
  %v207 = vunpack.c.h.b16 %v30
  %v208 = vunpack.c.l.b16 %v31
  %v209 = vunpack.c.h.b16 %v31
  %v210 = vunpack.c.l.b16 %v32
  %v211 = vunpack.c.h.b16 %v32
  %v212 = vunpack.c.l.b16 %v33
  %v213 = vunpack.c.h.b16 %v33
  %v214 = vunpack.c.l.b16 %v34
  %v215 = vunpack.c.h.b16 %v34
  %v216 = vunpack.c.l.b16 %v35
  %v217 = vunpack.c.h.b16 %v35
  %v218 = vunpack.c.l.b16 %v36
  %v219 = vunpack.c.h.b16 %v36
  %v220 = vunpack.c.l.b16 %v37
  %v221 = vunpack.c.h.b16 %v37
  %v222 = vunpack.c.l.b16 %v38
  %v223 = vunpack.c.h.b16 %v38
  %v224 = vunpack.c.l.b16 %v39
  %v225 = vunpack.c.h.b16 %v39
  %v226 = vunpack.c.l.b16 %v40
  %v227 = vunpack.c.h.b16 %v40
  %v228 = vunpack.c.l.b16 %v41
  %v229 = vunpack.c.h.b16 %v41
  %v230 = vunpack.c.l.b16 %v42
  %v231 = vunpack.c.h.b16 %v42
  %v232 = vunpack.c.l.b16 %v43
  %v233 = vunpack.c.h.b16 %v43
  %v234 = vunpack.c.l.b16 %v44
  %v235 = vunpack.c.h.b16 %v44
  %v236 = vunpack.c.l.b16 %v45
  %v237 = vunpack.c.h.b16 %v45
  %v238 = vunpack.c.l.b16 %v46
  %v239 = vunpack.c.h.b16 %v46
  %v240 = vunpack.c.l.b16 %v47
  %v241 = vunpack.c.h.b16 %v47
  %v242 = vunpack.c.l.b16 %v48
  %v243 = vunpack.c.h.b16 %v48
  %v244 = vunpack.c.l.b16 %v49
  %v245 = vunpack.c.h.b16 %v49
  %v246 = vunpack.c.l.b16 %v50
  %v247 = vunpack.c.h.b16 %v50
  %v248 = vunpack.c.l.b16 %v51
  %v249 = vunpack.c.h.b16 %v51
  %v250 = vunpack.c.l.b16 %v52
  %v251 = vunpack.c.h.b16 %v52
  %v252 = vunpack.c.l.b16 %v53
  %v253 = vunpack.c.h.b16 %v53
  %v254 = vunpack.c.l.b16 %v54
  %v255 = vunpack.c.h.b16 %v54
  %v256 = vunpack.c.l.b16 %v55
  %v257 = vunpack.c.h.b16 %v55
  %v258 = vunpack.c.l.b16 %v56
  %v259 = vunpack.c.h.b16 %v56
  %v260 = vunpack.c.l.b16 %v57
  %v261 = vunpack.c.h.b16 %v57
  %v262 = vunpack.c.l.b16 %v58
  %v263 = vunpack.c.h.b16 %v58
  %v264 = vunpack.c.l.b16 %v59
  %v265 = vunpack.c.h.b16 %v59
  %v266 = vunpack.c.l.b16 %v60
  %v267 = vunpack.c.h.b16 %v60
  %v268 = vunpack.c.l.b16 %v61
  %v269 = vunpack.c.h.b16 %v61
  %v270 = vunpack.c.l.b16 %v62
  %v271 = vunpack.c.h.b16 %v62
  %v272 = vunpack.c.l.b16 %v63
  %v273 = vunpack.c.h.b16 %v63
  %v274 = vunpack.c.l.b16 %v64
  %v275 = vunpack.c.h.b16 %v64
  %v276 = vunpack.c.l.b16 %v65
  %v277 = vunpack.c.h.b16 %v65
  %v278 = vunpack.c.l.b16 %v66
  %v279 = vunpack.c.h.b16 %v66
  %v280 = vunpack.c.l.b16 %v67
  %v281 = vunpack.c.h.b16 %v67
  %v282 = vunpack.c.l.b16 %v68
  %v283 = vunpack.c.h.b16 %v68
  %v284 = vunpack.c.l.b16 %v69
  %v285 = vunpack.c.h.b16 %v69
  %v286 = vunpack.c.l.b16 %v70
  %v287 = vunpack.c.h.b16 %v70
  %v288 = vunpack.c.l.b16 %v71
  %v289 = vunpack.c.h.b16 %v71
  %v290 = vunpack.c.l.b16 %v72
  %v291 = vunpack.c.h.b16 %v72
  %v292 = vunpack.c.l.b16 %v73
  %v293 = vunpack.c.h.b16 %v73
  %v294 = vunpack.c.l.b16 %v74
  %v295 = vunpack.c.h.b16 %v74
  %v296 = vunpack.c.l.b16 %v75
  %v297 = vunpack.c.h.b16 %v75
  %v298 = vunpack.c.l.b16 %v76
  %v299 = vunpack.c.h.b16 %v76
  %v300 = vunpack.c.l.b16 %v77
  %v301 = vunpack.c.h.b16 %v77
  %v302 = vpack.c.b16 %v176, %v174
  %v303 = vpack.c.b16 %v177, %v175
  %v304 = vpack.c.b16 %v180, %v178
  %v305 = vpack.c.b16 %v181, %v179
  %v306 = vpack.c.b16 %v184, %v182
  %v307 = vpack.c.b16 %v185, %v183
  %v308 = vpack.c.b16 %v188, %v186
  %v309 = vpack.c.b16 %v189, %v187
  %v310 = vpack.c.b16 %v192, %v190
  %v311 = vpack.c.b16 %v193, %v191
  %v312 = vpack.c.b16 %v196, %v194
  %v313 = vpack.c.b16 %v197, %v195
  %v314 = vpack.c.b16 %v200, %v198
  %v315 = vpack.c.b16 %v201, %v199
  %v316 = vpack.c.b16 %v204, %v202
  %v317 = vpack.c.b16 %v205, %v203
  %v318 = vpack.c.b16 %v208, %v206
  %v319 = vpack.c.b16 %v209, %v207
  %v320 = vpack.c.b16 %v212, %v210
  %v321 = vpack.c.b16 %v213, %v211
  %v322 = vpack.c.b16 %v216, %v214
  %v323 = vpack.c.b16 %v217, %v215
  %v324 = vpack.c.b16 %v220, %v218
  %v325 = vpack.c.b16 %v221, %v219
  %v326 = vpack.c.b16 %v224, %v222
  %v327 = vpack.c.b16 %v225, %v223
  %v328 = vpack.c.b16 %v228, %v226
  %v329 = vpack.c.b16 %v229, %v227
  %v330 = vpack.c.b16 %v232, %v230
  %v331 = vpack.c.b16 %v233, %v231
  %v332 = vpack.c.b16 %v236, %v234
  %v333 = vpack.c.b16 %v237, %v235
  %v334 = vpack.c.b16 %v240, %v238
  %v335 = vpack.c.b16 %v241, %v239
  %v336 = vpack.c.b16 %v244, %v242
  %v337 = vpack.c.b16 %v245, %v243
  %v338 = vpack.c.b16 %v248, %v246
  %v339 = vpack.c.b16 %v249, %v247
  %v340 = vpack.c.b16 %v252, %v250
  %v341 = vpack.c.b16 %v253, %v251
  %v342 = vpack.c.b16 %v256, %v254
  %v343 = vpack.c.b16 %v257, %v255
  %v344 = vpack.c.b16 %v260, %v258
  %v345 = vpack.c.b16 %v261, %v259
  %v346 = vpack.c.b16 %v264, %v262
  %v347 = vpack.c.b16 %v265, %v263
  %v348 = vpack.c.b16 %v268, %v266
  %v349 = vpack.c.b16 %v269, %v267
  %v350 = vpack.c.b16 %v272, %v270
  %v351 = vpack.c.b16 %v273, %v271
  %v352 = vpack.c.b16 %v276, %v274
  %v353 = vpack.c.b16 %v277, %v275
  %v354 = vpack.c.b16 %v280, %v278
  %v355 = vpack.c.b16 %v281, %v279
  %v356 = vpack.c.b16 %v284, %v282
  %v357 = vpack.c.b16 %v285, %v283
  %v358 = vpack.c.b16 %v288, %v286
  %v359 = vpack.c.b16 %v289, %v287
  %v360 = vpack.c.b16 %v292, %v290
  %v361 = vpack.c.b16 %v293, %v291
  %v362 = vpack.c.b16 %v296, %v294
  %v363 = vpack.c.b16 %v297, %v295
  %v364 = vpack.c.b16 %v300, %v298
  %v365 = vpack.c.b16 %v301, %v299
  %v462 = vunpack.c.l.b16 %v78
  %v463 = vunpack.c.l.b16 %v79
  %v464 = vunpack.c.l.b16 %v80
  %v465 = vunpack.c.l.b16 %v81
  %v466 = vunpack.c.l.b16 %v82
  %v467 = vunpack.c.l.b16 %v83
  %v468 = vunpack.c.l.b16 %v84
  %v469 = vunpack.c.l.b16 %v85
  %v470 = vunpack.c.l.b16 %v86
  %v471 = vunpack.c.l.b16 %v87
  %v472 = vunpack.c.l.b16 %v88
  %v473 = vunpack.c.l.b16 %v89
  %v474 = vunpack.c.l.b16 %v90
  %v475 = vunpack.c.l.b16 %v91
  %v476 = vunpack.c.l.b16 %v92
  %v477 = vunpack.c.l.b16 %v93
  %v478 = vunpack.c.l.b16 %v94
  %v479 = vunpack.c.l.b16 %v95
  %v480 = vunpack.c.l.b16 %v96
  %v481 = vunpack.c.l.b16 %v97
  %v482 = vunpack.c.l.b16 %v98
  %v483 = vunpack.c.l.b16 %v99
  %v484 = vunpack.c.l.b16 %v100
  %v485 = vunpack.c.l.b16 %v101
  %v486 = vunpack.c.l.b16 %v102
  %v487 = vunpack.c.l.b16 %v103
  %v488 = vunpack.c.l.b16 %v104
  %v489 = vunpack.c.l.b16 %v105
  %v490 = vunpack.c.l.b16 %v106
  %v491 = vunpack.c.l.b16 %v107
  %v492 = vunpack.c.l.b16 %v108
  %v493 = vunpack.c.l.b16 %v109
  %v494 = vpack.c.b16 %v463, %v462
  %v495 = vpack.c.b16 %v465, %v464
  %v496 = vpack.c.b16 %v467, %v466
  %v497 = vpack.c.b16 %v469, %v468
  %v498 = vpack.c.b16 %v471, %v470
  %v499 = vpack.c.b16 %v473, %v472
  %v500 = vpack.c.b16 %v475, %v474
  %v501 = vpack.c.b16 %v477, %v476
  %v502 = vpack.c.b16 %v479, %v478
  %v503 = vpack.c.b16 %v481, %v480
  %v504 = vpack.c.b16 %v483, %v482
  %v505 = vpack.c.b16 %v485, %v484
  %v506 = vpack.c.b16 %v487, %v486
  %v507 = vpack.c.b16 %v489, %v488
  %v508 = vpack.c.b16 %v491, %v490
  %v509 = vpack.c.b16 %v493, %v492
  %526 = vmatprep.subr.bf16.mxu0 0
  %527 = vmatpush1.bf16.msra.mxu0 %v494
  %528 = vmatprep.subr.bf16.mxu0 0
  %529 = vmatpush1.bf16.msra.mxu0 %v495
  %530 = vmatprep.subr.bf16.mxu0 0
  %531 = vmatpush1.bf16.msra.mxu0 %v496
  %532 = vmatprep.subr.bf16.mxu0 0
  %533 = vmatpush1.bf16.msra.mxu0 %v497
  %534 = vmatprep.subr.bf16.mxu0 0
  %535 = vmatpush1.bf16.msra.mxu0 %v498
  %536 = vmatprep.subr.bf16.mxu0 0
  %537 = vmatpush1.bf16.msra.mxu0 %v499
  %538 = vmatprep.subr.bf16.mxu0 0
  %539 = vmatpush1.bf16.msra.mxu0 %v500
  %540 = vmatprep.subr.bf16.mxu0 0
  %541 = vmatpush1.bf16.msra.mxu0 %v501
  %542 = vmatprep.subr.bf16.mxu0 0
  %543 = vmatpush1.bf16.msra.mxu0 %v502
  %544 = vmatprep.subr.bf16.mxu0 0
  %545 = vmatpush1.bf16.msra.mxu0 %v503
  %546 = vmatprep.subr.bf16.mxu0 0
  %547 = vmatpush1.bf16.msra.mxu0 %v504
  %548 = vmatprep.subr.bf16.mxu0 0
  %549 = vmatpush1.bf16.msra.mxu0 %v505
  %550 = vmatprep.subr.bf16.mxu0 0
  %551 = vmatpush1.bf16.msra.mxu0 %v506
  %552 = vmatprep.subr.bf16.mxu0 0
  %553 = vmatpush1.bf16.msra.mxu0 %v507
  %554 = vmatprep.subr.bf16.mxu0 0
  %555 = vmatpush1.bf16.msra.mxu0 %v508
  %556 = vmatprep.subr.bf16.mxu0 0
  %557 = vmatpush1.bf16.msra.mxu0 %v509
  %558 = vmatprep.mubr.bf16.mxu0 %v303
  %559 = vmatmul.mubr.bf16.gmra.mrb[0].mxu0 %v302
  %v560 = vpop.f32.mrb[0].mxu0
  %v561 = vadd.f32 0.0, %v560
  %v562 = vpop.f32.mrb[0].mxu0
  %v563 = vpop.f32.mrb[0].mxu0
  %v564 = vadd.f32 0.0, %v563
  %v565 = vpop.f32.mrb[0].mxu0
  %566 = vmatprep.mubr.bf16.mxu0 %v305
  %567 = vmatmul.mubr.bf16.gmra.mrb[0].mxu0 %v304
  %v568 = vpop.f32.mrb[0].mxu0
  %v569 = vadd.f32 0.0, %v568
  %v570 = vpop.f32.mrb[0].mxu0
  %v571 = vpop.f32.mrb[0].mxu0
  %v572 = vadd.f32 0.0, %v571
  %v573 = vpop.f32.mrb[0].mxu0
  %574 = vmatprep.mubr.bf16.mxu0 %v307
  %575 = vmatmul.mubr.bf16.gmra.mrb[0].mxu0 %v306
  %v576 = vpop.f32.mrb[0].mxu0
  %v577 = vadd.f32 0.0, %v576
  %v578 = vpop.f32.mrb[0].mxu0
  %v579 = vpop.f32.mrb[0].mxu0
  %v580 = vadd.f32 0.0, %v579
  %v581 = vpop.f32.mrb[0].mxu0
  %582 = vmatprep.mubr.bf16.mxu0 %v309
  %583 = vmatmul.mubr.bf16.gmra.mrb[0].mxu0 %v308
  %v584 = vpop.f32.mrb[0].mxu0
  %v585 = vadd.f32 0.0, %v584
  %v586 = vpop.f32.mrb[0].mxu0
  %v587 = vpop.f32.mrb[0].mxu0
  %v588 = vadd.f32 0.0, %v587
  %v589 = vpop.f32.mrb[0].mxu0
  %590 = vmatprep.mubr.bf16.mxu0 %v311
  %591 = vmatmul.mubr.bf16.gmra.mrb[0].mxu0 %v310
  %v592 = vpop.f32.mrb[0].mxu0
  %v593 = vadd.f32 0.0, %v592
  %v594 = vpop.f32.mrb[0].mxu0
  %v595 = vpop.f32.mrb[0].mxu0
  %v596 = vadd.f32 0.0, %v595
  %v597 = vpop.f32.mrb[0].mxu0
  %598 = vmatprep.mubr.bf16.mxu0 %v313
  %599 = vmatmul.mubr.bf16.gmra.mrb[0].mxu0 %v312
  %v600 = vpop.f32.mrb[0].mxu0
  %v601 = vadd.f32 0.0, %v600
  %v602 = vpop.f32.mrb[0].mxu0
  %v603 = vpop.f32.mrb[0].mxu0
  %v604 = vadd.f32 0.0, %v603
  %v605 = vpop.f32.mrb[0].mxu0
  %606 = vmatprep.mubr.bf16.mxu0 %v315
  %607 = vmatmul.mubr.bf16.gmra.mrb[0].mxu0 %v314
  %v608 = vpop.f32.mrb[0].mxu0
  %v609 = vadd.f32 0.0, %v608
  %v610 = vpop.f32.mrb[0].mxu0
  %v611 = vpop.f32.mrb[0].mxu0
  %v612 = vadd.f32 0.0, %v611
  %v613 = vpop.f32.mrb[0].mxu0
  %614 = vmatprep.mubr.bf16.mxu0 %v317
  %615 = vmatmul.mubr.bf16.gmra.mrb[0].mxu0 %v316
  %v616 = vpop.f32.mrb[0].mxu0
  %v617 = vadd.f32 0.0, %v616
  %v618 = vpop.f32.mrb[0].mxu0
  %v619 = vpop.f32.mrb[0].mxu0
  %v620 = vadd.f32 0.0, %v619
  %v621 = vpop.f32.mrb[0].mxu0
  %622 = vmatprep.mubr.bf16.mxu0 %v319
  %623 = vmatmul.mubr.bf16.gmra.mrb[0].mxu0 %v318
  %v624 = vpop.f32.mrb[0].mxu0
  %v625 = vadd.f32 0.0, %v624
  %v626 = vpop.f32.mrb[0].mxu0
  %v627 = vpop.f32.mrb[0].mxu0
  %v628 = vadd.f32 0.0, %v627
  %v629 = vpop.f32.mrb[0].mxu0
  %630 = vmatprep.mubr.bf16.mxu0 %v321
  %631 = vmatmul.mubr.bf16.gmra.mrb[0].mxu0 %v320
  %v632 = vpop.f32.mrb[0].mxu0
  %v633 = vadd.f32 0.0, %v632
  %v634 = vpop.f32.mrb[0].mxu0
  %v635 = vpop.f32.mrb[0].mxu0
  %v636 = vadd.f32 0.0, %v635
  %v637 = vpop.f32.mrb[0].mxu0
  %638 = vmatprep.mubr.bf16.mxu0 %v323
  %639 = vmatmul.mubr.bf16.gmra.mrb[0].mxu0 %v322
  %v640 = vpop.f32.mrb[0].mxu0
  %v641 = vadd.f32 0.0, %v640
  %v642 = vpop.f32.mrb[0].mxu0
  %v643 = vpop.f32.mrb[0].mxu0
  %v644 = vadd.f32 0.0, %v643
  %v645 = vpop.f32.mrb[0].mxu0
  %646 = vmatprep.mubr.bf16.mxu0 %v325
  %647 = vmatmul.mubr.bf16.gmra.mrb[0].mxu0 %v324
  %v648 = vpop.f32.mrb[0].mxu0
  %v649 = vadd.f32 0.0, %v648
  %v650 = vpop.f32.mrb[0].mxu0
  %v651 = vpop.f32.mrb[0].mxu0
  %v652 = vadd.f32 0.0, %v651
  %v653 = vpop.f32.mrb[0].mxu0
  %654 = vmatprep.mubr.bf16.mxu0 %v327
  %655 = vmatmul.mubr.bf16.gmra.mrb[0].mxu0 %v326
  %v656 = vpop.f32.mrb[0].mxu0
  %v657 = vadd.f32 0.0, %v656
  %v658 = vpop.f32.mrb[0].mxu0
  %v659 = vpop.f32.mrb[0].mxu0
  %v660 = vadd.f32 0.0, %v659
  %v661 = vpop.f32.mrb[0].mxu0
  %662 = vmatprep.mubr.bf16.mxu0 %v329
  %663 = vmatmul.mubr.bf16.gmra.mrb[0].mxu0 %v328
  %v664 = vpop.f32.mrb[0].mxu0
  %v665 = vadd.f32 0.0, %v664
  %v666 = vpop.f32.mrb[0].mxu0
  %v667 = vpop.f32.mrb[0].mxu0
  %v668 = vadd.f32 0.0, %v667
  %v669 = vpop.f32.mrb[0].mxu0
  %670 = vmatprep.mubr.bf16.mxu0 %v331
  %671 = vmatmul.mubr.bf16.gmra.mrb[0].mxu0 %v330
  %v672 = vpop.f32.mrb[0].mxu0
  %v673 = vadd.f32 0.0, %v672
  %v674 = vpop.f32.mrb[0].mxu0
  %v675 = vpop.f32.mrb[0].mxu0
  %v676 = vadd.f32 0.0, %v675
  %v677 = vpop.f32.mrb[0].mxu0
  %678 = vmatprep.mubr.bf16.mxu0 %v333
  %679 = vmatmul.mubr.bf16.gmra.mrb[0].mxu0 %v332
  %v680 = vpop.f32.mrb[0].mxu0
  %v681 = vadd.f32 0.0, %v680
  %v682 = vpop.f32.mrb[0].mxu0
  %v683 = vpop.f32.mrb[0].mxu0
  %v684 = vadd.f32 0.0, %v683
  %v685 = vpop.f32.mrb[0].mxu0
  %686 = vmatprep.mubr.bf16.mxu0 %v335
  %687 = vmatmul.mubr.bf16.gmra.mrb[0].mxu0 %v334
  %v688 = vpop.f32.mrb[0].mxu0
  %v689 = vadd.f32 0.0, %v688
  %v690 = vpop.f32.mrb[0].mxu0
  %v691 = vpop.f32.mrb[0].mxu0
  %v692 = vadd.f32 0.0, %v691
  %v693 = vpop.f32.mrb[0].mxu0
  %694 = vmatprep.mubr.bf16.mxu0 %v337
  %695 = vmatmul.mubr.bf16.gmra.mrb[0].mxu0 %v336
  %v696 = vpop.f32.mrb[0].mxu0
  %v697 = vadd.f32 0.0, %v696
  %v698 = vpop.f32.mrb[0].mxu0
  %v699 = vpop.f32.mrb[0].mxu0
  %v700 = vadd.f32 0.0, %v699
  %v701 = vpop.f32.mrb[0].mxu0
  %702 = vmatprep.mubr.bf16.mxu0 %v339
  %703 = vmatmul.mubr.bf16.gmra.mrb[0].mxu0 %v338
  %v704 = vpop.f32.mrb[0].mxu0
  %v705 = vadd.f32 0.0, %v704
  %v706 = vpop.f32.mrb[0].mxu0
  %v707 = vpop.f32.mrb[0].mxu0
  %v708 = vadd.f32 0.0, %v707
  %v709 = vpop.f32.mrb[0].mxu0
  %710 = vmatprep.mubr.bf16.mxu0 %v341
  %711 = vmatmul.mubr.bf16.gmra.mrb[0].mxu0 %v340
  %v712 = vpop.f32.mrb[0].mxu0
  %v713 = vadd.f32 0.0, %v712
  %v714 = vpop.f32.mrb[0].mxu0
  %v715 = vpop.f32.mrb[0].mxu0
  %v716 = vadd.f32 0.0, %v715
  %v717 = vpop.f32.mrb[0].mxu0
  %718 = vmatprep.mubr.bf16.mxu0 %v343
  %719 = vmatmul.mubr.bf16.gmra.mrb[0].mxu0 %v342
  %v720 = vpop.f32.mrb[0].mxu0
  %v721 = vadd.f32 0.0, %v720
  %v722 = vpop.f32.mrb[0].mxu0
  %v723 = vpop.f32.mrb[0].mxu0
  %v724 = vadd.f32 0.0, %v723
  %v725 = vpop.f32.mrb[0].mxu0
  %726 = vmatprep.mubr.bf16.mxu0 %v345
  %727 = vmatmul.mubr.bf16.gmra.mrb[0].mxu0 %v344
  %v728 = vpop.f32.mrb[0].mxu0
  %v729 = vadd.f32 0.0, %v728
  %v730 = vpop.f32.mrb[0].mxu0
  %v731 = vpop.f32.mrb[0].mxu0
  %v732 = vadd.f32 0.0, %v731
  %v733 = vpop.f32.mrb[0].mxu0
  %734 = vmatprep.mubr.bf16.mxu0 %v347
  %735 = vmatmul.mubr.bf16.gmra.mrb[0].mxu0 %v346
  %v736 = vpop.f32.mrb[0].mxu0
  %v737 = vadd.f32 0.0, %v736
  %v738 = vpop.f32.mrb[0].mxu0
  %v739 = vpop.f32.mrb[0].mxu0
  %v740 = vadd.f32 0.0, %v739
  %v741 = vpop.f32.mrb[0].mxu0
  %742 = vmatprep.mubr.bf16.mxu0 %v349
  %743 = vmatmul.mubr.bf16.gmra.mrb[0].mxu0 %v348
  %v744 = vpop.f32.mrb[0].mxu0
  %v745 = vadd.f32 0.0, %v744
  %v746 = vpop.f32.mrb[0].mxu0
  %v747 = vpop.f32.mrb[0].mxu0
  %v748 = vadd.f32 0.0, %v747
  %v749 = vpop.f32.mrb[0].mxu0
  %750 = vmatprep.mubr.bf16.mxu0 %v351
  %751 = vmatmul.mubr.bf16.gmra.mrb[0].mxu0 %v350
  %v752 = vpop.f32.mrb[0].mxu0
  %v753 = vadd.f32 0.0, %v752
  %v754 = vpop.f32.mrb[0].mxu0
  %v755 = vpop.f32.mrb[0].mxu0
  %v756 = vadd.f32 0.0, %v755
  %v757 = vpop.f32.mrb[0].mxu0
  %758 = vmatprep.mubr.bf16.mxu0 %v353
  %759 = vmatmul.mubr.bf16.gmra.mrb[0].mxu0 %v352
  %v760 = vpop.f32.mrb[0].mxu0
  %v761 = vadd.f32 0.0, %v760
  %v762 = vpop.f32.mrb[0].mxu0
  %v763 = vpop.f32.mrb[0].mxu0
  %v764 = vadd.f32 0.0, %v763
  %v765 = vpop.f32.mrb[0].mxu0
  %766 = vmatprep.mubr.bf16.mxu0 %v355
  %767 = vmatmul.mubr.bf16.gmra.mrb[0].mxu0 %v354
  %v768 = vpop.f32.mrb[0].mxu0
  %v769 = vadd.f32 0.0, %v768
  %v770 = vpop.f32.mrb[0].mxu0
  %v771 = vpop.f32.mrb[0].mxu0
  %v772 = vadd.f32 0.0, %v771
  %v773 = vpop.f32.mrb[0].mxu0
  %774 = vmatprep.mubr.bf16.mxu0 %v357
  %775 = vmatmul.mubr.bf16.gmra.mrb[0].mxu0 %v356
  %v776 = vpop.f32.mrb[0].mxu0
  %v777 = vadd.f32 0.0, %v776
  %v778 = vpop.f32.mrb[0].mxu0
  %v779 = vpop.f32.mrb[0].mxu0
  %v780 = vadd.f32 0.0, %v779
  %v781 = vpop.f32.mrb[0].mxu0
  %782 = vmatprep.mubr.bf16.mxu0 %v359
  %783 = vmatmul.mubr.bf16.gmra.mrb[0].mxu0 %v358
  %v784 = vpop.f32.mrb[0].mxu0
  %v785 = vadd.f32 0.0, %v784
  %v786 = vpop.f32.mrb[0].mxu0
  %v787 = vpop.f32.mrb[0].mxu0
  %v788 = vadd.f32 0.0, %v787
  %v789 = vpop.f32.mrb[0].mxu0
  %790 = vmatprep.mubr.bf16.mxu0 %v361
  %791 = vmatmul.mubr.bf16.gmra.mrb[0].mxu0 %v360
  %v792 = vpop.f32.mrb[0].mxu0
  %v793 = vadd.f32 0.0, %v792
  %v794 = vpop.f32.mrb[0].mxu0
  %v795 = vpop.f32.mrb[0].mxu0
  %v796 = vadd.f32 0.0, %v795
  %v797 = vpop.f32.mrb[0].mxu0
  %798 = vmatprep.mubr.bf16.mxu0 %v363
  %799 = vmatmul.mubr.bf16.gmra.mrb[0].mxu0 %v362
  %v800 = vpop.f32.mrb[0].mxu0
  %v801 = vadd.f32 0.0, %v800
  %v802 = vpop.f32.mrb[0].mxu0
  %v803 = vpop.f32.mrb[0].mxu0
  %v804 = vadd.f32 0.0, %v803
  %v805 = vpop.f32.mrb[0].mxu0
  %806 = vmatprep.mubr.bf16.mxu0 %v365
  %807 = vmatmul.mubr.bf16.gmra.mrb[0].mxu0 %v364
  %v808 = vpop.f32.mrb[0].mxu0
  %v809 = vadd.f32 0.0, %v808
  %v810 = vpop.f32.mrb[0].mxu0
  %v811 = vpop.f32.mrb[0].mxu0
  %v812 = vadd.f32 0.0, %v811
  %v813 = vpop.f32.mrb[0].mxu0
  %814 = vdwg.mxu0
  %815 = vst [vmem:[%s2] sm:$0xff] %v561
  %816 = vst [vmem:[%s2 + $0x8] sm:$0xff] %v564
  %817 = vst [vmem:[%s2 + $0x10] sm:$0xff] %v569
  %818 = vst [vmem:[%s2 + $0x18] sm:$0xff] %v572
  %819 = vst [vmem:[%s2 + $0x20] sm:$0xff] %v577
  %820 = vst [vmem:[%s2 + $0x28] sm:$0xff] %v580
  %821 = vst [vmem:[%s2 + $0x30] sm:$0xff] %v585
  %822 = vst [vmem:[%s2 + $0x38] sm:$0xff] %v588
  %823 = vst [vmem:[%s2 + $0x40] sm:$0xff] %v593
  %824 = vst [vmem:[%s2 + $0x48] sm:$0xff] %v596
  %825 = vst [vmem:[%s2 + $0x50] sm:$0xff] %v601
  %826 = vst [vmem:[%s2 + $0x58] sm:$0xff] %v604
  %827 = vst [vmem:[%s2 + $0x60] sm:$0xff] %v609
  %828 = vst [vmem:[%s2 + $0x68] sm:$0xff] %v612
  %829 = vst [vmem:[%s2 + $0x70] sm:$0xff] %v617
  %830 = vst [vmem:[%s2 + $0x78] sm:$0xff] %v620
  %831 = vst [vmem:[%s2 + $0x80] sm:$0xff] %v625
  %832 = vst [vmem:[%s2 + $0x88] sm:$0xff] %v628
  %833 = vst [vmem:[%s2 + $0x90] sm:$0xff] %v633
  %834 = vst [vmem:[%s2 + $0x98] sm:$0xff] %v636
  %835 = vst [vmem:[%s2 + $0xa0] sm:$0xff] %v641
  %836 = vst [vmem:[%s2 + $0xa8] sm:$0xff] %v644
  %837 = vst [vmem:[%s2 + $0xb0] sm:$0xff] %v649
  %838 = vst [vmem:[%s2 + $0xb8] sm:$0xff] %v652
  %839 = vst [vmem:[%s2 + $0xc0] sm:$0xff] %v657
  %840 = vst [vmem:[%s2 + $0xc8] sm:$0xff] %v660
  %841 = vst [vmem:[%s2 + $0xd0] sm:$0xff] %v665
  %842 = vst [vmem:[%s2 + $0xd8] sm:$0xff] %v668
  %843 = vst [vmem:[%s2 + $0xe0] sm:$0xff] %v673
  %844 = vst [vmem:[%s2 + $0xe8] sm:$0xff] %v676
  %845 = vst [vmem:[%s2 + $0xf0] sm:$0xff] %v681
  %846 = vst [vmem:[%s2 + $0xf8] sm:$0xff] %v684
  %847 = vst [vmem:[%s2 + $0x100] sm:$0xff] %v689
  %848 = vst [vmem:[%s2 + $0x108] sm:$0xff] %v692
  %849 = vst [vmem:[%s2 + $0x110] sm:$0xff] %v697
  %850 = vst [vmem:[%s2 + $0x118] sm:$0xff] %v700
  %851 = vst [vmem:[%s2 + $0x120] sm:$0xff] %v705
  %852 = vst [vmem:[%s2 + $0x128] sm:$0xff] %v708
  %853 = vst [vmem:[%s2 + $0x130] sm:$0xff] %v713
  %854 = vst [vmem:[%s2 + $0x138] sm:$0xff] %v716
  %855 = vst [vmem:[%s2 + $0x140] sm:$0xff] %v721
  %856 = vst [vmem:[%s2 + $0x148] sm:$0xff] %v724
  %857 = vst [vmem:[%s2 + $0x150] sm:$0xff] %v729
  %858 = vst [vmem:[%s2 + $0x158] sm:$0xff] %v732
  %859 = vst [vmem:[%s2 + $0x160] sm:$0xff] %v737
  %860 = vst [vmem:[%s2 + $0x168] sm:$0xff] %v740
  %861 = vst [vmem:[%s2 + $0x170] sm:$0xff] %v745
  %862 = vst [vmem:[%s2 + $0x178] sm:$0xff] %v748
  %863 = vst [vmem:[%s2 + $0x180] sm:$0xff] %v753
  %864 = vst [vmem:[%s2 + $0x188] sm:$0xff] %v756
  %865 = vst [vmem:[%s2 + $0x190] sm:$0xff] %v761
  %866 = vst [vmem:[%s2 + $0x198] sm:$0xff] %v764
  %867 = vst [vmem:[%s2 + $0x1a0] sm:$0xff] %v769
  %868 = vst [vmem:[%s2 + $0x1a8] sm:$0xff] %v772
  %869 = vst [vmem:[%s2 + $0x1b0] sm:$0xff] %v777
  %870 = vst [vmem:[%s2 + $0x1b8] sm:$0xff] %v780
  %871 = vst [vmem:[%s2 + $0x1c0] sm:$0xff] %v785
  %872 = vst [vmem:[%s2 + $0x1c8] sm:$0xff] %v788
  %873 = vst [vmem:[%s2 + $0x1d0] sm:$0xff] %v793
  %874 = vst [vmem:[%s2 + $0x1d8] sm:$0xff] %v796
  %875 = vst [vmem:[%s2 + $0x1e0] sm:$0xff] %v801
  %876 = vst [vmem:[%s2 + $0x1e8] sm:$0xff] %v804
  %877 = vst [vmem:[%s2 + $0x1f0] sm:$0xff] %v809
  %878 = vst [vmem:[%s2 + $0x1f8] sm:$0xff] %v812
  %879 = vmatprep.subr.mxu0 0.0
  %880 = vmatpush1.msra.mxu0 %v561
  %881 = vmatprep.subr.mxu0 0.0
  %882 = vmatpush1.msra.mxu0 %v564
  %883 = vmatprep.subr.mxu0 0.0
  %884 = vmatpush1.msra.mxu0 %v569
  %885 = vmatprep.subr.mxu0 0.0
  %886 = vmatpush1.msra.mxu0 %v572
  %887 = vmatprep.subr.mxu0 0.0
  %888 = vmatpush1.msra.mxu0 %v577
  %889 = vmatprep.subr.mxu0 0.0
  %890 = vmatpush1.msra.mxu0 %v580
  %891 = vmatprep.subr.mxu0 0.0
  %892 = vmatpush1.msra.mxu0 %v585
  %893 = vmatprep.subr.mxu0 0.0
  %894 = vmatpush1.msra.mxu0 %v588
  %895 = vmatprep.subr.mxu0 0.0
  %896 = vmatpush1.msra.mxu0 %v593
  %897 = vmatprep.subr.mxu0 0.0
  %898 = vmatpush1.msra.mxu0 %v596
  %899 = vmatprep.subr.mxu0 0.0
  %900 = vmatpush1.msra.mxu0 %v601
  %901 = vmatprep.subr.mxu0 0.0
  %902 = vmatpush1.msra.mxu0 %v604
  %903 = vmatprep.subr.mxu0 0.0
  %904 = vmatpush1.msra.mxu0 %v609
  %905 = vmatprep.subr.mxu0 0.0
  %906 = vmatpush1.msra.mxu0 %v612
  %907 = vmatprep.subr.mxu0 0.0
  %908 = vmatpush1.msra.mxu0 %v617
  %909 = vmatprep.subr.mxu0 0.0
  %910 = vmatpush1.msra.mxu0 %v620
  %911 = vmatprep.subr.mxu0 0.0
  %912 = vmatpush1.msra.mxu0 %v625
  %913 = vmatprep.subr.mxu0 0.0
  %914 = vmatpush1.msra.mxu0 %v628
  %915 = vmatprep.subr.mxu0 0.0
  %916 = vmatpush1.msra.mxu0 %v633
  %917 = vmatprep.subr.mxu0 0.0
  %918 = vmatpush1.msra.mxu0 %v636
  %919 = vmatprep.subr.mxu0 0.0
  %920 = vmatpush1.msra.mxu0 %v641
  %921 = vmatprep.subr.mxu0 0.0
  %922 = vmatpush1.msra.mxu0 %v644
  %923 = vmatprep.subr.mxu0 0.0
  %924 = vmatpush1.msra.mxu0 %v649
  %925 = vmatprep.subr.mxu0 0.0
  %926 = vmatpush1.msra.mxu0 %v652
  %927 = vmatprep.subr.mxu0 0.0
  %928 = vmatpush1.msra.mxu0 %v657
  %929 = vmatprep.subr.mxu0 0.0
  %930 = vmatpush1.msra.mxu0 %v660
  %931 = vmatprep.subr.mxu0 0.0
  %932 = vmatpush1.msra.mxu0 %v665
  %933 = vmatprep.subr.mxu0 0.0
  %934 = vmatpush1.msra.mxu0 %v668
  %935 = vmatprep.subr.mxu0 0.0
  %936 = vmatpush1.msra.mxu0 %v673
  %937 = vmatprep.subr.mxu0 0.0
  %938 = vmatpush1.msra.mxu0 %v676
  %939 = vmatprep.subr.mxu0 0.0
  %940 = vmatpush1.msra.mxu0 %v681
  %941 = vmatprep.subr.mxu0 0.0
  %942 = vmatpush1.msra.mxu0 %v684
  %943 = vmatprep.mubr.f32.mxu0 1.0
  %944 = vmatmul.mubr.f32.gmra.mrb[0].mxu0 1.0
  %v945 = vpop.f32.mrb[0].mxu0
  %v946 = vadd.f32 0.0, %v945
  %v947 = vpop.f32.mrb[0].mxu0
  %948 = vdwg.mxu0
  %949 = vmatprep.subr.mxu0 0.0
  %950 = vmatpush1.msra.mxu0 %v689
  %951 = vmatprep.subr.mxu0 0.0
  %952 = vmatpush1.msra.mxu0 %v692
  %953 = vmatprep.subr.mxu0 0.0
  %954 = vmatpush1.msra.mxu0 %v697
  %955 = vmatprep.subr.mxu0 0.0
  %956 = vmatpush1.msra.mxu0 %v700
  %957 = vmatprep.subr.mxu0 0.0
  %958 = vmatpush1.msra.mxu0 %v705
  %959 = vmatprep.subr.mxu0 0.0
  %960 = vmatpush1.msra.mxu0 %v708
  %961 = vmatprep.subr.mxu0 0.0
  %962 = vmatpush1.msra.mxu0 %v713
  %963 = vmatprep.subr.mxu0 0.0
  %964 = vmatpush1.msra.mxu0 %v716
  %965 = vmatprep.subr.mxu0 0.0
  %966 = vmatpush1.msra.mxu0 %v721
  %967 = vmatprep.subr.mxu0 0.0
  %968 = vmatpush1.msra.mxu0 %v724
  %969 = vmatprep.subr.mxu0 0.0
  %970 = vmatpush1.msra.mxu0 %v729
  %971 = vmatprep.subr.mxu0 0.0
  %972 = vmatpush1.msra.mxu0 %v732
  %973 = vmatprep.subr.mxu0 0.0
  %974 = vmatpush1.msra.mxu0 %v737
  %975 = vmatprep.subr.mxu0 0.0
  %976 = vmatpush1.msra.mxu0 %v740
  %977 = vmatprep.subr.mxu0 0.0
  %978 = vmatpush1.msra.mxu0 %v745
  %979 = vmatprep.subr.mxu0 0.0
  %980 = vmatpush1.msra.mxu0 %v748
  %981 = vmatprep.subr.mxu0 0.0
  %982 = vmatpush1.msra.mxu0 %v753
  %983 = vmatprep.subr.mxu0 0.0
  %984 = vmatpush1.msra.mxu0 %v756
  %985 = vmatprep.subr.mxu0 0.0
  %986 = vmatpush1.msra.mxu0 %v761
  %987 = vmatprep.subr.mxu0 0.0
  %988 = vmatpush1.msra.mxu0 %v764
  %989 = vmatprep.subr.mxu0 0.0
  %990 = vmatpush1.msra.mxu0 %v769
  %991 = vmatprep.subr.mxu0 0.0
  %992 = vmatpush1.msra.mxu0 %v772
  %993 = vmatprep.subr.mxu0 0.0
  %994 = vmatpush1.msra.mxu0 %v777
  %995 = vmatprep.subr.mxu0 0.0
  %996 = vmatpush1.msra.mxu0 %v780
  %997 = vmatprep.subr.mxu0 0.0
  %998 = vmatpush1.msra.mxu0 %v785
  %999 = vmatprep.subr.mxu0 0.0
  %1000 = vmatpush1.msra.mxu0 %v788
  %1001 = vmatprep.subr.mxu0 0.0
  %1002 = vmatpush1.msra.mxu0 %v793
  %1003 = vmatprep.subr.mxu0 0.0
  %1004 = vmatpush1.msra.mxu0 %v796
  %1005 = vmatprep.subr.mxu0 0.0
  %1006 = vmatpush1.msra.mxu0 %v801
  %1007 = vmatprep.subr.mxu0 0.0
  %1008 = vmatpush1.msra.mxu0 %v804
  %1009 = vmatprep.subr.mxu0 0.0
  %1010 = vmatpush1.msra.mxu0 %v809
  %1011 = vmatprep.subr.mxu0 0.0
  %1012 = vmatpush1.msra.mxu0 %v812
  %1013 = vmatprep.mubr.f32.mxu0 1.0
  %1014 = vmatmul.mubr.f32.gmra.mrb[0].mxu0 1.0
  %v1015 = vpop.f32.mrb[0].mxu0
  %v1016 = vadd.f32 %v946, %v1015
  %v1017 = vpop.f32.mrb[0].mxu0
  %1018 = vdwg.mxu0
  %v1019 = vmul.f32 %v561, %v561
  %v1020 = vmul.f32 %v564, %v564
  %v1021 = vmul.f32 %v569, %v569
  %v1022 = vmul.f32 %v572, %v572
  %v1023 = vmul.f32 %v577, %v577
  %v1024 = vmul.f32 %v580, %v580
  %v1025 = vmul.f32 %v585, %v585
  %v1026 = vmul.f32 %v588, %v588
  %v1027 = vmul.f32 %v593, %v593
  %v1028 = vmul.f32 %v596, %v596
  %v1029 = vmul.f32 %v601, %v601
  %v1030 = vmul.f32 %v604, %v604
  %v1031 = vmul.f32 %v609, %v609
  %v1032 = vmul.f32 %v612, %v612
  %v1033 = vmul.f32 %v617, %v617
  %v1034 = vmul.f32 %v620, %v620
  %v1035 = vmul.f32 %v625, %v625
  %v1036 = vmul.f32 %v628, %v628
  %v1037 = vmul.f32 %v633, %v633
  %v1038 = vmul.f32 %v636, %v636
  %v1039 = vmul.f32 %v641, %v641
  %v1040 = vmul.f32 %v644, %v644
  %v1041 = vmul.f32 %v649, %v649
  %v1042 = vmul.f32 %v652, %v652
  %v1043 = vmul.f32 %v657, %v657
  %v1044 = vmul.f32 %v660, %v660
  %v1045 = vmul.f32 %v665, %v665
  %v1046 = vmul.f32 %v668, %v668
  %v1047 = vmul.f32 %v673, %v673
  %v1048 = vmul.f32 %v676, %v676
  %v1049 = vmul.f32 %v681, %v681
  %v1050 = vmul.f32 %v684, %v684
  %v1051 = vmul.f32 %v689, %v689
  %v1052 = vmul.f32 %v692, %v692
  %v1053 = vmul.f32 %v697, %v697
  %v1054 = vmul.f32 %v700, %v700
  %v1055 = vmul.f32 %v705, %v705
  %v1056 = vmul.f32 %v708, %v708
  %v1057 = vmul.f32 %v713, %v713
  %v1058 = vmul.f32 %v716, %v716
  %v1059 = vmul.f32 %v721, %v721
  %v1060 = vmul.f32 %v724, %v724
  %v1061 = vmul.f32 %v729, %v729
  %v1062 = vmul.f32 %v732, %v732
  %v1063 = vmul.f32 %v737, %v737
  %v1064 = vmul.f32 %v740, %v740
  %v1065 = vmul.f32 %v745, %v745
  %v1066 = vmul.f32 %v748, %v748
  %v1067 = vmul.f32 %v753, %v753
  %v1068 = vmul.f32 %v756, %v756
  %v1069 = vmul.f32 %v761, %v761
  %v1070 = vmul.f32 %v764, %v764
  %v1071 = vmul.f32 %v769, %v769
  %v1072 = vmul.f32 %v772, %v772
  %v1073 = vmul.f32 %v777, %v777
  %v1074 = vmul.f32 %v780, %v780
  %v1075 = vmul.f32 %v785, %v785
  %v1076 = vmul.f32 %v788, %v788
  %v1077 = vmul.f32 %v793, %v793
  %v1078 = vmul.f32 %v796, %v796
  %v1079 = vmul.f32 %v801, %v801
  %v1080 = vmul.f32 %v804, %v804
  %v1081 = vmul.f32 %v809, %v809
  %v1082 = vmul.f32 %v812, %v812
  %1083 = vmatprep.subr.mxu0 0.0
  %1084 = vmatpush1.msra.mxu0 %v1019
  %1085 = vmatprep.subr.mxu0 0.0
  %1086 = vmatpush1.msra.mxu0 %v1020
  %1087 = vmatprep.subr.mxu0 0.0
  %1088 = vmatpush1.msra.mxu0 %v1021
  %1089 = vmatprep.subr.mxu0 0.0
  %1090 = vmatpush1.msra.mxu0 %v1022
  %1091 = vmatprep.subr.mxu0 0.0
  %1092 = vmatpush1.msra.mxu0 %v1023
  %1093 = vmatprep.subr.mxu0 0.0
  %1094 = vmatpush1.msra.mxu0 %v1024
  %1095 = vmatprep.subr.mxu0 0.0
  %1096 = vmatpush1.msra.mxu0 %v1025
  %1097 = vmatprep.subr.mxu0 0.0
  %1098 = vmatpush1.msra.mxu0 %v1026
  %1099 = vmatprep.subr.mxu0 0.0
  %1100 = vmatpush1.msra.mxu0 %v1027
  %1101 = vmatprep.subr.mxu0 0.0
  %1102 = vmatpush1.msra.mxu0 %v1028
  %1103 = vmatprep.subr.mxu0 0.0
  %1104 = vmatpush1.msra.mxu0 %v1029
  %1105 = vmatprep.subr.mxu0 0.0
  %1106 = vmatpush1.msra.mxu0 %v1030
  %1107 = vmatprep.subr.mxu0 0.0
  %1108 = vmatpush1.msra.mxu0 %v1031
  %1109 = vmatprep.subr.mxu0 0.0
  %1110 = vmatpush1.msra.mxu0 %v1032
  %1111 = vmatprep.subr.mxu0 0.0
  %1112 = vmatpush1.msra.mxu0 %v1033
  %1113 = vmatprep.subr.mxu0 0.0
  %1114 = vmatpush1.msra.mxu0 %v1034
  %1115 = vmatprep.subr.mxu0 0.0
  %1116 = vmatpush1.msra.mxu0 %v1035
  %1117 = vmatprep.subr.mxu0 0.0
  %1118 = vmatpush1.msra.mxu0 %v1036
  %1119 = vmatprep.subr.mxu0 0.0
  %1120 = vmatpush1.msra.mxu0 %v1037
  %1121 = vmatprep.subr.mxu0 0.0
  %1122 = vmatpush1.msra.mxu0 %v1038
  %1123 = vmatprep.subr.mxu0 0.0
  %1124 = vmatpush1.msra.mxu0 %v1039
  %1125 = vmatprep.subr.mxu0 0.0
  %1126 = vmatpush1.msra.mxu0 %v1040
  %1127 = vmatprep.subr.mxu0 0.0
  %1128 = vmatpush1.msra.mxu0 %v1041
  %1129 = vmatprep.subr.mxu0 0.0
  %1130 = vmatpush1.msra.mxu0 %v1042
  %1131 = vmatprep.subr.mxu0 0.0
  %1132 = vmatpush1.msra.mxu0 %v1043
  %1133 = vmatprep.subr.mxu0 0.0
  %1134 = vmatpush1.msra.mxu0 %v1044
  %1135 = vmatprep.subr.mxu0 0.0
  %1136 = vmatpush1.msra.mxu0 %v1045
  %1137 = vmatprep.subr.mxu0 0.0
  %1138 = vmatpush1.msra.mxu0 %v1046
  %1139 = vmatprep.subr.mxu0 0.0
  %1140 = vmatpush1.msra.mxu0 %v1047
  %1141 = vmatprep.subr.mxu0 0.0
  %1142 = vmatpush1.msra.mxu0 %v1048
  %1143 = vmatprep.subr.mxu0 0.0
  %1144 = vmatpush1.msra.mxu0 %v1049
  %1145 = vmatprep.subr.mxu0 0.0
  %1146 = vmatpush1.msra.mxu0 %v1050
  %1147 = vmatprep.mubr.f32.mxu0 1.0
  %1148 = vmatmul.mubr.f32.gmra.mrb[0].mxu0 1.0
  %v1149 = vpop.f32.mrb[0].mxu0
  %v1150 = vadd.f32 0.0, %v1149
  %v1151 = vpop.f32.mrb[0].mxu0
  %1152 = vdwg.mxu0
  %1153 = vmatprep.subr.mxu0 0.0
  %1154 = vmatpush1.msra.mxu0 %v1051
  %1155 = vmatprep.subr.mxu0 0.0
  %1156 = vmatpush1.msra.mxu0 %v1052
  %1157 = vmatprep.subr.mxu0 0.0
  %1158 = vmatpush1.msra.mxu0 %v1053
  %1159 = vmatprep.subr.mxu0 0.0
  %1160 = vmatpush1.msra.mxu0 %v1054
  %1161 = vmatprep.subr.mxu0 0.0
  %1162 = vmatpush1.msra.mxu0 %v1055
  %1163 = vmatprep.subr.mxu0 0.0
  %1164 = vmatpush1.msra.mxu0 %v1056
  %1165 = vmatprep.subr.mxu0 0.0
  %1166 = vmatpush1.msra.mxu0 %v1057
  %1167 = vmatprep.subr.mxu0 0.0
  %1168 = vmatpush1.msra.mxu0 %v1058
  %1169 = vmatprep.subr.mxu0 0.0
  %1170 = vmatpush1.msra.mxu0 %v1059
  %1171 = vmatprep.subr.mxu0 0.0
  %1172 = vmatpush1.msra.mxu0 %v1060
  %1173 = vmatprep.subr.mxu0 0.0
  %1174 = vmatpush1.msra.mxu0 %v1061
  %1175 = vmatprep.subr.mxu0 0.0
  %1176 = vmatpush1.msra.mxu0 %v1062
  %1177 = vmatprep.subr.mxu0 0.0
  %1178 = vmatpush1.msra.mxu0 %v1063
  %1179 = vmatprep.subr.mxu0 0.0
  %1180 = vmatpush1.msra.mxu0 %v1064
  %1181 = vmatprep.subr.mxu0 0.0
  %1182 = vmatpush1.msra.mxu0 %v1065
  %1183 = vmatprep.subr.mxu0 0.0
  %1184 = vmatpush1.msra.mxu0 %v1066
  %1185 = vmatprep.subr.mxu0 0.0
  %1186 = vmatpush1.msra.mxu0 %v1067
  %1187 = vmatprep.subr.mxu0 0.0
  %1188 = vmatpush1.msra.mxu0 %v1068
  %1189 = vmatprep.subr.mxu0 0.0
  %1190 = vmatpush1.msra.mxu0 %v1069
  %1191 = vmatprep.subr.mxu0 0.0
  %1192 = vmatpush1.msra.mxu0 %v1070
  %1193 = vmatprep.subr.mxu0 0.0
  %1194 = vmatpush1.msra.mxu0 %v1071
  %1195 = vmatprep.subr.mxu0 0.0
  %1196 = vmatpush1.msra.mxu0 %v1072
  %1197 = vmatprep.subr.mxu0 0.0
  %1198 = vmatpush1.msra.mxu0 %v1073
  %1199 = vmatprep.subr.mxu0 0.0
  %1200 = vmatpush1.msra.mxu0 %v1074
  %1201 = vmatprep.subr.mxu0 0.0
  %1202 = vmatpush1.msra.mxu0 %v1075
  %1203 = vmatprep.subr.mxu0 0.0
  %1204 = vmatpush1.msra.mxu0 %v1076
  %1205 = vmatprep.subr.mxu0 0.0
  %1206 = vmatpush1.msra.mxu0 %v1077
  %1207 = vmatprep.subr.mxu0 0.0
  %1208 = vmatpush1.msra.mxu0 %v1078
  %1209 = vmatprep.subr.mxu0 0.0
  %1210 = vmatpush1.msra.mxu0 %v1079
  %1211 = vmatprep.subr.mxu0 0.0
  %1212 = vmatpush1.msra.mxu0 %v1080
  %1213 = vmatprep.subr.mxu0 0.0
  %1214 = vmatpush1.msra.mxu0 %v1081
  %1215 = vmatprep.subr.mxu0 0.0
  %1216 = vmatpush1.msra.mxu0 %v1082
  %1217 = vmatprep.mubr.f32.mxu0 1.0
  %1218 = vmatmul.mubr.f32.gmra.mrb[0].mxu0 1.0
  %v1219 = vpop.f32.mrb[0].mxu0
  %v1220 = vadd.f32 %v1150, %v1219
  %v1221 = vpop.f32.mrb[0].mxu0
  %1222 = vdwg.mxu0
  %v1224 = vrot.slane %v1220, 7
  %vm1226 = vcmask 1040384
  %v1227 = vsel %vm1226, %v1016, %v1224
  %1228 = vst [vmem:[%s3] sm:$0x3] %v1227
  // Predicated region
  $region10: #{_lambda_.9} parent=0 // pred_check
    _
  $region11: #{_lambda_.9} parent=0 // pred_check_branch
    %1230 = sbr.rel (0) target = $region13
  $region12: #{_lambda_.9} parent=0 // pred_region
    _
  $region13: #{_lambda_.9} parent=0 // pred_fallthru
    _
  // Predicated region
  $region14: #{_lambda_.9} parent=0 // pred_check
    _
  $region15: #{_lambda_.9} parent=0 // pred_check_branch
    %1232 = sbr.rel (0) target = $region17
  $region16: #{_lambda_.9} parent=0 // pred_region
    _
  $region17: #{_lambda_.9} parent=0 // pred_fallthru
    _
  // Predicated region
  $region18: #{_lambda_.9} parent=0 // pred_check
    _
  $region19: #{_lambda_.9} parent=0 // pred_check_branch
    %1234 = sbr.rel (0) target = $region21
  $region20: #{_lambda_.9} parent=0 // pred_region
    _
  $region21: #{_lambda_.9} parent=0 // pred_fallthru
    _
  // Predicated region
  $region22: #{_lambda_.9} parent=0 // pred_check
    _
  $region23: #{_lambda_.9} parent=0 // pred_check_branch
    %1236 = sbr.rel (0) target = $region25
  $region24: #{_lambda_.9} parent=0 // pred_region
    _
  $region25: #{_lambda_.9} parent=0 // pred_fallthru
    _

// kernel: _lambda_.10
$region0: #{_lambda_.10}
  #allocation0 [shape = 'u32[]', space=smem, size = 0x4, offset = 0x4, fixed_abs, tag = 'smem constant byte address 0x4 - core index']
  #allocation1 [shape = 'u32[144,128]{1,0:T(1,128)}', space=vmem, size = 0x12000, scoped, tag = 'internal scratch']
  %s0 = inlined_call_operand.vmem [shape: f32[512,128], index: 0, kind: input, shape index: {}]
  %s1 = inlined_call_operand.vmem [shape: f32[1,128], index: 1, kind: input, shape index: {}]
  %s2 = inlined_call_operand.vmem [shape: f32[1,128], index: 2, kind: input, shape index: {}]
  %s3 = inlined_call_operand.vmem [shape: f32[512,128], index: 3, kind: output, shape index: {}]
  %s4 = sld [smem:[#allocation0]]
  $region22: #{_lambda_.10} parent=0
    _
  %s6 = ssub.s32 1, %s4
  %s7 = scalar_select 0, %s6, %s4
  // Predicated region
  $region2: #{_lambda_.10} parent=0 // pred_check
    _
  $region3: #{_lambda_.10} parent=0 // pred_check_branch
    %9 = sbr.rel (0) target = $region5
  $region4: #{_lambda_.10} parent=0 // pred_region
    _
  $region5: #{_lambda_.10} parent=0 // pred_fallthru
    _
  // Predicated region
  $region6: #{_lambda_.10} parent=0 // pred_check
    _
  $region7: #{_lambda_.10} parent=0 // pred_check_branch
    %11 = sbr.rel (0) target = $region9
  $region8: #{_lambda_.10} parent=0 // pred_region
    _
  $region9: #{_lambda_.10} parent=0 // pred_fallthru
    _
  // Predicated region
  $region10: #{_lambda_.10} parent=0 // pred_check
    _
  $region11: #{_lambda_.10} parent=0 // pred_check_branch
    %13 = sbr.rel (0) target = $region13
  $region12: #{_lambda_.10} parent=0 // pred_region
    _
  $region13: #{_lambda_.10} parent=0 // pred_fallthru
    _
  %v14 = vld [vmem:[%s0] sm:$0xff]
  %v15 = vld [vmem:[%s0 + $0x8] sm:$0xff]
  %v16 = vld [vmem:[%s0 + $0x10] sm:$0xff]
  %v17 = vld [vmem:[%s0 + $0x18] sm:$0xff]
  %v18 = vld [vmem:[%s0 + $0x20] sm:$0xff]
  %v19 = vld [vmem:[%s0 + $0x28] sm:$0xff]
  %v20 = vld [vmem:[%s0 + $0x30] sm:$0xff]
  %v21 = vld [vmem:[%s0 + $0x38] sm:$0xff]
  %v22 = vld [vmem:[%s0 + $0x40] sm:$0xff]
  %v23 = vld [vmem:[%s0 + $0x48] sm:$0xff]
  %v24 = vld [vmem:[%s0 + $0x50] sm:$0xff]
  %v25 = vld [vmem:[%s0 + $0x58] sm:$0xff]
  %v26 = vld [vmem:[%s0 + $0x60] sm:$0xff]
  %v27 = vld [vmem:[%s0 + $0x68] sm:$0xff]
  %v28 = vld [vmem:[%s0 + $0x70] sm:$0xff]
  %v29 = vld [vmem:[%s0 + $0x78] sm:$0xff]
  %v30 = vld [vmem:[%s0 + $0x80] sm:$0xff]
  %v31 = vld [vmem:[%s0 + $0x88] sm:$0xff]
  %v32 = vld [vmem:[%s0 + $0x90] sm:$0xff]
  %v33 = vld [vmem:[%s0 + $0x98] sm:$0xff]
  %v34 = vld [vmem:[%s0 + $0xa0] sm:$0xff]
  %v35 = vld [vmem:[%s0 + $0xa8] sm:$0xff]
  %v36 = vld [vmem:[%s0 + $0xb0] sm:$0xff]
  %v37 = vld [vmem:[%s0 + $0xb8] sm:$0xff]
  %v38 = vld [vmem:[%s0 + $0xc0] sm:$0xff]
  %v39 = vld [vmem:[%s0 + $0xc8] sm:$0xff]
  %v40 = vld [vmem:[%s0 + $0xd0] sm:$0xff]
  %v41 = vld [vmem:[%s0 + $0xd8] sm:$0xff]
  %v42 = vld [vmem:[%s0 + $0xe0] sm:$0xff]
  %v43 = vld [vmem:[%s0 + $0xe8] sm:$0xff]
  %v44 = vld [vmem:[%s0 + $0xf0] sm:$0xff]
  %v45 = vld [vmem:[%s0 + $0xf8] sm:$0xff]
  %v46 = vld [vmem:[%s0 + $0x100] sm:$0xff]
  %v47 = vld [vmem:[%s0 + $0x108] sm:$0xff]
  %v48 = vld [vmem:[%s0 + $0x110] sm:$0xff]
  %v49 = vld [vmem:[%s0 + $0x118] sm:$0xff]
  %v50 = vld [vmem:[%s0 + $0x120] sm:$0xff]
  %v51 = vld [vmem:[%s0 + $0x128] sm:$0xff]
  %v52 = vld [vmem:[%s0 + $0x130] sm:$0xff]
  %v53 = vld [vmem:[%s0 + $0x138] sm:$0xff]
  %v54 = vld [vmem:[%s0 + $0x140] sm:$0xff]
  %v55 = vld [vmem:[%s0 + $0x148] sm:$0xff]
  %v56 = vld [vmem:[%s0 + $0x150] sm:$0xff]
  %v57 = vld [vmem:[%s0 + $0x158] sm:$0xff]
  %v58 = vld [vmem:[%s0 + $0x160] sm:$0xff]
  %v59 = vld [vmem:[%s0 + $0x168] sm:$0xff]
  %v60 = vld [vmem:[%s0 + $0x170] sm:$0xff]
  %v61 = vld [vmem:[%s0 + $0x178] sm:$0xff]
  %v62 = vld [vmem:[%s0 + $0x180] sm:$0xff]
  %v63 = vld [vmem:[%s0 + $0x188] sm:$0xff]
  %v64 = vld [vmem:[%s0 + $0x190] sm:$0xff]
  %v65 = vld [vmem:[%s0 + $0x198] sm:$0xff]
  %v66 = vld [vmem:[%s0 + $0x1a0] sm:$0xff]
  %v67 = vld [vmem:[%s0 + $0x1a8] sm:$0xff]
  %v68 = vld [vmem:[%s0 + $0x1b0] sm:$0xff]
  %v69 = vld [vmem:[%s0 + $0x1b8] sm:$0xff]
  %v70 = vld [vmem:[%s0 + $0x1c0] sm:$0xff]
  %v71 = vld [vmem:[%s0 + $0x1c8] sm:$0xff]
  %v72 = vld [vmem:[%s0 + $0x1d0] sm:$0xff]
  %v73 = vld [vmem:[%s0 + $0x1d8] sm:$0xff]
  %v74 = vld [vmem:[%s0 + $0x1e0] sm:$0xff]
  %v75 = vld [vmem:[%s0 + $0x1e8] sm:$0xff]
  %v76 = vld [vmem:[%s0 + $0x1f0] sm:$0xff]
  %v77 = vld [vmem:[%s0 + $0x1f8] sm:$0xff]
  %v78 = vld [vmem:[%s1] sm:$0x1]
  %v80 = vlaneseq
  %v81 = vshrl.u32 %v80, 7
  %v82 = vsub.s32 0, %v81
  %v83 = vrot.slane %v78, %v82
  %v85 = vmul.f32 %v14, %v83
  %v86 = vmul.f32 %v15, %v83
  %v87 = vmul.f32 %v16, %v83
  %v88 = vmul.f32 %v17, %v83
  %v89 = vmul.f32 %v18, %v83
  %v90 = vmul.f32 %v19, %v83
  %v91 = vmul.f32 %v20, %v83
  %v92 = vmul.f32 %v21, %v83
  %v93 = vmul.f32 %v22, %v83
  %v94 = vmul.f32 %v23, %v83
  %v95 = vmul.f32 %v24, %v83
  %v96 = vmul.f32 %v25, %v83
  %v97 = vmul.f32 %v26, %v83
  %v98 = vmul.f32 %v27, %v83
  %v99 = vmul.f32 %v28, %v83
  %v100 = vmul.f32 %v29, %v83
  %v101 = vmul.f32 %v30, %v83
  %v102 = vmul.f32 %v31, %v83
  %v103 = vmul.f32 %v32, %v83
  %v104 = vmul.f32 %v33, %v83
  %v105 = vmul.f32 %v34, %v83
  %v106 = vmul.f32 %v35, %v83
  %v107 = vmul.f32 %v36, %v83
  %v108 = vmul.f32 %v37, %v83
  %v109 = vmul.f32 %v38, %v83
  %v110 = vmul.f32 %v39, %v83
  %v111 = vmul.f32 %v40, %v83
  %v112 = vmul.f32 %v41, %v83
  %v113 = vmul.f32 %v42, %v83
  %v114 = vmul.f32 %v43, %v83
  %v115 = vmul.f32 %v44, %v83
  %v116 = vmul.f32 %v45, %v83
  %v117 = vmul.f32 %v46, %v83
  %v118 = vmul.f32 %v47, %v83
  %v119 = vmul.f32 %v48, %v83
  %v120 = vmul.f32 %v49, %v83
  %v121 = vmul.f32 %v50, %v83
  %v122 = vmul.f32 %v51, %v83
  %v123 = vmul.f32 %v52, %v83
  %v124 = vmul.f32 %v53, %v83
  %v125 = vmul.f32 %v54, %v83
  %v126 = vmul.f32 %v55, %v83
  %v127 = vmul.f32 %v56, %v83
  %v128 = vmul.f32 %v57, %v83
  %v129 = vmul.f32 %v58, %v83
  %v130 = vmul.f32 %v59, %v83
  %v131 = vmul.f32 %v60, %v83
  %v132 = vmul.f32 %v61, %v83
  %v133 = vmul.f32 %v62, %v83
  %v134 = vmul.f32 %v63, %v83
  %v135 = vmul.f32 %v64, %v83
  %v136 = vmul.f32 %v65, %v83
  %v137 = vmul.f32 %v66, %v83
  %v138 = vmul.f32 %v67, %v83
  %v139 = vmul.f32 %v68, %v83
  %v140 = vmul.f32 %v69, %v83
  %v141 = vmul.f32 %v70, %v83
  %v142 = vmul.f32 %v71, %v83
  %v143 = vmul.f32 %v72, %v83
  %v144 = vmul.f32 %v73, %v83
  %v145 = vmul.f32 %v74, %v83
  %v146 = vmul.f32 %v75, %v83
  %v147 = vmul.f32 %v76, %v83
  %v148 = vmul.f32 %v77, %v83
  %v149 = vld [vmem:[%s2] sm:$0x1]
  %v151 = vlaneseq
  %v152 = vshrl.u32 %v151, 7
  %v153 = vsub.s32 0, %v152
  %v154 = vrot.slane %v149, %v153
  %v156 = vadd.f32 %v85, %v154
  %v157 = vadd.f32 %v86, %v154
  %v158 = vadd.f32 %v87, %v154
  %v159 = vadd.f32 %v88, %v154
  %v160 = vadd.f32 %v89, %v154
  %v161 = vadd.f32 %v90, %v154
  %v162 = vadd.f32 %v91, %v154
  %v163 = vadd.f32 %v92, %v154
  %v164 = vadd.f32 %v93, %v154
  %v165 = vadd.f32 %v94, %v154
  %v166 = vadd.f32 %v95, %v154
  %v167 = vadd.f32 %v96, %v154
  %v168 = vadd.f32 %v97, %v154
  %v169 = vadd.f32 %v98, %v154
  %v170 = vadd.f32 %v99, %v154
  %v171 = vadd.f32 %v100, %v154
  %v172 = vadd.f32 %v101, %v154
  %v173 = vadd.f32 %v102, %v154
  %v174 = vadd.f32 %v103, %v154
  %v175 = vadd.f32 %v104, %v154
  %v176 = vadd.f32 %v105, %v154
  %v177 = vadd.f32 %v106, %v154
  %v178 = vadd.f32 %v107, %v154
  %v179 = vadd.f32 %v108, %v154
  %v180 = vadd.f32 %v109, %v154
  %v181 = vadd.f32 %v110, %v154
  %v182 = vadd.f32 %v111, %v154
  %v183 = vadd.f32 %v112, %v154
  %v184 = vadd.f32 %v113, %v154
  %v185 = vadd.f32 %v114, %v154
  %v186 = vadd.f32 %v115, %v154
  %v187 = vadd.f32 %v116, %v154
  %v188 = vadd.f32 %v117, %v154
  %v189 = vadd.f32 %v118, %v154
  %v190 = vadd.f32 %v119, %v154
  %v191 = vadd.f32 %v120, %v154
  %v192 = vadd.f32 %v121, %v154
  %v193 = vadd.f32 %v122, %v154
  %v194 = vadd.f32 %v123, %v154
  %v195 = vadd.f32 %v124, %v154
  %v196 = vadd.f32 %v125, %v154
  %v197 = vadd.f32 %v126, %v154
  %v198 = vadd.f32 %v127, %v154
  %v199 = vadd.f32 %v128, %v154
  %v200 = vadd.f32 %v129, %v154
  %v201 = vadd.f32 %v130, %v154
  %v202 = vadd.f32 %v131, %v154
  %v203 = vadd.f32 %v132, %v154
  %v204 = vadd.f32 %v133, %v154
  %v205 = vadd.f32 %v134, %v154
  %v206 = vadd.f32 %v135, %v154
  %v207 = vadd.f32 %v136, %v154
  %v208 = vadd.f32 %v137, %v154
  %v209 = vadd.f32 %v138, %v154
  %v210 = vadd.f32 %v139, %v154
  %v211 = vadd.f32 %v140, %v154
  %v212 = vadd.f32 %v141, %v154
  %v213 = vadd.f32 %v142, %v154
  %v214 = vadd.f32 %v143, %v154
  %v215 = vadd.f32 %v144, %v154
  %v216 = vadd.f32 %v145, %v154
  %v217 = vadd.f32 %v146, %v154
  %v218 = vadd.f32 %v147, %v154
  %v219 = vadd.f32 %v148, %v154
  %vm220 = vcmp.ge.f32.partialorder %v156, 0.0
  %vm221 = vcmp.ge.f32.partialorder %v157, 0.0
  %vm222 = vcmp.ge.f32.partialorder %v158, 0.0
  %vm223 = vcmp.ge.f32.partialorder %v159, 0.0
  %vm224 = vcmp.ge.f32.partialorder %v160, 0.0
  %vm225 = vcmp.ge.f32.partialorder %v161, 0.0
  %vm226 = vcmp.ge.f32.partialorder %v162, 0.0
  %vm227 = vcmp.ge.f32.partialorder %v163, 0.0
  %vm228 = vcmp.ge.f32.partialorder %v164, 0.0
  %vm229 = vcmp.ge.f32.partialorder %v165, 0.0
  %vm230 = vcmp.ge.f32.partialorder %v166, 0.0
  %vm231 = vcmp.ge.f32.partialorder %v167, 0.0
  %vm232 = vcmp.ge.f32.partialorder %v168, 0.0
  %vm233 = vcmp.ge.f32.partialorder %v169, 0.0
  %vm234 = vcmp.ge.f32.partialorder %v170, 0.0
  %vm235 = vcmp.ge.f32.partialorder %v171, 0.0
  %vm236 = vcmp.ge.f32.partialorder %v172, 0.0
  %vm237 = vcmp.ge.f32.partialorder %v173, 0.0
  %vm238 = vcmp.ge.f32.partialorder %v174, 0.0
  %vm239 = vcmp.ge.f32.partialorder %v175, 0.0
  %vm240 = vcmp.ge.f32.partialorder %v176, 0.0
  %vm241 = vcmp.ge.f32.partialorder %v177, 0.0
  %vm242 = vcmp.ge.f32.partialorder %v178, 0.0
  %vm243 = vcmp.ge.f32.partialorder %v179, 0.0
  %vm244 = vcmp.ge.f32.partialorder %v180, 0.0
  %vm245 = vcmp.ge.f32.partialorder %v181, 0.0
  %vm246 = vcmp.ge.f32.partialorder %v182, 0.0
  %vm247 = vcmp.ge.f32.partialorder %v183, 0.0
  %vm248 = vcmp.ge.f32.partialorder %v184, 0.0
  %vm249 = vcmp.ge.f32.partialorder %v185, 0.0
  %vm250 = vcmp.ge.f32.partialorder %v186, 0.0
  %vm251 = vcmp.ge.f32.partialorder %v187, 0.0
  %vm252 = vcmp.ge.f32.partialorder %v188, 0.0
  %vm253 = vcmp.ge.f32.partialorder %v189, 0.0
  %vm254 = vcmp.ge.f32.partialorder %v190, 0.0
  %vm255 = vcmp.ge.f32.partialorder %v191, 0.0
  %vm256 = vcmp.ge.f32.partialorder %v192, 0.0
  %vm257 = vcmp.ge.f32.partialorder %v193, 0.0
  %vm258 = vcmp.ge.f32.partialorder %v194, 0.0
  %vm259 = vcmp.ge.f32.partialorder %v195, 0.0
  %vm260 = vcmp.ge.f32.partialorder %v196, 0.0
  %vm261 = vcmp.ge.f32.partialorder %v197, 0.0
  %vm262 = vcmp.ge.f32.partialorder %v198, 0.0
  %vm263 = vcmp.ge.f32.partialorder %v199, 0.0
  %vm264 = vcmp.ge.f32.partialorder %v200, 0.0
  %vm265 = vcmp.ge.f32.partialorder %v201, 0.0
  %vm266 = vcmp.ge.f32.partialorder %v202, 0.0
  %vm267 = vcmp.ge.f32.partialorder %v203, 0.0
  %vm268 = vcmp.ge.f32.partialorder %v204, 0.0
  %vm269 = vcmp.ge.f32.partialorder %v205, 0.0
  %vm270 = vcmp.ge.f32.partialorder %v206, 0.0
  %vm271 = vcmp.ge.f32.partialorder %v207, 0.0
  %vm272 = vcmp.ge.f32.partialorder %v208, 0.0
  %vm273 = vcmp.ge.f32.partialorder %v209, 0.0
  %vm274 = vcmp.ge.f32.partialorder %v210, 0.0
  %vm275 = vcmp.ge.f32.partialorder %v211, 0.0
  %vm276 = vcmp.ge.f32.partialorder %v212, 0.0
  %vm277 = vcmp.ge.f32.partialorder %v213, 0.0
  %vm278 = vcmp.ge.f32.partialorder %v214, 0.0
  %vm279 = vcmp.ge.f32.partialorder %v215, 0.0
  %vm280 = vcmp.ge.f32.partialorder %v216, 0.0
  %vm281 = vcmp.ge.f32.partialorder %v217, 0.0
  %vm282 = vcmp.ge.f32.partialorder %v218, 0.0
  %vm283 = vcmp.ge.f32.partialorder %v219, 0.0
  %v284 = vmul.f32 %v156, 0.2
  %v285 = vmul.f32 %v157, 0.2
  %v286 = vmul.f32 %v158, 0.2
  %v287 = vmul.f32 %v159, 0.2
  %v288 = vmul.f32 %v160, 0.2
  %v289 = vmul.f32 %v161, 0.2
  %v290 = vmul.f32 %v162, 0.2
  %v291 = vmul.f32 %v163, 0.2
  %v292 = vmul.f32 %v164, 0.2
  %v293 = vmul.f32 %v165, 0.2
  %v294 = vmul.f32 %v166, 0.2
  %v295 = vmul.f32 %v167, 0.2
  %v296 = vmul.f32 %v168, 0.2
  %v297 = vmul.f32 %v169, 0.2
  %v298 = vmul.f32 %v170, 0.2
  %v299 = vmul.f32 %v171, 0.2
  %v300 = vmul.f32 %v172, 0.2
  %v301 = vmul.f32 %v173, 0.2
  %v302 = vmul.f32 %v174, 0.2
  %v303 = vmul.f32 %v175, 0.2
  %v304 = vmul.f32 %v176, 0.2
  %v305 = vmul.f32 %v177, 0.2
  %v306 = vmul.f32 %v178, 0.2
  %v307 = vmul.f32 %v179, 0.2
  %v308 = vmul.f32 %v180, 0.2
  %v309 = vmul.f32 %v181, 0.2
  %v310 = vmul.f32 %v182, 0.2
  %v311 = vmul.f32 %v183, 0.2
  %v312 = vmul.f32 %v184, 0.2
  %v313 = vmul.f32 %v185, 0.2
  %v314 = vmul.f32 %v186, 0.2
  %v315 = vmul.f32 %v187, 0.2
  %v316 = vmul.f32 %v188, 0.2
  %v317 = vmul.f32 %v189, 0.2
  %v318 = vmul.f32 %v190, 0.2
  %v319 = vmul.f32 %v191, 0.2
  %v320 = vmul.f32 %v192, 0.2
  %v321 = vmul.f32 %v193, 0.2
  %v322 = vmul.f32 %v194, 0.2
  %v323 = vmul.f32 %v195, 0.2
  %v324 = vmul.f32 %v196, 0.2
  %v325 = vmul.f32 %v197, 0.2
  %v326 = vmul.f32 %v198, 0.2
  %v327 = vmul.f32 %v199, 0.2
  %v328 = vmul.f32 %v200, 0.2
  %v329 = vmul.f32 %v201, 0.2
  %v330 = vmul.f32 %v202, 0.2
  %v331 = vmul.f32 %v203, 0.2
  %v332 = vmul.f32 %v204, 0.2
  %v333 = vmul.f32 %v205, 0.2
  %v334 = vmul.f32 %v206, 0.2
  %v335 = vmul.f32 %v207, 0.2
  %v336 = vmul.f32 %v208, 0.2
  %v337 = vmul.f32 %v209, 0.2
  %v338 = vmul.f32 %v210, 0.2
  %v339 = vmul.f32 %v211, 0.2
  %v340 = vmul.f32 %v212, 0.2
  %v341 = vmul.f32 %v213, 0.2
  %v342 = vmul.f32 %v214, 0.2
  %v343 = vmul.f32 %v215, 0.2
  %v344 = vmul.f32 %v216, 0.2
  %v345 = vmul.f32 %v217, 0.2
  %v346 = vmul.f32 %v218, 0.2
  %v347 = vmul.f32 %v219, 0.2
  %v348 = vsel %vm220, %v156, %v284
  %v349 = vsel %vm221, %v157, %v285
  %v350 = vsel %vm222, %v158, %v286
  %v351 = vsel %vm223, %v159, %v287
  %v352 = vsel %vm224, %v160, %v288
  %v353 = vsel %vm225, %v161, %v289
  %v354 = vsel %vm226, %v162, %v290
  %v355 = vsel %vm227, %v163, %v291
  %v356 = vsel %vm228, %v164, %v292
  %v357 = vsel %vm229, %v165, %v293
  %v358 = vsel %vm230, %v166, %v294
  %v359 = vsel %vm231, %v167, %v295
  %v360 = vsel %vm232, %v168, %v296
  %v361 = vsel %vm233, %v169, %v297
  %v362 = vsel %vm234, %v170, %v298
  %v363 = vsel %vm235, %v171, %v299
  %v364 = vsel %vm236, %v172, %v300
  %v365 = vsel %vm237, %v173, %v301
  %v366 = vsel %vm238, %v174, %v302
  %v367 = vsel %vm239, %v175, %v303
  %v368 = vsel %vm240, %v176, %v304
  %v369 = vsel %vm241, %v177, %v305
  %v370 = vsel %vm242, %v178, %v306
  %v371 = vsel %vm243, %v179, %v307
  %v372 = vsel %vm244, %v180, %v308
  %v373 = vsel %vm245, %v181, %v309
  %v374 = vsel %vm246, %v182, %v310
  %v375 = vsel %vm247, %v183, %v311
  %v376 = vsel %vm248, %v184, %v312
  %v377 = vsel %vm249, %v185, %v313
  %v378 = vsel %vm250, %v186, %v314
  %v379 = vsel %vm251, %v187, %v315
  %v380 = vsel %vm252, %v188, %v316
  %v381 = vsel %vm253, %v189, %v317
  %v382 = vsel %vm254, %v190, %v318
  %v383 = vsel %vm255, %v191, %v319
  %v384 = vsel %vm256, %v192, %v320
  %v385 = vsel %vm257, %v193, %v321
  %v386 = vsel %vm258, %v194, %v322
  %v387 = vsel %vm259, %v195, %v323
  %v388 = vsel %vm260, %v196, %v324
  %v389 = vsel %vm261, %v197, %v325
  %v390 = vsel %vm262, %v198, %v326
  %v391 = vsel %vm263, %v199, %v327
  %v392 = vsel %vm264, %v200, %v328
  %v393 = vsel %vm265, %v201, %v329
  %v394 = vsel %vm266, %v202, %v330
  %v395 = vsel %vm267, %v203, %v331
  %v396 = vsel %vm268, %v204, %v332
  %v397 = vsel %vm269, %v205, %v333
  %v398 = vsel %vm270, %v206, %v334
  %v399 = vsel %vm271, %v207, %v335
  %v400 = vsel %vm272, %v208, %v336
  %v401 = vsel %vm273, %v209, %v337
  %v402 = vsel %vm274, %v210, %v338
  %v403 = vsel %vm275, %v211, %v339
  %v404 = vsel %vm276, %v212, %v340
  %v405 = vsel %vm277, %v213, %v341
  %v406 = vsel %vm278, %v214, %v342
  %v407 = vsel %vm279, %v215, %v343
  %v408 = vsel %vm280, %v216, %v344
  %v409 = vsel %vm281, %v217, %v345
  %v410 = vsel %vm282, %v218, %v346
  %v411 = vsel %vm283, %v219, %v347
  %412 = vst [vmem:[%s3] sm:$0xff] %v348
  %413 = vst [vmem:[%s3 + $0x8] sm:$0xff] %v349
  %414 = vst [vmem:[%s3 + $0x10] sm:$0xff] %v350
  %415 = vst [vmem:[%s3 + $0x18] sm:$0xff] %v351
  %416 = vst [vmem:[%s3 + $0x20] sm:$0xff] %v352
  %417 = vst [vmem:[%s3 + $0x28] sm:$0xff] %v353
  %418 = vst [vmem:[%s3 + $0x30] sm:$0xff] %v354
  %419 = vst [vmem:[%s3 + $0x38] sm:$0xff] %v355
  %420 = vst [vmem:[%s3 + $0x40] sm:$0xff] %v356
  %421 = vst [vmem:[%s3 + $0x48] sm:$0xff] %v357
  %422 = vst [vmem:[%s3 + $0x50] sm:$0xff] %v358
  %423 = vst [vmem:[%s3 + $0x58] sm:$0xff] %v359
  %424 = vst [vmem:[%s3 + $0x60] sm:$0xff] %v360
  %425 = vst [vmem:[%s3 + $0x68] sm:$0xff] %v361
  %426 = vst [vmem:[%s3 + $0x70] sm:$0xff] %v362
  %427 = vst [vmem:[%s3 + $0x78] sm:$0xff] %v363
  %428 = vst [vmem:[%s3 + $0x80] sm:$0xff] %v364
  %429 = vst [vmem:[%s3 + $0x88] sm:$0xff] %v365
  %430 = vst [vmem:[%s3 + $0x90] sm:$0xff] %v366
  %431 = vst [vmem:[%s3 + $0x98] sm:$0xff] %v367
  %432 = vst [vmem:[%s3 + $0xa0] sm:$0xff] %v368
  %433 = vst [vmem:[%s3 + $0xa8] sm:$0xff] %v369
  %434 = vst [vmem:[%s3 + $0xb0] sm:$0xff] %v370
  %435 = vst [vmem:[%s3 + $0xb8] sm:$0xff] %v371
  %436 = vst [vmem:[%s3 + $0xc0] sm:$0xff] %v372
  %437 = vst [vmem:[%s3 + $0xc8] sm:$0xff] %v373
  %438 = vst [vmem:[%s3 + $0xd0] sm:$0xff] %v374
  %439 = vst [vmem:[%s3 + $0xd8] sm:$0xff] %v375
  %440 = vst [vmem:[%s3 + $0xe0] sm:$0xff] %v376
  %441 = vst [vmem:[%s3 + $0xe8] sm:$0xff] %v377
  %442 = vst [vmem:[%s3 + $0xf0] sm:$0xff] %v378
  %443 = vst [vmem:[%s3 + $0xf8] sm:$0xff] %v379
  %444 = vst [vmem:[%s3 + $0x100] sm:$0xff] %v380
  %445 = vst [vmem:[%s3 + $0x108] sm:$0xff] %v381
  %446 = vst [vmem:[%s3 + $0x110] sm:$0xff] %v382
  %447 = vst [vmem:[%s3 + $0x118] sm:$0xff] %v383
  %448 = vst [vmem:[%s3 + $0x120] sm:$0xff] %v384
  %449 = vst [vmem:[%s3 + $0x128] sm:$0xff] %v385
  %450 = vst [vmem:[%s3 + $0x130] sm:$0xff] %v386
  %451 = vst [vmem:[%s3 + $0x138] sm:$0xff] %v387
  %452 = vst [vmem:[%s3 + $0x140] sm:$0xff] %v388
  %453 = vst [vmem:[%s3 + $0x148] sm:$0xff] %v389
  %454 = vst [vmem:[%s3 + $0x150] sm:$0xff] %v390
  %455 = vst [vmem:[%s3 + $0x158] sm:$0xff] %v391
  %456 = vst [vmem:[%s3 + $0x160] sm:$0xff] %v392
  %457 = vst [vmem:[%s3 + $0x168] sm:$0xff] %v393
  %458 = vst [vmem:[%s3 + $0x170] sm:$0xff] %v394
  %459 = vst [vmem:[%s3 + $0x178] sm:$0xff] %v395
  %460 = vst [vmem:[%s3 + $0x180] sm:$0xff] %v396
  %461 = vst [vmem:[%s3 + $0x188] sm:$0xff] %v397
  %462 = vst [vmem:[%s3 + $0x190] sm:$0xff] %v398
  %463 = vst [vmem:[%s3 + $0x198] sm:$0xff] %v399
  %464 = vst [vmem:[%s3 + $0x1a0] sm:$0xff] %v400
  %465 = vst [vmem:[%s3 + $0x1a8] sm:$0xff] %v401
  %466 = vst [vmem:[%s3 + $0x1b0] sm:$0xff] %v402
  %467 = vst [vmem:[%s3 + $0x1b8] sm:$0xff] %v403
  %468 = vst [vmem:[%s3 + $0x1c0] sm:$0xff] %v404
  %469 = vst [vmem:[%s3 + $0x1c8] sm:$0xff] %v405
  %470 = vst [vmem:[%s3 + $0x1d0] sm:$0xff] %v406
  %471 = vst [vmem:[%s3 + $0x1d8] sm:$0xff] %v407
  %472 = vst [vmem:[%s3 + $0x1e0] sm:$0xff] %v408
  %473 = vst [vmem:[%s3 + $0x1e8] sm:$0xff] %v409
  %474 = vst [vmem:[%s3 + $0x1f0] sm:$0xff] %v410
  %475 = vst [vmem:[%s3 + $0x1f8] sm:$0xff] %v411
  // Predicated region
  $region14: #{_lambda_.10} parent=0 // pred_check
    _
  $region15: #{_lambda_.10} parent=0 // pred_check_branch
    %477 = sbr.rel (0) target = $region17
  $region16: #{_lambda_.10} parent=0 // pred_region
    _
  $region17: #{_lambda_.10} parent=0 // pred_fallthru
    _
  // Predicated region
  $region18: #{_lambda_.10} parent=0 // pred_check
    _
  $region19: #{_lambda_.10} parent=0 // pred_check_branch
    %479 = sbr.rel (0) target = $region21
  $region20: #{_lambda_.10} parent=0 // pred_region
    _
  $region21: #{_lambda_.10} parent=0 // pred_fallthru
    _

// kernel: _lambda_.12
$region0: #{_lambda_.12}
  #allocation0 [shape = 'u32[]', space=smem, size = 0x4, offset = 0x4, fixed_abs, tag = 'smem constant byte address 0x4 - core index']
  #allocation1 [shape = 'u32[144,128]{1,0:T(1,128)}', space=vmem, size = 0x12000, scoped, tag = 'internal scratch']
  %s0 = inlined_call_operand.vmem [shape: f32[128,256], index: 0, kind: input, shape index: {}]
  %s1 = inlined_call_operand.vmem [shape: f32[1,256], index: 1, kind: input, shape index: {}]
  %s2 = inlined_call_operand.vmem [shape: f32[1,256], index: 2, kind: input, shape index: {}]
  %s3 = inlined_call_operand.vmem [shape: f32[128,256], index: 3, kind: output, shape index: {}]
  %s4 = sld [smem:[#allocation0]]
  $region22: #{_lambda_.12} parent=0
    _
  %s6 = ssub.s32 1, %s4
  %s7 = scalar_select 0, %s6, %s4
  // Predicated region
  $region2: #{_lambda_.12} parent=0 // pred_check
    _
  $region3: #{_lambda_.12} parent=0 // pred_check_branch
    %9 = sbr.rel (0) target = $region5
  $region4: #{_lambda_.12} parent=0 // pred_region
    _
  $region5: #{_lambda_.12} parent=0 // pred_fallthru
    _
  // Predicated region
  $region6: #{_lambda_.12} parent=0 // pred_check
    _
  $region7: #{_lambda_.12} parent=0 // pred_check_branch
    %11 = sbr.rel (0) target = $region9
  $region8: #{_lambda_.12} parent=0 // pred_region
    _
  $region9: #{_lambda_.12} parent=0 // pred_fallthru
    _
  // Predicated region
  $region10: #{_lambda_.12} parent=0 // pred_check
    _
  $region11: #{_lambda_.12} parent=0 // pred_check_branch
    %13 = sbr.rel (0) target = $region13
  $region12: #{_lambda_.12} parent=0 // pred_region
    _
  $region13: #{_lambda_.12} parent=0 // pred_fallthru
    _
  %v14 = vld [vmem:[%s0] sm:$0xff]
  %v15 = vld [vmem:[%s0 + $0x8] sm:$0xff]
  %v16 = vld [vmem:[%s0 + $0x10] sm:$0xff]
  %v17 = vld [vmem:[%s0 + $0x18] sm:$0xff]
  %v18 = vld [vmem:[%s0 + $0x20] sm:$0xff]
  %v19 = vld [vmem:[%s0 + $0x28] sm:$0xff]
  %v20 = vld [vmem:[%s0 + $0x30] sm:$0xff]
  %v21 = vld [vmem:[%s0 + $0x38] sm:$0xff]
  %v22 = vld [vmem:[%s0 + $0x40] sm:$0xff]
  %v23 = vld [vmem:[%s0 + $0x48] sm:$0xff]
  %v24 = vld [vmem:[%s0 + $0x50] sm:$0xff]
  %v25 = vld [vmem:[%s0 + $0x58] sm:$0xff]
  %v26 = vld [vmem:[%s0 + $0x60] sm:$0xff]
  %v27 = vld [vmem:[%s0 + $0x68] sm:$0xff]
  %v28 = vld [vmem:[%s0 + $0x70] sm:$0xff]
  %v29 = vld [vmem:[%s0 + $0x78] sm:$0xff]
  %v30 = vld [vmem:[%s0 + $0x80] sm:$0xff]
  %v31 = vld [vmem:[%s0 + $0x88] sm:$0xff]
  %v32 = vld [vmem:[%s0 + $0x90] sm:$0xff]
  %v33 = vld [vmem:[%s0 + $0x98] sm:$0xff]
  %v34 = vld [vmem:[%s0 + $0xa0] sm:$0xff]
  %v35 = vld [vmem:[%s0 + $0xa8] sm:$0xff]
  %v36 = vld [vmem:[%s0 + $0xb0] sm:$0xff]
  %v37 = vld [vmem:[%s0 + $0xb8] sm:$0xff]
  %v38 = vld [vmem:[%s0 + $0xc0] sm:$0xff]
  %v39 = vld [vmem:[%s0 + $0xc8] sm:$0xff]
  %v40 = vld [vmem:[%s0 + $0xd0] sm:$0xff]
  %v41 = vld [vmem:[%s0 + $0xd8] sm:$0xff]
  %v42 = vld [vmem:[%s0 + $0xe0] sm:$0xff]
  %v43 = vld [vmem:[%s0 + $0xe8] sm:$0xff]
  %v44 = vld [vmem:[%s0 + $0xf0] sm:$0xff]
  %v45 = vld [vmem:[%s0 + $0xf8] sm:$0xff]
  %v46 = vld [vmem:[%s1] sm:$0x3]
  %v48 = vlaneseq
  %v49 = vshrl.u32 %v48, 7
  %v50 = vsub.s32 0, %v49
  %v51 = vrot.slane %v46, %v50
  %v52 = vlaneseq
  %v53 = vshrl.u32 %v52, 7
  %v54 = vsub.s32 1, %v53
  %v55 = vrot.slane %v46, %v54
  %v58 = vmul.f32 %v14, %v51
  %v59 = vmul.f32 %v15, %v55
  %v60 = vmul.f32 %v16, %v51
  %v61 = vmul.f32 %v17, %v55
  %v62 = vmul.f32 %v18, %v51
  %v63 = vmul.f32 %v19, %v55
  %v64 = vmul.f32 %v20, %v51
  %v65 = vmul.f32 %v21, %v55
  %v66 = vmul.f32 %v22, %v51
  %v67 = vmul.f32 %v23, %v55
  %v68 = vmul.f32 %v24, %v51
  %v69 = vmul.f32 %v25, %v55
  %v70 = vmul.f32 %v26, %v51
  %v71 = vmul.f32 %v27, %v55
  %v72 = vmul.f32 %v28, %v51
  %v73 = vmul.f32 %v29, %v55
  %v74 = vmul.f32 %v30, %v51
  %v75 = vmul.f32 %v31, %v55
  %v76 = vmul.f32 %v32, %v51
  %v77 = vmul.f32 %v33, %v55
  %v78 = vmul.f32 %v34, %v51
  %v79 = vmul.f32 %v35, %v55
  %v80 = vmul.f32 %v36, %v51
  %v81 = vmul.f32 %v37, %v55
  %v82 = vmul.f32 %v38, %v51
  %v83 = vmul.f32 %v39, %v55
  %v84 = vmul.f32 %v40, %v51
  %v85 = vmul.f32 %v41, %v55
  %v86 = vmul.f32 %v42, %v51
  %v87 = vmul.f32 %v43, %v55
  %v88 = vmul.f32 %v44, %v51
  %v89 = vmul.f32 %v45, %v55
  %v90 = vld [vmem:[%s2] sm:$0x3]
  %v92 = vlaneseq
  %v93 = vshrl.u32 %v92, 7
  %v94 = vsub.s32 0, %v93
  %v95 = vrot.slane %v90, %v94
  %v96 = vlaneseq
  %v97 = vshrl.u32 %v96, 7
  %v98 = vsub.s32 1, %v97
  %v99 = vrot.slane %v90, %v98
  %v102 = vadd.f32 %v58, %v95
  %v103 = vadd.f32 %v59, %v99
  %v104 = vadd.f32 %v60, %v95
  %v105 = vadd.f32 %v61, %v99
  %v106 = vadd.f32 %v62, %v95
  %v107 = vadd.f32 %v63, %v99
  %v108 = vadd.f32 %v64, %v95
  %v109 = vadd.f32 %v65, %v99
  %v110 = vadd.f32 %v66, %v95
  %v111 = vadd.f32 %v67, %v99
  %v112 = vadd.f32 %v68, %v95
  %v113 = vadd.f32 %v69, %v99
  %v114 = vadd.f32 %v70, %v95
  %v115 = vadd.f32 %v71, %v99
  %v116 = vadd.f32 %v72, %v95
  %v117 = vadd.f32 %v73, %v99
  %v118 = vadd.f32 %v74, %v95
  %v119 = vadd.f32 %v75, %v99
  %v120 = vadd.f32 %v76, %v95
  %v121 = vadd.f32 %v77, %v99
  %v122 = vadd.f32 %v78, %v95
  %v123 = vadd.f32 %v79, %v99
  %v124 = vadd.f32 %v80, %v95
  %v125 = vadd.f32 %v81, %v99
  %v126 = vadd.f32 %v82, %v95
  %v127 = vadd.f32 %v83, %v99
  %v128 = vadd.f32 %v84, %v95
  %v129 = vadd.f32 %v85, %v99
  %v130 = vadd.f32 %v86, %v95
  %v131 = vadd.f32 %v87, %v99
  %v132 = vadd.f32 %v88, %v95
  %v133 = vadd.f32 %v89, %v99
  %vm134 = vcmp.ge.f32.partialorder %v102, 0.0
  %vm135 = vcmp.ge.f32.partialorder %v103, 0.0
  %vm136 = vcmp.ge.f32.partialorder %v104, 0.0
  %vm137 = vcmp.ge.f32.partialorder %v105, 0.0
  %vm138 = vcmp.ge.f32.partialorder %v106, 0.0
  %vm139 = vcmp.ge.f32.partialorder %v107, 0.0
  %vm140 = vcmp.ge.f32.partialorder %v108, 0.0
  %vm141 = vcmp.ge.f32.partialorder %v109, 0.0
  %vm142 = vcmp.ge.f32.partialorder %v110, 0.0
  %vm143 = vcmp.ge.f32.partialorder %v111, 0.0
  %vm144 = vcmp.ge.f32.partialorder %v112, 0.0
  %vm145 = vcmp.ge.f32.partialorder %v113, 0.0
  %vm146 = vcmp.ge.f32.partialorder %v114, 0.0
  %vm147 = vcmp.ge.f32.partialorder %v115, 0.0
  %vm148 = vcmp.ge.f32.partialorder %v116, 0.0
  %vm149 = vcmp.ge.f32.partialorder %v117, 0.0
  %vm150 = vcmp.ge.f32.partialorder %v118, 0.0
  %vm151 = vcmp.ge.f32.partialorder %v119, 0.0
  %vm152 = vcmp.ge.f32.partialorder %v120, 0.0
  %vm153 = vcmp.ge.f32.partialorder %v121, 0.0
  %vm154 = vcmp.ge.f32.partialorder %v122, 0.0
  %vm155 = vcmp.ge.f32.partialorder %v123, 0.0
  %vm156 = vcmp.ge.f32.partialorder %v124, 0.0
  %vm157 = vcmp.ge.f32.partialorder %v125, 0.0
  %vm158 = vcmp.ge.f32.partialorder %v126, 0.0
  %vm159 = vcmp.ge.f32.partialorder %v127, 0.0
  %vm160 = vcmp.ge.f32.partialorder %v128, 0.0
  %vm161 = vcmp.ge.f32.partialorder %v129, 0.0
  %vm162 = vcmp.ge.f32.partialorder %v130, 0.0
  %vm163 = vcmp.ge.f32.partialorder %v131, 0.0
  %vm164 = vcmp.ge.f32.partialorder %v132, 0.0
  %vm165 = vcmp.ge.f32.partialorder %v133, 0.0
  %v166 = vmul.f32 %v102, 0.2
  %v167 = vmul.f32 %v103, 0.2
  %v168 = vmul.f32 %v104, 0.2
  %v169 = vmul.f32 %v105, 0.2
  %v170 = vmul.f32 %v106, 0.2
  %v171 = vmul.f32 %v107, 0.2
  %v172 = vmul.f32 %v108, 0.2
  %v173 = vmul.f32 %v109, 0.2
  %v174 = vmul.f32 %v110, 0.2
  %v175 = vmul.f32 %v111, 0.2
  %v176 = vmul.f32 %v112, 0.2
  %v177 = vmul.f32 %v113, 0.2
  %v178 = vmul.f32 %v114, 0.2
  %v179 = vmul.f32 %v115, 0.2
  %v180 = vmul.f32 %v116, 0.2
  %v181 = vmul.f32 %v117, 0.2
  %v182 = vmul.f32 %v118, 0.2
  %v183 = vmul.f32 %v119, 0.2
  %v184 = vmul.f32 %v120, 0.2
  %v185 = vmul.f32 %v121, 0.2
  %v186 = vmul.f32 %v122, 0.2
  %v187 = vmul.f32 %v123, 0.2
  %v188 = vmul.f32 %v124, 0.2
  %v189 = vmul.f32 %v125, 0.2
  %v190 = vmul.f32 %v126, 0.2
  %v191 = vmul.f32 %v127, 0.2
  %v192 = vmul.f32 %v128, 0.2
  %v193 = vmul.f32 %v129, 0.2
  %v194 = vmul.f32 %v130, 0.2
  %v195 = vmul.f32 %v131, 0.2
  %v196 = vmul.f32 %v132, 0.2
  %v197 = vmul.f32 %v133, 0.2
  %v198 = vsel %vm134, %v102, %v166
  %v199 = vsel %vm135, %v103, %v167
  %v200 = vsel %vm136, %v104, %v168
  %v201 = vsel %vm137, %v105, %v169
  %v202 = vsel %vm138, %v106, %v170
  %v203 = vsel %vm139, %v107, %v171
  %v204 = vsel %vm140, %v108, %v172
  %v205 = vsel %vm141, %v109, %v173
  %v206 = vsel %vm142, %v110, %v174
  %v207 = vsel %vm143, %v111, %v175
  %v208 = vsel %vm144, %v112, %v176
  %v209 = vsel %vm145, %v113, %v177
  %v210 = vsel %vm146, %v114, %v178
  %v211 = vsel %vm147, %v115, %v179
  %v212 = vsel %vm148, %v116, %v180
  %v213 = vsel %vm149, %v117, %v181
  %v214 = vsel %vm150, %v118, %v182
  %v215 = vsel %vm151, %v119, %v183
  %v216 = vsel %vm152, %v120, %v184
  %v217 = vsel %vm153, %v121, %v185
  %v218 = vsel %vm154, %v122, %v186
  %v219 = vsel %vm155, %v123, %v187
  %v220 = vsel %vm156, %v124, %v188
  %v221 = vsel %vm157, %v125, %v189
  %v222 = vsel %vm158, %v126, %v190
  %v223 = vsel %vm159, %v127, %v191
  %v224 = vsel %vm160, %v128, %v192
  %v225 = vsel %vm161, %v129, %v193
  %v226 = vsel %vm162, %v130, %v194
  %v227 = vsel %vm163, %v131, %v195
  %v228 = vsel %vm164, %v132, %v196
  %v229 = vsel %vm165, %v133, %v197
  %230 = vst [vmem:[%s3] sm:$0xff] %v198
  %231 = vst [vmem:[%s3 + $0x8] sm:$0xff] %v199
  %232 = vst [vmem:[%s3 + $0x10] sm:$0xff] %v200
  %233 = vst [vmem:[%s3 + $0x18] sm:$0xff] %v201
  %234 = vst [vmem:[%s3 + $0x20] sm:$0xff] %v202
  %235 = vst [vmem:[%s3 + $0x28] sm:$0xff] %v203
  %236 = vst [vmem:[%s3 + $0x30] sm:$0xff] %v204
  %237 = vst [vmem:[%s3 + $0x38] sm:$0xff] %v205
  %238 = vst [vmem:[%s3 + $0x40] sm:$0xff] %v206
  %239 = vst [vmem:[%s3 + $0x48] sm:$0xff] %v207
  %240 = vst [vmem:[%s3 + $0x50] sm:$0xff] %v208
  %241 = vst [vmem:[%s3 + $0x58] sm:$0xff] %v209
  %242 = vst [vmem:[%s3 + $0x60] sm:$0xff] %v210
  %243 = vst [vmem:[%s3 + $0x68] sm:$0xff] %v211
  %244 = vst [vmem:[%s3 + $0x70] sm:$0xff] %v212
  %245 = vst [vmem:[%s3 + $0x78] sm:$0xff] %v213
  %246 = vst [vmem:[%s3 + $0x80] sm:$0xff] %v214
  %247 = vst [vmem:[%s3 + $0x88] sm:$0xff] %v215
  %248 = vst [vmem:[%s3 + $0x90] sm:$0xff] %v216
  %249 = vst [vmem:[%s3 + $0x98] sm:$0xff] %v217
  %250 = vst [vmem:[%s3 + $0xa0] sm:$0xff] %v218
  %251 = vst [vmem:[%s3 + $0xa8] sm:$0xff] %v219
  %252 = vst [vmem:[%s3 + $0xb0] sm:$0xff] %v220
  %253 = vst [vmem:[%s3 + $0xb8] sm:$0xff] %v221
  %254 = vst [vmem:[%s3 + $0xc0] sm:$0xff] %v222
  %255 = vst [vmem:[%s3 + $0xc8] sm:$0xff] %v223
  %256 = vst [vmem:[%s3 + $0xd0] sm:$0xff] %v224
  %257 = vst [vmem:[%s3 + $0xd8] sm:$0xff] %v225
  %258 = vst [vmem:[%s3 + $0xe0] sm:$0xff] %v226
  %259 = vst [vmem:[%s3 + $0xe8] sm:$0xff] %v227
  %260 = vst [vmem:[%s3 + $0xf0] sm:$0xff] %v228
  %261 = vst [vmem:[%s3 + $0xf8] sm:$0xff] %v229
  // Predicated region
  $region14: #{_lambda_.12} parent=0 // pred_check
    _
  $region15: #{_lambda_.12} parent=0 // pred_check_branch
    %263 = sbr.rel (0) target = $region17
  $region16: #{_lambda_.12} parent=0 // pred_region
    _
  $region17: #{_lambda_.12} parent=0 // pred_fallthru
    _
  // Predicated region
  $region18: #{_lambda_.12} parent=0 // pred_check
    _
  $region19: #{_lambda_.12} parent=0 // pred_check_branch
    %265 = sbr.rel (0) target = $region21
  $region20: #{_lambda_.12} parent=0 // pred_region
    _
  $region21: #{_lambda_.12} parent=0 // pred_fallthru
    _

// kernel: _lambda_.11
$region0: #{_lambda_.11}
  #allocation0 [shape = 'u32[]', space=smem, size = 0x4, offset = 0x4, fixed_abs, tag = 'smem constant byte address 0x4 - core index']
  #allocation1 [shape = 'u32[144,128]{1,0:T(1,128)}', space=vmem, size = 0x12000, scoped, tag = 'internal scratch']
  %s0 = inlined_call_operand.vmem [shape: bf16[128,512], index: 0, kind: input, shape index: {}]
  %s1 = inlined_call_operand.vmem [shape: bf16[512,256], index: 1, kind: input, shape index: {}]
  %s2 = inlined_call_operand.vmem [shape: f32[128,256], index: 2, kind: output, shape index: {0}]
  %s3 = inlined_call_operand.vmem [shape: f32[1,2,256], index: 3, kind: output, shape index: {1}]
  %4 = xla_tuple %s2, %s3
  %s5 = sld [smem:[#allocation0]]
  $region26: #{_lambda_.11} parent=0
    _
  %s7 = ssub.s32 1, %s5
  %s8 = scalar_select 0, %s7, %s5
  // Predicated region
  $region2: #{_lambda_.11} parent=0 // pred_check
    _
  $region3: #{_lambda_.11} parent=0 // pred_check_branch
    %10 = sbr.rel (0) target = $region5
  $region4: #{_lambda_.11} parent=0 // pred_region
    _
  $region5: #{_lambda_.11} parent=0 // pred_fallthru
    _
  // Predicated region
  $region6: #{_lambda_.11} parent=0 // pred_check
    _
  $region7: #{_lambda_.11} parent=0 // pred_check_branch
    %12 = sbr.rel (0) target = $region9
  $region8: #{_lambda_.11} parent=0 // pred_region
    _
  $region9: #{_lambda_.11} parent=0 // pred_fallthru
    _
  %v13 = vld [vmem:[%s0] sm:$0xff]
  %v14 = vld [vmem:[%s0 + $0x8] sm:$0xff]
  %v15 = vld [vmem:[%s0 + $0x10] sm:$0xff]
  %v16 = vld [vmem:[%s0 + $0x18] sm:$0xff]
  %v17 = vld [vmem:[%s0 + $0x20] sm:$0xff]
  %v18 = vld [vmem:[%s0 + $0x28] sm:$0xff]
  %v19 = vld [vmem:[%s0 + $0x30] sm:$0xff]
  %v20 = vld [vmem:[%s0 + $0x38] sm:$0xff]
  %v21 = vld [vmem:[%s0 + $0x40] sm:$0xff]
  %v22 = vld [vmem:[%s0 + $0x48] sm:$0xff]
  %v23 = vld [vmem:[%s0 + $0x50] sm:$0xff]
  %v24 = vld [vmem:[%s0 + $0x58] sm:$0xff]
  %v25 = vld [vmem:[%s0 + $0x60] sm:$0xff]
  %v26 = vld [vmem:[%s0 + $0x68] sm:$0xff]
  %v27 = vld [vmem:[%s0 + $0x70] sm:$0xff]
  %v28 = vld [vmem:[%s0 + $0x78] sm:$0xff]
  %v29 = vld [vmem:[%s0 + $0x80] sm:$0xff]
  %v30 = vld [vmem:[%s0 + $0x88] sm:$0xff]
  %v31 = vld [vmem:[%s0 + $0x90] sm:$0xff]
  %v32 = vld [vmem:[%s0 + $0x98] sm:$0xff]
  %v33 = vld [vmem:[%s0 + $0xa0] sm:$0xff]
  %v34 = vld [vmem:[%s0 + $0xa8] sm:$0xff]
  %v35 = vld [vmem:[%s0 + $0xb0] sm:$0xff]
  %v36 = vld [vmem:[%s0 + $0xb8] sm:$0xff]
  %v37 = vld [vmem:[%s0 + $0xc0] sm:$0xff]
  %v38 = vld [vmem:[%s0 + $0xc8] sm:$0xff]
  %v39 = vld [vmem:[%s0 + $0xd0] sm:$0xff]
  %v40 = vld [vmem:[%s0 + $0xd8] sm:$0xff]
  %v41 = vld [vmem:[%s0 + $0xe0] sm:$0xff]
  %v42 = vld [vmem:[%s0 + $0xe8] sm:$0xff]
  %v43 = vld [vmem:[%s0 + $0xf0] sm:$0xff]
  %v44 = vld [vmem:[%s0 + $0xf8] sm:$0xff]
  %v45 = vld [vmem:[%s1] sm:$0xff]
  %v46 = vld [vmem:[%s1 + $0x8] sm:$0xff]
  %v47 = vld [vmem:[%s1 + $0x10] sm:$0xff]
  %v48 = vld [vmem:[%s1 + $0x18] sm:$0xff]
  %v49 = vld [vmem:[%s1 + $0x20] sm:$0xff]
  %v50 = vld [vmem:[%s1 + $0x28] sm:$0xff]
  %v51 = vld [vmem:[%s1 + $0x30] sm:$0xff]
  %v52 = vld [vmem:[%s1 + $0x38] sm:$0xff]
  %v53 = vld [vmem:[%s1 + $0x40] sm:$0xff]
  %v54 = vld [vmem:[%s1 + $0x48] sm:$0xff]
  %v55 = vld [vmem:[%s1 + $0x50] sm:$0xff]
  %v56 = vld [vmem:[%s1 + $0x58] sm:$0xff]
  %v57 = vld [vmem:[%s1 + $0x60] sm:$0xff]
  %v58 = vld [vmem:[%s1 + $0x68] sm:$0xff]
  %v59 = vld [vmem:[%s1 + $0x70] sm:$0xff]
  %v60 = vld [vmem:[%s1 + $0x78] sm:$0xff]
  %v61 = vld [vmem:[%s1 + $0x80] sm:$0xff]
  %v62 = vld [vmem:[%s1 + $0x88] sm:$0xff]
  %v63 = vld [vmem:[%s1 + $0x90] sm:$0xff]
  %v64 = vld [vmem:[%s1 + $0x98] sm:$0xff]
  %v65 = vld [vmem:[%s1 + $0xa0] sm:$0xff]
  %v66 = vld [vmem:[%s1 + $0xa8] sm:$0xff]
  %v67 = vld [vmem:[%s1 + $0xb0] sm:$0xff]
  %v68 = vld [vmem:[%s1 + $0xb8] sm:$0xff]
  %v69 = vld [vmem:[%s1 + $0xc0] sm:$0xff]
  %v70 = vld [vmem:[%s1 + $0xc8] sm:$0xff]
  %v71 = vld [vmem:[%s1 + $0xd0] sm:$0xff]
  %v72 = vld [vmem:[%s1 + $0xd8] sm:$0xff]
  %v73 = vld [vmem:[%s1 + $0xe0] sm:$0xff]
  %v74 = vld [vmem:[%s1 + $0xe8] sm:$0xff]
  %v75 = vld [vmem:[%s1 + $0xf0] sm:$0xff]
  %v76 = vld [vmem:[%s1 + $0xf8] sm:$0xff]
  %v77 = vld [vmem:[%s1 + $0x100] sm:$0xff]
  %v78 = vld [vmem:[%s1 + $0x108] sm:$0xff]
  %v79 = vld [vmem:[%s1 + $0x110] sm:$0xff]
  %v80 = vld [vmem:[%s1 + $0x118] sm:$0xff]
  %v81 = vld [vmem:[%s1 + $0x120] sm:$0xff]
  %v82 = vld [vmem:[%s1 + $0x128] sm:$0xff]
  %v83 = vld [vmem:[%s1 + $0x130] sm:$0xff]
  %v84 = vld [vmem:[%s1 + $0x138] sm:$0xff]
  %v85 = vld [vmem:[%s1 + $0x140] sm:$0xff]
  %v86 = vld [vmem:[%s1 + $0x148] sm:$0xff]
  %v87 = vld [vmem:[%s1 + $0x150] sm:$0xff]
  %v88 = vld [vmem:[%s1 + $0x158] sm:$0xff]
  %v89 = vld [vmem:[%s1 + $0x160] sm:$0xff]
  %v90 = vld [vmem:[%s1 + $0x168] sm:$0xff]
  %v91 = vld [vmem:[%s1 + $0x170] sm:$0xff]
  %v92 = vld [vmem:[%s1 + $0x178] sm:$0xff]
  %v93 = vld [vmem:[%s1 + $0x180] sm:$0xff]
  %v94 = vld [vmem:[%s1 + $0x188] sm:$0xff]
  %v95 = vld [vmem:[%s1 + $0x190] sm:$0xff]
  %v96 = vld [vmem:[%s1 + $0x198] sm:$0xff]
  %v97 = vld [vmem:[%s1 + $0x1a0] sm:$0xff]
  %v98 = vld [vmem:[%s1 + $0x1a8] sm:$0xff]
  %v99 = vld [vmem:[%s1 + $0x1b0] sm:$0xff]
  %v100 = vld [vmem:[%s1 + $0x1b8] sm:$0xff]
  %v101 = vld [vmem:[%s1 + $0x1c0] sm:$0xff]
  %v102 = vld [vmem:[%s1 + $0x1c8] sm:$0xff]
  %v103 = vld [vmem:[%s1 + $0x1d0] sm:$0xff]
  %v104 = vld [vmem:[%s1 + $0x1d8] sm:$0xff]
  %v105 = vld [vmem:[%s1 + $0x1e0] sm:$0xff]
  %v106 = vld [vmem:[%s1 + $0x1e8] sm:$0xff]
  %v107 = vld [vmem:[%s1 + $0x1f0] sm:$0xff]
  %v108 = vld [vmem:[%s1 + $0x1f8] sm:$0xff]
  %v141 = vunpack.c.l.b16 %v13
  %v142 = vunpack.c.h.b16 %v13
  %v143 = vunpack.c.l.b16 %v14
  %v144 = vunpack.c.h.b16 %v14
  %v145 = vunpack.c.l.b16 %v15
  %v146 = vunpack.c.h.b16 %v15
  %v147 = vunpack.c.l.b16 %v16
  %v148 = vunpack.c.h.b16 %v16
  %v149 = vunpack.c.l.b16 %v17
  %v150 = vunpack.c.h.b16 %v17
  %v151 = vunpack.c.l.b16 %v18
  %v152 = vunpack.c.h.b16 %v18
  %v153 = vunpack.c.l.b16 %v19
  %v154 = vunpack.c.h.b16 %v19
  %v155 = vunpack.c.l.b16 %v20
  %v156 = vunpack.c.h.b16 %v20
  %v157 = vunpack.c.l.b16 %v21
  %v158 = vunpack.c.h.b16 %v21
  %v159 = vunpack.c.l.b16 %v22
  %v160 = vunpack.c.h.b16 %v22
  %v161 = vunpack.c.l.b16 %v23
  %v162 = vunpack.c.h.b16 %v23
  %v163 = vunpack.c.l.b16 %v24
  %v164 = vunpack.c.h.b16 %v24
  %v165 = vunpack.c.l.b16 %v25
  %v166 = vunpack.c.h.b16 %v25
  %v167 = vunpack.c.l.b16 %v26
  %v168 = vunpack.c.h.b16 %v26
  %v169 = vunpack.c.l.b16 %v27
  %v170 = vunpack.c.h.b16 %v27
  %v171 = vunpack.c.l.b16 %v28
  %v172 = vunpack.c.h.b16 %v28
  %v173 = vunpack.c.l.b16 %v29
  %v174 = vunpack.c.h.b16 %v29
  %v175 = vunpack.c.l.b16 %v30
  %v176 = vunpack.c.h.b16 %v30
  %v177 = vunpack.c.l.b16 %v31
  %v178 = vunpack.c.h.b16 %v31
  %v179 = vunpack.c.l.b16 %v32
  %v180 = vunpack.c.h.b16 %v32
  %v181 = vunpack.c.l.b16 %v33
  %v182 = vunpack.c.h.b16 %v33
  %v183 = vunpack.c.l.b16 %v34
  %v184 = vunpack.c.h.b16 %v34
  %v185 = vunpack.c.l.b16 %v35
  %v186 = vunpack.c.h.b16 %v35
  %v187 = vunpack.c.l.b16 %v36
  %v188 = vunpack.c.h.b16 %v36
  %v189 = vunpack.c.l.b16 %v37
  %v190 = vunpack.c.h.b16 %v37
  %v191 = vunpack.c.l.b16 %v38
  %v192 = vunpack.c.h.b16 %v38
  %v193 = vunpack.c.l.b16 %v39
  %v194 = vunpack.c.h.b16 %v39
  %v195 = vunpack.c.l.b16 %v40
  %v196 = vunpack.c.h.b16 %v40
  %v197 = vunpack.c.l.b16 %v41
  %v198 = vunpack.c.h.b16 %v41
  %v199 = vunpack.c.l.b16 %v42
  %v200 = vunpack.c.h.b16 %v42
  %v201 = vunpack.c.l.b16 %v43
  %v202 = vunpack.c.h.b16 %v43
  %v203 = vunpack.c.l.b16 %v44
  %v204 = vunpack.c.h.b16 %v44
  %v205 = vpack.c.b16 %v145, %v141
  %v206 = vpack.c.b16 %v146, %v142
  %v207 = vpack.c.b16 %v147, %v143
  %v208 = vpack.c.b16 %v148, %v144
  %v209 = vpack.c.b16 %v153, %v149
  %v210 = vpack.c.b16 %v154, %v150
  %v211 = vpack.c.b16 %v155, %v151
  %v212 = vpack.c.b16 %v156, %v152
  %v213 = vpack.c.b16 %v161, %v157
  %v214 = vpack.c.b16 %v162, %v158
  %v215 = vpack.c.b16 %v163, %v159
  %v216 = vpack.c.b16 %v164, %v160
  %v217 = vpack.c.b16 %v169, %v165
  %v218 = vpack.c.b16 %v170, %v166
  %v219 = vpack.c.b16 %v171, %v167
  %v220 = vpack.c.b16 %v172, %v168
  %v221 = vpack.c.b16 %v177, %v173
  %v222 = vpack.c.b16 %v178, %v174
  %v223 = vpack.c.b16 %v179, %v175
  %v224 = vpack.c.b16 %v180, %v176
  %v225 = vpack.c.b16 %v185, %v181
  %v226 = vpack.c.b16 %v186, %v182
  %v227 = vpack.c.b16 %v187, %v183
  %v228 = vpack.c.b16 %v188, %v184
  %v229 = vpack.c.b16 %v193, %v189
  %v230 = vpack.c.b16 %v194, %v190
  %v231 = vpack.c.b16 %v195, %v191
  %v232 = vpack.c.b16 %v196, %v192
  %v233 = vpack.c.b16 %v201, %v197
  %v234 = vpack.c.b16 %v202, %v198
  %v235 = vpack.c.b16 %v203, %v199
  %v236 = vpack.c.b16 %v204, %v200
  %v333 = vunpack.c.l.b16 %v45
  %v334 = vunpack.c.h.b16 %v45
  %v335 = vunpack.c.l.b16 %v46
  %v336 = vunpack.c.h.b16 %v46
  %v337 = vunpack.c.l.b16 %v47
  %v338 = vunpack.c.h.b16 %v47
  %v339 = vunpack.c.l.b16 %v48
  %v340 = vunpack.c.h.b16 %v48
  %v341 = vunpack.c.l.b16 %v49
  %v342 = vunpack.c.h.b16 %v49
  %v343 = vunpack.c.l.b16 %v50
  %v344 = vunpack.c.h.b16 %v50
  %v345 = vunpack.c.l.b16 %v51
  %v346 = vunpack.c.h.b16 %v51
  %v347 = vunpack.c.l.b16 %v52
  %v348 = vunpack.c.h.b16 %v52
  %v349 = vunpack.c.l.b16 %v53
  %v350 = vunpack.c.h.b16 %v53
  %v351 = vunpack.c.l.b16 %v54
  %v352 = vunpack.c.h.b16 %v54
  %v353 = vunpack.c.l.b16 %v55
  %v354 = vunpack.c.h.b16 %v55
  %v355 = vunpack.c.l.b16 %v56
  %v356 = vunpack.c.h.b16 %v56
  %v357 = vunpack.c.l.b16 %v57
  %v358 = vunpack.c.h.b16 %v57
  %v359 = vunpack.c.l.b16 %v58
  %v360 = vunpack.c.h.b16 %v58
  %v361 = vunpack.c.l.b16 %v59
  %v362 = vunpack.c.h.b16 %v59
  %v363 = vunpack.c.l.b16 %v60
  %v364 = vunpack.c.h.b16 %v60
  %v365 = vunpack.c.l.b16 %v61
  %v366 = vunpack.c.h.b16 %v61
  %v367 = vunpack.c.l.b16 %v62
  %v368 = vunpack.c.h.b16 %v62
  %v369 = vunpack.c.l.b16 %v63
  %v370 = vunpack.c.h.b16 %v63
  %v371 = vunpack.c.l.b16 %v64
  %v372 = vunpack.c.h.b16 %v64
  %v373 = vunpack.c.l.b16 %v65
  %v374 = vunpack.c.h.b16 %v65
  %v375 = vunpack.c.l.b16 %v66
  %v376 = vunpack.c.h.b16 %v66
  %v377 = vunpack.c.l.b16 %v67
  %v378 = vunpack.c.h.b16 %v67
  %v379 = vunpack.c.l.b16 %v68
  %v380 = vunpack.c.h.b16 %v68
  %v381 = vunpack.c.l.b16 %v69
  %v382 = vunpack.c.h.b16 %v69
  %v383 = vunpack.c.l.b16 %v70
  %v384 = vunpack.c.h.b16 %v70
  %v385 = vunpack.c.l.b16 %v71
  %v386 = vunpack.c.h.b16 %v71
  %v387 = vunpack.c.l.b16 %v72
  %v388 = vunpack.c.h.b16 %v72
  %v389 = vunpack.c.l.b16 %v73
  %v390 = vunpack.c.h.b16 %v73
  %v391 = vunpack.c.l.b16 %v74
  %v392 = vunpack.c.h.b16 %v74
  %v393 = vunpack.c.l.b16 %v75
  %v394 = vunpack.c.h.b16 %v75
  %v395 = vunpack.c.l.b16 %v76
  %v396 = vunpack.c.h.b16 %v76
  %v397 = vunpack.c.l.b16 %v77
  %v398 = vunpack.c.h.b16 %v77
  %v399 = vunpack.c.l.b16 %v78
  %v400 = vunpack.c.h.b16 %v78
  %v401 = vunpack.c.l.b16 %v79
  %v402 = vunpack.c.h.b16 %v79
  %v403 = vunpack.c.l.b16 %v80
  %v404 = vunpack.c.h.b16 %v80
  %v405 = vunpack.c.l.b16 %v81
  %v406 = vunpack.c.h.b16 %v81
  %v407 = vunpack.c.l.b16 %v82
  %v408 = vunpack.c.h.b16 %v82
  %v409 = vunpack.c.l.b16 %v83
  %v410 = vunpack.c.h.b16 %v83
  %v411 = vunpack.c.l.b16 %v84
  %v412 = vunpack.c.h.b16 %v84
  %v413 = vunpack.c.l.b16 %v85
  %v414 = vunpack.c.h.b16 %v85
  %v415 = vunpack.c.l.b16 %v86
  %v416 = vunpack.c.h.b16 %v86
  %v417 = vunpack.c.l.b16 %v87
  %v418 = vunpack.c.h.b16 %v87
  %v419 = vunpack.c.l.b16 %v88
  %v420 = vunpack.c.h.b16 %v88
  %v421 = vunpack.c.l.b16 %v89
  %v422 = vunpack.c.h.b16 %v89
  %v423 = vunpack.c.l.b16 %v90
  %v424 = vunpack.c.h.b16 %v90
  %v425 = vunpack.c.l.b16 %v91
  %v426 = vunpack.c.h.b16 %v91
  %v427 = vunpack.c.l.b16 %v92
  %v428 = vunpack.c.h.b16 %v92
  %v429 = vunpack.c.l.b16 %v93
  %v430 = vunpack.c.h.b16 %v93
  %v431 = vunpack.c.l.b16 %v94
  %v432 = vunpack.c.h.b16 %v94
  %v433 = vunpack.c.l.b16 %v95
  %v434 = vunpack.c.h.b16 %v95
  %v435 = vunpack.c.l.b16 %v96
  %v436 = vunpack.c.h.b16 %v96
  %v437 = vunpack.c.l.b16 %v97
  %v438 = vunpack.c.h.b16 %v97
  %v439 = vunpack.c.l.b16 %v98
  %v440 = vunpack.c.h.b16 %v98
  %v441 = vunpack.c.l.b16 %v99
  %v442 = vunpack.c.h.b16 %v99
  %v443 = vunpack.c.l.b16 %v100
  %v444 = vunpack.c.h.b16 %v100
  %v445 = vunpack.c.l.b16 %v101
  %v446 = vunpack.c.h.b16 %v101
  %v447 = vunpack.c.l.b16 %v102
  %v448 = vunpack.c.h.b16 %v102
  %v449 = vunpack.c.l.b16 %v103
  %v450 = vunpack.c.h.b16 %v103
  %v451 = vunpack.c.l.b16 %v104
  %v452 = vunpack.c.h.b16 %v104
  %v453 = vunpack.c.l.b16 %v105
  %v454 = vunpack.c.h.b16 %v105
  %v455 = vunpack.c.l.b16 %v106
  %v456 = vunpack.c.h.b16 %v106
  %v457 = vunpack.c.l.b16 %v107
  %v458 = vunpack.c.h.b16 %v107
  %v459 = vunpack.c.l.b16 %v108
  %v460 = vunpack.c.h.b16 %v108
  %v461 = vpack.c.b16 %v335, %v333
  %v462 = vpack.c.b16 %v336, %v334
  %v463 = vpack.c.b16 %v339, %v337
  %v464 = vpack.c.b16 %v340, %v338
  %v465 = vpack.c.b16 %v343, %v341
  %v466 = vpack.c.b16 %v344, %v342
  %v467 = vpack.c.b16 %v347, %v345
  %v468 = vpack.c.b16 %v348, %v346
  %v469 = vpack.c.b16 %v351, %v349
  %v470 = vpack.c.b16 %v352, %v350
  %v471 = vpack.c.b16 %v355, %v353
  %v472 = vpack.c.b16 %v356, %v354
  %v473 = vpack.c.b16 %v359, %v357
  %v474 = vpack.c.b16 %v360, %v358
  %v475 = vpack.c.b16 %v363, %v361
  %v476 = vpack.c.b16 %v364, %v362
  %v477 = vpack.c.b16 %v367, %v365
  %v478 = vpack.c.b16 %v368, %v366
  %v479 = vpack.c.b16 %v371, %v369
  %v480 = vpack.c.b16 %v372, %v370
  %v481 = vpack.c.b16 %v375, %v373
  %v482 = vpack.c.b16 %v376, %v374
  %v483 = vpack.c.b16 %v379, %v377
  %v484 = vpack.c.b16 %v380, %v378
  %v485 = vpack.c.b16 %v383, %v381
  %v486 = vpack.c.b16 %v384, %v382
  %v487 = vpack.c.b16 %v387, %v385
  %v488 = vpack.c.b16 %v388, %v386
  %v489 = vpack.c.b16 %v391, %v389
  %v490 = vpack.c.b16 %v392, %v390
  %v491 = vpack.c.b16 %v395, %v393
  %v492 = vpack.c.b16 %v396, %v394
  %v493 = vpack.c.b16 %v399, %v397
  %v494 = vpack.c.b16 %v400, %v398
  %v495 = vpack.c.b16 %v403, %v401
  %v496 = vpack.c.b16 %v404, %v402
  %v497 = vpack.c.b16 %v407, %v405
  %v498 = vpack.c.b16 %v408, %v406
  %v499 = vpack.c.b16 %v411, %v409
  %v500 = vpack.c.b16 %v412, %v410
  %v501 = vpack.c.b16 %v415, %v413
  %v502 = vpack.c.b16 %v416, %v414
  %v503 = vpack.c.b16 %v419, %v417
  %v504 = vpack.c.b16 %v420, %v418
  %v505 = vpack.c.b16 %v423, %v421
  %v506 = vpack.c.b16 %v424, %v422
  %v507 = vpack.c.b16 %v427, %v425
  %v508 = vpack.c.b16 %v428, %v426
  %v509 = vpack.c.b16 %v431, %v429
  %v510 = vpack.c.b16 %v432, %v430
  %v511 = vpack.c.b16 %v435, %v433
  %v512 = vpack.c.b16 %v436, %v434
  %v513 = vpack.c.b16 %v439, %v437
  %v514 = vpack.c.b16 %v440, %v438
  %v515 = vpack.c.b16 %v443, %v441
  %v516 = vpack.c.b16 %v444, %v442
  %v517 = vpack.c.b16 %v447, %v445
  %v518 = vpack.c.b16 %v448, %v446
  %v519 = vpack.c.b16 %v451, %v449
  %v520 = vpack.c.b16 %v452, %v450
  %v521 = vpack.c.b16 %v455, %v453
  %v522 = vpack.c.b16 %v456, %v454
  %v523 = vpack.c.b16 %v459, %v457
  %v524 = vpack.c.b16 %v460, %v458
  %589 = vmatprep.subr.bf16.mxu0 %v462
  %590 = vmatpush1.bf16.msra.mxu0 %v461
  %591 = vmatprep.subr.bf16.mxu0 %v464
  %592 = vmatpush1.bf16.msra.mxu0 %v463
  %593 = vmatprep.subr.bf16.mxu0 %v466
  %594 = vmatpush1.bf16.msra.mxu0 %v465
  %595 = vmatprep.subr.bf16.mxu0 %v468
  %596 = vmatpush1.bf16.msra.mxu0 %v467
  %597 = vmatprep.subr.bf16.mxu0 %v470
  %598 = vmatpush1.bf16.msra.mxu0 %v469
  %599 = vmatprep.subr.bf16.mxu0 %v472
  %600 = vmatpush1.bf16.msra.mxu0 %v471
  %601 = vmatprep.subr.bf16.mxu0 %v474
  %602 = vmatpush1.bf16.msra.mxu0 %v473
  %603 = vmatprep.subr.bf16.mxu0 %v476
  %604 = vmatpush1.bf16.msra.mxu0 %v475
  %605 = vmatprep.subr.bf16.mxu0 %v478
  %606 = vmatpush1.bf16.msra.mxu0 %v477
  %607 = vmatprep.subr.bf16.mxu0 %v480
  %608 = vmatpush1.bf16.msra.mxu0 %v479
  %609 = vmatprep.subr.bf16.mxu0 %v482
  %610 = vmatpush1.bf16.msra.mxu0 %v481
  %611 = vmatprep.subr.bf16.mxu0 %v484
  %612 = vmatpush1.bf16.msra.mxu0 %v483
  %613 = vmatprep.subr.bf16.mxu0 %v486
  %614 = vmatpush1.bf16.msra.mxu0 %v485
  %615 = vmatprep.subr.bf16.mxu0 %v488
  %616 = vmatpush1.bf16.msra.mxu0 %v487
  %617 = vmatprep.subr.bf16.mxu0 %v490
  %618 = vmatpush1.bf16.msra.mxu0 %v489
  %619 = vmatprep.subr.bf16.mxu0 %v492
  %620 = vmatpush1.bf16.msra.mxu0 %v491
  %621 = vmatprep.mubr.bf16.mxu0 %v206
  %622 = vmatmul.mubr.bf16.gmra.mrb[0].mxu0 %v205
  %v623 = vpop.f32.mrb[0].mxu0
  %v624 = vadd.f32 0.0, %v623
  %v625 = vpop.f32.mrb[0].mxu0
  %v626 = vadd.f32 0.0, %v625
  %v627 = vpop.f32.mrb[0].mxu0
  %v628 = vadd.f32 0.0, %v627
  %v629 = vpop.f32.mrb[0].mxu0
  %v630 = vadd.f32 0.0, %v629
  %631 = vmatprep.mubr.bf16.mxu0 %v210
  %632 = vmatmul.mubr.bf16.gmra.mrb[0].mxu0 %v209
  %v633 = vpop.f32.mrb[0].mxu0
  %v634 = vadd.f32 0.0, %v633
  %v635 = vpop.f32.mrb[0].mxu0
  %v636 = vadd.f32 0.0, %v635
  %v637 = vpop.f32.mrb[0].mxu0
  %v638 = vadd.f32 0.0, %v637
  %v639 = vpop.f32.mrb[0].mxu0
  %v640 = vadd.f32 0.0, %v639
  %641 = vmatprep.mubr.bf16.mxu0 %v214
  %642 = vmatmul.mubr.bf16.gmra.mrb[0].mxu0 %v213
  %v643 = vpop.f32.mrb[0].mxu0
  %v644 = vadd.f32 0.0, %v643
  %v645 = vpop.f32.mrb[0].mxu0
  %v646 = vadd.f32 0.0, %v645
  %v647 = vpop.f32.mrb[0].mxu0
  %v648 = vadd.f32 0.0, %v647
  %v649 = vpop.f32.mrb[0].mxu0
  %v650 = vadd.f32 0.0, %v649
  %651 = vmatprep.mubr.bf16.mxu0 %v218
  %652 = vmatmul.mubr.bf16.gmra.mrb[0].mxu0 %v217
  %v653 = vpop.f32.mrb[0].mxu0
  %v654 = vadd.f32 0.0, %v653
  %v655 = vpop.f32.mrb[0].mxu0
  %v656 = vadd.f32 0.0, %v655
  %v657 = vpop.f32.mrb[0].mxu0
  %v658 = vadd.f32 0.0, %v657
  %v659 = vpop.f32.mrb[0].mxu0
  %v660 = vadd.f32 0.0, %v659
  %661 = vmatprep.mubr.bf16.mxu0 %v222
  %662 = vmatmul.mubr.bf16.gmra.mrb[0].mxu0 %v221
  %v663 = vpop.f32.mrb[0].mxu0
  %v664 = vadd.f32 0.0, %v663
  %v665 = vpop.f32.mrb[0].mxu0
  %v666 = vadd.f32 0.0, %v665
  %v667 = vpop.f32.mrb[0].mxu0
  %v668 = vadd.f32 0.0, %v667
  %v669 = vpop.f32.mrb[0].mxu0
  %v670 = vadd.f32 0.0, %v669
  %671 = vmatprep.mubr.bf16.mxu0 %v226
  %672 = vmatmul.mubr.bf16.gmra.mrb[0].mxu0 %v225
  %v673 = vpop.f32.mrb[0].mxu0
  %v674 = vadd.f32 0.0, %v673
  %v675 = vpop.f32.mrb[0].mxu0
  %v676 = vadd.f32 0.0, %v675
  %v677 = vpop.f32.mrb[0].mxu0
  %v678 = vadd.f32 0.0, %v677
  %v679 = vpop.f32.mrb[0].mxu0
  %v680 = vadd.f32 0.0, %v679
  %681 = vmatprep.mubr.bf16.mxu0 %v230
  %682 = vmatmul.mubr.bf16.gmra.mrb[0].mxu0 %v229
  %v683 = vpop.f32.mrb[0].mxu0
  %v684 = vadd.f32 0.0, %v683
  %v685 = vpop.f32.mrb[0].mxu0
  %v686 = vadd.f32 0.0, %v685
  %v687 = vpop.f32.mrb[0].mxu0
  %v688 = vadd.f32 0.0, %v687
  %v689 = vpop.f32.mrb[0].mxu0
  %v690 = vadd.f32 0.0, %v689
  %691 = vmatprep.mubr.bf16.mxu0 %v234
  %692 = vmatmul.mubr.bf16.gmra.mrb[0].mxu0 %v233
  %v693 = vpop.f32.mrb[0].mxu0
  %v694 = vadd.f32 0.0, %v693
  %v695 = vpop.f32.mrb[0].mxu0
  %v696 = vadd.f32 0.0, %v695
  %v697 = vpop.f32.mrb[0].mxu0
  %v698 = vadd.f32 0.0, %v697
  %v699 = vpop.f32.mrb[0].mxu0
  %v700 = vadd.f32 0.0, %v699
  %701 = vdwg.mxu0
  %702 = vmatprep.subr.bf16.mxu0 %v494
  %703 = vmatpush1.bf16.msra.mxu0 %v493
  %704 = vmatprep.subr.bf16.mxu0 %v496
  %705 = vmatpush1.bf16.msra.mxu0 %v495
  %706 = vmatprep.subr.bf16.mxu0 %v498
  %707 = vmatpush1.bf16.msra.mxu0 %v497
  %708 = vmatprep.subr.bf16.mxu0 %v500
  %709 = vmatpush1.bf16.msra.mxu0 %v499
  %710 = vmatprep.subr.bf16.mxu0 %v502
  %711 = vmatpush1.bf16.msra.mxu0 %v501
  %712 = vmatprep.subr.bf16.mxu0 %v504
  %713 = vmatpush1.bf16.msra.mxu0 %v503
  %714 = vmatprep.subr.bf16.mxu0 %v506
  %715 = vmatpush1.bf16.msra.mxu0 %v505
  %716 = vmatprep.subr.bf16.mxu0 %v508
  %717 = vmatpush1.bf16.msra.mxu0 %v507
  %718 = vmatprep.subr.bf16.mxu0 %v510
  %719 = vmatpush1.bf16.msra.mxu0 %v509
  %720 = vmatprep.subr.bf16.mxu0 %v512
  %721 = vmatpush1.bf16.msra.mxu0 %v511
  %722 = vmatprep.subr.bf16.mxu0 %v514
  %723 = vmatpush1.bf16.msra.mxu0 %v513
  %724 = vmatprep.subr.bf16.mxu0 %v516
  %725 = vmatpush1.bf16.msra.mxu0 %v515
  %726 = vmatprep.subr.bf16.mxu0 %v518
  %727 = vmatpush1.bf16.msra.mxu0 %v517
  %728 = vmatprep.subr.bf16.mxu0 %v520
  %729 = vmatpush1.bf16.msra.mxu0 %v519
  %730 = vmatprep.subr.bf16.mxu0 %v522
  %731 = vmatpush1.bf16.msra.mxu0 %v521
  %732 = vmatprep.subr.bf16.mxu0 %v524
  %733 = vmatpush1.bf16.msra.mxu0 %v523
  %734 = vmatprep.mubr.bf16.mxu0 %v208
  %735 = vmatmul.mubr.bf16.gmra.mrb[0].mxu0 %v207
  %v736 = vpop.f32.mrb[0].mxu0
  %v737 = vadd.f32 %v624, %v736
  %v738 = vpop.f32.mrb[0].mxu0
  %v739 = vadd.f32 %v626, %v738
  %v740 = vpop.f32.mrb[0].mxu0
  %v741 = vadd.f32 %v628, %v740
  %v742 = vpop.f32.mrb[0].mxu0
  %v743 = vadd.f32 %v630, %v742
  %744 = vmatprep.mubr.bf16.mxu0 %v212
  %745 = vmatmul.mubr.bf16.gmra.mrb[0].mxu0 %v211
  %v746 = vpop.f32.mrb[0].mxu0
  %v747 = vadd.f32 %v634, %v746
  %v748 = vpop.f32.mrb[0].mxu0
  %v749 = vadd.f32 %v636, %v748
  %v750 = vpop.f32.mrb[0].mxu0
  %v751 = vadd.f32 %v638, %v750
  %v752 = vpop.f32.mrb[0].mxu0
  %v753 = vadd.f32 %v640, %v752
  %754 = vmatprep.mubr.bf16.mxu0 %v216
  %755 = vmatmul.mubr.bf16.gmra.mrb[0].mxu0 %v215
  %v756 = vpop.f32.mrb[0].mxu0
  %v757 = vadd.f32 %v644, %v756
  %v758 = vpop.f32.mrb[0].mxu0
  %v759 = vadd.f32 %v646, %v758
  %v760 = vpop.f32.mrb[0].mxu0
  %v761 = vadd.f32 %v648, %v760
  %v762 = vpop.f32.mrb[0].mxu0
  %v763 = vadd.f32 %v650, %v762
  %764 = vmatprep.mubr.bf16.mxu0 %v220
  %765 = vmatmul.mubr.bf16.gmra.mrb[0].mxu0 %v219
  %v766 = vpop.f32.mrb[0].mxu0
  %v767 = vadd.f32 %v654, %v766
  %v768 = vpop.f32.mrb[0].mxu0
  %v769 = vadd.f32 %v656, %v768
  %v770 = vpop.f32.mrb[0].mxu0
  %v771 = vadd.f32 %v658, %v770
  %v772 = vpop.f32.mrb[0].mxu0
  %v773 = vadd.f32 %v660, %v772
  %774 = vmatprep.mubr.bf16.mxu0 %v224
  %775 = vmatmul.mubr.bf16.gmra.mrb[0].mxu0 %v223
  %v776 = vpop.f32.mrb[0].mxu0
  %v777 = vadd.f32 %v664, %v776
  %v778 = vpop.f32.mrb[0].mxu0
  %v779 = vadd.f32 %v666, %v778
  %v780 = vpop.f32.mrb[0].mxu0
  %v781 = vadd.f32 %v668, %v780
  %v782 = vpop.f32.mrb[0].mxu0
  %v783 = vadd.f32 %v670, %v782
  %784 = vmatprep.mubr.bf16.mxu0 %v228
  %785 = vmatmul.mubr.bf16.gmra.mrb[0].mxu0 %v227
  %v786 = vpop.f32.mrb[0].mxu0
  %v787 = vadd.f32 %v674, %v786
  %v788 = vpop.f32.mrb[0].mxu0
  %v789 = vadd.f32 %v676, %v788
  %v790 = vpop.f32.mrb[0].mxu0
  %v791 = vadd.f32 %v678, %v790
  %v792 = vpop.f32.mrb[0].mxu0
  %v793 = vadd.f32 %v680, %v792
  %794 = vmatprep.mubr.bf16.mxu0 %v232
  %795 = vmatmul.mubr.bf16.gmra.mrb[0].mxu0 %v231
  %v796 = vpop.f32.mrb[0].mxu0
  %v797 = vadd.f32 %v684, %v796
  %v798 = vpop.f32.mrb[0].mxu0
  %v799 = vadd.f32 %v686, %v798
  %v800 = vpop.f32.mrb[0].mxu0
  %v801 = vadd.f32 %v688, %v800
  %v802 = vpop.f32.mrb[0].mxu0
  %v803 = vadd.f32 %v690, %v802
  %804 = vmatprep.mubr.bf16.mxu0 %v236
  %805 = vmatmul.mubr.bf16.gmra.mrb[0].mxu0 %v235
  %v806 = vpop.f32.mrb[0].mxu0
  %v807 = vadd.f32 %v694, %v806
  %v808 = vpop.f32.mrb[0].mxu0
  %v809 = vadd.f32 %v696, %v808
  %v810 = vpop.f32.mrb[0].mxu0
  %v811 = vadd.f32 %v698, %v810
  %v812 = vpop.f32.mrb[0].mxu0
  %v813 = vadd.f32 %v700, %v812
  %814 = vdwg.mxu0
  %815 = vst [vmem:[%s2] sm:$0xff] %v737
  %816 = vst [vmem:[%s2 + $0x8] sm:$0xff] %v739
  %817 = vst [vmem:[%s2 + $0x10] sm:$0xff] %v741
  %818 = vst [vmem:[%s2 + $0x18] sm:$0xff] %v743
  %819 = vst [vmem:[%s2 + $0x20] sm:$0xff] %v747
  %820 = vst [vmem:[%s2 + $0x28] sm:$0xff] %v749
  %821 = vst [vmem:[%s2 + $0x30] sm:$0xff] %v751
  %822 = vst [vmem:[%s2 + $0x38] sm:$0xff] %v753
  %823 = vst [vmem:[%s2 + $0x40] sm:$0xff] %v757
  %824 = vst [vmem:[%s2 + $0x48] sm:$0xff] %v759
  %825 = vst [vmem:[%s2 + $0x50] sm:$0xff] %v761
  %826 = vst [vmem:[%s2 + $0x58] sm:$0xff] %v763
  %827 = vst [vmem:[%s2 + $0x60] sm:$0xff] %v767
  %828 = vst [vmem:[%s2 + $0x68] sm:$0xff] %v769
  %829 = vst [vmem:[%s2 + $0x70] sm:$0xff] %v771
  %830 = vst [vmem:[%s2 + $0x78] sm:$0xff] %v773
  %831 = vst [vmem:[%s2 + $0x80] sm:$0xff] %v777
  %832 = vst [vmem:[%s2 + $0x88] sm:$0xff] %v779
  %833 = vst [vmem:[%s2 + $0x90] sm:$0xff] %v781
  %834 = vst [vmem:[%s2 + $0x98] sm:$0xff] %v783
  %835 = vst [vmem:[%s2 + $0xa0] sm:$0xff] %v787
  %836 = vst [vmem:[%s2 + $0xa8] sm:$0xff] %v789
  %837 = vst [vmem:[%s2 + $0xb0] sm:$0xff] %v791
  %838 = vst [vmem:[%s2 + $0xb8] sm:$0xff] %v793
  %839 = vst [vmem:[%s2 + $0xc0] sm:$0xff] %v797
  %840 = vst [vmem:[%s2 + $0xc8] sm:$0xff] %v799
  %841 = vst [vmem:[%s2 + $0xd0] sm:$0xff] %v801
  %842 = vst [vmem:[%s2 + $0xd8] sm:$0xff] %v803
  %843 = vst [vmem:[%s2 + $0xe0] sm:$0xff] %v807
  %844 = vst [vmem:[%s2 + $0xe8] sm:$0xff] %v809
  %845 = vst [vmem:[%s2 + $0xf0] sm:$0xff] %v811
  %846 = vst [vmem:[%s2 + $0xf8] sm:$0xff] %v813
  %847 = vmatprep.subr.mxu0 %v739
  %848 = vmatpush1.msra.mxu0 %v737
  %849 = vmatprep.subr.mxu0 %v743
  %850 = vmatpush1.msra.mxu0 %v741
  %851 = vmatprep.subr.mxu0 %v749
  %852 = vmatpush1.msra.mxu0 %v747
  %853 = vmatprep.subr.mxu0 %v753
  %854 = vmatpush1.msra.mxu0 %v751
  %855 = vmatprep.subr.mxu0 %v759
  %856 = vmatpush1.msra.mxu0 %v757
  %857 = vmatprep.subr.mxu0 %v763
  %858 = vmatpush1.msra.mxu0 %v761
  %859 = vmatprep.subr.mxu0 %v769
  %860 = vmatpush1.msra.mxu0 %v767
  %861 = vmatprep.subr.mxu0 %v773
  %862 = vmatpush1.msra.mxu0 %v771
  %863 = vmatprep.subr.mxu0 %v779
  %864 = vmatpush1.msra.mxu0 %v777
  %865 = vmatprep.subr.mxu0 %v783
  %866 = vmatpush1.msra.mxu0 %v781
  %867 = vmatprep.subr.mxu0 %v789
  %868 = vmatpush1.msra.mxu0 %v787
  %869 = vmatprep.subr.mxu0 %v793
  %870 = vmatpush1.msra.mxu0 %v791
  %871 = vmatprep.subr.mxu0 %v799
  %872 = vmatpush1.msra.mxu0 %v797
  %873 = vmatprep.subr.mxu0 %v803
  %874 = vmatpush1.msra.mxu0 %v801
  %875 = vmatprep.subr.mxu0 %v809
  %876 = vmatpush1.msra.mxu0 %v807
  %877 = vmatprep.subr.mxu0 %v813
  %878 = vmatpush1.msra.mxu0 %v811
  %879 = vmatprep.subr.mxu0 0.0
  %880 = vmatpush1.msra.mxu0 0.0
  %881 = vmatprep.subr.mxu0 0.0
  %882 = vmatpush1.msra.mxu0 0.0
  %883 = vmatprep.subr.mxu0 0.0
  %884 = vmatpush1.msra.mxu0 0.0
  %885 = vmatprep.subr.mxu0 0.0
  %886 = vmatpush1.msra.mxu0 0.0
  %887 = vmatprep.subr.mxu0 0.0
  %888 = vmatpush1.msra.mxu0 0.0
  %889 = vmatprep.subr.mxu0 0.0
  %890 = vmatpush1.msra.mxu0 0.0
  %891 = vmatprep.subr.mxu0 0.0
  %892 = vmatpush1.msra.mxu0 0.0
  %893 = vmatprep.subr.mxu0 0.0
  %894 = vmatpush1.msra.mxu0 0.0
  %895 = vmatprep.subr.mxu0 0.0
  %896 = vmatpush1.msra.mxu0 0.0
  %897 = vmatprep.subr.mxu0 0.0
  %898 = vmatpush1.msra.mxu0 0.0
  %899 = vmatprep.subr.mxu0 0.0
  %900 = vmatpush1.msra.mxu0 0.0
  %901 = vmatprep.subr.mxu0 0.0
  %902 = vmatpush1.msra.mxu0 0.0
  %903 = vmatprep.subr.mxu0 0.0
  %904 = vmatpush1.msra.mxu0 0.0
  %905 = vmatprep.subr.mxu0 0.0
  %906 = vmatpush1.msra.mxu0 0.0
  %907 = vmatprep.subr.mxu0 0.0
  %908 = vmatpush1.msra.mxu0 0.0
  %909 = vmatprep.subr.mxu0 0.0
  %910 = vmatpush1.msra.mxu0 0.0
  %911 = vmatprep.mubr.f32.mxu0 0.0
  %912 = vmatmul.mubr.f32.gmra.mrb[0].mxu0 1.0
  %v913 = vpop.f32.mrb[0].mxu0
  %v914 = vadd.f32 0.0, %v913
  %v915 = vpop.f32.mrb[0].mxu0
  %v916 = vadd.f32 0.0, %v915
  %917 = vdwg.mxu0
  %v918 = vmul.f32 %v737, %v737
  %v919 = vmul.f32 %v739, %v739
  %v920 = vmul.f32 %v741, %v741
  %v921 = vmul.f32 %v743, %v743
  %v922 = vmul.f32 %v747, %v747
  %v923 = vmul.f32 %v749, %v749
  %v924 = vmul.f32 %v751, %v751
  %v925 = vmul.f32 %v753, %v753
  %v926 = vmul.f32 %v757, %v757
  %v927 = vmul.f32 %v759, %v759
  %v928 = vmul.f32 %v761, %v761
  %v929 = vmul.f32 %v763, %v763
  %v930 = vmul.f32 %v767, %v767
  %v931 = vmul.f32 %v769, %v769
  %v932 = vmul.f32 %v771, %v771
  %v933 = vmul.f32 %v773, %v773
  %v934 = vmul.f32 %v777, %v777
  %v935 = vmul.f32 %v779, %v779
  %v936 = vmul.f32 %v781, %v781
  %v937 = vmul.f32 %v783, %v783
  %v938 = vmul.f32 %v787, %v787
  %v939 = vmul.f32 %v789, %v789
  %v940 = vmul.f32 %v791, %v791
  %v941 = vmul.f32 %v793, %v793
  %v942 = vmul.f32 %v797, %v797
  %v943 = vmul.f32 %v799, %v799
  %v944 = vmul.f32 %v801, %v801
  %v945 = vmul.f32 %v803, %v803
  %v946 = vmul.f32 %v807, %v807
  %v947 = vmul.f32 %v809, %v809
  %v948 = vmul.f32 %v811, %v811
  %v949 = vmul.f32 %v813, %v813
  %950 = vmatprep.subr.mxu0 %v919
  %951 = vmatpush1.msra.mxu0 %v918
  %952 = vmatprep.subr.mxu0 %v921
  %953 = vmatpush1.msra.mxu0 %v920
  %954 = vmatprep.subr.mxu0 %v923
  %955 = vmatpush1.msra.mxu0 %v922
  %956 = vmatprep.subr.mxu0 %v925
  %957 = vmatpush1.msra.mxu0 %v924
  %958 = vmatprep.subr.mxu0 %v927
  %959 = vmatpush1.msra.mxu0 %v926
  %960 = vmatprep.subr.mxu0 %v929
  %961 = vmatpush1.msra.mxu0 %v928
  %962 = vmatprep.subr.mxu0 %v931
  %963 = vmatpush1.msra.mxu0 %v930
  %964 = vmatprep.subr.mxu0 %v933
  %965 = vmatpush1.msra.mxu0 %v932
  %966 = vmatprep.subr.mxu0 %v935
  %967 = vmatpush1.msra.mxu0 %v934
  %968 = vmatprep.subr.mxu0 %v937
  %969 = vmatpush1.msra.mxu0 %v936
  %970 = vmatprep.subr.mxu0 %v939
  %971 = vmatpush1.msra.mxu0 %v938
  %972 = vmatprep.subr.mxu0 %v941
  %973 = vmatpush1.msra.mxu0 %v940
  %974 = vmatprep.subr.mxu0 %v943
  %975 = vmatpush1.msra.mxu0 %v942
  %976 = vmatprep.subr.mxu0 %v945
  %977 = vmatpush1.msra.mxu0 %v944
  %978 = vmatprep.subr.mxu0 %v947
  %979 = vmatpush1.msra.mxu0 %v946
  %980 = vmatprep.subr.mxu0 %v949
  %981 = vmatpush1.msra.mxu0 %v948
  %982 = vmatprep.subr.mxu0 0.0
  %983 = vmatpush1.msra.mxu0 0.0
  %984 = vmatprep.subr.mxu0 0.0
  %985 = vmatpush1.msra.mxu0 0.0
  %986 = vmatprep.subr.mxu0 0.0
  %987 = vmatpush1.msra.mxu0 0.0
  %988 = vmatprep.subr.mxu0 0.0
  %989 = vmatpush1.msra.mxu0 0.0
  %990 = vmatprep.subr.mxu0 0.0
  %991 = vmatpush1.msra.mxu0 0.0
  %992 = vmatprep.subr.mxu0 0.0
  %993 = vmatpush1.msra.mxu0 0.0
  %994 = vmatprep.subr.mxu0 0.0
  %995 = vmatpush1.msra.mxu0 0.0
  %996 = vmatprep.subr.mxu0 0.0
  %997 = vmatpush1.msra.mxu0 0.0
  %998 = vmatprep.subr.mxu0 0.0
  %999 = vmatpush1.msra.mxu0 0.0
  %1000 = vmatprep.subr.mxu0 0.0
  %1001 = vmatpush1.msra.mxu0 0.0
  %1002 = vmatprep.subr.mxu0 0.0
  %1003 = vmatpush1.msra.mxu0 0.0
  %1004 = vmatprep.subr.mxu0 0.0
  %1005 = vmatpush1.msra.mxu0 0.0
  %1006 = vmatprep.subr.mxu0 0.0
  %1007 = vmatpush1.msra.mxu0 0.0
  %1008 = vmatprep.subr.mxu0 0.0
  %1009 = vmatpush1.msra.mxu0 0.0
  %1010 = vmatprep.subr.mxu0 0.0
  %1011 = vmatpush1.msra.mxu0 0.0
  %1012 = vmatprep.subr.mxu0 0.0
  %1013 = vmatpush1.msra.mxu0 0.0
  %1014 = vmatprep.mubr.f32.mxu0 0.0
  %1015 = vmatmul.mubr.f32.gmra.mrb[0].mxu0 1.0
  %v1016 = vpop.f32.mrb[0].mxu0
  %v1017 = vadd.f32 0.0, %v1016
  %v1018 = vpop.f32.mrb[0].mxu0
  %v1019 = vadd.f32 0.0, %v1018
  %1020 = vdwg.mxu0
  %v1023 = vrot.slane %v1017, 7
  %v1024 = vrot.slane %v1019, 7
  %vm1027 = vcmask 1040384
  %v1028 = vsel %vm1027, %v914, %v1023
  %v1029 = vsel %vm1027, %v916, %v1024
  %v1032 = vcombine.low %v1028, %v1029
  %v1034 = vunpack.c.l.s4 1983009808
  %v1035 = vunpack.c.0.s8 %v1034
  %v1036 = vlaneseq
  %v1037 = vshrl.u32 %v1036, 7
  %v1038 = vsub.s32 %v1035, %v1037
  %v1039 = vrot.slane %v1032, %v1038
  %1041 = vst [vmem:[%s3] sm:$0xf] %v1039
  // Predicated region
  $region10: #{_lambda_.11} parent=0 // pred_check
    _
  $region11: #{_lambda_.11} parent=0 // pred_check_branch
    %1043 = sbr.rel (0) target = $region13
  $region12: #{_lambda_.11} parent=0 // pred_region
    _
  $region13: #{_lambda_.11} parent=0 // pred_fallthru
    _
  // Predicated region
  $region14: #{_lambda_.11} parent=0 // pred_check
    _
  $region15: #{_lambda_.11} parent=0 // pred_check_branch
    %1045 = sbr.rel (0) target = $region17
  $region16: #{_lambda_.11} parent=0 // pred_region
    _
  $region17: #{_lambda_.11} parent=0 // pred_fallthru
    _
  // Predicated region
  $region18: #{_lambda_.11} parent=0 // pred_check
    _
  $region19: #{_lambda_.11} parent=0 // pred_check_branch
    %1047 = sbr.rel (0) target = $region21
  $region20: #{_lambda_.11} parent=0 // pred_region
    _
  $region21: #{_lambda_.11} parent=0 // pred_fallthru
    _
  // Predicated region
  $region22: #{_lambda_.11} parent=0 // pred_check
    _
  $region23: #{_lambda_.11} parent=0 // pred_check_branch
    %1049 = sbr.rel (0) target = $region25
  $region24: #{_lambda_.11} parent=0 // pred_region
    _
  $region25: #{_lambda_.11} parent=0 // pred_fallthru
    _

// kernel: _lambda_.14
$region0: #{_lambda_.14}
  #allocation0 [shape = 'u32[]', space=smem, size = 0x4, offset = 0x4, fixed_abs, tag = 'smem constant byte address 0x4 - core index']
  #allocation1 [shape = 'u32[144,128]{1,0:T(1,128)}', space=vmem, size = 0x12000, scoped, tag = 'internal scratch']
  %s0 = inlined_call_operand.vmem [shape: f32[32,512], index: 0, kind: input, shape index: {}]
  %s1 = inlined_call_operand.vmem [shape: f32[1,512], index: 1, kind: input, shape index: {}]
  %s2 = inlined_call_operand.vmem [shape: f32[1,512], index: 2, kind: input, shape index: {}]
  %s3 = inlined_call_operand.vmem [shape: f32[32,512], index: 3, kind: output, shape index: {}]
  %s4 = sld [smem:[#allocation0]]
  $region22: #{_lambda_.14} parent=0
    _
  %s6 = ssub.s32 1, %s4
  %s7 = scalar_select 0, %s6, %s4
  // Predicated region
  $region2: #{_lambda_.14} parent=0 // pred_check
    _
  $region3: #{_lambda_.14} parent=0 // pred_check_branch
    %9 = sbr.rel (0) target = $region5
  $region4: #{_lambda_.14} parent=0 // pred_region
    _
  $region5: #{_lambda_.14} parent=0 // pred_fallthru
    _
  // Predicated region
  $region6: #{_lambda_.14} parent=0 // pred_check
    _
  $region7: #{_lambda_.14} parent=0 // pred_check_branch
    %11 = sbr.rel (0) target = $region9
  $region8: #{_lambda_.14} parent=0 // pred_region
    _
  $region9: #{_lambda_.14} parent=0 // pred_fallthru
    _
  // Predicated region
  $region10: #{_lambda_.14} parent=0 // pred_check
    _
  $region11: #{_lambda_.14} parent=0 // pred_check_branch
    %13 = sbr.rel (0) target = $region13
  $region12: #{_lambda_.14} parent=0 // pred_region
    _
  $region13: #{_lambda_.14} parent=0 // pred_fallthru
    _
  %v14 = vld [vmem:[%s0] sm:$0xff]
  %v15 = vld [vmem:[%s0 + $0x8] sm:$0xff]
  %v16 = vld [vmem:[%s0 + $0x10] sm:$0xff]
  %v17 = vld [vmem:[%s0 + $0x18] sm:$0xff]
  %v18 = vld [vmem:[%s0 + $0x20] sm:$0xff]
  %v19 = vld [vmem:[%s0 + $0x28] sm:$0xff]
  %v20 = vld [vmem:[%s0 + $0x30] sm:$0xff]
  %v21 = vld [vmem:[%s0 + $0x38] sm:$0xff]
  %v22 = vld [vmem:[%s0 + $0x40] sm:$0xff]
  %v23 = vld [vmem:[%s0 + $0x48] sm:$0xff]
  %v24 = vld [vmem:[%s0 + $0x50] sm:$0xff]
  %v25 = vld [vmem:[%s0 + $0x58] sm:$0xff]
  %v26 = vld [vmem:[%s0 + $0x60] sm:$0xff]
  %v27 = vld [vmem:[%s0 + $0x68] sm:$0xff]
  %v28 = vld [vmem:[%s0 + $0x70] sm:$0xff]
  %v29 = vld [vmem:[%s0 + $0x78] sm:$0xff]
  %v30 = vld [vmem:[%s1] sm:$0xf]
  %v32 = vlaneseq
  %v33 = vshrl.u32 %v32, 7
  %v34 = vsub.s32 0, %v33
  %v35 = vrot.slane %v30, %v34
  %v36 = vlaneseq
  %v37 = vshrl.u32 %v36, 7
  %v38 = vsub.s32 1, %v37
  %v39 = vrot.slane %v30, %v38
  %v40 = vlaneseq
  %v41 = vshrl.u32 %v40, 7
  %v42 = vsub.s32 2, %v41
  %v43 = vrot.slane %v30, %v42
  %v44 = vlaneseq
  %v45 = vshrl.u32 %v44, 7
  %v46 = vsub.s32 3, %v45
  %v47 = vrot.slane %v30, %v46
  %v52 = vmul.f32 %v14, %v35
  %v53 = vmul.f32 %v15, %v39
  %v54 = vmul.f32 %v16, %v43
  %v55 = vmul.f32 %v17, %v47
  %v56 = vmul.f32 %v18, %v35
  %v57 = vmul.f32 %v19, %v39
  %v58 = vmul.f32 %v20, %v43
  %v59 = vmul.f32 %v21, %v47
  %v60 = vmul.f32 %v22, %v35
  %v61 = vmul.f32 %v23, %v39
  %v62 = vmul.f32 %v24, %v43
  %v63 = vmul.f32 %v25, %v47
  %v64 = vmul.f32 %v26, %v35
  %v65 = vmul.f32 %v27, %v39
  %v66 = vmul.f32 %v28, %v43
  %v67 = vmul.f32 %v29, %v47
  %v68 = vld [vmem:[%s2] sm:$0xf]
  %v70 = vlaneseq
  %v71 = vshrl.u32 %v70, 7
  %v72 = vsub.s32 0, %v71
  %v73 = vrot.slane %v68, %v72
  %v74 = vlaneseq
  %v75 = vshrl.u32 %v74, 7
  %v76 = vsub.s32 1, %v75
  %v77 = vrot.slane %v68, %v76
  %v78 = vlaneseq
  %v79 = vshrl.u32 %v78, 7
  %v80 = vsub.s32 2, %v79
  %v81 = vrot.slane %v68, %v80
  %v82 = vlaneseq
  %v83 = vshrl.u32 %v82, 7
  %v84 = vsub.s32 3, %v83
  %v85 = vrot.slane %v68, %v84
  %v90 = vadd.f32 %v52, %v73
  %v91 = vadd.f32 %v53, %v77
  %v92 = vadd.f32 %v54, %v81
  %v93 = vadd.f32 %v55, %v85
  %v94 = vadd.f32 %v56, %v73
  %v95 = vadd.f32 %v57, %v77
  %v96 = vadd.f32 %v58, %v81
  %v97 = vadd.f32 %v59, %v85
  %v98 = vadd.f32 %v60, %v73
  %v99 = vadd.f32 %v61, %v77
  %v100 = vadd.f32 %v62, %v81
  %v101 = vadd.f32 %v63, %v85
  %v102 = vadd.f32 %v64, %v73
  %v103 = vadd.f32 %v65, %v77
  %v104 = vadd.f32 %v66, %v81
  %v105 = vadd.f32 %v67, %v85
  %vm106 = vcmp.ge.f32.partialorder %v90, 0.0
  %vm107 = vcmp.ge.f32.partialorder %v91, 0.0
  %vm108 = vcmp.ge.f32.partialorder %v92, 0.0
  %vm109 = vcmp.ge.f32.partialorder %v93, 0.0
  %vm110 = vcmp.ge.f32.partialorder %v94, 0.0
  %vm111 = vcmp.ge.f32.partialorder %v95, 0.0
  %vm112 = vcmp.ge.f32.partialorder %v96, 0.0
  %vm113 = vcmp.ge.f32.partialorder %v97, 0.0
  %vm114 = vcmp.ge.f32.partialorder %v98, 0.0
  %vm115 = vcmp.ge.f32.partialorder %v99, 0.0
  %vm116 = vcmp.ge.f32.partialorder %v100, 0.0
  %vm117 = vcmp.ge.f32.partialorder %v101, 0.0
  %vm118 = vcmp.ge.f32.partialorder %v102, 0.0
  %vm119 = vcmp.ge.f32.partialorder %v103, 0.0
  %vm120 = vcmp.ge.f32.partialorder %v104, 0.0
  %vm121 = vcmp.ge.f32.partialorder %v105, 0.0
  %v122 = vmul.f32 %v90, 0.2
  %v123 = vmul.f32 %v91, 0.2
  %v124 = vmul.f32 %v92, 0.2
  %v125 = vmul.f32 %v93, 0.2
  %v126 = vmul.f32 %v94, 0.2
  %v127 = vmul.f32 %v95, 0.2
  %v128 = vmul.f32 %v96, 0.2
  %v129 = vmul.f32 %v97, 0.2
  %v130 = vmul.f32 %v98, 0.2
  %v131 = vmul.f32 %v99, 0.2
  %v132 = vmul.f32 %v100, 0.2
  %v133 = vmul.f32 %v101, 0.2
  %v134 = vmul.f32 %v102, 0.2
  %v135 = vmul.f32 %v103, 0.2
  %v136 = vmul.f32 %v104, 0.2
  %v137 = vmul.f32 %v105, 0.2
  %v138 = vsel %vm106, %v90, %v122
  %v139 = vsel %vm107, %v91, %v123
  %v140 = vsel %vm108, %v92, %v124
  %v141 = vsel %vm109, %v93, %v125
  %v142 = vsel %vm110, %v94, %v126
  %v143 = vsel %vm111, %v95, %v127
  %v144 = vsel %vm112, %v96, %v128
  %v145 = vsel %vm113, %v97, %v129
  %v146 = vsel %vm114, %v98, %v130
  %v147 = vsel %vm115, %v99, %v131
  %v148 = vsel %vm116, %v100, %v132
  %v149 = vsel %vm117, %v101, %v133
  %v150 = vsel %vm118, %v102, %v134
  %v151 = vsel %vm119, %v103, %v135
  %v152 = vsel %vm120, %v104, %v136
  %v153 = vsel %vm121, %v105, %v137
  %154 = vst [vmem:[%s3] sm:$0xff] %v138
  %155 = vst [vmem:[%s3 + $0x8] sm:$0xff] %v139
  %156 = vst [vmem:[%s3 + $0x10] sm:$0xff] %v140
  %157 = vst [vmem:[%s3 + $0x18] sm:$0xff] %v141
  %158 = vst [vmem:[%s3 + $0x20] sm:$0xff] %v142
  %159 = vst [vmem:[%s3 + $0x28] sm:$0xff] %v143
  %160 = vst [vmem:[%s3 + $0x30] sm:$0xff] %v144
  %161 = vst [vmem:[%s3 + $0x38] sm:$0xff] %v145
  %162 = vst [vmem:[%s3 + $0x40] sm:$0xff] %v146
  %163 = vst [vmem:[%s3 + $0x48] sm:$0xff] %v147
  %164 = vst [vmem:[%s3 + $0x50] sm:$0xff] %v148
  %165 = vst [vmem:[%s3 + $0x58] sm:$0xff] %v149
  %166 = vst [vmem:[%s3 + $0x60] sm:$0xff] %v150
  %167 = vst [vmem:[%s3 + $0x68] sm:$0xff] %v151
  %168 = vst [vmem:[%s3 + $0x70] sm:$0xff] %v152
  %169 = vst [vmem:[%s3 + $0x78] sm:$0xff] %v153
  // Predicated region
  $region14: #{_lambda_.14} parent=0 // pred_check
    _
  $region15: #{_lambda_.14} parent=0 // pred_check_branch
    %171 = sbr.rel (0) target = $region17
  $region16: #{_lambda_.14} parent=0 // pred_region
    _
  $region17: #{_lambda_.14} parent=0 // pred_fallthru
    _
  // Predicated region
  $region18: #{_lambda_.14} parent=0 // pred_check
    _
  $region19: #{_lambda_.14} parent=0 // pred_check_branch
    %173 = sbr.rel (0) target = $region21
  $region20: #{_lambda_.14} parent=0 // pred_region
    _
  $region21: #{_lambda_.14} parent=0 // pred_fallthru
    _

// kernel: _lambda_.13
$region0: #{_lambda_.13}
  #allocation0 [shape = 'u32[]', space=smem, size = 0x4, offset = 0x4, fixed_abs, tag = 'smem constant byte address 0x4 - core index']
  #allocation1 [shape = 'u32[144,128]{1,0:T(1,128)}', space=vmem, size = 0x12000, scoped, tag = 'internal scratch']
  %s0 = inlined_call_operand.vmem [shape: bf16[32,1024], index: 0, kind: input, shape index: {}]
  %s1 = inlined_call_operand.vmem [shape: bf16[1024,512], index: 1, kind: input, shape index: {}]
  %s2 = inlined_call_operand.vmem [shape: f32[32,512], index: 2, kind: output, shape index: {0}]
  %s3 = inlined_call_operand.vmem [shape: f32[1,2,512], index: 3, kind: output, shape index: {1}]
  %4 = xla_tuple %s2, %s3
  %s5 = sld [smem:[#allocation0]]
  $region26: #{_lambda_.13} parent=0
    _
  %s7 = ssub.s32 1, %s5
  %s8 = scalar_select 0, %s7, %s5
  // Predicated region
  $region2: #{_lambda_.13} parent=0 // pred_check
    _
  $region3: #{_lambda_.13} parent=0 // pred_check_branch
    %10 = sbr.rel (0) target = $region5
  $region4: #{_lambda_.13} parent=0 // pred_region
    _
  $region5: #{_lambda_.13} parent=0 // pred_fallthru
    _
  // Predicated region
  $region6: #{_lambda_.13} parent=0 // pred_check
    _
  $region7: #{_lambda_.13} parent=0 // pred_check_branch
    %12 = sbr.rel (0) target = $region9
  $region8: #{_lambda_.13} parent=0 // pred_region
    _
  $region9: #{_lambda_.13} parent=0 // pred_fallthru
    _
  %v13 = vld [vmem:[%s0] sm:$0xff]
  %v14 = vld [vmem:[%s0 + $0x8] sm:$0xff]
  %v15 = vld [vmem:[%s0 + $0x10] sm:$0xff]
  %v16 = vld [vmem:[%s0 + $0x18] sm:$0xff]
  %v17 = vld [vmem:[%s0 + $0x20] sm:$0xff]
  %v18 = vld [vmem:[%s0 + $0x28] sm:$0xff]
  %v19 = vld [vmem:[%s0 + $0x30] sm:$0xff]
  %v20 = vld [vmem:[%s0 + $0x38] sm:$0xff]
  %v21 = vld [vmem:[%s0 + $0x40] sm:$0xff]
  %v22 = vld [vmem:[%s0 + $0x48] sm:$0xff]
  %v23 = vld [vmem:[%s0 + $0x50] sm:$0xff]
  %v24 = vld [vmem:[%s0 + $0x58] sm:$0xff]
  %v25 = vld [vmem:[%s0 + $0x60] sm:$0xff]
  %v26 = vld [vmem:[%s0 + $0x68] sm:$0xff]
  %v27 = vld [vmem:[%s0 + $0x70] sm:$0xff]
  %v28 = vld [vmem:[%s0 + $0x78] sm:$0xff]
  %v29 = vld [vmem:[%s1] sm:$0xff]
  %v30 = vld [vmem:[%s1 + $0x8] sm:$0xff]
  %v31 = vld [vmem:[%s1 + $0x10] sm:$0xff]
  %v32 = vld [vmem:[%s1 + $0x18] sm:$0xff]
  %v33 = vld [vmem:[%s1 + $0x20] sm:$0xff]
  %v34 = vld [vmem:[%s1 + $0x28] sm:$0xff]
  %v35 = vld [vmem:[%s1 + $0x30] sm:$0xff]
  %v36 = vld [vmem:[%s1 + $0x38] sm:$0xff]
  %v37 = vld [vmem:[%s1 + $0x40] sm:$0xff]
  %v38 = vld [vmem:[%s1 + $0x48] sm:$0xff]
  %v39 = vld [vmem:[%s1 + $0x50] sm:$0xff]
  %v40 = vld [vmem:[%s1 + $0x58] sm:$0xff]
  %v41 = vld [vmem:[%s1 + $0x60] sm:$0xff]
  %v42 = vld [vmem:[%s1 + $0x68] sm:$0xff]
  %v43 = vld [vmem:[%s1 + $0x70] sm:$0xff]
  %v44 = vld [vmem:[%s1 + $0x78] sm:$0xff]
  %v45 = vld [vmem:[%s1 + $0x80] sm:$0xff]
  %v46 = vld [vmem:[%s1 + $0x88] sm:$0xff]
  %v47 = vld [vmem:[%s1 + $0x90] sm:$0xff]
  %v48 = vld [vmem:[%s1 + $0x98] sm:$0xff]
  %v49 = vld [vmem:[%s1 + $0xa0] sm:$0xff]
  %v50 = vld [vmem:[%s1 + $0xa8] sm:$0xff]
  %v51 = vld [vmem:[%s1 + $0xb0] sm:$0xff]
  %v52 = vld [vmem:[%s1 + $0xb8] sm:$0xff]
  %v53 = vld [vmem:[%s1 + $0xc0] sm:$0xff]
  %v54 = vld [vmem:[%s1 + $0xc8] sm:$0xff]
  %v55 = vld [vmem:[%s1 + $0xd0] sm:$0xff]
  %v56 = vld [vmem:[%s1 + $0xd8] sm:$0xff]
  %v57 = vld [vmem:[%s1 + $0xe0] sm:$0xff]
  %v58 = vld [vmem:[%s1 + $0xe8] sm:$0xff]
  %v59 = vld [vmem:[%s1 + $0xf0] sm:$0xff]
  %v60 = vld [vmem:[%s1 + $0xf8] sm:$0xff]
  %v61 = vld [vmem:[%s1 + $0x100] sm:$0xff]
  %v62 = vld [vmem:[%s1 + $0x108] sm:$0xff]
  %v63 = vld [vmem:[%s1 + $0x110] sm:$0xff]
  %v64 = vld [vmem:[%s1 + $0x118] sm:$0xff]
  %v65 = vld [vmem:[%s1 + $0x120] sm:$0xff]
  %v66 = vld [vmem:[%s1 + $0x128] sm:$0xff]
  %v67 = vld [vmem:[%s1 + $0x130] sm:$0xff]
  %v68 = vld [vmem:[%s1 + $0x138] sm:$0xff]
  %v69 = vld [vmem:[%s1 + $0x140] sm:$0xff]
  %v70 = vld [vmem:[%s1 + $0x148] sm:$0xff]
  %v71 = vld [vmem:[%s1 + $0x150] sm:$0xff]
  %v72 = vld [vmem:[%s1 + $0x158] sm:$0xff]
  %v73 = vld [vmem:[%s1 + $0x160] sm:$0xff]
  %v74 = vld [vmem:[%s1 + $0x168] sm:$0xff]
  %v75 = vld [vmem:[%s1 + $0x170] sm:$0xff]
  %v76 = vld [vmem:[%s1 + $0x178] sm:$0xff]
  %v77 = vld [vmem:[%s1 + $0x180] sm:$0xff]
  %v78 = vld [vmem:[%s1 + $0x188] sm:$0xff]
  %v79 = vld [vmem:[%s1 + $0x190] sm:$0xff]
  %v80 = vld [vmem:[%s1 + $0x198] sm:$0xff]
  %v81 = vld [vmem:[%s1 + $0x1a0] sm:$0xff]
  %v82 = vld [vmem:[%s1 + $0x1a8] sm:$0xff]
  %v83 = vld [vmem:[%s1 + $0x1b0] sm:$0xff]
  %v84 = vld [vmem:[%s1 + $0x1b8] sm:$0xff]
  %v85 = vld [vmem:[%s1 + $0x1c0] sm:$0xff]
  %v86 = vld [vmem:[%s1 + $0x1c8] sm:$0xff]
  %v87 = vld [vmem:[%s1 + $0x1d0] sm:$0xff]
  %v88 = vld [vmem:[%s1 + $0x1d8] sm:$0xff]
  %v89 = vld [vmem:[%s1 + $0x1e0] sm:$0xff]
  %v90 = vld [vmem:[%s1 + $0x1e8] sm:$0xff]
  %v91 = vld [vmem:[%s1 + $0x1f0] sm:$0xff]
  %v92 = vld [vmem:[%s1 + $0x1f8] sm:$0xff]
  %v93 = vld [vmem:[%s1 + $0x200] sm:$0xff]
  %v94 = vld [vmem:[%s1 + $0x208] sm:$0xff]
  %v95 = vld [vmem:[%s1 + $0x210] sm:$0xff]
  %v96 = vld [vmem:[%s1 + $0x218] sm:$0xff]
  %v97 = vld [vmem:[%s1 + $0x220] sm:$0xff]
  %v98 = vld [vmem:[%s1 + $0x228] sm:$0xff]
  %v99 = vld [vmem:[%s1 + $0x230] sm:$0xff]
  %v100 = vld [vmem:[%s1 + $0x238] sm:$0xff]
  %v101 = vld [vmem:[%s1 + $0x240] sm:$0xff]
  %v102 = vld [vmem:[%s1 + $0x248] sm:$0xff]
  %v103 = vld [vmem:[%s1 + $0x250] sm:$0xff]
  %v104 = vld [vmem:[%s1 + $0x258] sm:$0xff]
  %v105 = vld [vmem:[%s1 + $0x260] sm:$0xff]
  %v106 = vld [vmem:[%s1 + $0x268] sm:$0xff]
  %v107 = vld [vmem:[%s1 + $0x270] sm:$0xff]
  %v108 = vld [vmem:[%s1 + $0x278] sm:$0xff]
  %v109 = vld [vmem:[%s1 + $0x280] sm:$0xff]
  %v110 = vld [vmem:[%s1 + $0x288] sm:$0xff]
  %v111 = vld [vmem:[%s1 + $0x290] sm:$0xff]
  %v112 = vld [vmem:[%s1 + $0x298] sm:$0xff]
  %v113 = vld [vmem:[%s1 + $0x2a0] sm:$0xff]
  %v114 = vld [vmem:[%s1 + $0x2a8] sm:$0xff]
  %v115 = vld [vmem:[%s1 + $0x2b0] sm:$0xff]
  %v116 = vld [vmem:[%s1 + $0x2b8] sm:$0xff]
  %v117 = vld [vmem:[%s1 + $0x2c0] sm:$0xff]
  %v118 = vld [vmem:[%s1 + $0x2c8] sm:$0xff]
  %v119 = vld [vmem:[%s1 + $0x2d0] sm:$0xff]
  %v120 = vld [vmem:[%s1 + $0x2d8] sm:$0xff]
  %v121 = vld [vmem:[%s1 + $0x2e0] sm:$0xff]
  %v122 = vld [vmem:[%s1 + $0x2e8] sm:$0xff]
  %v123 = vld [vmem:[%s1 + $0x2f0] sm:$0xff]
  %v124 = vld [vmem:[%s1 + $0x2f8] sm:$0xff]
  %v125 = vld [vmem:[%s1 + $0x300] sm:$0xff]
  %v126 = vld [vmem:[%s1 + $0x308] sm:$0xff]
  %v127 = vld [vmem:[%s1 + $0x310] sm:$0xff]
  %v128 = vld [vmem:[%s1 + $0x318] sm:$0xff]
  %v129 = vld [vmem:[%s1 + $0x320] sm:$0xff]
  %v130 = vld [vmem:[%s1 + $0x328] sm:$0xff]
  %v131 = vld [vmem:[%s1 + $0x330] sm:$0xff]
  %v132 = vld [vmem:[%s1 + $0x338] sm:$0xff]
  %v133 = vld [vmem:[%s1 + $0x340] sm:$0xff]
  %v134 = vld [vmem:[%s1 + $0x348] sm:$0xff]
  %v135 = vld [vmem:[%s1 + $0x350] sm:$0xff]
  %v136 = vld [vmem:[%s1 + $0x358] sm:$0xff]
  %v137 = vld [vmem:[%s1 + $0x360] sm:$0xff]
  %v138 = vld [vmem:[%s1 + $0x368] sm:$0xff]
  %v139 = vld [vmem:[%s1 + $0x370] sm:$0xff]
  %v140 = vld [vmem:[%s1 + $0x378] sm:$0xff]
  %v141 = vld [vmem:[%s1 + $0x380] sm:$0xff]
  %v142 = vld [vmem:[%s1 + $0x388] sm:$0xff]
  %v143 = vld [vmem:[%s1 + $0x390] sm:$0xff]
  %v144 = vld [vmem:[%s1 + $0x398] sm:$0xff]
  %v145 = vld [vmem:[%s1 + $0x3a0] sm:$0xff]
  %v146 = vld [vmem:[%s1 + $0x3a8] sm:$0xff]
  %v147 = vld [vmem:[%s1 + $0x3b0] sm:$0xff]
  %v148 = vld [vmem:[%s1 + $0x3b8] sm:$0xff]
  %v149 = vld [vmem:[%s1 + $0x3c0] sm:$0xff]
  %v150 = vld [vmem:[%s1 + $0x3c8] sm:$0xff]
  %v151 = vld [vmem:[%s1 + $0x3d0] sm:$0xff]
  %v152 = vld [vmem:[%s1 + $0x3d8] sm:$0xff]
  %v153 = vld [vmem:[%s1 + $0x3e0] sm:$0xff]
  %v154 = vld [vmem:[%s1 + $0x3e8] sm:$0xff]
  %v155 = vld [vmem:[%s1 + $0x3f0] sm:$0xff]
  %v156 = vld [vmem:[%s1 + $0x3f8] sm:$0xff]
  %v157 = vld [vmem:[%s1 + $0x400] sm:$0xff]
  %v158 = vld [vmem:[%s1 + $0x408] sm:$0xff]
  %v159 = vld [vmem:[%s1 + $0x410] sm:$0xff]
  %v160 = vld [vmem:[%s1 + $0x418] sm:$0xff]
  %v161 = vld [vmem:[%s1 + $0x420] sm:$0xff]
  %v162 = vld [vmem:[%s1 + $0x428] sm:$0xff]
  %v163 = vld [vmem:[%s1 + $0x430] sm:$0xff]
  %v164 = vld [vmem:[%s1 + $0x438] sm:$0xff]
  %v165 = vld [vmem:[%s1 + $0x440] sm:$0xff]
  %v166 = vld [vmem:[%s1 + $0x448] sm:$0xff]
  %v167 = vld [vmem:[%s1 + $0x450] sm:$0xff]
  %v168 = vld [vmem:[%s1 + $0x458] sm:$0xff]
  %v169 = vld [vmem:[%s1 + $0x460] sm:$0xff]
  %v170 = vld [vmem:[%s1 + $0x468] sm:$0xff]
  %v171 = vld [vmem:[%s1 + $0x470] sm:$0xff]
  %v172 = vld [vmem:[%s1 + $0x478] sm:$0xff]
  %v173 = vld [vmem:[%s1 + $0x480] sm:$0xff]
  %v174 = vld [vmem:[%s1 + $0x488] sm:$0xff]
  %v175 = vld [vmem:[%s1 + $0x490] sm:$0xff]
  %v176 = vld [vmem:[%s1 + $0x498] sm:$0xff]
  %v177 = vld [vmem:[%s1 + $0x4a0] sm:$0xff]
  %v178 = vld [vmem:[%s1 + $0x4a8] sm:$0xff]
  %v179 = vld [vmem:[%s1 + $0x4b0] sm:$0xff]
  %v180 = vld [vmem:[%s1 + $0x4b8] sm:$0xff]
  %v181 = vld [vmem:[%s1 + $0x4c0] sm:$0xff]
  %v182 = vld [vmem:[%s1 + $0x4c8] sm:$0xff]
  %v183 = vld [vmem:[%s1 + $0x4d0] sm:$0xff]
  %v184 = vld [vmem:[%s1 + $0x4d8] sm:$0xff]
  %v185 = vld [vmem:[%s1 + $0x4e0] sm:$0xff]
  %v186 = vld [vmem:[%s1 + $0x4e8] sm:$0xff]
  %v187 = vld [vmem:[%s1 + $0x4f0] sm:$0xff]
  %v188 = vld [vmem:[%s1 + $0x4f8] sm:$0xff]
  %v189 = vld [vmem:[%s1 + $0x500] sm:$0xff]
  %v190 = vld [vmem:[%s1 + $0x508] sm:$0xff]
  %v191 = vld [vmem:[%s1 + $0x510] sm:$0xff]
  %v192 = vld [vmem:[%s1 + $0x518] sm:$0xff]
  %v193 = vld [vmem:[%s1 + $0x520] sm:$0xff]
  %v194 = vld [vmem:[%s1 + $0x528] sm:$0xff]
  %v195 = vld [vmem:[%s1 + $0x530] sm:$0xff]
  %v196 = vld [vmem:[%s1 + $0x538] sm:$0xff]
  %v197 = vld [vmem:[%s1 + $0x540] sm:$0xff]
  %v198 = vld [vmem:[%s1 + $0x548] sm:$0xff]
  %v199 = vld [vmem:[%s1 + $0x550] sm:$0xff]
  %v200 = vld [vmem:[%s1 + $0x558] sm:$0xff]
  %v201 = vld [vmem:[%s1 + $0x560] sm:$0xff]
  %v202 = vld [vmem:[%s1 + $0x568] sm:$0xff]
  %v203 = vld [vmem:[%s1 + $0x570] sm:$0xff]
  %v204 = vld [vmem:[%s1 + $0x578] sm:$0xff]
  %v205 = vld [vmem:[%s1 + $0x580] sm:$0xff]
  %v206 = vld [vmem:[%s1 + $0x588] sm:$0xff]
  %v207 = vld [vmem:[%s1 + $0x590] sm:$0xff]
  %v208 = vld [vmem:[%s1 + $0x598] sm:$0xff]
  %v209 = vld [vmem:[%s1 + $0x5a0] sm:$0xff]
  %v210 = vld [vmem:[%s1 + $0x5a8] sm:$0xff]
  %v211 = vld [vmem:[%s1 + $0x5b0] sm:$0xff]
  %v212 = vld [vmem:[%s1 + $0x5b8] sm:$0xff]
  %v213 = vld [vmem:[%s1 + $0x5c0] sm:$0xff]
  %v214 = vld [vmem:[%s1 + $0x5c8] sm:$0xff]
  %v215 = vld [vmem:[%s1 + $0x5d0] sm:$0xff]
  %v216 = vld [vmem:[%s1 + $0x5d8] sm:$0xff]
  %v217 = vld [vmem:[%s1 + $0x5e0] sm:$0xff]
  %v218 = vld [vmem:[%s1 + $0x5e8] sm:$0xff]
  %v219 = vld [vmem:[%s1 + $0x5f0] sm:$0xff]
  %v220 = vld [vmem:[%s1 + $0x5f8] sm:$0xff]
  %v221 = vld [vmem:[%s1 + $0x600] sm:$0xff]
  %v222 = vld [vmem:[%s1 + $0x608] sm:$0xff]
  %v223 = vld [vmem:[%s1 + $0x610] sm:$0xff]
  %v224 = vld [vmem:[%s1 + $0x618] sm:$0xff]
  %v225 = vld [vmem:[%s1 + $0x620] sm:$0xff]
  %v226 = vld [vmem:[%s1 + $0x628] sm:$0xff]
  %v227 = vld [vmem:[%s1 + $0x630] sm:$0xff]
  %v228 = vld [vmem:[%s1 + $0x638] sm:$0xff]
  %v229 = vld [vmem:[%s1 + $0x640] sm:$0xff]
  %v230 = vld [vmem:[%s1 + $0x648] sm:$0xff]
  %v231 = vld [vmem:[%s1 + $0x650] sm:$0xff]
  %v232 = vld [vmem:[%s1 + $0x658] sm:$0xff]
  %v233 = vld [vmem:[%s1 + $0x660] sm:$0xff]
  %v234 = vld [vmem:[%s1 + $0x668] sm:$0xff]
  %v235 = vld [vmem:[%s1 + $0x670] sm:$0xff]
  %v236 = vld [vmem:[%s1 + $0x678] sm:$0xff]
  %v237 = vld [vmem:[%s1 + $0x680] sm:$0xff]
  %v238 = vld [vmem:[%s1 + $0x688] sm:$0xff]
  %v239 = vld [vmem:[%s1 + $0x690] sm:$0xff]
  %v240 = vld [vmem:[%s1 + $0x698] sm:$0xff]
  %v241 = vld [vmem:[%s1 + $0x6a0] sm:$0xff]
  %v242 = vld [vmem:[%s1 + $0x6a8] sm:$0xff]
  %v243 = vld [vmem:[%s1 + $0x6b0] sm:$0xff]
  %v244 = vld [vmem:[%s1 + $0x6b8] sm:$0xff]
  %v245 = vld [vmem:[%s1 + $0x6c0] sm:$0xff]
  %v246 = vld [vmem:[%s1 + $0x6c8] sm:$0xff]
  %v247 = vld [vmem:[%s1 + $0x6d0] sm:$0xff]
  %v248 = vld [vmem:[%s1 + $0x6d8] sm:$0xff]
  %v249 = vld [vmem:[%s1 + $0x6e0] sm:$0xff]
  %v250 = vld [vmem:[%s1 + $0x6e8] sm:$0xff]
  %v251 = vld [vmem:[%s1 + $0x6f0] sm:$0xff]
  %v252 = vld [vmem:[%s1 + $0x6f8] sm:$0xff]
  %v253 = vld [vmem:[%s1 + $0x700] sm:$0xff]
  %v254 = vld [vmem:[%s1 + $0x708] sm:$0xff]
  %v255 = vld [vmem:[%s1 + $0x710] sm:$0xff]
  %v256 = vld [vmem:[%s1 + $0x718] sm:$0xff]
  %v257 = vld [vmem:[%s1 + $0x720] sm:$0xff]
  %v258 = vld [vmem:[%s1 + $0x728] sm:$0xff]
  %v259 = vld [vmem:[%s1 + $0x730] sm:$0xff]
  %v260 = vld [vmem:[%s1 + $0x738] sm:$0xff]
  %v261 = vld [vmem:[%s1 + $0x740] sm:$0xff]
  %v262 = vld [vmem:[%s1 + $0x748] sm:$0xff]
  %v263 = vld [vmem:[%s1 + $0x750] sm:$0xff]
  %v264 = vld [vmem:[%s1 + $0x758] sm:$0xff]
  %v265 = vld [vmem:[%s1 + $0x760] sm:$0xff]
  %v266 = vld [vmem:[%s1 + $0x768] sm:$0xff]
  %v267 = vld [vmem:[%s1 + $0x770] sm:$0xff]
  %v268 = vld [vmem:[%s1 + $0x778] sm:$0xff]
  %v269 = vld [vmem:[%s1 + $0x780] sm:$0xff]
  %v270 = vld [vmem:[%s1 + $0x788] sm:$0xff]
  %v271 = vld [vmem:[%s1 + $0x790] sm:$0xff]
  %v272 = vld [vmem:[%s1 + $0x798] sm:$0xff]
  %v273 = vld [vmem:[%s1 + $0x7a0] sm:$0xff]
  %v274 = vld [vmem:[%s1 + $0x7a8] sm:$0xff]
  %v275 = vld [vmem:[%s1 + $0x7b0] sm:$0xff]
  %v276 = vld [vmem:[%s1 + $0x7b8] sm:$0xff]
  %v277 = vld [vmem:[%s1 + $0x7c0] sm:$0xff]
  %v278 = vld [vmem:[%s1 + $0x7c8] sm:$0xff]
  %v279 = vld [vmem:[%s1 + $0x7d0] sm:$0xff]
  %v280 = vld [vmem:[%s1 + $0x7d8] sm:$0xff]
  %v281 = vld [vmem:[%s1 + $0x7e0] sm:$0xff]
  %v282 = vld [vmem:[%s1 + $0x7e8] sm:$0xff]
  %v283 = vld [vmem:[%s1 + $0x7f0] sm:$0xff]
  %v284 = vld [vmem:[%s1 + $0x7f8] sm:$0xff]
  %v301 = vunpack.c.l.b16 %v13
  %v302 = vunpack.c.h.b16 %v13
  %v303 = vunpack.c.l.b16 %v14
  %v304 = vunpack.c.h.b16 %v14
  %v305 = vunpack.c.l.b16 %v15
  %v306 = vunpack.c.h.b16 %v15
  %v307 = vunpack.c.l.b16 %v16
  %v308 = vunpack.c.h.b16 %v16
  %v309 = vunpack.c.l.b16 %v17
  %v310 = vunpack.c.h.b16 %v17
  %v311 = vunpack.c.l.b16 %v18
  %v312 = vunpack.c.h.b16 %v18
  %v313 = vunpack.c.l.b16 %v19
  %v314 = vunpack.c.h.b16 %v19
  %v315 = vunpack.c.l.b16 %v20
  %v316 = vunpack.c.h.b16 %v20
  %v317 = vunpack.c.l.b16 %v21
  %v318 = vunpack.c.h.b16 %v21
  %v319 = vunpack.c.l.b16 %v22
  %v320 = vunpack.c.h.b16 %v22
  %v321 = vunpack.c.l.b16 %v23
  %v322 = vunpack.c.h.b16 %v23
  %v323 = vunpack.c.l.b16 %v24
  %v324 = vunpack.c.h.b16 %v24
  %v325 = vunpack.c.l.b16 %v25
  %v326 = vunpack.c.h.b16 %v25
  %v327 = vunpack.c.l.b16 %v26
  %v328 = vunpack.c.h.b16 %v26
  %v329 = vunpack.c.l.b16 %v27
  %v330 = vunpack.c.h.b16 %v27
  %v331 = vunpack.c.l.b16 %v28
  %v332 = vunpack.c.h.b16 %v28
  %v333 = vpack.c.b16 %v309, %v301
  %v334 = vpack.c.b16 %v310, %v302
  %v335 = vpack.c.b16 %v311, %v303
  %v336 = vpack.c.b16 %v312, %v304
  %v337 = vpack.c.b16 %v313, %v305
  %v338 = vpack.c.b16 %v314, %v306
  %v339 = vpack.c.b16 %v315, %v307
  %v340 = vpack.c.b16 %v316, %v308
  %v341 = vpack.c.b16 %v325, %v317
  %v342 = vpack.c.b16 %v326, %v318
  %v343 = vpack.c.b16 %v327, %v319
  %v344 = vpack.c.b16 %v328, %v320
  %v345 = vpack.c.b16 %v329, %v321
  %v346 = vpack.c.b16 %v330, %v322
  %v347 = vpack.c.b16 %v331, %v323
  %v348 = vpack.c.b16 %v332, %v324
  %v621 = vunpack.c.l.b16 %v29
  %v622 = vunpack.c.h.b16 %v29
  %v623 = vunpack.c.l.b16 %v30
  %v624 = vunpack.c.h.b16 %v30
  %v625 = vunpack.c.l.b16 %v31
  %v626 = vunpack.c.h.b16 %v31
  %v627 = vunpack.c.l.b16 %v32
  %v628 = vunpack.c.h.b16 %v32
  %v629 = vunpack.c.l.b16 %v33
  %v630 = vunpack.c.h.b16 %v33
  %v631 = vunpack.c.l.b16 %v34
  %v632 = vunpack.c.h.b16 %v34
  %v633 = vunpack.c.l.b16 %v35
  %v634 = vunpack.c.h.b16 %v35
  %v635 = vunpack.c.l.b16 %v36
  %v636 = vunpack.c.h.b16 %v36
  %v637 = vunpack.c.l.b16 %v37
  %v638 = vunpack.c.h.b16 %v37
  %v639 = vunpack.c.l.b16 %v38
  %v640 = vunpack.c.h.b16 %v38
  %v641 = vunpack.c.l.b16 %v39
  %v642 = vunpack.c.h.b16 %v39
  %v643 = vunpack.c.l.b16 %v40
  %v644 = vunpack.c.h.b16 %v40
  %v645 = vunpack.c.l.b16 %v41
  %v646 = vunpack.c.h.b16 %v41
  %v647 = vunpack.c.l.b16 %v42
  %v648 = vunpack.c.h.b16 %v42
  %v649 = vunpack.c.l.b16 %v43
  %v650 = vunpack.c.h.b16 %v43
  %v651 = vunpack.c.l.b16 %v44
  %v652 = vunpack.c.h.b16 %v44
  %v653 = vunpack.c.l.b16 %v45
  %v654 = vunpack.c.h.b16 %v45
  %v655 = vunpack.c.l.b16 %v46
  %v656 = vunpack.c.h.b16 %v46
  %v657 = vunpack.c.l.b16 %v47
  %v658 = vunpack.c.h.b16 %v47
  %v659 = vunpack.c.l.b16 %v48
  %v660 = vunpack.c.h.b16 %v48
  %v661 = vunpack.c.l.b16 %v49
  %v662 = vunpack.c.h.b16 %v49
  %v663 = vunpack.c.l.b16 %v50
  %v664 = vunpack.c.h.b16 %v50
  %v665 = vunpack.c.l.b16 %v51
  %v666 = vunpack.c.h.b16 %v51
  %v667 = vunpack.c.l.b16 %v52
  %v668 = vunpack.c.h.b16 %v52
  %v669 = vunpack.c.l.b16 %v53
  %v670 = vunpack.c.h.b16 %v53
  %v671 = vunpack.c.l.b16 %v54
  %v672 = vunpack.c.h.b16 %v54
  %v673 = vunpack.c.l.b16 %v55
  %v674 = vunpack.c.h.b16 %v55
  %v675 = vunpack.c.l.b16 %v56
  %v676 = vunpack.c.h.b16 %v56
  %v677 = vunpack.c.l.b16 %v57
  %v678 = vunpack.c.h.b16 %v57
  %v679 = vunpack.c.l.b16 %v58
  %v680 = vunpack.c.h.b16 %v58
  %v681 = vunpack.c.l.b16 %v59
  %v682 = vunpack.c.h.b16 %v59
  %v683 = vunpack.c.l.b16 %v60
  %v684 = vunpack.c.h.b16 %v60
  %v685 = vunpack.c.l.b16 %v61
  %v686 = vunpack.c.h.b16 %v61
  %v687 = vunpack.c.l.b16 %v62
  %v688 = vunpack.c.h.b16 %v62
  %v689 = vunpack.c.l.b16 %v63
  %v690 = vunpack.c.h.b16 %v63
  %v691 = vunpack.c.l.b16 %v64
  %v692 = vunpack.c.h.b16 %v64
  %v693 = vunpack.c.l.b16 %v65
  %v694 = vunpack.c.h.b16 %v65
  %v695 = vunpack.c.l.b16 %v66
  %v696 = vunpack.c.h.b16 %v66
  %v697 = vunpack.c.l.b16 %v67
  %v698 = vunpack.c.h.b16 %v67
  %v699 = vunpack.c.l.b16 %v68
  %v700 = vunpack.c.h.b16 %v68
  %v701 = vunpack.c.l.b16 %v69
  %v702 = vunpack.c.h.b16 %v69
  %v703 = vunpack.c.l.b16 %v70
  %v704 = vunpack.c.h.b16 %v70
  %v705 = vunpack.c.l.b16 %v71
  %v706 = vunpack.c.h.b16 %v71
  %v707 = vunpack.c.l.b16 %v72
  %v708 = vunpack.c.h.b16 %v72
  %v709 = vunpack.c.l.b16 %v73
  %v710 = vunpack.c.h.b16 %v73
  %v711 = vunpack.c.l.b16 %v74
  %v712 = vunpack.c.h.b16 %v74
  %v713 = vunpack.c.l.b16 %v75
  %v714 = vunpack.c.h.b16 %v75
  %v715 = vunpack.c.l.b16 %v76
  %v716 = vunpack.c.h.b16 %v76
  %v717 = vunpack.c.l.b16 %v77
  %v718 = vunpack.c.h.b16 %v77
  %v719 = vunpack.c.l.b16 %v78
  %v720 = vunpack.c.h.b16 %v78
  %v721 = vunpack.c.l.b16 %v79
  %v722 = vunpack.c.h.b16 %v79
  %v723 = vunpack.c.l.b16 %v80
  %v724 = vunpack.c.h.b16 %v80
  %v725 = vunpack.c.l.b16 %v81
  %v726 = vunpack.c.h.b16 %v81
  %v727 = vunpack.c.l.b16 %v82
  %v728 = vunpack.c.h.b16 %v82
  %v729 = vunpack.c.l.b16 %v83
  %v730 = vunpack.c.h.b16 %v83
  %v731 = vunpack.c.l.b16 %v84
  %v732 = vunpack.c.h.b16 %v84
  %v733 = vunpack.c.l.b16 %v85
  %v734 = vunpack.c.h.b16 %v85
  %v735 = vunpack.c.l.b16 %v86
  %v736 = vunpack.c.h.b16 %v86
  %v737 = vunpack.c.l.b16 %v87
  %v738 = vunpack.c.h.b16 %v87
  %v739 = vunpack.c.l.b16 %v88
  %v740 = vunpack.c.h.b16 %v88
  %v741 = vunpack.c.l.b16 %v89
  %v742 = vunpack.c.h.b16 %v89
  %v743 = vunpack.c.l.b16 %v90
  %v744 = vunpack.c.h.b16 %v90
  %v745 = vunpack.c.l.b16 %v91
  %v746 = vunpack.c.h.b16 %v91
  %v747 = vunpack.c.l.b16 %v92
  %v748 = vunpack.c.h.b16 %v92
  %v749 = vunpack.c.l.b16 %v93
  %v750 = vunpack.c.h.b16 %v93
  %v751 = vunpack.c.l.b16 %v94
  %v752 = vunpack.c.h.b16 %v94
  %v753 = vunpack.c.l.b16 %v95
  %v754 = vunpack.c.h.b16 %v95
  %v755 = vunpack.c.l.b16 %v96
  %v756 = vunpack.c.h.b16 %v96
  %v757 = vunpack.c.l.b16 %v97
  %v758 = vunpack.c.h.b16 %v97
  %v759 = vunpack.c.l.b16 %v98
  %v760 = vunpack.c.h.b16 %v98
  %v761 = vunpack.c.l.b16 %v99
  %v762 = vunpack.c.h.b16 %v99
  %v763 = vunpack.c.l.b16 %v100
  %v764 = vunpack.c.h.b16 %v100
  %v765 = vunpack.c.l.b16 %v101
  %v766 = vunpack.c.h.b16 %v101
  %v767 = vunpack.c.l.b16 %v102
  %v768 = vunpack.c.h.b16 %v102
  %v769 = vunpack.c.l.b16 %v103
  %v770 = vunpack.c.h.b16 %v103
  %v771 = vunpack.c.l.b16 %v104
  %v772 = vunpack.c.h.b16 %v104
  %v773 = vunpack.c.l.b16 %v105
  %v774 = vunpack.c.h.b16 %v105
  %v775 = vunpack.c.l.b16 %v106
  %v776 = vunpack.c.h.b16 %v106
  %v777 = vunpack.c.l.b16 %v107
  %v778 = vunpack.c.h.b16 %v107
  %v779 = vunpack.c.l.b16 %v108
  %v780 = vunpack.c.h.b16 %v108
  %v781 = vunpack.c.l.b16 %v109
  %v782 = vunpack.c.h.b16 %v109
  %v783 = vunpack.c.l.b16 %v110
  %v784 = vunpack.c.h.b16 %v110
  %v785 = vunpack.c.l.b16 %v111
  %v786 = vunpack.c.h.b16 %v111
  %v787 = vunpack.c.l.b16 %v112
  %v788 = vunpack.c.h.b16 %v112
  %v789 = vunpack.c.l.b16 %v113
  %v790 = vunpack.c.h.b16 %v113
  %v791 = vunpack.c.l.b16 %v114
  %v792 = vunpack.c.h.b16 %v114
  %v793 = vunpack.c.l.b16 %v115
  %v794 = vunpack.c.h.b16 %v115
  %v795 = vunpack.c.l.b16 %v116
  %v796 = vunpack.c.h.b16 %v116
  %v797 = vunpack.c.l.b16 %v117
  %v798 = vunpack.c.h.b16 %v117
  %v799 = vunpack.c.l.b16 %v118
  %v800 = vunpack.c.h.b16 %v118
  %v801 = vunpack.c.l.b16 %v119
  %v802 = vunpack.c.h.b16 %v119
  %v803 = vunpack.c.l.b16 %v120
  %v804 = vunpack.c.h.b16 %v120
  %v805 = vunpack.c.l.b16 %v121
  %v806 = vunpack.c.h.b16 %v121
  %v807 = vunpack.c.l.b16 %v122
  %v808 = vunpack.c.h.b16 %v122
  %v809 = vunpack.c.l.b16 %v123
  %v810 = vunpack.c.h.b16 %v123
  %v811 = vunpack.c.l.b16 %v124
  %v812 = vunpack.c.h.b16 %v124
  %v813 = vunpack.c.l.b16 %v125
  %v814 = vunpack.c.h.b16 %v125
  %v815 = vunpack.c.l.b16 %v126
  %v816 = vunpack.c.h.b16 %v126
  %v817 = vunpack.c.l.b16 %v127
  %v818 = vunpack.c.h.b16 %v127
  %v819 = vunpack.c.l.b16 %v128
  %v820 = vunpack.c.h.b16 %v128
  %v821 = vunpack.c.l.b16 %v129
  %v822 = vunpack.c.h.b16 %v129
  %v823 = vunpack.c.l.b16 %v130
  %v824 = vunpack.c.h.b16 %v130
  %v825 = vunpack.c.l.b16 %v131
  %v826 = vunpack.c.h.b16 %v131
  %v827 = vunpack.c.l.b16 %v132
  %v828 = vunpack.c.h.b16 %v132
  %v829 = vunpack.c.l.b16 %v133
  %v830 = vunpack.c.h.b16 %v133
  %v831 = vunpack.c.l.b16 %v134
  %v832 = vunpack.c.h.b16 %v134
  %v833 = vunpack.c.l.b16 %v135
  %v834 = vunpack.c.h.b16 %v135
  %v835 = vunpack.c.l.b16 %v136
  %v836 = vunpack.c.h.b16 %v136
  %v837 = vunpack.c.l.b16 %v137
  %v838 = vunpack.c.h.b16 %v137
  %v839 = vunpack.c.l.b16 %v138
  %v840 = vunpack.c.h.b16 %v138
  %v841 = vunpack.c.l.b16 %v139
  %v842 = vunpack.c.h.b16 %v139
  %v843 = vunpack.c.l.b16 %v140
  %v844 = vunpack.c.h.b16 %v140
  %v845 = vunpack.c.l.b16 %v141
  %v846 = vunpack.c.h.b16 %v141
  %v847 = vunpack.c.l.b16 %v142
  %v848 = vunpack.c.h.b16 %v142
  %v849 = vunpack.c.l.b16 %v143
  %v850 = vunpack.c.h.b16 %v143
  %v851 = vunpack.c.l.b16 %v144
  %v852 = vunpack.c.h.b16 %v144
  %v853 = vunpack.c.l.b16 %v145
  %v854 = vunpack.c.h.b16 %v145
  %v855 = vunpack.c.l.b16 %v146
  %v856 = vunpack.c.h.b16 %v146
  %v857 = vunpack.c.l.b16 %v147
  %v858 = vunpack.c.h.b16 %v147
  %v859 = vunpack.c.l.b16 %v148
  %v860 = vunpack.c.h.b16 %v148
  %v861 = vunpack.c.l.b16 %v149
  %v862 = vunpack.c.h.b16 %v149
  %v863 = vunpack.c.l.b16 %v150
  %v864 = vunpack.c.h.b16 %v150
  %v865 = vunpack.c.l.b16 %v151
  %v866 = vunpack.c.h.b16 %v151
  %v867 = vunpack.c.l.b16 %v152
  %v868 = vunpack.c.h.b16 %v152
  %v869 = vunpack.c.l.b16 %v153
  %v870 = vunpack.c.h.b16 %v153
  %v871 = vunpack.c.l.b16 %v154
  %v872 = vunpack.c.h.b16 %v154
  %v873 = vunpack.c.l.b16 %v155
  %v874 = vunpack.c.h.b16 %v155
  %v875 = vunpack.c.l.b16 %v156
  %v876 = vunpack.c.h.b16 %v156
  %v877 = vunpack.c.l.b16 %v157
  %v878 = vunpack.c.h.b16 %v157
  %v879 = vunpack.c.l.b16 %v158
  %v880 = vunpack.c.h.b16 %v158
  %v881 = vunpack.c.l.b16 %v159
  %v882 = vunpack.c.h.b16 %v159
  %v883 = vunpack.c.l.b16 %v160
  %v884 = vunpack.c.h.b16 %v160
  %v885 = vunpack.c.l.b16 %v161
  %v886 = vunpack.c.h.b16 %v161
  %v887 = vunpack.c.l.b16 %v162
  %v888 = vunpack.c.h.b16 %v162
  %v889 = vunpack.c.l.b16 %v163
  %v890 = vunpack.c.h.b16 %v163
  %v891 = vunpack.c.l.b16 %v164
  %v892 = vunpack.c.h.b16 %v164
  %v893 = vunpack.c.l.b16 %v165
  %v894 = vunpack.c.h.b16 %v165
  %v895 = vunpack.c.l.b16 %v166
  %v896 = vunpack.c.h.b16 %v166
  %v897 = vunpack.c.l.b16 %v167
  %v898 = vunpack.c.h.b16 %v167
  %v899 = vunpack.c.l.b16 %v168
  %v900 = vunpack.c.h.b16 %v168
  %v901 = vunpack.c.l.b16 %v169
  %v902 = vunpack.c.h.b16 %v169
  %v903 = vunpack.c.l.b16 %v170
  %v904 = vunpack.c.h.b16 %v170
  %v905 = vunpack.c.l.b16 %v171
  %v906 = vunpack.c.h.b16 %v171
  %v907 = vunpack.c.l.b16 %v172
  %v908 = vunpack.c.h.b16 %v172
  %v909 = vunpack.c.l.b16 %v173
  %v910 = vunpack.c.h.b16 %v173
  %v911 = vunpack.c.l.b16 %v174
  %v912 = vunpack.c.h.b16 %v174
  %v913 = vunpack.c.l.b16 %v175
  %v914 = vunpack.c.h.b16 %v175
  %v915 = vunpack.c.l.b16 %v176
  %v916 = vunpack.c.h.b16 %v176
  %v917 = vunpack.c.l.b16 %v177
  %v918 = vunpack.c.h.b16 %v177
  %v919 = vunpack.c.l.b16 %v178
  %v920 = vunpack.c.h.b16 %v178
  %v921 = vunpack.c.l.b16 %v179
  %v922 = vunpack.c.h.b16 %v179
  %v923 = vunpack.c.l.b16 %v180
  %v924 = vunpack.c.h.b16 %v180
  %v925 = vunpack.c.l.b16 %v181
  %v926 = vunpack.c.h.b16 %v181
  %v927 = vunpack.c.l.b16 %v182
  %v928 = vunpack.c.h.b16 %v182
  %v929 = vunpack.c.l.b16 %v183
  %v930 = vunpack.c.h.b16 %v183
  %v931 = vunpack.c.l.b16 %v184
  %v932 = vunpack.c.h.b16 %v184
  %v933 = vunpack.c.l.b16 %v185
  %v934 = vunpack.c.h.b16 %v185
  %v935 = vunpack.c.l.b16 %v186
  %v936 = vunpack.c.h.b16 %v186
  %v937 = vunpack.c.l.b16 %v187
  %v938 = vunpack.c.h.b16 %v187
  %v939 = vunpack.c.l.b16 %v188
  %v940 = vunpack.c.h.b16 %v188
  %v941 = vunpack.c.l.b16 %v189
  %v942 = vunpack.c.h.b16 %v189
  %v943 = vunpack.c.l.b16 %v190
  %v944 = vunpack.c.h.b16 %v190
  %v945 = vunpack.c.l.b16 %v191
  %v946 = vunpack.c.h.b16 %v191
  %v947 = vunpack.c.l.b16 %v192
  %v948 = vunpack.c.h.b16 %v192
  %v949 = vunpack.c.l.b16 %v193
  %v950 = vunpack.c.h.b16 %v193
  %v951 = vunpack.c.l.b16 %v194
  %v952 = vunpack.c.h.b16 %v194
  %v953 = vunpack.c.l.b16 %v195
  %v954 = vunpack.c.h.b16 %v195
  %v955 = vunpack.c.l.b16 %v196
  %v956 = vunpack.c.h.b16 %v196
  %v957 = vunpack.c.l.b16 %v197
  %v958 = vunpack.c.h.b16 %v197
  %v959 = vunpack.c.l.b16 %v198
  %v960 = vunpack.c.h.b16 %v198
  %v961 = vunpack.c.l.b16 %v199
  %v962 = vunpack.c.h.b16 %v199
  %v963 = vunpack.c.l.b16 %v200
  %v964 = vunpack.c.h.b16 %v200
  %v965 = vunpack.c.l.b16 %v201
  %v966 = vunpack.c.h.b16 %v201
  %v967 = vunpack.c.l.b16 %v202
  %v968 = vunpack.c.h.b16 %v202
  %v969 = vunpack.c.l.b16 %v203
  %v970 = vunpack.c.h.b16 %v203
  %v971 = vunpack.c.l.b16 %v204
  %v972 = vunpack.c.h.b16 %v204
  %v973 = vunpack.c.l.b16 %v205
  %v974 = vunpack.c.h.b16 %v205
  %v975 = vunpack.c.l.b16 %v206
  %v976 = vunpack.c.h.b16 %v206
  %v977 = vunpack.c.l.b16 %v207
  %v978 = vunpack.c.h.b16 %v207
  %v979 = vunpack.c.l.b16 %v208
  %v980 = vunpack.c.h.b16 %v208
  %v981 = vunpack.c.l.b16 %v209
  %v982 = vunpack.c.h.b16 %v209
  %v983 = vunpack.c.l.b16 %v210
  %v984 = vunpack.c.h.b16 %v210
  %v985 = vunpack.c.l.b16 %v211
  %v986 = vunpack.c.h.b16 %v211
  %v987 = vunpack.c.l.b16 %v212
  %v988 = vunpack.c.h.b16 %v212
  %v989 = vunpack.c.l.b16 %v213
  %v990 = vunpack.c.h.b16 %v213
  %v991 = vunpack.c.l.b16 %v214
  %v992 = vunpack.c.h.b16 %v214
  %v993 = vunpack.c.l.b16 %v215
  %v994 = vunpack.c.h.b16 %v215
  %v995 = vunpack.c.l.b16 %v216
  %v996 = vunpack.c.h.b16 %v216
  %v997 = vunpack.c.l.b16 %v217
  %v998 = vunpack.c.h.b16 %v217
  %v999 = vunpack.c.l.b16 %v218
  %v1000 = vunpack.c.h.b16 %v218
  %v1001 = vunpack.c.l.b16 %v219
  %v1002 = vunpack.c.h.b16 %v219
  %v1003 = vunpack.c.l.b16 %v220
  %v1004 = vunpack.c.h.b16 %v220
  %v1005 = vunpack.c.l.b16 %v221
  %v1006 = vunpack.c.h.b16 %v221
  %v1007 = vunpack.c.l.b16 %v222
  %v1008 = vunpack.c.h.b16 %v222
  %v1009 = vunpack.c.l.b16 %v223
  %v1010 = vunpack.c.h.b16 %v223
  %v1011 = vunpack.c.l.b16 %v224
  %v1012 = vunpack.c.h.b16 %v224
  %v1013 = vunpack.c.l.b16 %v225
  %v1014 = vunpack.c.h.b16 %v225
  %v1015 = vunpack.c.l.b16 %v226
  %v1016 = vunpack.c.h.b16 %v226
  %v1017 = vunpack.c.l.b16 %v227
  %v1018 = vunpack.c.h.b16 %v227
  %v1019 = vunpack.c.l.b16 %v228
  %v1020 = vunpack.c.h.b16 %v228
  %v1021 = vunpack.c.l.b16 %v229
  %v1022 = vunpack.c.h.b16 %v229
  %v1023 = vunpack.c.l.b16 %v230
  %v1024 = vunpack.c.h.b16 %v230
  %v1025 = vunpack.c.l.b16 %v231
  %v1026 = vunpack.c.h.b16 %v231
  %v1027 = vunpack.c.l.b16 %v232
  %v1028 = vunpack.c.h.b16 %v232
  %v1029 = vunpack.c.l.b16 %v233
  %v1030 = vunpack.c.h.b16 %v233
  %v1031 = vunpack.c.l.b16 %v234
  %v1032 = vunpack.c.h.b16 %v234
  %v1033 = vunpack.c.l.b16 %v235
  %v1034 = vunpack.c.h.b16 %v235
  %v1035 = vunpack.c.l.b16 %v236
  %v1036 = vunpack.c.h.b16 %v236
  %v1037 = vunpack.c.l.b16 %v237
  %v1038 = vunpack.c.h.b16 %v237
  %v1039 = vunpack.c.l.b16 %v238
  %v1040 = vunpack.c.h.b16 %v238
  %v1041 = vunpack.c.l.b16 %v239
  %v1042 = vunpack.c.h.b16 %v239
  %v1043 = vunpack.c.l.b16 %v240
  %v1044 = vunpack.c.h.b16 %v240
  %v1045 = vunpack.c.l.b16 %v241
  %v1046 = vunpack.c.h.b16 %v241
  %v1047 = vunpack.c.l.b16 %v242
  %v1048 = vunpack.c.h.b16 %v242
  %v1049 = vunpack.c.l.b16 %v243
  %v1050 = vunpack.c.h.b16 %v243
  %v1051 = vunpack.c.l.b16 %v244
  %v1052 = vunpack.c.h.b16 %v244
  %v1053 = vunpack.c.l.b16 %v245
  %v1054 = vunpack.c.h.b16 %v245
  %v1055 = vunpack.c.l.b16 %v246
  %v1056 = vunpack.c.h.b16 %v246
  %v1057 = vunpack.c.l.b16 %v247
  %v1058 = vunpack.c.h.b16 %v247
  %v1059 = vunpack.c.l.b16 %v248
  %v1060 = vunpack.c.h.b16 %v248
  %v1061 = vunpack.c.l.b16 %v249
  %v1062 = vunpack.c.h.b16 %v249
  %v1063 = vunpack.c.l.b16 %v250
  %v1064 = vunpack.c.h.b16 %v250
  %v1065 = vunpack.c.l.b16 %v251
  %v1066 = vunpack.c.h.b16 %v251
  %v1067 = vunpack.c.l.b16 %v252
  %v1068 = vunpack.c.h.b16 %v252
  %v1069 = vunpack.c.l.b16 %v253
  %v1070 = vunpack.c.h.b16 %v253
  %v1071 = vunpack.c.l.b16 %v254
  %v1072 = vunpack.c.h.b16 %v254
  %v1073 = vunpack.c.l.b16 %v255
  %v1074 = vunpack.c.h.b16 %v255
  %v1075 = vunpack.c.l.b16 %v256
  %v1076 = vunpack.c.h.b16 %v256
  %v1077 = vunpack.c.l.b16 %v257
  %v1078 = vunpack.c.h.b16 %v257
  %v1079 = vunpack.c.l.b16 %v258
  %v1080 = vunpack.c.h.b16 %v258
  %v1081 = vunpack.c.l.b16 %v259
  %v1082 = vunpack.c.h.b16 %v259
  %v1083 = vunpack.c.l.b16 %v260
  %v1084 = vunpack.c.h.b16 %v260
  %v1085 = vunpack.c.l.b16 %v261
  %v1086 = vunpack.c.h.b16 %v261
  %v1087 = vunpack.c.l.b16 %v262
  %v1088 = vunpack.c.h.b16 %v262
  %v1089 = vunpack.c.l.b16 %v263
  %v1090 = vunpack.c.h.b16 %v263
  %v1091 = vunpack.c.l.b16 %v264
  %v1092 = vunpack.c.h.b16 %v264
  %v1093 = vunpack.c.l.b16 %v265
  %v1094 = vunpack.c.h.b16 %v265
  %v1095 = vunpack.c.l.b16 %v266
  %v1096 = vunpack.c.h.b16 %v266
  %v1097 = vunpack.c.l.b16 %v267
  %v1098 = vunpack.c.h.b16 %v267
  %v1099 = vunpack.c.l.b16 %v268
  %v1100 = vunpack.c.h.b16 %v268
  %v1101 = vunpack.c.l.b16 %v269
  %v1102 = vunpack.c.h.b16 %v269
  %v1103 = vunpack.c.l.b16 %v270
  %v1104 = vunpack.c.h.b16 %v270
  %v1105 = vunpack.c.l.b16 %v271
  %v1106 = vunpack.c.h.b16 %v271
  %v1107 = vunpack.c.l.b16 %v272
  %v1108 = vunpack.c.h.b16 %v272
  %v1109 = vunpack.c.l.b16 %v273
  %v1110 = vunpack.c.h.b16 %v273
  %v1111 = vunpack.c.l.b16 %v274
  %v1112 = vunpack.c.h.b16 %v274
  %v1113 = vunpack.c.l.b16 %v275
  %v1114 = vunpack.c.h.b16 %v275
  %v1115 = vunpack.c.l.b16 %v276
  %v1116 = vunpack.c.h.b16 %v276
  %v1117 = vunpack.c.l.b16 %v277
  %v1118 = vunpack.c.h.b16 %v277
  %v1119 = vunpack.c.l.b16 %v278
  %v1120 = vunpack.c.h.b16 %v278
  %v1121 = vunpack.c.l.b16 %v279
  %v1122 = vunpack.c.h.b16 %v279
  %v1123 = vunpack.c.l.b16 %v280
  %v1124 = vunpack.c.h.b16 %v280
  %v1125 = vunpack.c.l.b16 %v281
  %v1126 = vunpack.c.h.b16 %v281
  %v1127 = vunpack.c.l.b16 %v282
  %v1128 = vunpack.c.h.b16 %v282
  %v1129 = vunpack.c.l.b16 %v283
  %v1130 = vunpack.c.h.b16 %v283
  %v1131 = vunpack.c.l.b16 %v284
  %v1132 = vunpack.c.h.b16 %v284
  %v1133 = vpack.c.b16 %v625, %v621
  %v1134 = vpack.c.b16 %v626, %v622
  %v1135 = vpack.c.b16 %v627, %v623
  %v1136 = vpack.c.b16 %v628, %v624
  %v1137 = vpack.c.b16 %v633, %v629
  %v1138 = vpack.c.b16 %v634, %v630
  %v1139 = vpack.c.b16 %v635, %v631
  %v1140 = vpack.c.b16 %v636, %v632
  %v1141 = vpack.c.b16 %v641, %v637
  %v1142 = vpack.c.b16 %v642, %v638
  %v1143 = vpack.c.b16 %v643, %v639
  %v1144 = vpack.c.b16 %v644, %v640
  %v1145 = vpack.c.b16 %v649, %v645
  %v1146 = vpack.c.b16 %v650, %v646
  %v1147 = vpack.c.b16 %v651, %v647
  %v1148 = vpack.c.b16 %v652, %v648
  %v1149 = vpack.c.b16 %v657, %v653
  %v1150 = vpack.c.b16 %v658, %v654
  %v1151 = vpack.c.b16 %v659, %v655
  %v1152 = vpack.c.b16 %v660, %v656
  %v1153 = vpack.c.b16 %v665, %v661
  %v1154 = vpack.c.b16 %v666, %v662
  %v1155 = vpack.c.b16 %v667, %v663
  %v1156 = vpack.c.b16 %v668, %v664
  %v1157 = vpack.c.b16 %v673, %v669
  %v1158 = vpack.c.b16 %v674, %v670
  %v1159 = vpack.c.b16 %v675, %v671
  %v1160 = vpack.c.b16 %v676, %v672
  %v1161 = vpack.c.b16 %v681, %v677
  %v1162 = vpack.c.b16 %v682, %v678
  %v1163 = vpack.c.b16 %v683, %v679
  %v1164 = vpack.c.b16 %v684, %v680
  %v1165 = vpack.c.b16 %v689, %v685
  %v1166 = vpack.c.b16 %v690, %v686
  %v1167 = vpack.c.b16 %v691, %v687
  %v1168 = vpack.c.b16 %v692, %v688
  %v1169 = vpack.c.b16 %v697, %v693
  %v1170 = vpack.c.b16 %v698, %v694
  %v1171 = vpack.c.b16 %v699, %v695
  %v1172 = vpack.c.b16 %v700, %v696
  %v1173 = vpack.c.b16 %v705, %v701
  %v1174 = vpack.c.b16 %v706, %v702
  %v1175 = vpack.c.b16 %v707, %v703
  %v1176 = vpack.c.b16 %v708, %v704
  %v1177 = vpack.c.b16 %v713, %v709
  %v1178 = vpack.c.b16 %v714, %v710
  %v1179 = vpack.c.b16 %v715, %v711
  %v1180 = vpack.c.b16 %v716, %v712
  %v1181 = vpack.c.b16 %v721, %v717
  %v1182 = vpack.c.b16 %v722, %v718
  %v1183 = vpack.c.b16 %v723, %v719
  %v1184 = vpack.c.b16 %v724, %v720
  %v1185 = vpack.c.b16 %v729, %v725
  %v1186 = vpack.c.b16 %v730, %v726
  %v1187 = vpack.c.b16 %v731, %v727
  %v1188 = vpack.c.b16 %v732, %v728
  %v1189 = vpack.c.b16 %v737, %v733
  %v1190 = vpack.c.b16 %v738, %v734
  %v1191 = vpack.c.b16 %v739, %v735
  %v1192 = vpack.c.b16 %v740, %v736
  %v1193 = vpack.c.b16 %v745, %v741
  %v1194 = vpack.c.b16 %v746, %v742
  %v1195 = vpack.c.b16 %v747, %v743
  %v1196 = vpack.c.b16 %v748, %v744
  %v1197 = vpack.c.b16 %v753, %v749
  %v1198 = vpack.c.b16 %v754, %v750
  %v1199 = vpack.c.b16 %v755, %v751
  %v1200 = vpack.c.b16 %v756, %v752
  %v1201 = vpack.c.b16 %v761, %v757
  %v1202 = vpack.c.b16 %v762, %v758
  %v1203 = vpack.c.b16 %v763, %v759
  %v1204 = vpack.c.b16 %v764, %v760
  %v1205 = vpack.c.b16 %v769, %v765
  %v1206 = vpack.c.b16 %v770, %v766
  %v1207 = vpack.c.b16 %v771, %v767
  %v1208 = vpack.c.b16 %v772, %v768
  %v1209 = vpack.c.b16 %v777, %v773
  %v1210 = vpack.c.b16 %v778, %v774
  %v1211 = vpack.c.b16 %v779, %v775
  %v1212 = vpack.c.b16 %v780, %v776
  %v1213 = vpack.c.b16 %v785, %v781
  %v1214 = vpack.c.b16 %v786, %v782
  %v1215 = vpack.c.b16 %v787, %v783
  %v1216 = vpack.c.b16 %v788, %v784
  %v1217 = vpack.c.b16 %v793, %v789
  %v1218 = vpack.c.b16 %v794, %v790
  %v1219 = vpack.c.b16 %v795, %v791
  %v1220 = vpack.c.b16 %v796, %v792
  %v1221 = vpack.c.b16 %v801, %v797
  %v1222 = vpack.c.b16 %v802, %v798
  %v1223 = vpack.c.b16 %v803, %v799
  %v1224 = vpack.c.b16 %v804, %v800
  %v1225 = vpack.c.b16 %v809, %v805
  %v1226 = vpack.c.b16 %v810, %v806
  %v1227 = vpack.c.b16 %v811, %v807
  %v1228 = vpack.c.b16 %v812, %v808
  %v1229 = vpack.c.b16 %v817, %v813
  %v1230 = vpack.c.b16 %v818, %v814
  %v1231 = vpack.c.b16 %v819, %v815
  %v1232 = vpack.c.b16 %v820, %v816
  %v1233 = vpack.c.b16 %v825, %v821
  %v1234 = vpack.c.b16 %v826, %v822
  %v1235 = vpack.c.b16 %v827, %v823
  %v1236 = vpack.c.b16 %v828, %v824
  %v1237 = vpack.c.b16 %v833, %v829
  %v1238 = vpack.c.b16 %v834, %v830
  %v1239 = vpack.c.b16 %v835, %v831
  %v1240 = vpack.c.b16 %v836, %v832
  %v1241 = vpack.c.b16 %v841, %v837
  %v1242 = vpack.c.b16 %v842, %v838
  %v1243 = vpack.c.b16 %v843, %v839
  %v1244 = vpack.c.b16 %v844, %v840
  %v1245 = vpack.c.b16 %v849, %v845
  %v1246 = vpack.c.b16 %v850, %v846
  %v1247 = vpack.c.b16 %v851, %v847
  %v1248 = vpack.c.b16 %v852, %v848
  %v1249 = vpack.c.b16 %v857, %v853
  %v1250 = vpack.c.b16 %v858, %v854
  %v1251 = vpack.c.b16 %v859, %v855
  %v1252 = vpack.c.b16 %v860, %v856
  %v1253 = vpack.c.b16 %v865, %v861
  %v1254 = vpack.c.b16 %v866, %v862
  %v1255 = vpack.c.b16 %v867, %v863
  %v1256 = vpack.c.b16 %v868, %v864
  %v1257 = vpack.c.b16 %v873, %v869
  %v1258 = vpack.c.b16 %v874, %v870
  %v1259 = vpack.c.b16 %v875, %v871
  %v1260 = vpack.c.b16 %v876, %v872
  %v1261 = vpack.c.b16 %v881, %v877
  %v1262 = vpack.c.b16 %v882, %v878
  %v1263 = vpack.c.b16 %v883, %v879
  %v1264 = vpack.c.b16 %v884, %v880
  %v1265 = vpack.c.b16 %v889, %v885
  %v1266 = vpack.c.b16 %v890, %v886
  %v1267 = vpack.c.b16 %v891, %v887
  %v1268 = vpack.c.b16 %v892, %v888
  %v1269 = vpack.c.b16 %v897, %v893
  %v1270 = vpack.c.b16 %v898, %v894
  %v1271 = vpack.c.b16 %v899, %v895
  %v1272 = vpack.c.b16 %v900, %v896
  %v1273 = vpack.c.b16 %v905, %v901
  %v1274 = vpack.c.b16 %v906, %v902
  %v1275 = vpack.c.b16 %v907, %v903
  %v1276 = vpack.c.b16 %v908, %v904
  %v1277 = vpack.c.b16 %v913, %v909
  %v1278 = vpack.c.b16 %v914, %v910
  %v1279 = vpack.c.b16 %v915, %v911
  %v1280 = vpack.c.b16 %v916, %v912
  %v1281 = vpack.c.b16 %v921, %v917
  %v1282 = vpack.c.b16 %v922, %v918
  %v1283 = vpack.c.b16 %v923, %v919
  %v1284 = vpack.c.b16 %v924, %v920
  %v1285 = vpack.c.b16 %v929, %v925
  %v1286 = vpack.c.b16 %v930, %v926
  %v1287 = vpack.c.b16 %v931, %v927
  %v1288 = vpack.c.b16 %v932, %v928
  %v1289 = vpack.c.b16 %v937, %v933
  %v1290 = vpack.c.b16 %v938, %v934
  %v1291 = vpack.c.b16 %v939, %v935
  %v1292 = vpack.c.b16 %v940, %v936
  %v1293 = vpack.c.b16 %v945, %v941
  %v1294 = vpack.c.b16 %v946, %v942
  %v1295 = vpack.c.b16 %v947, %v943
  %v1296 = vpack.c.b16 %v948, %v944
  %v1297 = vpack.c.b16 %v953, %v949
  %v1298 = vpack.c.b16 %v954, %v950
  %v1299 = vpack.c.b16 %v955, %v951
  %v1300 = vpack.c.b16 %v956, %v952
  %v1301 = vpack.c.b16 %v961, %v957
  %v1302 = vpack.c.b16 %v962, %v958
  %v1303 = vpack.c.b16 %v963, %v959
  %v1304 = vpack.c.b16 %v964, %v960
  %v1305 = vpack.c.b16 %v969, %v965
  %v1306 = vpack.c.b16 %v970, %v966
  %v1307 = vpack.c.b16 %v971, %v967
  %v1308 = vpack.c.b16 %v972, %v968
  %v1309 = vpack.c.b16 %v977, %v973
  %v1310 = vpack.c.b16 %v978, %v974
  %v1311 = vpack.c.b16 %v979, %v975
  %v1312 = vpack.c.b16 %v980, %v976
  %v1313 = vpack.c.b16 %v985, %v981
  %v1314 = vpack.c.b16 %v986, %v982
  %v1315 = vpack.c.b16 %v987, %v983
  %v1316 = vpack.c.b16 %v988, %v984
  %v1317 = vpack.c.b16 %v993, %v989
  %v1318 = vpack.c.b16 %v994, %v990
  %v1319 = vpack.c.b16 %v995, %v991
  %v1320 = vpack.c.b16 %v996, %v992
  %v1321 = vpack.c.b16 %v1001, %v997
  %v1322 = vpack.c.b16 %v1002, %v998
  %v1323 = vpack.c.b16 %v1003, %v999
  %v1324 = vpack.c.b16 %v1004, %v1000
  %v1325 = vpack.c.b16 %v1009, %v1005
  %v1326 = vpack.c.b16 %v1010, %v1006
  %v1327 = vpack.c.b16 %v1011, %v1007
  %v1328 = vpack.c.b16 %v1012, %v1008
  %v1329 = vpack.c.b16 %v1017, %v1013
  %v1330 = vpack.c.b16 %v1018, %v1014
  %v1331 = vpack.c.b16 %v1019, %v1015
  %v1332 = vpack.c.b16 %v1020, %v1016
  %v1333 = vpack.c.b16 %v1025, %v1021
  %v1334 = vpack.c.b16 %v1026, %v1022
  %v1335 = vpack.c.b16 %v1027, %v1023
  %v1336 = vpack.c.b16 %v1028, %v1024
  %v1337 = vpack.c.b16 %v1033, %v1029
  %v1338 = vpack.c.b16 %v1034, %v1030
  %v1339 = vpack.c.b16 %v1035, %v1031
  %v1340 = vpack.c.b16 %v1036, %v1032
  %v1341 = vpack.c.b16 %v1041, %v1037
  %v1342 = vpack.c.b16 %v1042, %v1038
  %v1343 = vpack.c.b16 %v1043, %v1039
  %v1344 = vpack.c.b16 %v1044, %v1040
  %v1345 = vpack.c.b16 %v1049, %v1045
  %v1346 = vpack.c.b16 %v1050, %v1046
  %v1347 = vpack.c.b16 %v1051, %v1047
  %v1348 = vpack.c.b16 %v1052, %v1048
  %v1349 = vpack.c.b16 %v1057, %v1053
  %v1350 = vpack.c.b16 %v1058, %v1054
  %v1351 = vpack.c.b16 %v1059, %v1055
  %v1352 = vpack.c.b16 %v1060, %v1056
  %v1353 = vpack.c.b16 %v1065, %v1061
  %v1354 = vpack.c.b16 %v1066, %v1062
  %v1355 = vpack.c.b16 %v1067, %v1063
  %v1356 = vpack.c.b16 %v1068, %v1064
  %v1357 = vpack.c.b16 %v1073, %v1069
  %v1358 = vpack.c.b16 %v1074, %v1070
  %v1359 = vpack.c.b16 %v1075, %v1071
  %v1360 = vpack.c.b16 %v1076, %v1072
  %v1361 = vpack.c.b16 %v1081, %v1077
  %v1362 = vpack.c.b16 %v1082, %v1078
  %v1363 = vpack.c.b16 %v1083, %v1079
  %v1364 = vpack.c.b16 %v1084, %v1080
  %v1365 = vpack.c.b16 %v1089, %v1085
  %v1366 = vpack.c.b16 %v1090, %v1086
  %v1367 = vpack.c.b16 %v1091, %v1087
  %v1368 = vpack.c.b16 %v1092, %v1088
  %v1369 = vpack.c.b16 %v1097, %v1093
  %v1370 = vpack.c.b16 %v1098, %v1094
  %v1371 = vpack.c.b16 %v1099, %v1095
  %v1372 = vpack.c.b16 %v1100, %v1096
  %v1373 = vpack.c.b16 %v1105, %v1101
  %v1374 = vpack.c.b16 %v1106, %v1102
  %v1375 = vpack.c.b16 %v1107, %v1103
  %v1376 = vpack.c.b16 %v1108, %v1104
  %v1377 = vpack.c.b16 %v1113, %v1109
  %v1378 = vpack.c.b16 %v1114, %v1110
  %v1379 = vpack.c.b16 %v1115, %v1111
  %v1380 = vpack.c.b16 %v1116, %v1112
  %v1381 = vpack.c.b16 %v1121, %v1117
  %v1382 = vpack.c.b16 %v1122, %v1118
  %v1383 = vpack.c.b16 %v1123, %v1119
  %v1384 = vpack.c.b16 %v1124, %v1120
  %v1385 = vpack.c.b16 %v1129, %v1125
  %v1386 = vpack.c.b16 %v1130, %v1126
  %v1387 = vpack.c.b16 %v1131, %v1127
  %v1388 = vpack.c.b16 %v1132, %v1128
  %1645 = vmatprep.subr.bf16.mxu0 %v1134
  %1646 = vmatpush1.bf16.msra.mxu0 %v1133
  %1647 = vmatprep.subr.bf16.mxu0 %v1138
  %1648 = vmatpush1.bf16.msra.mxu0 %v1137
  %1649 = vmatprep.subr.bf16.mxu0 %v1142
  %1650 = vmatpush1.bf16.msra.mxu0 %v1141
  %1651 = vmatprep.subr.bf16.mxu0 %v1146
  %1652 = vmatpush1.bf16.msra.mxu0 %v1145
  %1653 = vmatprep.subr.bf16.mxu0 %v1150
  %1654 = vmatpush1.bf16.msra.mxu0 %v1149
  %1655 = vmatprep.subr.bf16.mxu0 %v1154
  %1656 = vmatpush1.bf16.msra.mxu0 %v1153
  %1657 = vmatprep.subr.bf16.mxu0 %v1158
  %1658 = vmatpush1.bf16.msra.mxu0 %v1157
  %1659 = vmatprep.subr.bf16.mxu0 %v1162
  %1660 = vmatpush1.bf16.msra.mxu0 %v1161
  %1661 = vmatprep.subr.bf16.mxu0 %v1166
  %1662 = vmatpush1.bf16.msra.mxu0 %v1165
  %1663 = vmatprep.subr.bf16.mxu0 %v1170
  %1664 = vmatpush1.bf16.msra.mxu0 %v1169
  %1665 = vmatprep.subr.bf16.mxu0 %v1174
  %1666 = vmatpush1.bf16.msra.mxu0 %v1173
  %1667 = vmatprep.subr.bf16.mxu0 %v1178
  %1668 = vmatpush1.bf16.msra.mxu0 %v1177
  %1669 = vmatprep.subr.bf16.mxu0 %v1182
  %1670 = vmatpush1.bf16.msra.mxu0 %v1181
  %1671 = vmatprep.subr.bf16.mxu0 %v1186
  %1672 = vmatpush1.bf16.msra.mxu0 %v1185
  %1673 = vmatprep.subr.bf16.mxu0 %v1190
  %1674 = vmatpush1.bf16.msra.mxu0 %v1189
  %1675 = vmatprep.subr.bf16.mxu0 %v1194
  %1676 = vmatpush1.bf16.msra.mxu0 %v1193
  %1677 = vmatprep.mubr.bf16.mxu0 %v334
  %1678 = vmatmul.mubr.bf16.gmra.mrb[0].mxu0 %v333
  %v1679 = vpop.f32.mrb[0].mxu0
  %v1680 = vadd.f32 0.0, %v1679
  %v1681 = vpop.f32.mrb[0].mxu0
  %v1682 = vadd.f32 0.0, %v1681
  %v1683 = vpop.f32.mrb[0].mxu0
  %v1684 = vadd.f32 0.0, %v1683
  %v1685 = vpop.f32.mrb[0].mxu0
  %v1686 = vadd.f32 0.0, %v1685
  %1687 = vmatprep.mubr.bf16.mxu0 %v342
  %1688 = vmatmul.mubr.bf16.gmra.mrb[0].mxu0 %v341
  %v1689 = vpop.f32.mrb[0].mxu0
  %v1690 = vadd.f32 0.0, %v1689
  %v1691 = vpop.f32.mrb[0].mxu0
  %v1692 = vadd.f32 0.0, %v1691
  %v1693 = vpop.f32.mrb[0].mxu0
  %v1694 = vadd.f32 0.0, %v1693
  %v1695 = vpop.f32.mrb[0].mxu0
  %v1696 = vadd.f32 0.0, %v1695
  %1697 = vdwg.mxu0
  %1698 = vmatprep.subr.bf16.mxu0 %v1198
  %1699 = vmatpush1.bf16.msra.mxu0 %v1197
  %1700 = vmatprep.subr.bf16.mxu0 %v1202
  %1701 = vmatpush1.bf16.msra.mxu0 %v1201
  %1702 = vmatprep.subr.bf16.mxu0 %v1206
  %1703 = vmatpush1.bf16.msra.mxu0 %v1205
  %1704 = vmatprep.subr.bf16.mxu0 %v1210
  %1705 = vmatpush1.bf16.msra.mxu0 %v1209
  %1706 = vmatprep.subr.bf16.mxu0 %v1214
  %1707 = vmatpush1.bf16.msra.mxu0 %v1213
  %1708 = vmatprep.subr.bf16.mxu0 %v1218
  %1709 = vmatpush1.bf16.msra.mxu0 %v1217
  %1710 = vmatprep.subr.bf16.mxu0 %v1222
  %1711 = vmatpush1.bf16.msra.mxu0 %v1221
  %1712 = vmatprep.subr.bf16.mxu0 %v1226
  %1713 = vmatpush1.bf16.msra.mxu0 %v1225
  %1714 = vmatprep.subr.bf16.mxu0 %v1230
  %1715 = vmatpush1.bf16.msra.mxu0 %v1229
  %1716 = vmatprep.subr.bf16.mxu0 %v1234
  %1717 = vmatpush1.bf16.msra.mxu0 %v1233
  %1718 = vmatprep.subr.bf16.mxu0 %v1238
  %1719 = vmatpush1.bf16.msra.mxu0 %v1237
  %1720 = vmatprep.subr.bf16.mxu0 %v1242
  %1721 = vmatpush1.bf16.msra.mxu0 %v1241
  %1722 = vmatprep.subr.bf16.mxu0 %v1246
  %1723 = vmatpush1.bf16.msra.mxu0 %v1245
  %1724 = vmatprep.subr.bf16.mxu0 %v1250
  %1725 = vmatpush1.bf16.msra.mxu0 %v1249
  %1726 = vmatprep.subr.bf16.mxu0 %v1254
  %1727 = vmatpush1.bf16.msra.mxu0 %v1253
  %1728 = vmatprep.subr.bf16.mxu0 %v1258
  %1729 = vmatpush1.bf16.msra.mxu0 %v1257
  %1730 = vmatprep.mubr.bf16.mxu0 %v336
  %1731 = vmatmul.mubr.bf16.gmra.mrb[0].mxu0 %v335
  %v1732 = vpop.f32.mrb[0].mxu0
  %v1733 = vadd.f32 %v1680, %v1732
  %v1734 = vpop.f32.mrb[0].mxu0
  %v1735 = vadd.f32 %v1682, %v1734
  %v1736 = vpop.f32.mrb[0].mxu0
  %v1737 = vadd.f32 %v1684, %v1736
  %v1738 = vpop.f32.mrb[0].mxu0
  %v1739 = vadd.f32 %v1686, %v1738
  %1740 = vmatprep.mubr.bf16.mxu0 %v344
  %1741 = vmatmul.mubr.bf16.gmra.mrb[0].mxu0 %v343
  %v1742 = vpop.f32.mrb[0].mxu0
  %v1743 = vadd.f32 %v1690, %v1742
  %v1744 = vpop.f32.mrb[0].mxu0
  %v1745 = vadd.f32 %v1692, %v1744
  %v1746 = vpop.f32.mrb[0].mxu0
  %v1747 = vadd.f32 %v1694, %v1746
  %v1748 = vpop.f32.mrb[0].mxu0
  %v1749 = vadd.f32 %v1696, %v1748
  %1750 = vdwg.mxu0
  %1751 = vmatprep.subr.bf16.mxu0 %v1262
  %1752 = vmatpush1.bf16.msra.mxu0 %v1261
  %1753 = vmatprep.subr.bf16.mxu0 %v1266
  %1754 = vmatpush1.bf16.msra.mxu0 %v1265
  %1755 = vmatprep.subr.bf16.mxu0 %v1270
  %1756 = vmatpush1.bf16.msra.mxu0 %v1269
  %1757 = vmatprep.subr.bf16.mxu0 %v1274
  %1758 = vmatpush1.bf16.msra.mxu0 %v1273
  %1759 = vmatprep.subr.bf16.mxu0 %v1278
  %1760 = vmatpush1.bf16.msra.mxu0 %v1277
  %1761 = vmatprep.subr.bf16.mxu0 %v1282
  %1762 = vmatpush1.bf16.msra.mxu0 %v1281
  %1763 = vmatprep.subr.bf16.mxu0 %v1286
  %1764 = vmatpush1.bf16.msra.mxu0 %v1285
  %1765 = vmatprep.subr.bf16.mxu0 %v1290
  %1766 = vmatpush1.bf16.msra.mxu0 %v1289
  %1767 = vmatprep.subr.bf16.mxu0 %v1294
  %1768 = vmatpush1.bf16.msra.mxu0 %v1293
  %1769 = vmatprep.subr.bf16.mxu0 %v1298
  %1770 = vmatpush1.bf16.msra.mxu0 %v1297
  %1771 = vmatprep.subr.bf16.mxu0 %v1302
  %1772 = vmatpush1.bf16.msra.mxu0 %v1301
  %1773 = vmatprep.subr.bf16.mxu0 %v1306
  %1774 = vmatpush1.bf16.msra.mxu0 %v1305
  %1775 = vmatprep.subr.bf16.mxu0 %v1310
  %1776 = vmatpush1.bf16.msra.mxu0 %v1309
  %1777 = vmatprep.subr.bf16.mxu0 %v1314
  %1778 = vmatpush1.bf16.msra.mxu0 %v1313
  %1779 = vmatprep.subr.bf16.mxu0 %v1318
  %1780 = vmatpush1.bf16.msra.mxu0 %v1317
  %1781 = vmatprep.subr.bf16.mxu0 %v1322
  %1782 = vmatpush1.bf16.msra.mxu0 %v1321
  %1783 = vmatprep.mubr.bf16.mxu0 %v338
  %1784 = vmatmul.mubr.bf16.gmra.mrb[0].mxu0 %v337
  %v1785 = vpop.f32.mrb[0].mxu0
  %v1786 = vadd.f32 %v1733, %v1785
  %v1787 = vpop.f32.mrb[0].mxu0
  %v1788 = vadd.f32 %v1735, %v1787
  %v1789 = vpop.f32.mrb[0].mxu0
  %v1790 = vadd.f32 %v1737, %v1789
  %v1791 = vpop.f32.mrb[0].mxu0
  %v1792 = vadd.f32 %v1739, %v1791
  %1793 = vmatprep.mubr.bf16.mxu0 %v346
  %1794 = vmatmul.mubr.bf16.gmra.mrb[0].mxu0 %v345
  %v1795 = vpop.f32.mrb[0].mxu0
  %v1796 = vadd.f32 %v1743, %v1795
  %v1797 = vpop.f32.mrb[0].mxu0
  %v1798 = vadd.f32 %v1745, %v1797
  %v1799 = vpop.f32.mrb[0].mxu0
  %v1800 = vadd.f32 %v1747, %v1799
  %v1801 = vpop.f32.mrb[0].mxu0
  %v1802 = vadd.f32 %v1749, %v1801
  %1803 = vdwg.mxu0
  %1804 = vmatprep.subr.bf16.mxu0 %v1326
  %1805 = vmatpush1.bf16.msra.mxu0 %v1325
  %1806 = vmatprep.subr.bf16.mxu0 %v1330
  %1807 = vmatpush1.bf16.msra.mxu0 %v1329
  %1808 = vmatprep.subr.bf16.mxu0 %v1334
  %1809 = vmatpush1.bf16.msra.mxu0 %v1333
  %1810 = vmatprep.subr.bf16.mxu0 %v1338
  %1811 = vmatpush1.bf16.msra.mxu0 %v1337
  %1812 = vmatprep.subr.bf16.mxu0 %v1342
  %1813 = vmatpush1.bf16.msra.mxu0 %v1341
  %1814 = vmatprep.subr.bf16.mxu0 %v1346
  %1815 = vmatpush1.bf16.msra.mxu0 %v1345
  %1816 = vmatprep.subr.bf16.mxu0 %v1350
  %1817 = vmatpush1.bf16.msra.mxu0 %v1349
  %1818 = vmatprep.subr.bf16.mxu0 %v1354
  %1819 = vmatpush1.bf16.msra.mxu0 %v1353
  %1820 = vmatprep.subr.bf16.mxu0 %v1358
  %1821 = vmatpush1.bf16.msra.mxu0 %v1357
  %1822 = vmatprep.subr.bf16.mxu0 %v1362
  %1823 = vmatpush1.bf16.msra.mxu0 %v1361
  %1824 = vmatprep.subr.bf16.mxu0 %v1366
  %1825 = vmatpush1.bf16.msra.mxu0 %v1365
  %1826 = vmatprep.subr.bf16.mxu0 %v1370
  %1827 = vmatpush1.bf16.msra.mxu0 %v1369
  %1828 = vmatprep.subr.bf16.mxu0 %v1374
  %1829 = vmatpush1.bf16.msra.mxu0 %v1373
  %1830 = vmatprep.subr.bf16.mxu0 %v1378
  %1831 = vmatpush1.bf16.msra.mxu0 %v1377
  %1832 = vmatprep.subr.bf16.mxu0 %v1382
  %1833 = vmatpush1.bf16.msra.mxu0 %v1381
  %1834 = vmatprep.subr.bf16.mxu0 %v1386
  %1835 = vmatpush1.bf16.msra.mxu0 %v1385
  %1836 = vmatprep.mubr.bf16.mxu0 %v340
  %1837 = vmatmul.mubr.bf16.gmra.mrb[0].mxu0 %v339
  %v1838 = vpop.f32.mrb[0].mxu0
  %v1839 = vadd.f32 %v1786, %v1838
  %v1840 = vpop.f32.mrb[0].mxu0
  %v1841 = vadd.f32 %v1788, %v1840
  %v1842 = vpop.f32.mrb[0].mxu0
  %v1843 = vadd.f32 %v1790, %v1842
  %v1844 = vpop.f32.mrb[0].mxu0
  %v1845 = vadd.f32 %v1792, %v1844
  %1846 = vmatprep.mubr.bf16.mxu0 %v348
  %1847 = vmatmul.mubr.bf16.gmra.mrb[0].mxu0 %v347
  %v1848 = vpop.f32.mrb[0].mxu0
  %v1849 = vadd.f32 %v1796, %v1848
  %v1850 = vpop.f32.mrb[0].mxu0
  %v1851 = vadd.f32 %v1798, %v1850
  %v1852 = vpop.f32.mrb[0].mxu0
  %v1853 = vadd.f32 %v1800, %v1852
  %v1854 = vpop.f32.mrb[0].mxu0
  %v1855 = vadd.f32 %v1802, %v1854
  %1856 = vdwg.mxu0
  %1857 = vmatprep.subr.bf16.mxu0 %v1136
  %1858 = vmatpush1.bf16.msra.mxu0 %v1135
  %1859 = vmatprep.subr.bf16.mxu0 %v1140
  %1860 = vmatpush1.bf16.msra.mxu0 %v1139
  %1861 = vmatprep.subr.bf16.mxu0 %v1144
  %1862 = vmatpush1.bf16.msra.mxu0 %v1143
  %1863 = vmatprep.subr.bf16.mxu0 %v1148
  %1864 = vmatpush1.bf16.msra.mxu0 %v1147
  %1865 = vmatprep.subr.bf16.mxu0 %v1152
  %1866 = vmatpush1.bf16.msra.mxu0 %v1151
  %1867 = vmatprep.subr.bf16.mxu0 %v1156
  %1868 = vmatpush1.bf16.msra.mxu0 %v1155
  %1869 = vmatprep.subr.bf16.mxu0 %v1160
  %1870 = vmatpush1.bf16.msra.mxu0 %v1159
  %1871 = vmatprep.subr.bf16.mxu0 %v1164
  %1872 = vmatpush1.bf16.msra.mxu0 %v1163
  %1873 = vmatprep.subr.bf16.mxu0 %v1168
  %1874 = vmatpush1.bf16.msra.mxu0 %v1167
  %1875 = vmatprep.subr.bf16.mxu0 %v1172
  %1876 = vmatpush1.bf16.msra.mxu0 %v1171
  %1877 = vmatprep.subr.bf16.mxu0 %v1176
  %1878 = vmatpush1.bf16.msra.mxu0 %v1175
  %1879 = vmatprep.subr.bf16.mxu0 %v1180
  %1880 = vmatpush1.bf16.msra.mxu0 %v1179
  %1881 = vmatprep.subr.bf16.mxu0 %v1184
  %1882 = vmatpush1.bf16.msra.mxu0 %v1183
  %1883 = vmatprep.subr.bf16.mxu0 %v1188
  %1884 = vmatpush1.bf16.msra.mxu0 %v1187
  %1885 = vmatprep.subr.bf16.mxu0 %v1192
  %1886 = vmatpush1.bf16.msra.mxu0 %v1191
  %1887 = vmatprep.subr.bf16.mxu0 %v1196
  %1888 = vmatpush1.bf16.msra.mxu0 %v1195
  %1889 = vmatprep.mubr.bf16.mxu0 %v334
  %1890 = vmatmul.mubr.bf16.gmra.mrb[0].mxu0 %v333
  %v1891 = vpop.f32.mrb[0].mxu0
  %v1892 = vadd.f32 0.0, %v1891
  %v1893 = vpop.f32.mrb[0].mxu0
  %v1894 = vadd.f32 0.0, %v1893
  %v1895 = vpop.f32.mrb[0].mxu0
  %v1896 = vadd.f32 0.0, %v1895
  %v1897 = vpop.f32.mrb[0].mxu0
  %v1898 = vadd.f32 0.0, %v1897
  %1899 = vmatprep.mubr.bf16.mxu0 %v342
  %1900 = vmatmul.mubr.bf16.gmra.mrb[0].mxu0 %v341
  %v1901 = vpop.f32.mrb[0].mxu0
  %v1902 = vadd.f32 0.0, %v1901
  %v1903 = vpop.f32.mrb[0].mxu0
  %v1904 = vadd.f32 0.0, %v1903
  %v1905 = vpop.f32.mrb[0].mxu0
  %v1906 = vadd.f32 0.0, %v1905
  %v1907 = vpop.f32.mrb[0].mxu0
  %v1908 = vadd.f32 0.0, %v1907
  %1909 = vdwg.mxu0
  %1910 = vmatprep.subr.bf16.mxu0 %v1200
  %1911 = vmatpush1.bf16.msra.mxu0 %v1199
  %1912 = vmatprep.subr.bf16.mxu0 %v1204
  %1913 = vmatpush1.bf16.msra.mxu0 %v1203
  %1914 = vmatprep.subr.bf16.mxu0 %v1208
  %1915 = vmatpush1.bf16.msra.mxu0 %v1207
  %1916 = vmatprep.subr.bf16.mxu0 %v1212
  %1917 = vmatpush1.bf16.msra.mxu0 %v1211
  %1918 = vmatprep.subr.bf16.mxu0 %v1216
  %1919 = vmatpush1.bf16.msra.mxu0 %v1215
  %1920 = vmatprep.subr.bf16.mxu0 %v1220
  %1921 = vmatpush1.bf16.msra.mxu0 %v1219
  %1922 = vmatprep.subr.bf16.mxu0 %v1224
  %1923 = vmatpush1.bf16.msra.mxu0 %v1223
  %1924 = vmatprep.subr.bf16.mxu0 %v1228
  %1925 = vmatpush1.bf16.msra.mxu0 %v1227
  %1926 = vmatprep.subr.bf16.mxu0 %v1232
  %1927 = vmatpush1.bf16.msra.mxu0 %v1231
  %1928 = vmatprep.subr.bf16.mxu0 %v1236
  %1929 = vmatpush1.bf16.msra.mxu0 %v1235
  %1930 = vmatprep.subr.bf16.mxu0 %v1240
  %1931 = vmatpush1.bf16.msra.mxu0 %v1239
  %1932 = vmatprep.subr.bf16.mxu0 %v1244
  %1933 = vmatpush1.bf16.msra.mxu0 %v1243
  %1934 = vmatprep.subr.bf16.mxu0 %v1248
  %1935 = vmatpush1.bf16.msra.mxu0 %v1247
  %1936 = vmatprep.subr.bf16.mxu0 %v1252
  %1937 = vmatpush1.bf16.msra.mxu0 %v1251
  %1938 = vmatprep.subr.bf16.mxu0 %v1256
  %1939 = vmatpush1.bf16.msra.mxu0 %v1255
  %1940 = vmatprep.subr.bf16.mxu0 %v1260
  %1941 = vmatpush1.bf16.msra.mxu0 %v1259
  %1942 = vmatprep.mubr.bf16.mxu0 %v336
  %1943 = vmatmul.mubr.bf16.gmra.mrb[0].mxu0 %v335
  %v1944 = vpop.f32.mrb[0].mxu0
  %v1945 = vadd.f32 %v1892, %v1944
  %v1946 = vpop.f32.mrb[0].mxu0
  %v1947 = vadd.f32 %v1894, %v1946
  %v1948 = vpop.f32.mrb[0].mxu0
  %v1949 = vadd.f32 %v1896, %v1948
  %v1950 = vpop.f32.mrb[0].mxu0
  %v1951 = vadd.f32 %v1898, %v1950
  %1952 = vmatprep.mubr.bf16.mxu0 %v344
  %1953 = vmatmul.mubr.bf16.gmra.mrb[0].mxu0 %v343
  %v1954 = vpop.f32.mrb[0].mxu0
  %v1955 = vadd.f32 %v1902, %v1954
  %v1956 = vpop.f32.mrb[0].mxu0
  %v1957 = vadd.f32 %v1904, %v1956
  %v1958 = vpop.f32.mrb[0].mxu0
  %v1959 = vadd.f32 %v1906, %v1958
  %v1960 = vpop.f32.mrb[0].mxu0
  %v1961 = vadd.f32 %v1908, %v1960
  %1962 = vdwg.mxu0
  %1963 = vmatprep.subr.bf16.mxu0 %v1264
  %1964 = vmatpush1.bf16.msra.mxu0 %v1263
  %1965 = vmatprep.subr.bf16.mxu0 %v1268
  %1966 = vmatpush1.bf16.msra.mxu0 %v1267
  %1967 = vmatprep.subr.bf16.mxu0 %v1272
  %1968 = vmatpush1.bf16.msra.mxu0 %v1271
  %1969 = vmatprep.subr.bf16.mxu0 %v1276
  %1970 = vmatpush1.bf16.msra.mxu0 %v1275
  %1971 = vmatprep.subr.bf16.mxu0 %v1280
  %1972 = vmatpush1.bf16.msra.mxu0 %v1279
  %1973 = vmatprep.subr.bf16.mxu0 %v1284
  %1974 = vmatpush1.bf16.msra.mxu0 %v1283
  %1975 = vmatprep.subr.bf16.mxu0 %v1288
  %1976 = vmatpush1.bf16.msra.mxu0 %v1287
  %1977 = vmatprep.subr.bf16.mxu0 %v1292
  %1978 = vmatpush1.bf16.msra.mxu0 %v1291
  %1979 = vmatprep.subr.bf16.mxu0 %v1296
  %1980 = vmatpush1.bf16.msra.mxu0 %v1295
  %1981 = vmatprep.subr.bf16.mxu0 %v1300
  %1982 = vmatpush1.bf16.msra.mxu0 %v1299
  %1983 = vmatprep.subr.bf16.mxu0 %v1304
  %1984 = vmatpush1.bf16.msra.mxu0 %v1303
  %1985 = vmatprep.subr.bf16.mxu0 %v1308
  %1986 = vmatpush1.bf16.msra.mxu0 %v1307
  %1987 = vmatprep.subr.bf16.mxu0 %v1312
  %1988 = vmatpush1.bf16.msra.mxu0 %v1311
  %1989 = vmatprep.subr.bf16.mxu0 %v1316
  %1990 = vmatpush1.bf16.msra.mxu0 %v1315
  %1991 = vmatprep.subr.bf16.mxu0 %v1320
  %1992 = vmatpush1.bf16.msra.mxu0 %v1319
  %1993 = vmatprep.subr.bf16.mxu0 %v1324
  %1994 = vmatpush1.bf16.msra.mxu0 %v1323
  %1995 = vmatprep.mubr.bf16.mxu0 %v338
  %1996 = vmatmul.mubr.bf16.gmra.mrb[0].mxu0 %v337
  %v1997 = vpop.f32.mrb[0].mxu0
  %v1998 = vadd.f32 %v1945, %v1997
  %v1999 = vpop.f32.mrb[0].mxu0
  %v2000 = vadd.f32 %v1947, %v1999
  %v2001 = vpop.f32.mrb[0].mxu0
  %v2002 = vadd.f32 %v1949, %v2001
  %v2003 = vpop.f32.mrb[0].mxu0
  %v2004 = vadd.f32 %v1951, %v2003
  %2005 = vmatprep.mubr.bf16.mxu0 %v346
  %2006 = vmatmul.mubr.bf16.gmra.mrb[0].mxu0 %v345
  %v2007 = vpop.f32.mrb[0].mxu0
  %v2008 = vadd.f32 %v1955, %v2007
  %v2009 = vpop.f32.mrb[0].mxu0
  %v2010 = vadd.f32 %v1957, %v2009
  %v2011 = vpop.f32.mrb[0].mxu0
  %v2012 = vadd.f32 %v1959, %v2011
  %v2013 = vpop.f32.mrb[0].mxu0
  %v2014 = vadd.f32 %v1961, %v2013
  %2015 = vdwg.mxu0
  %2016 = vmatprep.subr.bf16.mxu0 %v1328
  %2017 = vmatpush1.bf16.msra.mxu0 %v1327
  %2018 = vmatprep.subr.bf16.mxu0 %v1332
  %2019 = vmatpush1.bf16.msra.mxu0 %v1331
  %2020 = vmatprep.subr.bf16.mxu0 %v1336
  %2021 = vmatpush1.bf16.msra.mxu0 %v1335
  %2022 = vmatprep.subr.bf16.mxu0 %v1340
  %2023 = vmatpush1.bf16.msra.mxu0 %v1339
  %2024 = vmatprep.subr.bf16.mxu0 %v1344
  %2025 = vmatpush1.bf16.msra.mxu0 %v1343
  %2026 = vmatprep.subr.bf16.mxu0 %v1348
  %2027 = vmatpush1.bf16.msra.mxu0 %v1347
  %2028 = vmatprep.subr.bf16.mxu0 %v1352
  %2029 = vmatpush1.bf16.msra.mxu0 %v1351
  %2030 = vmatprep.subr.bf16.mxu0 %v1356
  %2031 = vmatpush1.bf16.msra.mxu0 %v1355
  %2032 = vmatprep.subr.bf16.mxu0 %v1360
  %2033 = vmatpush1.bf16.msra.mxu0 %v1359
  %2034 = vmatprep.subr.bf16.mxu0 %v1364
  %2035 = vmatpush1.bf16.msra.mxu0 %v1363
  %2036 = vmatprep.subr.bf16.mxu0 %v1368
  %2037 = vmatpush1.bf16.msra.mxu0 %v1367
  %2038 = vmatprep.subr.bf16.mxu0 %v1372
  %2039 = vmatpush1.bf16.msra.mxu0 %v1371
  %2040 = vmatprep.subr.bf16.mxu0 %v1376
  %2041 = vmatpush1.bf16.msra.mxu0 %v1375
  %2042 = vmatprep.subr.bf16.mxu0 %v1380
  %2043 = vmatpush1.bf16.msra.mxu0 %v1379
  %2044 = vmatprep.subr.bf16.mxu0 %v1384
  %2045 = vmatpush1.bf16.msra.mxu0 %v1383
  %2046 = vmatprep.subr.bf16.mxu0 %v1388
  %2047 = vmatpush1.bf16.msra.mxu0 %v1387
  %2048 = vmatprep.mubr.bf16.mxu0 %v340
  %2049 = vmatmul.mubr.bf16.gmra.mrb[0].mxu0 %v339
  %v2050 = vpop.f32.mrb[0].mxu0
  %v2051 = vadd.f32 %v1998, %v2050
  %v2052 = vpop.f32.mrb[0].mxu0
  %v2053 = vadd.f32 %v2000, %v2052
  %v2054 = vpop.f32.mrb[0].mxu0
  %v2055 = vadd.f32 %v2002, %v2054
  %v2056 = vpop.f32.mrb[0].mxu0
  %v2057 = vadd.f32 %v2004, %v2056
  %2058 = vmatprep.mubr.bf16.mxu0 %v348
  %2059 = vmatmul.mubr.bf16.gmra.mrb[0].mxu0 %v347
  %v2060 = vpop.f32.mrb[0].mxu0
  %v2061 = vadd.f32 %v2008, %v2060
  %v2062 = vpop.f32.mrb[0].mxu0
  %v2063 = vadd.f32 %v2010, %v2062
  %v2064 = vpop.f32.mrb[0].mxu0
  %v2065 = vadd.f32 %v2012, %v2064
  %v2066 = vpop.f32.mrb[0].mxu0
  %v2067 = vadd.f32 %v2014, %v2066
  %2068 = vdwg.mxu0
  %2069 = vst [vmem:[%s2] sm:$0xff] %v1839
  %2070 = vst [vmem:[%s2 + $0x8] sm:$0xff] %v1841
  %2071 = vst [vmem:[%s2 + $0x10] sm:$0xff] %v2051
  %2072 = vst [vmem:[%s2 + $0x18] sm:$0xff] %v2053
  %2073 = vst [vmem:[%s2 + $0x20] sm:$0xff] %v1843
  %2074 = vst [vmem:[%s2 + $0x28] sm:$0xff] %v1845
  %2075 = vst [vmem:[%s2 + $0x30] sm:$0xff] %v2055
  %2076 = vst [vmem:[%s2 + $0x38] sm:$0xff] %v2057
  %2077 = vst [vmem:[%s2 + $0x40] sm:$0xff] %v1849
  %2078 = vst [vmem:[%s2 + $0x48] sm:$0xff] %v1851
  %2079 = vst [vmem:[%s2 + $0x50] sm:$0xff] %v2061
  %2080 = vst [vmem:[%s2 + $0x58] sm:$0xff] %v2063
  %2081 = vst [vmem:[%s2 + $0x60] sm:$0xff] %v1853
  %2082 = vst [vmem:[%s2 + $0x68] sm:$0xff] %v1855
  %2083 = vst [vmem:[%s2 + $0x70] sm:$0xff] %v2065
  %2084 = vst [vmem:[%s2 + $0x78] sm:$0xff] %v2067
  %vm2085 = vcmask 261120
  %v2087 = vsel %vm2085, 1.0, 0
  %2089 = vmatprep.subr.mxu0 %v1841
  %2090 = vmatpush1.msra.mxu0 %v1839
  %2091 = vmatprep.subr.mxu0 %v1845
  %2092 = vmatpush1.msra.mxu0 %v1843
  %2093 = vmatprep.subr.mxu0 %v1851
  %2094 = vmatpush1.msra.mxu0 %v1849
  %2095 = vmatprep.subr.mxu0 %v1855
  %2096 = vmatpush1.msra.mxu0 %v1853
  %2097 = vmatprep.subr.mxu0 0.0
  %2098 = vmatpush1.msra.mxu0 0.0
  %2099 = vmatprep.subr.mxu0 0.0
  %2100 = vmatpush1.msra.mxu0 0.0
  %2101 = vmatprep.subr.mxu0 0.0
  %2102 = vmatpush1.msra.mxu0 0.0
  %2103 = vmatprep.subr.mxu0 0.0
  %2104 = vmatpush1.msra.mxu0 0.0
  %2105 = vmatprep.subr.mxu0 0.0
  %2106 = vmatpush1.msra.mxu0 0.0
  %2107 = vmatprep.subr.mxu0 0.0
  %2108 = vmatpush1.msra.mxu0 0.0
  %2109 = vmatprep.subr.mxu0 0.0
  %2110 = vmatpush1.msra.mxu0 0.0
  %2111 = vmatprep.subr.mxu0 0.0
  %2112 = vmatpush1.msra.mxu0 0.0
  %2113 = vmatprep.subr.mxu0 0.0
  %2114 = vmatpush1.msra.mxu0 0.0
  %2115 = vmatprep.subr.mxu0 0.0
  %2116 = vmatpush1.msra.mxu0 0.0
  %2117 = vmatprep.subr.mxu0 0.0
  %2118 = vmatpush1.msra.mxu0 0.0
  %2119 = vmatprep.subr.mxu0 0.0
  %2120 = vmatpush1.msra.mxu0 0.0
  %2121 = vmatprep.subr.mxu0 0.0
  %2122 = vmatpush1.msra.mxu0 0.0
  %2123 = vmatprep.subr.mxu0 0.0
  %2124 = vmatpush1.msra.mxu0 0.0
  %2125 = vmatprep.subr.mxu0 0.0
  %2126 = vmatpush1.msra.mxu0 0.0
  %2127 = vmatprep.subr.mxu0 0.0
  %2128 = vmatpush1.msra.mxu0 0.0
  %2129 = vmatprep.subr.mxu0 0.0
  %2130 = vmatpush1.msra.mxu0 0.0
  %2131 = vmatprep.subr.mxu0 0.0
  %2132 = vmatpush1.msra.mxu0 0.0
  %2133 = vmatprep.subr.mxu0 0.0
  %2134 = vmatpush1.msra.mxu0 0.0
  %2135 = vmatprep.subr.mxu0 0.0
  %2136 = vmatpush1.msra.mxu0 0.0
  %2137 = vmatprep.subr.mxu0 0.0
  %2138 = vmatpush1.msra.mxu0 0.0
  %2139 = vmatprep.subr.mxu0 0.0
  %2140 = vmatpush1.msra.mxu0 0.0
  %2141 = vmatprep.subr.mxu0 0.0
  %2142 = vmatpush1.msra.mxu0 0.0
  %2143 = vmatprep.subr.mxu0 0.0
  %2144 = vmatpush1.msra.mxu0 0.0
  %2145 = vmatprep.subr.mxu0 0.0
  %2146 = vmatpush1.msra.mxu0 0.0
  %2147 = vmatprep.subr.mxu0 0.0
  %2148 = vmatpush1.msra.mxu0 0.0
  %2149 = vmatprep.subr.mxu0 0.0
  %2150 = vmatpush1.msra.mxu0 0.0
  %2151 = vmatprep.subr.mxu0 0.0
  %2152 = vmatpush1.msra.mxu0 0.0
  %2153 = vmatprep.mubr.f32.mxu0 0.0
  %2154 = vmatmul.mubr.f32.gmra.mrb[0].mxu0 %v2087
  %v2155 = vpop.f32.mrb[0].mxu0
  %v2156 = vadd.f32 0.0, %v2155
  %v2157 = vpop.f32.mrb[0].mxu0
  %v2158 = vadd.f32 0.0, %v2157
  %2159 = vdwg.mxu0
  %2160 = vmatprep.subr.mxu0 %v2053
  %2161 = vmatpush1.msra.mxu0 %v2051
  %2162 = vmatprep.subr.mxu0 %v2057
  %2163 = vmatpush1.msra.mxu0 %v2055
  %2164 = vmatprep.subr.mxu0 %v2063
  %2165 = vmatpush1.msra.mxu0 %v2061
  %2166 = vmatprep.subr.mxu0 %v2067
  %2167 = vmatpush1.msra.mxu0 %v2065
  %2168 = vmatprep.subr.mxu0 0.0
  %2169 = vmatpush1.msra.mxu0 0.0
  %2170 = vmatprep.subr.mxu0 0.0
  %2171 = vmatpush1.msra.mxu0 0.0
  %2172 = vmatprep.subr.mxu0 0.0
  %2173 = vmatpush1.msra.mxu0 0.0
  %2174 = vmatprep.subr.mxu0 0.0
  %2175 = vmatpush1.msra.mxu0 0.0
  %2176 = vmatprep.subr.mxu0 0.0
  %2177 = vmatpush1.msra.mxu0 0.0
  %2178 = vmatprep.subr.mxu0 0.0
  %2179 = vmatpush1.msra.mxu0 0.0
  %2180 = vmatprep.subr.mxu0 0.0
  %2181 = vmatpush1.msra.mxu0 0.0
  %2182 = vmatprep.subr.mxu0 0.0
  %2183 = vmatpush1.msra.mxu0 0.0
  %2184 = vmatprep.subr.mxu0 0.0
  %2185 = vmatpush1.msra.mxu0 0.0
  %2186 = vmatprep.subr.mxu0 0.0
  %2187 = vmatpush1.msra.mxu0 0.0
  %2188 = vmatprep.subr.mxu0 0.0
  %2189 = vmatpush1.msra.mxu0 0.0
  %2190 = vmatprep.subr.mxu0 0.0
  %2191 = vmatpush1.msra.mxu0 0.0
  %2192 = vmatprep.subr.mxu0 0.0
  %2193 = vmatpush1.msra.mxu0 0.0
  %2194 = vmatprep.subr.mxu0 0.0
  %2195 = vmatpush1.msra.mxu0 0.0
  %2196 = vmatprep.subr.mxu0 0.0
  %2197 = vmatpush1.msra.mxu0 0.0
  %2198 = vmatprep.subr.mxu0 0.0
  %2199 = vmatpush1.msra.mxu0 0.0
  %2200 = vmatprep.subr.mxu0 0.0
  %2201 = vmatpush1.msra.mxu0 0.0
  %2202 = vmatprep.subr.mxu0 0.0
  %2203 = vmatpush1.msra.mxu0 0.0
  %2204 = vmatprep.subr.mxu0 0.0
  %2205 = vmatpush1.msra.mxu0 0.0
  %2206 = vmatprep.subr.mxu0 0.0
  %2207 = vmatpush1.msra.mxu0 0.0
  %2208 = vmatprep.subr.mxu0 0.0
  %2209 = vmatpush1.msra.mxu0 0.0
  %2210 = vmatprep.subr.mxu0 0.0
  %2211 = vmatpush1.msra.mxu0 0.0
  %2212 = vmatprep.subr.mxu0 0.0
  %2213 = vmatpush1.msra.mxu0 0.0
  %2214 = vmatprep.subr.mxu0 0.0
  %2215 = vmatpush1.msra.mxu0 0.0
  %2216 = vmatprep.subr.mxu0 0.0
  %2217 = vmatpush1.msra.mxu0 0.0
  %2218 = vmatprep.subr.mxu0 0.0
  %2219 = vmatpush1.msra.mxu0 0.0
  %2220 = vmatprep.subr.mxu0 0.0
  %2221 = vmatpush1.msra.mxu0 0.0
  %2222 = vmatprep.subr.mxu0 0.0
  %2223 = vmatpush1.msra.mxu0 0.0
  %2224 = vmatprep.mubr.f32.mxu0 0.0
  %2225 = vmatmul.mubr.f32.gmra.mrb[0].mxu0 %v2087
  %v2226 = vpop.f32.mrb[0].mxu0
  %v2227 = vadd.f32 0.0, %v2226
  %v2228 = vpop.f32.mrb[0].mxu0
  %v2229 = vadd.f32 0.0, %v2228
  %2230 = vdwg.mxu0
  %v2231 = vmul.f32 %v1839, %v1839
  %v2232 = vmul.f32 %v1841, %v1841
  %v2233 = vmul.f32 %v2051, %v2051
  %v2234 = vmul.f32 %v2053, %v2053
  %v2235 = vmul.f32 %v1843, %v1843
  %v2236 = vmul.f32 %v1845, %v1845
  %v2237 = vmul.f32 %v2055, %v2055
  %v2238 = vmul.f32 %v2057, %v2057
  %v2239 = vmul.f32 %v1849, %v1849
  %v2240 = vmul.f32 %v1851, %v1851
  %v2241 = vmul.f32 %v2061, %v2061
  %v2242 = vmul.f32 %v2063, %v2063
  %v2243 = vmul.f32 %v1853, %v1853
  %v2244 = vmul.f32 %v1855, %v1855
  %v2245 = vmul.f32 %v2065, %v2065
  %v2246 = vmul.f32 %v2067, %v2067
  %2247 = vmatprep.subr.mxu0 %v2232
  %2248 = vmatpush1.msra.mxu0 %v2231
  %2249 = vmatprep.subr.mxu0 %v2236
  %2250 = vmatpush1.msra.mxu0 %v2235
  %2251 = vmatprep.subr.mxu0 %v2240
  %2252 = vmatpush1.msra.mxu0 %v2239
  %2253 = vmatprep.subr.mxu0 %v2244
  %2254 = vmatpush1.msra.mxu0 %v2243
  %2255 = vmatprep.subr.mxu0 0.0
  %2256 = vmatpush1.msra.mxu0 0.0
  %2257 = vmatprep.subr.mxu0 0.0
  %2258 = vmatpush1.msra.mxu0 0.0
  %2259 = vmatprep.subr.mxu0 0.0
  %2260 = vmatpush1.msra.mxu0 0.0
  %2261 = vmatprep.subr.mxu0 0.0
  %2262 = vmatpush1.msra.mxu0 0.0
  %2263 = vmatprep.subr.mxu0 0.0
  %2264 = vmatpush1.msra.mxu0 0.0
  %2265 = vmatprep.subr.mxu0 0.0
  %2266 = vmatpush1.msra.mxu0 0.0
  %2267 = vmatprep.subr.mxu0 0.0
  %2268 = vmatpush1.msra.mxu0 0.0
  %2269 = vmatprep.subr.mxu0 0.0
  %2270 = vmatpush1.msra.mxu0 0.0
  %2271 = vmatprep.subr.mxu0 0.0
  %2272 = vmatpush1.msra.mxu0 0.0
  %2273 = vmatprep.subr.mxu0 0.0
  %2274 = vmatpush1.msra.mxu0 0.0
  %2275 = vmatprep.subr.mxu0 0.0
  %2276 = vmatpush1.msra.mxu0 0.0
  %2277 = vmatprep.subr.mxu0 0.0
  %2278 = vmatpush1.msra.mxu0 0.0
  %2279 = vmatprep.subr.mxu0 0.0
  %2280 = vmatpush1.msra.mxu0 0.0
  %2281 = vmatprep.subr.mxu0 0.0
  %2282 = vmatpush1.msra.mxu0 0.0
  %2283 = vmatprep.subr.mxu0 0.0
  %2284 = vmatpush1.msra.mxu0 0.0
  %2285 = vmatprep.subr.mxu0 0.0
  %2286 = vmatpush1.msra.mxu0 0.0
  %2287 = vmatprep.subr.mxu0 0.0
  %2288 = vmatpush1.msra.mxu0 0.0
  %2289 = vmatprep.subr.mxu0 0.0
  %2290 = vmatpush1.msra.mxu0 0.0
  %2291 = vmatprep.subr.mxu0 0.0
  %2292 = vmatpush1.msra.mxu0 0.0
  %2293 = vmatprep.subr.mxu0 0.0
  %2294 = vmatpush1.msra.mxu0 0.0
  %2295 = vmatprep.subr.mxu0 0.0
  %2296 = vmatpush1.msra.mxu0 0.0
  %2297 = vmatprep.subr.mxu0 0.0
  %2298 = vmatpush1.msra.mxu0 0.0
  %2299 = vmatprep.subr.mxu0 0.0
  %2300 = vmatpush1.msra.mxu0 0.0
  %2301 = vmatprep.subr.mxu0 0.0
  %2302 = vmatpush1.msra.mxu0 0.0
  %2303 = vmatprep.subr.mxu0 0.0
  %2304 = vmatpush1.msra.mxu0 0.0
  %2305 = vmatprep.subr.mxu0 0.0
  %2306 = vmatpush1.msra.mxu0 0.0
  %2307 = vmatprep.subr.mxu0 0.0
  %2308 = vmatpush1.msra.mxu0 0.0
  %2309 = vmatprep.subr.mxu0 0.0
  %2310 = vmatpush1.msra.mxu0 0.0
  %2311 = vmatprep.mubr.f32.mxu0 0.0
  %2312 = vmatmul.mubr.f32.gmra.mrb[0].mxu0 %v2087
  %v2313 = vpop.f32.mrb[0].mxu0
  %v2314 = vadd.f32 0.0, %v2313
  %v2315 = vpop.f32.mrb[0].mxu0
  %v2316 = vadd.f32 0.0, %v2315
  %2317 = vdwg.mxu0
  %2318 = vmatprep.subr.mxu0 %v2234
  %2319 = vmatpush1.msra.mxu0 %v2233
  %2320 = vmatprep.subr.mxu0 %v2238
  %2321 = vmatpush1.msra.mxu0 %v2237
  %2322 = vmatprep.subr.mxu0 %v2242
  %2323 = vmatpush1.msra.mxu0 %v2241
  %2324 = vmatprep.subr.mxu0 %v2246
  %2325 = vmatpush1.msra.mxu0 %v2245
  %2326 = vmatprep.subr.mxu0 0.0
  %2327 = vmatpush1.msra.mxu0 0.0
  %2328 = vmatprep.subr.mxu0 0.0
  %2329 = vmatpush1.msra.mxu0 0.0
  %2330 = vmatprep.subr.mxu0 0.0
  %2331 = vmatpush1.msra.mxu0 0.0
  %2332 = vmatprep.subr.mxu0 0.0
  %2333 = vmatpush1.msra.mxu0 0.0
  %2334 = vmatprep.subr.mxu0 0.0
  %2335 = vmatpush1.msra.mxu0 0.0
  %2336 = vmatprep.subr.mxu0 0.0
  %2337 = vmatpush1.msra.mxu0 0.0
  %2338 = vmatprep.subr.mxu0 0.0
  %2339 = vmatpush1.msra.mxu0 0.0
  %2340 = vmatprep.subr.mxu0 0.0
  %2341 = vmatpush1.msra.mxu0 0.0
  %2342 = vmatprep.subr.mxu0 0.0
  %2343 = vmatpush1.msra.mxu0 0.0
  %2344 = vmatprep.subr.mxu0 0.0
  %2345 = vmatpush1.msra.mxu0 0.0
  %2346 = vmatprep.subr.mxu0 0.0
  %2347 = vmatpush1.msra.mxu0 0.0
  %2348 = vmatprep.subr.mxu0 0.0
  %2349 = vmatpush1.msra.mxu0 0.0
  %2350 = vmatprep.subr.mxu0 0.0
  %2351 = vmatpush1.msra.mxu0 0.0
  %2352 = vmatprep.subr.mxu0 0.0
  %2353 = vmatpush1.msra.mxu0 0.0
  %2354 = vmatprep.subr.mxu0 0.0
  %2355 = vmatpush1.msra.mxu0 0.0
  %2356 = vmatprep.subr.mxu0 0.0
  %2357 = vmatpush1.msra.mxu0 0.0
  %2358 = vmatprep.subr.mxu0 0.0
  %2359 = vmatpush1.msra.mxu0 0.0
  %2360 = vmatprep.subr.mxu0 0.0
  %2361 = vmatpush1.msra.mxu0 0.0
  %2362 = vmatprep.subr.mxu0 0.0
  %2363 = vmatpush1.msra.mxu0 0.0
  %2364 = vmatprep.subr.mxu0 0.0
  %2365 = vmatpush1.msra.mxu0 0.0
  %2366 = vmatprep.subr.mxu0 0.0
  %2367 = vmatpush1.msra.mxu0 0.0
  %2368 = vmatprep.subr.mxu0 0.0
  %2369 = vmatpush1.msra.mxu0 0.0
  %2370 = vmatprep.subr.mxu0 0.0
  %2371 = vmatpush1.msra.mxu0 0.0
  %2372 = vmatprep.subr.mxu0 0.0
  %2373 = vmatpush1.msra.mxu0 0.0
  %2374 = vmatprep.subr.mxu0 0.0
  %2375 = vmatpush1.msra.mxu0 0.0
  %2376 = vmatprep.subr.mxu0 0.0
  %2377 = vmatpush1.msra.mxu0 0.0
  %2378 = vmatprep.subr.mxu0 0.0
  %2379 = vmatpush1.msra.mxu0 0.0
  %2380 = vmatprep.subr.mxu0 0.0
  %2381 = vmatpush1.msra.mxu0 0.0
  %2382 = vmatprep.mubr.f32.mxu0 0.0
  %2383 = vmatmul.mubr.f32.gmra.mrb[0].mxu0 %v2087
  %v2384 = vpop.f32.mrb[0].mxu0
  %v2385 = vadd.f32 0.0, %v2384
  %v2386 = vpop.f32.mrb[0].mxu0
  %v2387 = vadd.f32 0.0, %v2386
  %2388 = vdwg.mxu0
  %v2393 = vrot.slane %v2314, 7
  %v2394 = vrot.slane %v2316, 7
  %v2395 = vrot.slane %v2385, 7
  %v2396 = vrot.slane %v2387, 7
  %vm2401 = vcmask 1040384
  %v2402 = vsel %vm2401, %v2156, %v2393
  %v2403 = vsel %vm2401, %v2158, %v2394
  %v2404 = vsel %vm2401, %v2227, %v2395
  %v2405 = vsel %vm2401, %v2229, %v2396
  %v2410 = vcombine.low %v2402, %v2403
  %v2411 = vcombine.low %v2404, %v2405
  %v2413 = vunpack.c.l.s4 1983009808
  %v2414 = vunpack.c.0.s8 %v2413
  %v2415 = vlaneseq
  %v2416 = vshrl.u32 %v2415, 7
  %v2417 = vsub.s32 %v2414, %v2416
  %v2418 = vrot.slane %v2410, %v2417
  %v2420 = vunpack.c.l.s4 1983009808
  %v2421 = vunpack.c.0.s8 %v2420
  %v2422 = vlaneseq
  %v2423 = vshrl.u32 %v2422, 7
  %v2424 = vsub.s32 %v2421, %v2423
  %v2425 = vrot.slane %v2411, %v2424
  %v2426 = vcombine.low %v2418, %v2425
  %2428 = vst [vmem:[%s3] sm:$0xff] %v2426
  // Predicated region
  $region10: #{_lambda_.13} parent=0 // pred_check
    _
  $region11: #{_lambda_.13} parent=0 // pred_check_branch
    %2430 = sbr.rel (0) target = $region13
  $region12: #{_lambda_.13} parent=0 // pred_region
    _
  $region13: #{_lambda_.13} parent=0 // pred_fallthru
    _
  // Predicated region
  $region14: #{_lambda_.13} parent=0 // pred_check
    _
  $region15: #{_lambda_.13} parent=0 // pred_check_branch
    %2432 = sbr.rel (0) target = $region17
  $region16: #{_lambda_.13} parent=0 // pred_region
    _
  $region17: #{_lambda_.13} parent=0 // pred_fallthru
    _
  // Predicated region
  $region18: #{_lambda_.13} parent=0 // pred_check
    _
  $region19: #{_lambda_.13} parent=0 // pred_check_branch
    %2434 = sbr.rel (0) target = $region21
  $region20: #{_lambda_.13} parent=0 // pred_region
    _
  $region21: #{_lambda_.13} parent=0 // pred_fallthru
    _
  // Predicated region
  $region22: #{_lambda_.13} parent=0 // pred_check
    _
  $region23: #{_lambda_.13} parent=0 // pred_check_branch
    %2436 = sbr.rel (0) target = $region25
  $region24: #{_lambda_.13} parent=0 // pred_region
    _
  $region25: #{_lambda_.13} parent=0 // pred_fallthru
    _

// kernel: _lambda_.15
$region0: #{_lambda_.15}
  #allocation0 [shape = 'u32[]', space=smem, size = 0x4, offset = 0x4, fixed_abs, tag = 'smem constant byte address 0x4 - core index']
  #allocation1 [shape = 'u32[144,128]{1,0:T(1,128)}', space=vmem, size = 0x12000, scoped, tag = 'internal scratch']
  #allocation2 [shape = 'f32[1,1]{1,0:T(1,128)S(1)}', space=vmem, size = 0x200, scoped, tag = 'scoped memory for _lambda_.15']
  %s0 = inlined_call_operand.vmem [shape: bf16[8,8192], index: 0, kind: input, shape index: {}]
  %s1 = inlined_call_operand.vmem [shape: bf16[8192,1], index: 1, kind: input, shape index: {}]
  %s2 = inlined_call_operand.<no memory space> [shape: f32[1,1], index: 2, kind: input, shape index: {}]
  %s3 = inlined_call_operand.vmem [shape: f32[8,1], index: 3, kind: output, shape index: {}]
  %s4 = sld [smem:[#allocation0]]
  $region22: #{_lambda_.15} parent=0
    _
  %s6 = ssub.s32 1, %s4
  %s7 = scalar_select 0, %s6, %s4
  %v8 = vstv %s2
  %9 = vst [vmem:[#allocation2] sm:$0x1] %v8
  // Predicated region
  $region2: #{_lambda_.15} parent=0 // pred_check
    _
  $region3: #{_lambda_.15} parent=0 // pred_check_branch
    %11 = sbr.rel (0) target = $region5
  $region4: #{_lambda_.15} parent=0 // pred_region
    _
  $region5: #{_lambda_.15} parent=0 // pred_fallthru
    _
  // Predicated region
  $region6: #{_lambda_.15} parent=0 // pred_check
    _
  $region7: #{_lambda_.15} parent=0 // pred_check_branch
    %13 = sbr.rel (0) target = $region9
  $region8: #{_lambda_.15} parent=0 // pred_region
    _
  $region9: #{_lambda_.15} parent=0 // pred_fallthru
    _
  // Predicated region
  $region10: #{_lambda_.15} parent=0 // pred_check
    _
  $region11: #{_lambda_.15} parent=0 // pred_check_branch
    %15 = sbr.rel (0) target = $region13
  $region12: #{_lambda_.15} parent=0 // pred_region
    _
  $region13: #{_lambda_.15} parent=0 // pred_fallthru
    _
  %v17 = vld [vmem:[%s0] sm:$0xff]
  %v18 = vld [vmem:[%s0 + $0x8] sm:$0xff]
  %v19 = vld [vmem:[%s0 + $0x10] sm:$0xff]
  %v20 = vld [vmem:[%s0 + $0x18] sm:$0xff]
  %v21 = vld [vmem:[%s0 + $0x20] sm:$0xff]
  %v22 = vld [vmem:[%s0 + $0x28] sm:$0xff]
  %v23 = vld [vmem:[%s0 + $0x30] sm:$0xff]
  %v24 = vld [vmem:[%s0 + $0x38] sm:$0xff]
  %v25 = vld [vmem:[%s0 + $0x40] sm:$0xff]
  %v26 = vld [vmem:[%s0 + $0x48] sm:$0xff]
  %v27 = vld [vmem:[%s0 + $0x50] sm:$0xff]
  %v28 = vld [vmem:[%s0 + $0x58] sm:$0xff]
  %v29 = vld [vmem:[%s0 + $0x60] sm:$0xff]
  %v30 = vld [vmem:[%s0 + $0x68] sm:$0xff]
  %v31 = vld [vmem:[%s0 + $0x70] sm:$0xff]
  %v32 = vld [vmem:[%s0 + $0x78] sm:$0xff]
  %v33 = vld [vmem:[%s0 + $0x80] sm:$0xff]
  %v34 = vld [vmem:[%s0 + $0x88] sm:$0xff]
  %v35 = vld [vmem:[%s0 + $0x90] sm:$0xff]
  %v36 = vld [vmem:[%s0 + $0x98] sm:$0xff]
  %v37 = vld [vmem:[%s0 + $0xa0] sm:$0xff]
  %v38 = vld [vmem:[%s0 + $0xa8] sm:$0xff]
  %v39 = vld [vmem:[%s0 + $0xb0] sm:$0xff]
  %v40 = vld [vmem:[%s0 + $0xb8] sm:$0xff]
  %v41 = vld [vmem:[%s0 + $0xc0] sm:$0xff]
  %v42 = vld [vmem:[%s0 + $0xc8] sm:$0xff]
  %v43 = vld [vmem:[%s0 + $0xd0] sm:$0xff]
  %v44 = vld [vmem:[%s0 + $0xd8] sm:$0xff]
  %v45 = vld [vmem:[%s0 + $0xe0] sm:$0xff]
  %v46 = vld [vmem:[%s0 + $0xe8] sm:$0xff]
  %v47 = vld [vmem:[%s0 + $0xf0] sm:$0xff]
  %v48 = vld [vmem:[%s0 + $0xf8] sm:$0xff]
  %v49 = vld [vmem:[%s1] sm:$0xf]
  %v50 = vld [vmem:[%s1 + $0x4] sm:$0xf]
  %v51 = vld [vmem:[%s1 + $0x8] sm:$0xf]
  %v52 = vld [vmem:[%s1 + $0xc] sm:$0xf]
  %v53 = vld [vmem:[%s1 + $0x10] sm:$0xf]
  %v54 = vld [vmem:[%s1 + $0x14] sm:$0xf]
  %v55 = vld [vmem:[%s1 + $0x18] sm:$0xf]
  %v56 = vld [vmem:[%s1 + $0x1c] sm:$0xf]
  %v57 = vld [vmem:[%s1 + $0x20] sm:$0xf]
  %v58 = vld [vmem:[%s1 + $0x24] sm:$0xf]
  %v59 = vld [vmem:[%s1 + $0x28] sm:$0xf]
  %v60 = vld [vmem:[%s1 + $0x2c] sm:$0xf]
  %v61 = vld [vmem:[%s1 + $0x30] sm:$0xf]
  %v62 = vld [vmem:[%s1 + $0x34] sm:$0xf]
  %v63 = vld [vmem:[%s1 + $0x38] sm:$0xf]
  %v64 = vld [vmem:[%s1 + $0x3c] sm:$0xf]
  %v65 = vld [vmem:[%s1 + $0x40] sm:$0xf]
  %v66 = vld [vmem:[%s1 + $0x44] sm:$0xf]
  %v67 = vld [vmem:[%s1 + $0x48] sm:$0xf]
  %v68 = vld [vmem:[%s1 + $0x4c] sm:$0xf]
  %v69 = vld [vmem:[%s1 + $0x50] sm:$0xf]
  %v70 = vld [vmem:[%s1 + $0x54] sm:$0xf]
  %v71 = vld [vmem:[%s1 + $0x58] sm:$0xf]
  %v72 = vld [vmem:[%s1 + $0x5c] sm:$0xf]
  %v73 = vld [vmem:[%s1 + $0x60] sm:$0xf]
  %v74 = vld [vmem:[%s1 + $0x64] sm:$0xf]
  %v75 = vld [vmem:[%s1 + $0x68] sm:$0xf]
  %v76 = vld [vmem:[%s1 + $0x6c] sm:$0xf]
  %v77 = vld [vmem:[%s1 + $0x70] sm:$0xf]
  %v78 = vld [vmem:[%s1 + $0x74] sm:$0xf]
  %v79 = vld [vmem:[%s1 + $0x78] sm:$0xf]
  %v80 = vld [vmem:[%s1 + $0x7c] sm:$0xf]
  %v81 = vld [vmem:[%s1 + $0x80] sm:$0xf]
  %v82 = vld [vmem:[%s1 + $0x84] sm:$0xf]
  %v83 = vld [vmem:[%s1 + $0x88] sm:$0xf]
  %v84 = vld [vmem:[%s1 + $0x8c] sm:$0xf]
  %v85 = vld [vmem:[%s1 + $0x90] sm:$0xf]
  %v86 = vld [vmem:[%s1 + $0x94] sm:$0xf]
  %v87 = vld [vmem:[%s1 + $0x98] sm:$0xf]
  %v88 = vld [vmem:[%s1 + $0x9c] sm:$0xf]
  %v89 = vld [vmem:[%s1 + $0xa0] sm:$0xf]
  %v90 = vld [vmem:[%s1 + $0xa4] sm:$0xf]
  %v91 = vld [vmem:[%s1 + $0xa8] sm:$0xf]
  %v92 = vld [vmem:[%s1 + $0xac] sm:$0xf]
  %v93 = vld [vmem:[%s1 + $0xb0] sm:$0xf]
  %v94 = vld [vmem:[%s1 + $0xb4] sm:$0xf]
  %v95 = vld [vmem:[%s1 + $0xb8] sm:$0xf]
  %v96 = vld [vmem:[%s1 + $0xbc] sm:$0xf]
  %v97 = vld [vmem:[%s1 + $0xc0] sm:$0xf]
  %v98 = vld [vmem:[%s1 + $0xc4] sm:$0xf]
  %v99 = vld [vmem:[%s1 + $0xc8] sm:$0xf]
  %v100 = vld [vmem:[%s1 + $0xcc] sm:$0xf]
  %v101 = vld [vmem:[%s1 + $0xd0] sm:$0xf]
  %v102 = vld [vmem:[%s1 + $0xd4] sm:$0xf]
  %v103 = vld [vmem:[%s1 + $0xd8] sm:$0xf]
  %v104 = vld [vmem:[%s1 + $0xdc] sm:$0xf]
  %v105 = vld [vmem:[%s1 + $0xe0] sm:$0xf]
  %v106 = vld [vmem:[%s1 + $0xe4] sm:$0xf]
  %v107 = vld [vmem:[%s1 + $0xe8] sm:$0xf]
  %v108 = vld [vmem:[%s1 + $0xec] sm:$0xf]
  %v109 = vld [vmem:[%s1 + $0xf0] sm:$0xf]
  %v110 = vld [vmem:[%s1 + $0xf4] sm:$0xf]
  %v111 = vld [vmem:[%s1 + $0xf8] sm:$0xf]
  %v112 = vld [vmem:[%s1 + $0xfc] sm:$0xf]
  %v113 = vld [vmem:[%s1 + $0x100] sm:$0xf]
  %v114 = vld [vmem:[%s1 + $0x104] sm:$0xf]
  %v115 = vld [vmem:[%s1 + $0x108] sm:$0xf]
  %v116 = vld [vmem:[%s1 + $0x10c] sm:$0xf]
  %v117 = vld [vmem:[%s1 + $0x110] sm:$0xf]
  %v118 = vld [vmem:[%s1 + $0x114] sm:$0xf]
  %v119 = vld [vmem:[%s1 + $0x118] sm:$0xf]
  %v120 = vld [vmem:[%s1 + $0x11c] sm:$0xf]
  %v121 = vld [vmem:[%s1 + $0x120] sm:$0xf]
  %v122 = vld [vmem:[%s1 + $0x124] sm:$0xf]
  %v123 = vld [vmem:[%s1 + $0x128] sm:$0xf]
  %v124 = vld [vmem:[%s1 + $0x12c] sm:$0xf]
  %v125 = vld [vmem:[%s1 + $0x130] sm:$0xf]
  %v126 = vld [vmem:[%s1 + $0x134] sm:$0xf]
  %v127 = vld [vmem:[%s1 + $0x138] sm:$0xf]
  %v128 = vld [vmem:[%s1 + $0x13c] sm:$0xf]
  %v129 = vld [vmem:[%s1 + $0x140] sm:$0xf]
  %v130 = vld [vmem:[%s1 + $0x144] sm:$0xf]
  %v131 = vld [vmem:[%s1 + $0x148] sm:$0xf]
  %v132 = vld [vmem:[%s1 + $0x14c] sm:$0xf]
  %v133 = vld [vmem:[%s1 + $0x150] sm:$0xf]
  %v134 = vld [vmem:[%s1 + $0x154] sm:$0xf]
  %v135 = vld [vmem:[%s1 + $0x158] sm:$0xf]
  %v136 = vld [vmem:[%s1 + $0x15c] sm:$0xf]
  %v137 = vld [vmem:[%s1 + $0x160] sm:$0xf]
  %v138 = vld [vmem:[%s1 + $0x164] sm:$0xf]
  %v139 = vld [vmem:[%s1 + $0x168] sm:$0xf]
  %v140 = vld [vmem:[%s1 + $0x16c] sm:$0xf]
  %v141 = vld [vmem:[%s1 + $0x170] sm:$0xf]
  %v142 = vld [vmem:[%s1 + $0x174] sm:$0xf]
  %v143 = vld [vmem:[%s1 + $0x178] sm:$0xf]
  %v144 = vld [vmem:[%s1 + $0x17c] sm:$0xf]
  %v145 = vld [vmem:[%s1 + $0x180] sm:$0xf]
  %v146 = vld [vmem:[%s1 + $0x184] sm:$0xf]
  %v147 = vld [vmem:[%s1 + $0x188] sm:$0xf]
  %v148 = vld [vmem:[%s1 + $0x18c] sm:$0xf]
  %v149 = vld [vmem:[%s1 + $0x190] sm:$0xf]
  %v150 = vld [vmem:[%s1 + $0x194] sm:$0xf]
  %v151 = vld [vmem:[%s1 + $0x198] sm:$0xf]
  %v152 = vld [vmem:[%s1 + $0x19c] sm:$0xf]
  %v153 = vld [vmem:[%s1 + $0x1a0] sm:$0xf]
  %v154 = vld [vmem:[%s1 + $0x1a4] sm:$0xf]
  %v155 = vld [vmem:[%s1 + $0x1a8] sm:$0xf]
  %v156 = vld [vmem:[%s1 + $0x1ac] sm:$0xf]
  %v157 = vld [vmem:[%s1 + $0x1b0] sm:$0xf]
  %v158 = vld [vmem:[%s1 + $0x1b4] sm:$0xf]
  %v159 = vld [vmem:[%s1 + $0x1b8] sm:$0xf]
  %v160 = vld [vmem:[%s1 + $0x1bc] sm:$0xf]
  %v161 = vld [vmem:[%s1 + $0x1c0] sm:$0xf]
  %v162 = vld [vmem:[%s1 + $0x1c4] sm:$0xf]
  %v163 = vld [vmem:[%s1 + $0x1c8] sm:$0xf]
  %v164 = vld [vmem:[%s1 + $0x1cc] sm:$0xf]
  %v165 = vld [vmem:[%s1 + $0x1d0] sm:$0xf]
  %v166 = vld [vmem:[%s1 + $0x1d4] sm:$0xf]
  %v167 = vld [vmem:[%s1 + $0x1d8] sm:$0xf]
  %v168 = vld [vmem:[%s1 + $0x1dc] sm:$0xf]
  %v169 = vld [vmem:[%s1 + $0x1e0] sm:$0xf]
  %v170 = vld [vmem:[%s1 + $0x1e4] sm:$0xf]
  %v171 = vld [vmem:[%s1 + $0x1e8] sm:$0xf]
  %v172 = vld [vmem:[%s1 + $0x1ec] sm:$0xf]
  %v173 = vld [vmem:[%s1 + $0x1f0] sm:$0xf]
  %v174 = vld [vmem:[%s1 + $0x1f4] sm:$0xf]
  %v175 = vld [vmem:[%s1 + $0x1f8] sm:$0xf]
  %v176 = vld [vmem:[%s1 + $0x1fc] sm:$0xf]
  %v177 = vld [vmem:[%s1 + $0x200] sm:$0xf]
  %v178 = vld [vmem:[%s1 + $0x204] sm:$0xf]
  %v179 = vld [vmem:[%s1 + $0x208] sm:$0xf]
  %v180 = vld [vmem:[%s1 + $0x20c] sm:$0xf]
  %v181 = vld [vmem:[%s1 + $0x210] sm:$0xf]
  %v182 = vld [vmem:[%s1 + $0x214] sm:$0xf]
  %v183 = vld [vmem:[%s1 + $0x218] sm:$0xf]
  %v184 = vld [vmem:[%s1 + $0x21c] sm:$0xf]
  %v185 = vld [vmem:[%s1 + $0x220] sm:$0xf]
  %v186 = vld [vmem:[%s1 + $0x224] sm:$0xf]
  %v187 = vld [vmem:[%s1 + $0x228] sm:$0xf]
  %v188 = vld [vmem:[%s1 + $0x22c] sm:$0xf]
  %v189 = vld [vmem:[%s1 + $0x230] sm:$0xf]
  %v190 = vld [vmem:[%s1 + $0x234] sm:$0xf]
  %v191 = vld [vmem:[%s1 + $0x238] sm:$0xf]
  %v192 = vld [vmem:[%s1 + $0x23c] sm:$0xf]
  %v193 = vld [vmem:[%s1 + $0x240] sm:$0xf]
  %v194 = vld [vmem:[%s1 + $0x244] sm:$0xf]
  %v195 = vld [vmem:[%s1 + $0x248] sm:$0xf]
  %v196 = vld [vmem:[%s1 + $0x24c] sm:$0xf]
  %v197 = vld [vmem:[%s1 + $0x250] sm:$0xf]
  %v198 = vld [vmem:[%s1 + $0x254] sm:$0xf]
  %v199 = vld [vmem:[%s1 + $0x258] sm:$0xf]
  %v200 = vld [vmem:[%s1 + $0x25c] sm:$0xf]
  %v201 = vld [vmem:[%s1 + $0x260] sm:$0xf]
  %v202 = vld [vmem:[%s1 + $0x264] sm:$0xf]
  %v203 = vld [vmem:[%s1 + $0x268] sm:$0xf]
  %v204 = vld [vmem:[%s1 + $0x26c] sm:$0xf]
  %v205 = vld [vmem:[%s1 + $0x270] sm:$0xf]
  %v206 = vld [vmem:[%s1 + $0x274] sm:$0xf]
  %v207 = vld [vmem:[%s1 + $0x278] sm:$0xf]
  %v208 = vld [vmem:[%s1 + $0x27c] sm:$0xf]
  %v209 = vld [vmem:[%s1 + $0x280] sm:$0xf]
  %v210 = vld [vmem:[%s1 + $0x284] sm:$0xf]
  %v211 = vld [vmem:[%s1 + $0x288] sm:$0xf]
  %v212 = vld [vmem:[%s1 + $0x28c] sm:$0xf]
  %v213 = vld [vmem:[%s1 + $0x290] sm:$0xf]
  %v214 = vld [vmem:[%s1 + $0x294] sm:$0xf]
  %v215 = vld [vmem:[%s1 + $0x298] sm:$0xf]
  %v216 = vld [vmem:[%s1 + $0x29c] sm:$0xf]
  %v217 = vld [vmem:[%s1 + $0x2a0] sm:$0xf]
  %v218 = vld [vmem:[%s1 + $0x2a4] sm:$0xf]
  %v219 = vld [vmem:[%s1 + $0x2a8] sm:$0xf]
  %v220 = vld [vmem:[%s1 + $0x2ac] sm:$0xf]
  %v221 = vld [vmem:[%s1 + $0x2b0] sm:$0xf]
  %v222 = vld [vmem:[%s1 + $0x2b4] sm:$0xf]
  %v223 = vld [vmem:[%s1 + $0x2b8] sm:$0xf]
  %v224 = vld [vmem:[%s1 + $0x2bc] sm:$0xf]
  %v225 = vld [vmem:[%s1 + $0x2c0] sm:$0xf]
  %v226 = vld [vmem:[%s1 + $0x2c4] sm:$0xf]
  %v227 = vld [vmem:[%s1 + $0x2c8] sm:$0xf]
  %v228 = vld [vmem:[%s1 + $0x2cc] sm:$0xf]
  %v229 = vld [vmem:[%s1 + $0x2d0] sm:$0xf]
  %v230 = vld [vmem:[%s1 + $0x2d4] sm:$0xf]
  %v231 = vld [vmem:[%s1 + $0x2d8] sm:$0xf]
  %v232 = vld [vmem:[%s1 + $0x2dc] sm:$0xf]
  %v233 = vld [vmem:[%s1 + $0x2e0] sm:$0xf]
  %v234 = vld [vmem:[%s1 + $0x2e4] sm:$0xf]
  %v235 = vld [vmem:[%s1 + $0x2e8] sm:$0xf]
  %v236 = vld [vmem:[%s1 + $0x2ec] sm:$0xf]
  %v237 = vld [vmem:[%s1 + $0x2f0] sm:$0xf]
  %v238 = vld [vmem:[%s1 + $0x2f4] sm:$0xf]
  %v239 = vld [vmem:[%s1 + $0x2f8] sm:$0xf]
  %v240 = vld [vmem:[%s1 + $0x2fc] sm:$0xf]
  %v241 = vld [vmem:[%s1 + $0x300] sm:$0xf]
  %v242 = vld [vmem:[%s1 + $0x304] sm:$0xf]
  %v243 = vld [vmem:[%s1 + $0x308] sm:$0xf]
  %v244 = vld [vmem:[%s1 + $0x30c] sm:$0xf]
  %v245 = vld [vmem:[%s1 + $0x310] sm:$0xf]
  %v246 = vld [vmem:[%s1 + $0x314] sm:$0xf]
  %v247 = vld [vmem:[%s1 + $0x318] sm:$0xf]
  %v248 = vld [vmem:[%s1 + $0x31c] sm:$0xf]
  %v249 = vld [vmem:[%s1 + $0x320] sm:$0xf]
  %v250 = vld [vmem:[%s1 + $0x324] sm:$0xf]
  %v251 = vld [vmem:[%s1 + $0x328] sm:$0xf]
  %v252 = vld [vmem:[%s1 + $0x32c] sm:$0xf]
  %v253 = vld [vmem:[%s1 + $0x330] sm:$0xf]
  %v254 = vld [vmem:[%s1 + $0x334] sm:$0xf]
  %v255 = vld [vmem:[%s1 + $0x338] sm:$0xf]
  %v256 = vld [vmem:[%s1 + $0x33c] sm:$0xf]
  %v257 = vld [vmem:[%s1 + $0x340] sm:$0xf]
  %v258 = vld [vmem:[%s1 + $0x344] sm:$0xf]
  %v259 = vld [vmem:[%s1 + $0x348] sm:$0xf]
  %v260 = vld [vmem:[%s1 + $0x34c] sm:$0xf]
  %v261 = vld [vmem:[%s1 + $0x350] sm:$0xf]
  %v262 = vld [vmem:[%s1 + $0x354] sm:$0xf]
  %v263 = vld [vmem:[%s1 + $0x358] sm:$0xf]
  %v264 = vld [vmem:[%s1 + $0x35c] sm:$0xf]
  %v265 = vld [vmem:[%s1 + $0x360] sm:$0xf]
  %v266 = vld [vmem:[%s1 + $0x364] sm:$0xf]
  %v267 = vld [vmem:[%s1 + $0x368] sm:$0xf]
  %v268 = vld [vmem:[%s1 + $0x36c] sm:$0xf]
  %v269 = vld [vmem:[%s1 + $0x370] sm:$0xf]
  %v270 = vld [vmem:[%s1 + $0x374] sm:$0xf]
  %v271 = vld [vmem:[%s1 + $0x378] sm:$0xf]
  %v272 = vld [vmem:[%s1 + $0x37c] sm:$0xf]
  %v273 = vld [vmem:[%s1 + $0x380] sm:$0xf]
  %v274 = vld [vmem:[%s1 + $0x384] sm:$0xf]
  %v275 = vld [vmem:[%s1 + $0x388] sm:$0xf]
  %v276 = vld [vmem:[%s1 + $0x38c] sm:$0xf]
  %v277 = vld [vmem:[%s1 + $0x390] sm:$0xf]
  %v278 = vld [vmem:[%s1 + $0x394] sm:$0xf]
  %v279 = vld [vmem:[%s1 + $0x398] sm:$0xf]
  %v280 = vld [vmem:[%s1 + $0x39c] sm:$0xf]
  %v281 = vld [vmem:[%s1 + $0x3a0] sm:$0xf]
  %v282 = vld [vmem:[%s1 + $0x3a4] sm:$0xf]
  %v283 = vld [vmem:[%s1 + $0x3a8] sm:$0xf]
  %v284 = vld [vmem:[%s1 + $0x3ac] sm:$0xf]
  %v285 = vld [vmem:[%s1 + $0x3b0] sm:$0xf]
  %v286 = vld [vmem:[%s1 + $0x3b4] sm:$0xf]
  %v287 = vld [vmem:[%s1 + $0x3b8] sm:$0xf]
  %v288 = vld [vmem:[%s1 + $0x3bc] sm:$0xf]
  %v289 = vld [vmem:[%s1 + $0x3c0] sm:$0xf]
  %v290 = vld [vmem:[%s1 + $0x3c4] sm:$0xf]
  %v291 = vld [vmem:[%s1 + $0x3c8] sm:$0xf]
  %v292 = vld [vmem:[%s1 + $0x3cc] sm:$0xf]
  %v293 = vld [vmem:[%s1 + $0x3d0] sm:$0xf]
  %v294 = vld [vmem:[%s1 + $0x3d4] sm:$0xf]
  %v295 = vld [vmem:[%s1 + $0x3d8] sm:$0xf]
  %v296 = vld [vmem:[%s1 + $0x3dc] sm:$0xf]
  %v297 = vld [vmem:[%s1 + $0x3e0] sm:$0xf]
  %v298 = vld [vmem:[%s1 + $0x3e4] sm:$0xf]
  %v299 = vld [vmem:[%s1 + $0x3e8] sm:$0xf]
  %v300 = vld [vmem:[%s1 + $0x3ec] sm:$0xf]
  %v301 = vld [vmem:[%s1 + $0x3f0] sm:$0xf]
  %v302 = vld [vmem:[%s1 + $0x3f4] sm:$0xf]
  %v303 = vld [vmem:[%s1 + $0x3f8] sm:$0xf]
  %v304 = vld [vmem:[%s1 + $0x3fc] sm:$0xf]
  %v305 = vld [vmem:[%s1 + $0x400] sm:$0xf]
  %v306 = vld [vmem:[%s1 + $0x404] sm:$0xf]
  %v307 = vld [vmem:[%s1 + $0x408] sm:$0xf]
  %v308 = vld [vmem:[%s1 + $0x40c] sm:$0xf]
  %v309 = vld [vmem:[%s1 + $0x410] sm:$0xf]
  %v310 = vld [vmem:[%s1 + $0x414] sm:$0xf]
  %v311 = vld [vmem:[%s1 + $0x418] sm:$0xf]
  %v312 = vld [vmem:[%s1 + $0x41c] sm:$0xf]
  %v313 = vld [vmem:[%s1 + $0x420] sm:$0xf]
  %v314 = vld [vmem:[%s1 + $0x424] sm:$0xf]
  %v315 = vld [vmem:[%s1 + $0x428] sm:$0xf]
  %v316 = vld [vmem:[%s1 + $0x42c] sm:$0xf]
  %v317 = vld [vmem:[%s1 + $0x430] sm:$0xf]
  %v318 = vld [vmem:[%s1 + $0x434] sm:$0xf]
  %v319 = vld [vmem:[%s1 + $0x438] sm:$0xf]
  %v320 = vld [vmem:[%s1 + $0x43c] sm:$0xf]
  %v321 = vld [vmem:[%s1 + $0x440] sm:$0xf]
  %v322 = vld [vmem:[%s1 + $0x444] sm:$0xf]
  %v323 = vld [vmem:[%s1 + $0x448] sm:$0xf]
  %v324 = vld [vmem:[%s1 + $0x44c] sm:$0xf]
  %v325 = vld [vmem:[%s1 + $0x450] sm:$0xf]
  %v326 = vld [vmem:[%s1 + $0x454] sm:$0xf]
  %v327 = vld [vmem:[%s1 + $0x458] sm:$0xf]
  %v328 = vld [vmem:[%s1 + $0x45c] sm:$0xf]
  %v329 = vld [vmem:[%s1 + $0x460] sm:$0xf]
  %v330 = vld [vmem:[%s1 + $0x464] sm:$0xf]
  %v331 = vld [vmem:[%s1 + $0x468] sm:$0xf]
  %v332 = vld [vmem:[%s1 + $0x46c] sm:$0xf]
  %v333 = vld [vmem:[%s1 + $0x470] sm:$0xf]
  %v334 = vld [vmem:[%s1 + $0x474] sm:$0xf]
  %v335 = vld [vmem:[%s1 + $0x478] sm:$0xf]
  %v336 = vld [vmem:[%s1 + $0x47c] sm:$0xf]
  %v337 = vld [vmem:[%s1 + $0x480] sm:$0xf]
  %v338 = vld [vmem:[%s1 + $0x484] sm:$0xf]
  %v339 = vld [vmem:[%s1 + $0x488] sm:$0xf]
  %v340 = vld [vmem:[%s1 + $0x48c] sm:$0xf]
  %v341 = vld [vmem:[%s1 + $0x490] sm:$0xf]
  %v342 = vld [vmem:[%s1 + $0x494] sm:$0xf]
  %v343 = vld [vmem:[%s1 + $0x498] sm:$0xf]
  %v344 = vld [vmem:[%s1 + $0x49c] sm:$0xf]
  %v345 = vld [vmem:[%s1 + $0x4a0] sm:$0xf]
  %v346 = vld [vmem:[%s1 + $0x4a4] sm:$0xf]
  %v347 = vld [vmem:[%s1 + $0x4a8] sm:$0xf]
  %v348 = vld [vmem:[%s1 + $0x4ac] sm:$0xf]
  %v349 = vld [vmem:[%s1 + $0x4b0] sm:$0xf]
  %v350 = vld [vmem:[%s1 + $0x4b4] sm:$0xf]
  %v351 = vld [vmem:[%s1 + $0x4b8] sm:$0xf]
  %v352 = vld [vmem:[%s1 + $0x4bc] sm:$0xf]
  %v353 = vld [vmem:[%s1 + $0x4c0] sm:$0xf]
  %v354 = vld [vmem:[%s1 + $0x4c4] sm:$0xf]
  %v355 = vld [vmem:[%s1 + $0x4c8] sm:$0xf]
  %v356 = vld [vmem:[%s1 + $0x4cc] sm:$0xf]
  %v357 = vld [vmem:[%s1 + $0x4d0] sm:$0xf]
  %v358 = vld [vmem:[%s1 + $0x4d4] sm:$0xf]
  %v359 = vld [vmem:[%s1 + $0x4d8] sm:$0xf]
  %v360 = vld [vmem:[%s1 + $0x4dc] sm:$0xf]
  %v361 = vld [vmem:[%s1 + $0x4e0] sm:$0xf]
  %v362 = vld [vmem:[%s1 + $0x4e4] sm:$0xf]
  %v363 = vld [vmem:[%s1 + $0x4e8] sm:$0xf]
  %v364 = vld [vmem:[%s1 + $0x4ec] sm:$0xf]
  %v365 = vld [vmem:[%s1 + $0x4f0] sm:$0xf]
  %v366 = vld [vmem:[%s1 + $0x4f4] sm:$0xf]
  %v367 = vld [vmem:[%s1 + $0x4f8] sm:$0xf]
  %v368 = vld [vmem:[%s1 + $0x4fc] sm:$0xf]
  %v369 = vld [vmem:[%s1 + $0x500] sm:$0xf]
  %v370 = vld [vmem:[%s1 + $0x504] sm:$0xf]
  %v371 = vld [vmem:[%s1 + $0x508] sm:$0xf]
  %v372 = vld [vmem:[%s1 + $0x50c] sm:$0xf]
  %v373 = vld [vmem:[%s1 + $0x510] sm:$0xf]
  %v374 = vld [vmem:[%s1 + $0x514] sm:$0xf]
  %v375 = vld [vmem:[%s1 + $0x518] sm:$0xf]
  %v376 = vld [vmem:[%s1 + $0x51c] sm:$0xf]
  %v377 = vld [vmem:[%s1 + $0x520] sm:$0xf]
  %v378 = vld [vmem:[%s1 + $0x524] sm:$0xf]
  %v379 = vld [vmem:[%s1 + $0x528] sm:$0xf]
  %v380 = vld [vmem:[%s1 + $0x52c] sm:$0xf]
  %v381 = vld [vmem:[%s1 + $0x530] sm:$0xf]
  %v382 = vld [vmem:[%s1 + $0x534] sm:$0xf]
  %v383 = vld [vmem:[%s1 + $0x538] sm:$0xf]
  %v384 = vld [vmem:[%s1 + $0x53c] sm:$0xf]
  %v385 = vld [vmem:[%s1 + $0x540] sm:$0xf]
  %v386 = vld [vmem:[%s1 + $0x544] sm:$0xf]
  %v387 = vld [vmem:[%s1 + $0x548] sm:$0xf]
  %v388 = vld [vmem:[%s1 + $0x54c] sm:$0xf]
  %v389 = vld [vmem:[%s1 + $0x550] sm:$0xf]
  %v390 = vld [vmem:[%s1 + $0x554] sm:$0xf]
  %v391 = vld [vmem:[%s1 + $0x558] sm:$0xf]
  %v392 = vld [vmem:[%s1 + $0x55c] sm:$0xf]
  %v393 = vld [vmem:[%s1 + $0x560] sm:$0xf]
  %v394 = vld [vmem:[%s1 + $0x564] sm:$0xf]
  %v395 = vld [vmem:[%s1 + $0x568] sm:$0xf]
  %v396 = vld [vmem:[%s1 + $0x56c] sm:$0xf]
  %v397 = vld [vmem:[%s1 + $0x570] sm:$0xf]
  %v398 = vld [vmem:[%s1 + $0x574] sm:$0xf]
  %v399 = vld [vmem:[%s1 + $0x578] sm:$0xf]
  %v400 = vld [vmem:[%s1 + $0x57c] sm:$0xf]
  %v401 = vld [vmem:[%s1 + $0x580] sm:$0xf]
  %v402 = vld [vmem:[%s1 + $0x584] sm:$0xf]
  %v403 = vld [vmem:[%s1 + $0x588] sm:$0xf]
  %v404 = vld [vmem:[%s1 + $0x58c] sm:$0xf]
  %v405 = vld [vmem:[%s1 + $0x590] sm:$0xf]
  %v406 = vld [vmem:[%s1 + $0x594] sm:$0xf]
  %v407 = vld [vmem:[%s1 + $0x598] sm:$0xf]
  %v408 = vld [vmem:[%s1 + $0x59c] sm:$0xf]
  %v409 = vld [vmem:[%s1 + $0x5a0] sm:$0xf]
  %v410 = vld [vmem:[%s1 + $0x5a4] sm:$0xf]
  %v411 = vld [vmem:[%s1 + $0x5a8] sm:$0xf]
  %v412 = vld [vmem:[%s1 + $0x5ac] sm:$0xf]
  %v413 = vld [vmem:[%s1 + $0x5b0] sm:$0xf]
  %v414 = vld [vmem:[%s1 + $0x5b4] sm:$0xf]
  %v415 = vld [vmem:[%s1 + $0x5b8] sm:$0xf]
  %v416 = vld [vmem:[%s1 + $0x5bc] sm:$0xf]
  %v417 = vld [vmem:[%s1 + $0x5c0] sm:$0xf]
  %v418 = vld [vmem:[%s1 + $0x5c4] sm:$0xf]
  %v419 = vld [vmem:[%s1 + $0x5c8] sm:$0xf]
  %v420 = vld [vmem:[%s1 + $0x5cc] sm:$0xf]
  %v421 = vld [vmem:[%s1 + $0x5d0] sm:$0xf]
  %v422 = vld [vmem:[%s1 + $0x5d4] sm:$0xf]
  %v423 = vld [vmem:[%s1 + $0x5d8] sm:$0xf]
  %v424 = vld [vmem:[%s1 + $0x5dc] sm:$0xf]
  %v425 = vld [vmem:[%s1 + $0x5e0] sm:$0xf]
  %v426 = vld [vmem:[%s1 + $0x5e4] sm:$0xf]
  %v427 = vld [vmem:[%s1 + $0x5e8] sm:$0xf]
  %v428 = vld [vmem:[%s1 + $0x5ec] sm:$0xf]
  %v429 = vld [vmem:[%s1 + $0x5f0] sm:$0xf]
  %v430 = vld [vmem:[%s1 + $0x5f4] sm:$0xf]
  %v431 = vld [vmem:[%s1 + $0x5f8] sm:$0xf]
  %v432 = vld [vmem:[%s1 + $0x5fc] sm:$0xf]
  %v433 = vld [vmem:[%s1 + $0x600] sm:$0xf]
  %v434 = vld [vmem:[%s1 + $0x604] sm:$0xf]
  %v435 = vld [vmem:[%s1 + $0x608] sm:$0xf]
  %v436 = vld [vmem:[%s1 + $0x60c] sm:$0xf]
  %v437 = vld [vmem:[%s1 + $0x610] sm:$0xf]
  %v438 = vld [vmem:[%s1 + $0x614] sm:$0xf]
  %v439 = vld [vmem:[%s1 + $0x618] sm:$0xf]
  %v440 = vld [vmem:[%s1 + $0x61c] sm:$0xf]
  %v441 = vld [vmem:[%s1 + $0x620] sm:$0xf]
  %v442 = vld [vmem:[%s1 + $0x624] sm:$0xf]
  %v443 = vld [vmem:[%s1 + $0x628] sm:$0xf]
  %v444 = vld [vmem:[%s1 + $0x62c] sm:$0xf]
  %v445 = vld [vmem:[%s1 + $0x630] sm:$0xf]
  %v446 = vld [vmem:[%s1 + $0x634] sm:$0xf]
  %v447 = vld [vmem:[%s1 + $0x638] sm:$0xf]
  %v448 = vld [vmem:[%s1 + $0x63c] sm:$0xf]
  %v449 = vld [vmem:[%s1 + $0x640] sm:$0xf]
  %v450 = vld [vmem:[%s1 + $0x644] sm:$0xf]
  %v451 = vld [vmem:[%s1 + $0x648] sm:$0xf]
  %v452 = vld [vmem:[%s1 + $0x64c] sm:$0xf]
  %v453 = vld [vmem:[%s1 + $0x650] sm:$0xf]
  %v454 = vld [vmem:[%s1 + $0x654] sm:$0xf]
  %v455 = vld [vmem:[%s1 + $0x658] sm:$0xf]
  %v456 = vld [vmem:[%s1 + $0x65c] sm:$0xf]
  %v457 = vld [vmem:[%s1 + $0x660] sm:$0xf]
  %v458 = vld [vmem:[%s1 + $0x664] sm:$0xf]
  %v459 = vld [vmem:[%s1 + $0x668] sm:$0xf]
  %v460 = vld [vmem:[%s1 + $0x66c] sm:$0xf]
  %v461 = vld [vmem:[%s1 + $0x670] sm:$0xf]
  %v462 = vld [vmem:[%s1 + $0x674] sm:$0xf]
  %v463 = vld [vmem:[%s1 + $0x678] sm:$0xf]
  %v464 = vld [vmem:[%s1 + $0x67c] sm:$0xf]
  %v465 = vld [vmem:[%s1 + $0x680] sm:$0xf]
  %v466 = vld [vmem:[%s1 + $0x684] sm:$0xf]
  %v467 = vld [vmem:[%s1 + $0x688] sm:$0xf]
  %v468 = vld [vmem:[%s1 + $0x68c] sm:$0xf]
  %v469 = vld [vmem:[%s1 + $0x690] sm:$0xf]
  %v470 = vld [vmem:[%s1 + $0x694] sm:$0xf]
  %v471 = vld [vmem:[%s1 + $0x698] sm:$0xf]
  %v472 = vld [vmem:[%s1 + $0x69c] sm:$0xf]
  %v473 = vld [vmem:[%s1 + $0x6a0] sm:$0xf]
  %v474 = vld [vmem:[%s1 + $0x6a4] sm:$0xf]
  %v475 = vld [vmem:[%s1 + $0x6a8] sm:$0xf]
  %v476 = vld [vmem:[%s1 + $0x6ac] sm:$0xf]
  %v477 = vld [vmem:[%s1 + $0x6b0] sm:$0xf]
  %v478 = vld [vmem:[%s1 + $0x6b4] sm:$0xf]
  %v479 = vld [vmem:[%s1 + $0x6b8] sm:$0xf]
  %v480 = vld [vmem:[%s1 + $0x6bc] sm:$0xf]
  %v481 = vld [vmem:[%s1 + $0x6c0] sm:$0xf]
  %v482 = vld [vmem:[%s1 + $0x6c4] sm:$0xf]
  %v483 = vld [vmem:[%s1 + $0x6c8] sm:$0xf]
  %v484 = vld [vmem:[%s1 + $0x6cc] sm:$0xf]
  %v485 = vld [vmem:[%s1 + $0x6d0] sm:$0xf]
  %v486 = vld [vmem:[%s1 + $0x6d4] sm:$0xf]
  %v487 = vld [vmem:[%s1 + $0x6d8] sm:$0xf]
  %v488 = vld [vmem:[%s1 + $0x6dc] sm:$0xf]
  %v489 = vld [vmem:[%s1 + $0x6e0] sm:$0xf]
  %v490 = vld [vmem:[%s1 + $0x6e4] sm:$0xf]
  %v491 = vld [vmem:[%s1 + $0x6e8] sm:$0xf]
  %v492 = vld [vmem:[%s1 + $0x6ec] sm:$0xf]
  %v493 = vld [vmem:[%s1 + $0x6f0] sm:$0xf]
  %v494 = vld [vmem:[%s1 + $0x6f4] sm:$0xf]
  %v495 = vld [vmem:[%s1 + $0x6f8] sm:$0xf]
  %v496 = vld [vmem:[%s1 + $0x6fc] sm:$0xf]
  %v497 = vld [vmem:[%s1 + $0x700] sm:$0xf]
  %v498 = vld [vmem:[%s1 + $0x704] sm:$0xf]
  %v499 = vld [vmem:[%s1 + $0x708] sm:$0xf]
  %v500 = vld [vmem:[%s1 + $0x70c] sm:$0xf]
  %v501 = vld [vmem:[%s1 + $0x710] sm:$0xf]
  %v502 = vld [vmem:[%s1 + $0x714] sm:$0xf]
  %v503 = vld [vmem:[%s1 + $0x718] sm:$0xf]
  %v504 = vld [vmem:[%s1 + $0x71c] sm:$0xf]
  %v505 = vld [vmem:[%s1 + $0x720] sm:$0xf]
  %v506 = vld [vmem:[%s1 + $0x724] sm:$0xf]
  %v507 = vld [vmem:[%s1 + $0x728] sm:$0xf]
  %v508 = vld [vmem:[%s1 + $0x72c] sm:$0xf]
  %v509 = vld [vmem:[%s1 + $0x730] sm:$0xf]
  %v510 = vld [vmem:[%s1 + $0x734] sm:$0xf]
  %v511 = vld [vmem:[%s1 + $0x738] sm:$0xf]
  %v512 = vld [vmem:[%s1 + $0x73c] sm:$0xf]
  %v513 = vld [vmem:[%s1 + $0x740] sm:$0xf]
  %v514 = vld [vmem:[%s1 + $0x744] sm:$0xf]
  %v515 = vld [vmem:[%s1 + $0x748] sm:$0xf]
  %v516 = vld [vmem:[%s1 + $0x74c] sm:$0xf]
  %v517 = vld [vmem:[%s1 + $0x750] sm:$0xf]
  %v518 = vld [vmem:[%s1 + $0x754] sm:$0xf]
  %v519 = vld [vmem:[%s1 + $0x758] sm:$0xf]
  %v520 = vld [vmem:[%s1 + $0x75c] sm:$0xf]
  %v521 = vld [vmem:[%s1 + $0x760] sm:$0xf]
  %v522 = vld [vmem:[%s1 + $0x764] sm:$0xf]
  %v523 = vld [vmem:[%s1 + $0x768] sm:$0xf]
  %v524 = vld [vmem:[%s1 + $0x76c] sm:$0xf]
  %v525 = vld [vmem:[%s1 + $0x770] sm:$0xf]
  %v526 = vld [vmem:[%s1 + $0x774] sm:$0xf]
  %v527 = vld [vmem:[%s1 + $0x778] sm:$0xf]
  %v528 = vld [vmem:[%s1 + $0x77c] sm:$0xf]
  %v529 = vld [vmem:[%s1 + $0x780] sm:$0xf]
  %v530 = vld [vmem:[%s1 + $0x784] sm:$0xf]
  %v531 = vld [vmem:[%s1 + $0x788] sm:$0xf]
  %v532 = vld [vmem:[%s1 + $0x78c] sm:$0xf]
  %v533 = vld [vmem:[%s1 + $0x790] sm:$0xf]
  %v534 = vld [vmem:[%s1 + $0x794] sm:$0xf]
  %v535 = vld [vmem:[%s1 + $0x798] sm:$0xf]
  %v536 = vld [vmem:[%s1 + $0x79c] sm:$0xf]
  %v537 = vld [vmem:[%s1 + $0x7a0] sm:$0xf]
  %v538 = vld [vmem:[%s1 + $0x7a4] sm:$0xf]
  %v539 = vld [vmem:[%s1 + $0x7a8] sm:$0xf]
  %v540 = vld [vmem:[%s1 + $0x7ac] sm:$0xf]
  %v541 = vld [vmem:[%s1 + $0x7b0] sm:$0xf]
  %v542 = vld [vmem:[%s1 + $0x7b4] sm:$0xf]
  %v543 = vld [vmem:[%s1 + $0x7b8] sm:$0xf]
  %v544 = vld [vmem:[%s1 + $0x7bc] sm:$0xf]
  %v545 = vld [vmem:[%s1 + $0x7c0] sm:$0xf]
  %v546 = vld [vmem:[%s1 + $0x7c4] sm:$0xf]
  %v547 = vld [vmem:[%s1 + $0x7c8] sm:$0xf]
  %v548 = vld [vmem:[%s1 + $0x7cc] sm:$0xf]
  %v549 = vld [vmem:[%s1 + $0x7d0] sm:$0xf]
  %v550 = vld [vmem:[%s1 + $0x7d4] sm:$0xf]
  %v551 = vld [vmem:[%s1 + $0x7d8] sm:$0xf]
  %v552 = vld [vmem:[%s1 + $0x7dc] sm:$0xf]
  %v553 = vld [vmem:[%s1 + $0x7e0] sm:$0xf]
  %v554 = vld [vmem:[%s1 + $0x7e4] sm:$0xf]
  %v555 = vld [vmem:[%s1 + $0x7e8] sm:$0xf]
  %v556 = vld [vmem:[%s1 + $0x7ec] sm:$0xf]
  %v557 = vld [vmem:[%s1 + $0x7f0] sm:$0xf]
  %v558 = vld [vmem:[%s1 + $0x7f4] sm:$0xf]
  %v559 = vld [vmem:[%s1 + $0x7f8] sm:$0xf]
  %v560 = vld [vmem:[%s1 + $0x7fc] sm:$0xf]
  %v561 = vld [vmem:[%s1 + $0x800] sm:$0xf]
  %v562 = vld [vmem:[%s1 + $0x804] sm:$0xf]
  %v563 = vld [vmem:[%s1 + $0x808] sm:$0xf]
  %v564 = vld [vmem:[%s1 + $0x80c] sm:$0xf]
  %v565 = vld [vmem:[%s1 + $0x810] sm:$0xf]
  %v566 = vld [vmem:[%s1 + $0x814] sm:$0xf]
  %v567 = vld [vmem:[%s1 + $0x818] sm:$0xf]
  %v568 = vld [vmem:[%s1 + $0x81c] sm:$0xf]
  %v569 = vld [vmem:[%s1 + $0x820] sm:$0xf]
  %v570 = vld [vmem:[%s1 + $0x824] sm:$0xf]
  %v571 = vld [vmem:[%s1 + $0x828] sm:$0xf]
  %v572 = vld [vmem:[%s1 + $0x82c] sm:$0xf]
  %v573 = vld [vmem:[%s1 + $0x830] sm:$0xf]
  %v574 = vld [vmem:[%s1 + $0x834] sm:$0xf]
  %v575 = vld [vmem:[%s1 + $0x838] sm:$0xf]
  %v576 = vld [vmem:[%s1 + $0x83c] sm:$0xf]
  %v577 = vld [vmem:[%s1 + $0x840] sm:$0xf]
  %v578 = vld [vmem:[%s1 + $0x844] sm:$0xf]
  %v579 = vld [vmem:[%s1 + $0x848] sm:$0xf]
  %v580 = vld [vmem:[%s1 + $0x84c] sm:$0xf]
  %v581 = vld [vmem:[%s1 + $0x850] sm:$0xf]
  %v582 = vld [vmem:[%s1 + $0x854] sm:$0xf]
  %v583 = vld [vmem:[%s1 + $0x858] sm:$0xf]
  %v584 = vld [vmem:[%s1 + $0x85c] sm:$0xf]
  %v585 = vld [vmem:[%s1 + $0x860] sm:$0xf]
  %v586 = vld [vmem:[%s1 + $0x864] sm:$0xf]
  %v587 = vld [vmem:[%s1 + $0x868] sm:$0xf]
  %v588 = vld [vmem:[%s1 + $0x86c] sm:$0xf]
  %v589 = vld [vmem:[%s1 + $0x870] sm:$0xf]
  %v590 = vld [vmem:[%s1 + $0x874] sm:$0xf]
  %v591 = vld [vmem:[%s1 + $0x878] sm:$0xf]
  %v592 = vld [vmem:[%s1 + $0x87c] sm:$0xf]
  %v593 = vld [vmem:[%s1 + $0x880] sm:$0xf]
  %v594 = vld [vmem:[%s1 + $0x884] sm:$0xf]
  %v595 = vld [vmem:[%s1 + $0x888] sm:$0xf]
  %v596 = vld [vmem:[%s1 + $0x88c] sm:$0xf]
  %v597 = vld [vmem:[%s1 + $0x890] sm:$0xf]
  %v598 = vld [vmem:[%s1 + $0x894] sm:$0xf]
  %v599 = vld [vmem:[%s1 + $0x898] sm:$0xf]
  %v600 = vld [vmem:[%s1 + $0x89c] sm:$0xf]
  %v601 = vld [vmem:[%s1 + $0x8a0] sm:$0xf]
  %v602 = vld [vmem:[%s1 + $0x8a4] sm:$0xf]
  %v603 = vld [vmem:[%s1 + $0x8a8] sm:$0xf]
  %v604 = vld [vmem:[%s1 + $0x8ac] sm:$0xf]
  %v605 = vld [vmem:[%s1 + $0x8b0] sm:$0xf]
  %v606 = vld [vmem:[%s1 + $0x8b4] sm:$0xf]
  %v607 = vld [vmem:[%s1 + $0x8b8] sm:$0xf]
  %v608 = vld [vmem:[%s1 + $0x8bc] sm:$0xf]
  %v609 = vld [vmem:[%s1 + $0x8c0] sm:$0xf]
  %v610 = vld [vmem:[%s1 + $0x8c4] sm:$0xf]
  %v611 = vld [vmem:[%s1 + $0x8c8] sm:$0xf]
  %v612 = vld [vmem:[%s1 + $0x8cc] sm:$0xf]
  %v613 = vld [vmem:[%s1 + $0x8d0] sm:$0xf]
  %v614 = vld [vmem:[%s1 + $0x8d4] sm:$0xf]
  %v615 = vld [vmem:[%s1 + $0x8d8] sm:$0xf]
  %v616 = vld [vmem:[%s1 + $0x8dc] sm:$0xf]
  %v617 = vld [vmem:[%s1 + $0x8e0] sm:$0xf]
  %v618 = vld [vmem:[%s1 + $0x8e4] sm:$0xf]
  %v619 = vld [vmem:[%s1 + $0x8e8] sm:$0xf]
  %v620 = vld [vmem:[%s1 + $0x8ec] sm:$0xf]
  %v621 = vld [vmem:[%s1 + $0x8f0] sm:$0xf]
  %v622 = vld [vmem:[%s1 + $0x8f4] sm:$0xf]
  %v623 = vld [vmem:[%s1 + $0x8f8] sm:$0xf]
  %v624 = vld [vmem:[%s1 + $0x8fc] sm:$0xf]
  %v625 = vld [vmem:[%s1 + $0x900] sm:$0xf]
  %v626 = vld [vmem:[%s1 + $0x904] sm:$0xf]
  %v627 = vld [vmem:[%s1 + $0x908] sm:$0xf]
  %v628 = vld [vmem:[%s1 + $0x90c] sm:$0xf]
  %v629 = vld [vmem:[%s1 + $0x910] sm:$0xf]
  %v630 = vld [vmem:[%s1 + $0x914] sm:$0xf]
  %v631 = vld [vmem:[%s1 + $0x918] sm:$0xf]
  %v632 = vld [vmem:[%s1 + $0x91c] sm:$0xf]
  %v633 = vld [vmem:[%s1 + $0x920] sm:$0xf]
  %v634 = vld [vmem:[%s1 + $0x924] sm:$0xf]
  %v635 = vld [vmem:[%s1 + $0x928] sm:$0xf]
  %v636 = vld [vmem:[%s1 + $0x92c] sm:$0xf]
  %v637 = vld [vmem:[%s1 + $0x930] sm:$0xf]
  %v638 = vld [vmem:[%s1 + $0x934] sm:$0xf]
  %v639 = vld [vmem:[%s1 + $0x938] sm:$0xf]
  %v640 = vld [vmem:[%s1 + $0x93c] sm:$0xf]
  %v641 = vld [vmem:[%s1 + $0x940] sm:$0xf]
  %v642 = vld [vmem:[%s1 + $0x944] sm:$0xf]
  %v643 = vld [vmem:[%s1 + $0x948] sm:$0xf]
  %v644 = vld [vmem:[%s1 + $0x94c] sm:$0xf]
  %v645 = vld [vmem:[%s1 + $0x950] sm:$0xf]
  %v646 = vld [vmem:[%s1 + $0x954] sm:$0xf]
  %v647 = vld [vmem:[%s1 + $0x958] sm:$0xf]
  %v648 = vld [vmem:[%s1 + $0x95c] sm:$0xf]
  %v649 = vld [vmem:[%s1 + $0x960] sm:$0xf]
  %v650 = vld [vmem:[%s1 + $0x964] sm:$0xf]
  %v651 = vld [vmem:[%s1 + $0x968] sm:$0xf]
  %v652 = vld [vmem:[%s1 + $0x96c] sm:$0xf]
  %v653 = vld [vmem:[%s1 + $0x970] sm:$0xf]
  %v654 = vld [vmem:[%s1 + $0x974] sm:$0xf]
  %v655 = vld [vmem:[%s1 + $0x978] sm:$0xf]
  %v656 = vld [vmem:[%s1 + $0x97c] sm:$0xf]
  %v657 = vld [vmem:[%s1 + $0x980] sm:$0xf]
  %v658 = vld [vmem:[%s1 + $0x984] sm:$0xf]
  %v659 = vld [vmem:[%s1 + $0x988] sm:$0xf]
  %v660 = vld [vmem:[%s1 + $0x98c] sm:$0xf]
  %v661 = vld [vmem:[%s1 + $0x990] sm:$0xf]
  %v662 = vld [vmem:[%s1 + $0x994] sm:$0xf]
  %v663 = vld [vmem:[%s1 + $0x998] sm:$0xf]
  %v664 = vld [vmem:[%s1 + $0x99c] sm:$0xf]
  %v665 = vld [vmem:[%s1 + $0x9a0] sm:$0xf]
  %v666 = vld [vmem:[%s1 + $0x9a4] sm:$0xf]
  %v667 = vld [vmem:[%s1 + $0x9a8] sm:$0xf]
  %v668 = vld [vmem:[%s1 + $0x9ac] sm:$0xf]
  %v669 = vld [vmem:[%s1 + $0x9b0] sm:$0xf]
  %v670 = vld [vmem:[%s1 + $0x9b4] sm:$0xf]
  %v671 = vld [vmem:[%s1 + $0x9b8] sm:$0xf]
  %v672 = vld [vmem:[%s1 + $0x9bc] sm:$0xf]
  %v673 = vld [vmem:[%s1 + $0x9c0] sm:$0xf]
  %v674 = vld [vmem:[%s1 + $0x9c4] sm:$0xf]
  %v675 = vld [vmem:[%s1 + $0x9c8] sm:$0xf]
  %v676 = vld [vmem:[%s1 + $0x9cc] sm:$0xf]
  %v677 = vld [vmem:[%s1 + $0x9d0] sm:$0xf]
  %v678 = vld [vmem:[%s1 + $0x9d4] sm:$0xf]
  %v679 = vld [vmem:[%s1 + $0x9d8] sm:$0xf]
  %v680 = vld [vmem:[%s1 + $0x9dc] sm:$0xf]
  %v681 = vld [vmem:[%s1 + $0x9e0] sm:$0xf]
  %v682 = vld [vmem:[%s1 + $0x9e4] sm:$0xf]
  %v683 = vld [vmem:[%s1 + $0x9e8] sm:$0xf]
  %v684 = vld [vmem:[%s1 + $0x9ec] sm:$0xf]
  %v685 = vld [vmem:[%s1 + $0x9f0] sm:$0xf]
  %v686 = vld [vmem:[%s1 + $0x9f4] sm:$0xf]
  %v687 = vld [vmem:[%s1 + $0x9f8] sm:$0xf]
  %v688 = vld [vmem:[%s1 + $0x9fc] sm:$0xf]
  %v689 = vld [vmem:[%s1 + $0xa00] sm:$0xf]
  %v690 = vld [vmem:[%s1 + $0xa04] sm:$0xf]
  %v691 = vld [vmem:[%s1 + $0xa08] sm:$0xf]
  %v692 = vld [vmem:[%s1 + $0xa0c] sm:$0xf]
  %v693 = vld [vmem:[%s1 + $0xa10] sm:$0xf]
  %v694 = vld [vmem:[%s1 + $0xa14] sm:$0xf]
  %v695 = vld [vmem:[%s1 + $0xa18] sm:$0xf]
  %v696 = vld [vmem:[%s1 + $0xa1c] sm:$0xf]
  %v697 = vld [vmem:[%s1 + $0xa20] sm:$0xf]
  %v698 = vld [vmem:[%s1 + $0xa24] sm:$0xf]
  %v699 = vld [vmem:[%s1 + $0xa28] sm:$0xf]
  %v700 = vld [vmem:[%s1 + $0xa2c] sm:$0xf]
  %v701 = vld [vmem:[%s1 + $0xa30] sm:$0xf]
  %v702 = vld [vmem:[%s1 + $0xa34] sm:$0xf]
  %v703 = vld [vmem:[%s1 + $0xa38] sm:$0xf]
  %v704 = vld [vmem:[%s1 + $0xa3c] sm:$0xf]
  %v705 = vld [vmem:[%s1 + $0xa40] sm:$0xf]
  %v706 = vld [vmem:[%s1 + $0xa44] sm:$0xf]
  %v707 = vld [vmem:[%s1 + $0xa48] sm:$0xf]
  %v708 = vld [vmem:[%s1 + $0xa4c] sm:$0xf]
  %v709 = vld [vmem:[%s1 + $0xa50] sm:$0xf]
  %v710 = vld [vmem:[%s1 + $0xa54] sm:$0xf]
  %v711 = vld [vmem:[%s1 + $0xa58] sm:$0xf]
  %v712 = vld [vmem:[%s1 + $0xa5c] sm:$0xf]
  %v713 = vld [vmem:[%s1 + $0xa60] sm:$0xf]
  %v714 = vld [vmem:[%s1 + $0xa64] sm:$0xf]
  %v715 = vld [vmem:[%s1 + $0xa68] sm:$0xf]
  %v716 = vld [vmem:[%s1 + $0xa6c] sm:$0xf]
  %v717 = vld [vmem:[%s1 + $0xa70] sm:$0xf]
  %v718 = vld [vmem:[%s1 + $0xa74] sm:$0xf]
  %v719 = vld [vmem:[%s1 + $0xa78] sm:$0xf]
  %v720 = vld [vmem:[%s1 + $0xa7c] sm:$0xf]
  %v721 = vld [vmem:[%s1 + $0xa80] sm:$0xf]
  %v722 = vld [vmem:[%s1 + $0xa84] sm:$0xf]
  %v723 = vld [vmem:[%s1 + $0xa88] sm:$0xf]
  %v724 = vld [vmem:[%s1 + $0xa8c] sm:$0xf]
  %v725 = vld [vmem:[%s1 + $0xa90] sm:$0xf]
  %v726 = vld [vmem:[%s1 + $0xa94] sm:$0xf]
  %v727 = vld [vmem:[%s1 + $0xa98] sm:$0xf]
  %v728 = vld [vmem:[%s1 + $0xa9c] sm:$0xf]
  %v729 = vld [vmem:[%s1 + $0xaa0] sm:$0xf]
  %v730 = vld [vmem:[%s1 + $0xaa4] sm:$0xf]
  %v731 = vld [vmem:[%s1 + $0xaa8] sm:$0xf]
  %v732 = vld [vmem:[%s1 + $0xaac] sm:$0xf]
  %v733 = vld [vmem:[%s1 + $0xab0] sm:$0xf]
  %v734 = vld [vmem:[%s1 + $0xab4] sm:$0xf]
  %v735 = vld [vmem:[%s1 + $0xab8] sm:$0xf]
  %v736 = vld [vmem:[%s1 + $0xabc] sm:$0xf]
  %v737 = vld [vmem:[%s1 + $0xac0] sm:$0xf]
  %v738 = vld [vmem:[%s1 + $0xac4] sm:$0xf]
  %v739 = vld [vmem:[%s1 + $0xac8] sm:$0xf]
  %v740 = vld [vmem:[%s1 + $0xacc] sm:$0xf]
  %v741 = vld [vmem:[%s1 + $0xad0] sm:$0xf]
  %v742 = vld [vmem:[%s1 + $0xad4] sm:$0xf]
  %v743 = vld [vmem:[%s1 + $0xad8] sm:$0xf]
  %v744 = vld [vmem:[%s1 + $0xadc] sm:$0xf]
  %v745 = vld [vmem:[%s1 + $0xae0] sm:$0xf]
  %v746 = vld [vmem:[%s1 + $0xae4] sm:$0xf]
  %v747 = vld [vmem:[%s1 + $0xae8] sm:$0xf]
  %v748 = vld [vmem:[%s1 + $0xaec] sm:$0xf]
  %v749 = vld [vmem:[%s1 + $0xaf0] sm:$0xf]
  %v750 = vld [vmem:[%s1 + $0xaf4] sm:$0xf]
  %v751 = vld [vmem:[%s1 + $0xaf8] sm:$0xf]
  %v752 = vld [vmem:[%s1 + $0xafc] sm:$0xf]
  %v753 = vld [vmem:[%s1 + $0xb00] sm:$0xf]
  %v754 = vld [vmem:[%s1 + $0xb04] sm:$0xf]
  %v755 = vld [vmem:[%s1 + $0xb08] sm:$0xf]
  %v756 = vld [vmem:[%s1 + $0xb0c] sm:$0xf]
  %v757 = vld [vmem:[%s1 + $0xb10] sm:$0xf]
  %v758 = vld [vmem:[%s1 + $0xb14] sm:$0xf]
  %v759 = vld [vmem:[%s1 + $0xb18] sm:$0xf]
  %v760 = vld [vmem:[%s1 + $0xb1c] sm:$0xf]
  %v761 = vld [vmem:[%s1 + $0xb20] sm:$0xf]
  %v762 = vld [vmem:[%s1 + $0xb24] sm:$0xf]
  %v763 = vld [vmem:[%s1 + $0xb28] sm:$0xf]
  %v764 = vld [vmem:[%s1 + $0xb2c] sm:$0xf]
  %v765 = vld [vmem:[%s1 + $0xb30] sm:$0xf]
  %v766 = vld [vmem:[%s1 + $0xb34] sm:$0xf]
  %v767 = vld [vmem:[%s1 + $0xb38] sm:$0xf]
  %v768 = vld [vmem:[%s1 + $0xb3c] sm:$0xf]
  %v769 = vld [vmem:[%s1 + $0xb40] sm:$0xf]
  %v770 = vld [vmem:[%s1 + $0xb44] sm:$0xf]
  %v771 = vld [vmem:[%s1 + $0xb48] sm:$0xf]
  %v772 = vld [vmem:[%s1 + $0xb4c] sm:$0xf]
  %v773 = vld [vmem:[%s1 + $0xb50] sm:$0xf]
  %v774 = vld [vmem:[%s1 + $0xb54] sm:$0xf]
  %v775 = vld [vmem:[%s1 + $0xb58] sm:$0xf]
  %v776 = vld [vmem:[%s1 + $0xb5c] sm:$0xf]
  %v777 = vld [vmem:[%s1 + $0xb60] sm:$0xf]
  %v778 = vld [vmem:[%s1 + $0xb64] sm:$0xf]
  %v779 = vld [vmem:[%s1 + $0xb68] sm:$0xf]
  %v780 = vld [vmem:[%s1 + $0xb6c] sm:$0xf]
  %v781 = vld [vmem:[%s1 + $0xb70] sm:$0xf]
  %v782 = vld [vmem:[%s1 + $0xb74] sm:$0xf]
  %v783 = vld [vmem:[%s1 + $0xb78] sm:$0xf]
  %v784 = vld [vmem:[%s1 + $0xb7c] sm:$0xf]
  %v785 = vld [vmem:[%s1 + $0xb80] sm:$0xf]
  %v786 = vld [vmem:[%s1 + $0xb84] sm:$0xf]
  %v787 = vld [vmem:[%s1 + $0xb88] sm:$0xf]
  %v788 = vld [vmem:[%s1 + $0xb8c] sm:$0xf]
  %v789 = vld [vmem:[%s1 + $0xb90] sm:$0xf]
  %v790 = vld [vmem:[%s1 + $0xb94] sm:$0xf]
  %v791 = vld [vmem:[%s1 + $0xb98] sm:$0xf]
  %v792 = vld [vmem:[%s1 + $0xb9c] sm:$0xf]
  %v793 = vld [vmem:[%s1 + $0xba0] sm:$0xf]
  %v794 = vld [vmem:[%s1 + $0xba4] sm:$0xf]
  %v795 = vld [vmem:[%s1 + $0xba8] sm:$0xf]
  %v796 = vld [vmem:[%s1 + $0xbac] sm:$0xf]
  %v797 = vld [vmem:[%s1 + $0xbb0] sm:$0xf]
  %v798 = vld [vmem:[%s1 + $0xbb4] sm:$0xf]
  %v799 = vld [vmem:[%s1 + $0xbb8] sm:$0xf]
  %v800 = vld [vmem:[%s1 + $0xbbc] sm:$0xf]
  %v801 = vld [vmem:[%s1 + $0xbc0] sm:$0xf]
  %v802 = vld [vmem:[%s1 + $0xbc4] sm:$0xf]
  %v803 = vld [vmem:[%s1 + $0xbc8] sm:$0xf]
  %v804 = vld [vmem:[%s1 + $0xbcc] sm:$0xf]
  %v805 = vld [vmem:[%s1 + $0xbd0] sm:$0xf]
  %v806 = vld [vmem:[%s1 + $0xbd4] sm:$0xf]
  %v807 = vld [vmem:[%s1 + $0xbd8] sm:$0xf]
  %v808 = vld [vmem:[%s1 + $0xbdc] sm:$0xf]
  %v809 = vld [vmem:[%s1 + $0xbe0] sm:$0xf]
  %v810 = vld [vmem:[%s1 + $0xbe4] sm:$0xf]
  %v811 = vld [vmem:[%s1 + $0xbe8] sm:$0xf]
  %v812 = vld [vmem:[%s1 + $0xbec] sm:$0xf]
  %v813 = vld [vmem:[%s1 + $0xbf0] sm:$0xf]
  %v814 = vld [vmem:[%s1 + $0xbf4] sm:$0xf]
  %v815 = vld [vmem:[%s1 + $0xbf8] sm:$0xf]
  %v816 = vld [vmem:[%s1 + $0xbfc] sm:$0xf]
  %v817 = vld [vmem:[%s1 + $0xc00] sm:$0xf]
  %v818 = vld [vmem:[%s1 + $0xc04] sm:$0xf]
  %v819 = vld [vmem:[%s1 + $0xc08] sm:$0xf]
  %v820 = vld [vmem:[%s1 + $0xc0c] sm:$0xf]
  %v821 = vld [vmem:[%s1 + $0xc10] sm:$0xf]
  %v822 = vld [vmem:[%s1 + $0xc14] sm:$0xf]
  %v823 = vld [vmem:[%s1 + $0xc18] sm:$0xf]
  %v824 = vld [vmem:[%s1 + $0xc1c] sm:$0xf]
  %v825 = vld [vmem:[%s1 + $0xc20] sm:$0xf]
  %v826 = vld [vmem:[%s1 + $0xc24] sm:$0xf]
  %v827 = vld [vmem:[%s1 + $0xc28] sm:$0xf]
  %v828 = vld [vmem:[%s1 + $0xc2c] sm:$0xf]
  %v829 = vld [vmem:[%s1 + $0xc30] sm:$0xf]
  %v830 = vld [vmem:[%s1 + $0xc34] sm:$0xf]
  %v831 = vld [vmem:[%s1 + $0xc38] sm:$0xf]
  %v832 = vld [vmem:[%s1 + $0xc3c] sm:$0xf]
  %v833 = vld [vmem:[%s1 + $0xc40] sm:$0xf]
  %v834 = vld [vmem:[%s1 + $0xc44] sm:$0xf]
  %v835 = vld [vmem:[%s1 + $0xc48] sm:$0xf]
  %v836 = vld [vmem:[%s1 + $0xc4c] sm:$0xf]
  %v837 = vld [vmem:[%s1 + $0xc50] sm:$0xf]
  %v838 = vld [vmem:[%s1 + $0xc54] sm:$0xf]
  %v839 = vld [vmem:[%s1 + $0xc58] sm:$0xf]
  %v840 = vld [vmem:[%s1 + $0xc5c] sm:$0xf]
  %v841 = vld [vmem:[%s1 + $0xc60] sm:$0xf]
  %v842 = vld [vmem:[%s1 + $0xc64] sm:$0xf]
  %v843 = vld [vmem:[%s1 + $0xc68] sm:$0xf]
  %v844 = vld [vmem:[%s1 + $0xc6c] sm:$0xf]
  %v845 = vld [vmem:[%s1 + $0xc70] sm:$0xf]
  %v846 = vld [vmem:[%s1 + $0xc74] sm:$0xf]
  %v847 = vld [vmem:[%s1 + $0xc78] sm:$0xf]
  %v848 = vld [vmem:[%s1 + $0xc7c] sm:$0xf]
  %v849 = vld [vmem:[%s1 + $0xc80] sm:$0xf]
  %v850 = vld [vmem:[%s1 + $0xc84] sm:$0xf]
  %v851 = vld [vmem:[%s1 + $0xc88] sm:$0xf]
  %v852 = vld [vmem:[%s1 + $0xc8c] sm:$0xf]
  %v853 = vld [vmem:[%s1 + $0xc90] sm:$0xf]
  %v854 = vld [vmem:[%s1 + $0xc94] sm:$0xf]
  %v855 = vld [vmem:[%s1 + $0xc98] sm:$0xf]
  %v856 = vld [vmem:[%s1 + $0xc9c] sm:$0xf]
  %v857 = vld [vmem:[%s1 + $0xca0] sm:$0xf]
  %v858 = vld [vmem:[%s1 + $0xca4] sm:$0xf]
  %v859 = vld [vmem:[%s1 + $0xca8] sm:$0xf]
  %v860 = vld [vmem:[%s1 + $0xcac] sm:$0xf]
  %v861 = vld [vmem:[%s1 + $0xcb0] sm:$0xf]
  %v862 = vld [vmem:[%s1 + $0xcb4] sm:$0xf]
  %v863 = vld [vmem:[%s1 + $0xcb8] sm:$0xf]
  %v864 = vld [vmem:[%s1 + $0xcbc] sm:$0xf]
  %v865 = vld [vmem:[%s1 + $0xcc0] sm:$0xf]
  %v866 = vld [vmem:[%s1 + $0xcc4] sm:$0xf]
  %v867 = vld [vmem:[%s1 + $0xcc8] sm:$0xf]
  %v868 = vld [vmem:[%s1 + $0xccc] sm:$0xf]
  %v869 = vld [vmem:[%s1 + $0xcd0] sm:$0xf]
  %v870 = vld [vmem:[%s1 + $0xcd4] sm:$0xf]
  %v871 = vld [vmem:[%s1 + $0xcd8] sm:$0xf]
  %v872 = vld [vmem:[%s1 + $0xcdc] sm:$0xf]
  %v873 = vld [vmem:[%s1 + $0xce0] sm:$0xf]
  %v874 = vld [vmem:[%s1 + $0xce4] sm:$0xf]
  %v875 = vld [vmem:[%s1 + $0xce8] sm:$0xf]
  %v876 = vld [vmem:[%s1 + $0xcec] sm:$0xf]
  %v877 = vld [vmem:[%s1 + $0xcf0] sm:$0xf]
  %v878 = vld [vmem:[%s1 + $0xcf4] sm:$0xf]
  %v879 = vld [vmem:[%s1 + $0xcf8] sm:$0xf]
  %v880 = vld [vmem:[%s1 + $0xcfc] sm:$0xf]
  %v881 = vld [vmem:[%s1 + $0xd00] sm:$0xf]
  %v882 = vld [vmem:[%s1 + $0xd04] sm:$0xf]
  %v883 = vld [vmem:[%s1 + $0xd08] sm:$0xf]
  %v884 = vld [vmem:[%s1 + $0xd0c] sm:$0xf]
  %v885 = vld [vmem:[%s1 + $0xd10] sm:$0xf]
  %v886 = vld [vmem:[%s1 + $0xd14] sm:$0xf]
  %v887 = vld [vmem:[%s1 + $0xd18] sm:$0xf]
  %v888 = vld [vmem:[%s1 + $0xd1c] sm:$0xf]
  %v889 = vld [vmem:[%s1 + $0xd20] sm:$0xf]
  %v890 = vld [vmem:[%s1 + $0xd24] sm:$0xf]
  %v891 = vld [vmem:[%s1 + $0xd28] sm:$0xf]
  %v892 = vld [vmem:[%s1 + $0xd2c] sm:$0xf]
  %v893 = vld [vmem:[%s1 + $0xd30] sm:$0xf]
  %v894 = vld [vmem:[%s1 + $0xd34] sm:$0xf]
  %v895 = vld [vmem:[%s1 + $0xd38] sm:$0xf]
  %v896 = vld [vmem:[%s1 + $0xd3c] sm:$0xf]
  %v897 = vld [vmem:[%s1 + $0xd40] sm:$0xf]
  %v898 = vld [vmem:[%s1 + $0xd44] sm:$0xf]
  %v899 = vld [vmem:[%s1 + $0xd48] sm:$0xf]
  %v900 = vld [vmem:[%s1 + $0xd4c] sm:$0xf]
  %v901 = vld [vmem:[%s1 + $0xd50] sm:$0xf]
  %v902 = vld [vmem:[%s1 + $0xd54] sm:$0xf]
  %v903 = vld [vmem:[%s1 + $0xd58] sm:$0xf]
  %v904 = vld [vmem:[%s1 + $0xd5c] sm:$0xf]
  %v905 = vld [vmem:[%s1 + $0xd60] sm:$0xf]
  %v906 = vld [vmem:[%s1 + $0xd64] sm:$0xf]
  %v907 = vld [vmem:[%s1 + $0xd68] sm:$0xf]
  %v908 = vld [vmem:[%s1 + $0xd6c] sm:$0xf]
  %v909 = vld [vmem:[%s1 + $0xd70] sm:$0xf]
  %v910 = vld [vmem:[%s1 + $0xd74] sm:$0xf]
  %v911 = vld [vmem:[%s1 + $0xd78] sm:$0xf]
  %v912 = vld [vmem:[%s1 + $0xd7c] sm:$0xf]
  %v913 = vld [vmem:[%s1 + $0xd80] sm:$0xf]
  %v914 = vld [vmem:[%s1 + $0xd84] sm:$0xf]
  %v915 = vld [vmem:[%s1 + $0xd88] sm:$0xf]
  %v916 = vld [vmem:[%s1 + $0xd8c] sm:$0xf]
  %v917 = vld [vmem:[%s1 + $0xd90] sm:$0xf]
  %v918 = vld [vmem:[%s1 + $0xd94] sm:$0xf]
  %v919 = vld [vmem:[%s1 + $0xd98] sm:$0xf]
  %v920 = vld [vmem:[%s1 + $0xd9c] sm:$0xf]
  %v921 = vld [vmem:[%s1 + $0xda0] sm:$0xf]
  %v922 = vld [vmem:[%s1 + $0xda4] sm:$0xf]
  %v923 = vld [vmem:[%s1 + $0xda8] sm:$0xf]
  %v924 = vld [vmem:[%s1 + $0xdac] sm:$0xf]
  %v925 = vld [vmem:[%s1 + $0xdb0] sm:$0xf]
  %v926 = vld [vmem:[%s1 + $0xdb4] sm:$0xf]
  %v927 = vld [vmem:[%s1 + $0xdb8] sm:$0xf]
  %v928 = vld [vmem:[%s1 + $0xdbc] sm:$0xf]
  %v929 = vld [vmem:[%s1 + $0xdc0] sm:$0xf]
  %v930 = vld [vmem:[%s1 + $0xdc4] sm:$0xf]
  %v931 = vld [vmem:[%s1 + $0xdc8] sm:$0xf]
  %v932 = vld [vmem:[%s1 + $0xdcc] sm:$0xf]
  %v933 = vld [vmem:[%s1 + $0xdd0] sm:$0xf]
  %v934 = vld [vmem:[%s1 + $0xdd4] sm:$0xf]
  %v935 = vld [vmem:[%s1 + $0xdd8] sm:$0xf]
  %v936 = vld [vmem:[%s1 + $0xddc] sm:$0xf]
  %v937 = vld [vmem:[%s1 + $0xde0] sm:$0xf]
  %v938 = vld [vmem:[%s1 + $0xde4] sm:$0xf]
  %v939 = vld [vmem:[%s1 + $0xde8] sm:$0xf]
  %v940 = vld [vmem:[%s1 + $0xdec] sm:$0xf]
  %v941 = vld [vmem:[%s1 + $0xdf0] sm:$0xf]
  %v942 = vld [vmem:[%s1 + $0xdf4] sm:$0xf]
  %v943 = vld [vmem:[%s1 + $0xdf8] sm:$0xf]
  %v944 = vld [vmem:[%s1 + $0xdfc] sm:$0xf]
  %v945 = vld [vmem:[%s1 + $0xe00] sm:$0xf]
  %v946 = vld [vmem:[%s1 + $0xe04] sm:$0xf]
  %v947 = vld [vmem:[%s1 + $0xe08] sm:$0xf]
  %v948 = vld [vmem:[%s1 + $0xe0c] sm:$0xf]
  %v949 = vld [vmem:[%s1 + $0xe10] sm:$0xf]
  %v950 = vld [vmem:[%s1 + $0xe14] sm:$0xf]
  %v951 = vld [vmem:[%s1 + $0xe18] sm:$0xf]
  %v952 = vld [vmem:[%s1 + $0xe1c] sm:$0xf]
  %v953 = vld [vmem:[%s1 + $0xe20] sm:$0xf]
  %v954 = vld [vmem:[%s1 + $0xe24] sm:$0xf]
  %v955 = vld [vmem:[%s1 + $0xe28] sm:$0xf]
  %v956 = vld [vmem:[%s1 + $0xe2c] sm:$0xf]
  %v957 = vld [vmem:[%s1 + $0xe30] sm:$0xf]
  %v958 = vld [vmem:[%s1 + $0xe34] sm:$0xf]
  %v959 = vld [vmem:[%s1 + $0xe38] sm:$0xf]
  %v960 = vld [vmem:[%s1 + $0xe3c] sm:$0xf]
  %v961 = vld [vmem:[%s1 + $0xe40] sm:$0xf]
  %v962 = vld [vmem:[%s1 + $0xe44] sm:$0xf]
  %v963 = vld [vmem:[%s1 + $0xe48] sm:$0xf]
  %v964 = vld [vmem:[%s1 + $0xe4c] sm:$0xf]
  %v965 = vld [vmem:[%s1 + $0xe50] sm:$0xf]
  %v966 = vld [vmem:[%s1 + $0xe54] sm:$0xf]
  %v967 = vld [vmem:[%s1 + $0xe58] sm:$0xf]
  %v968 = vld [vmem:[%s1 + $0xe5c] sm:$0xf]
  %v969 = vld [vmem:[%s1 + $0xe60] sm:$0xf]
  %v970 = vld [vmem:[%s1 + $0xe64] sm:$0xf]
  %v971 = vld [vmem:[%s1 + $0xe68] sm:$0xf]
  %v972 = vld [vmem:[%s1 + $0xe6c] sm:$0xf]
  %v973 = vld [vmem:[%s1 + $0xe70] sm:$0xf]
  %v974 = vld [vmem:[%s1 + $0xe74] sm:$0xf]
  %v975 = vld [vmem:[%s1 + $0xe78] sm:$0xf]
  %v976 = vld [vmem:[%s1 + $0xe7c] sm:$0xf]
  %v977 = vld [vmem:[%s1 + $0xe80] sm:$0xf]
  %v978 = vld [vmem:[%s1 + $0xe84] sm:$0xf]
  %v979 = vld [vmem:[%s1 + $0xe88] sm:$0xf]
  %v980 = vld [vmem:[%s1 + $0xe8c] sm:$0xf]
  %v981 = vld [vmem:[%s1 + $0xe90] sm:$0xf]
  %v982 = vld [vmem:[%s1 + $0xe94] sm:$0xf]
  %v983 = vld [vmem:[%s1 + $0xe98] sm:$0xf]
  %v984 = vld [vmem:[%s1 + $0xe9c] sm:$0xf]
  %v985 = vld [vmem:[%s1 + $0xea0] sm:$0xf]
  %v986 = vld [vmem:[%s1 + $0xea4] sm:$0xf]
  %v987 = vld [vmem:[%s1 + $0xea8] sm:$0xf]
  %v988 = vld [vmem:[%s1 + $0xeac] sm:$0xf]
  %v989 = vld [vmem:[%s1 + $0xeb0] sm:$0xf]
  %v990 = vld [vmem:[%s1 + $0xeb4] sm:$0xf]
  %v991 = vld [vmem:[%s1 + $0xeb8] sm:$0xf]
  %v992 = vld [vmem:[%s1 + $0xebc] sm:$0xf]
  %v993 = vld [vmem:[%s1 + $0xec0] sm:$0xf]
  %v994 = vld [vmem:[%s1 + $0xec4] sm:$0xf]
  %v995 = vld [vmem:[%s1 + $0xec8] sm:$0xf]
  %v996 = vld [vmem:[%s1 + $0xecc] sm:$0xf]
  %v997 = vld [vmem:[%s1 + $0xed0] sm:$0xf]
  %v998 = vld [vmem:[%s1 + $0xed4] sm:$0xf]
  %v999 = vld [vmem:[%s1 + $0xed8] sm:$0xf]
  %v1000 = vld [vmem:[%s1 + $0xedc] sm:$0xf]
  %v1001 = vld [vmem:[%s1 + $0xee0] sm:$0xf]
  %v1002 = vld [vmem:[%s1 + $0xee4] sm:$0xf]
  %v1003 = vld [vmem:[%s1 + $0xee8] sm:$0xf]
  %v1004 = vld [vmem:[%s1 + $0xeec] sm:$0xf]
  %v1005 = vld [vmem:[%s1 + $0xef0] sm:$0xf]
  %v1006 = vld [vmem:[%s1 + $0xef4] sm:$0xf]
  %v1007 = vld [vmem:[%s1 + $0xef8] sm:$0xf]
  %v1008 = vld [vmem:[%s1 + $0xefc] sm:$0xf]
  %v1009 = vld [vmem:[%s1 + $0xf00] sm:$0xf]
  %v1010 = vld [vmem:[%s1 + $0xf04] sm:$0xf]
  %v1011 = vld [vmem:[%s1 + $0xf08] sm:$0xf]
  %v1012 = vld [vmem:[%s1 + $0xf0c] sm:$0xf]
  %v1013 = vld [vmem:[%s1 + $0xf10] sm:$0xf]
  %v1014 = vld [vmem:[%s1 + $0xf14] sm:$0xf]
  %v1015 = vld [vmem:[%s1 + $0xf18] sm:$0xf]
  %v1016 = vld [vmem:[%s1 + $0xf1c] sm:$0xf]
  %v1017 = vld [vmem:[%s1 + $0xf20] sm:$0xf]
  %v1018 = vld [vmem:[%s1 + $0xf24] sm:$0xf]
  %v1019 = vld [vmem:[%s1 + $0xf28] sm:$0xf]
  %v1020 = vld [vmem:[%s1 + $0xf2c] sm:$0xf]
  %v1021 = vld [vmem:[%s1 + $0xf30] sm:$0xf]
  %v1022 = vld [vmem:[%s1 + $0xf34] sm:$0xf]
  %v1023 = vld [vmem:[%s1 + $0xf38] sm:$0xf]
  %v1024 = vld [vmem:[%s1 + $0xf3c] sm:$0xf]
  %v1025 = vld [vmem:[%s1 + $0xf40] sm:$0xf]
  %v1026 = vld [vmem:[%s1 + $0xf44] sm:$0xf]
  %v1027 = vld [vmem:[%s1 + $0xf48] sm:$0xf]
  %v1028 = vld [vmem:[%s1 + $0xf4c] sm:$0xf]
  %v1029 = vld [vmem:[%s1 + $0xf50] sm:$0xf]
  %v1030 = vld [vmem:[%s1 + $0xf54] sm:$0xf]
  %v1031 = vld [vmem:[%s1 + $0xf58] sm:$0xf]
  %v1032 = vld [vmem:[%s1 + $0xf5c] sm:$0xf]
  %v1033 = vld [vmem:[%s1 + $0xf60] sm:$0xf]
  %v1034 = vld [vmem:[%s1 + $0xf64] sm:$0xf]
  %v1035 = vld [vmem:[%s1 + $0xf68] sm:$0xf]
  %v1036 = vld [vmem:[%s1 + $0xf6c] sm:$0xf]
  %v1037 = vld [vmem:[%s1 + $0xf70] sm:$0xf]
  %v1038 = vld [vmem:[%s1 + $0xf74] sm:$0xf]
  %v1039 = vld [vmem:[%s1 + $0xf78] sm:$0xf]
  %v1040 = vld [vmem:[%s1 + $0xf7c] sm:$0xf]
  %v1041 = vld [vmem:[%s1 + $0xf80] sm:$0xf]
  %v1042 = vld [vmem:[%s1 + $0xf84] sm:$0xf]
  %v1043 = vld [vmem:[%s1 + $0xf88] sm:$0xf]
  %v1044 = vld [vmem:[%s1 + $0xf8c] sm:$0xf]
  %v1045 = vld [vmem:[%s1 + $0xf90] sm:$0xf]
  %v1046 = vld [vmem:[%s1 + $0xf94] sm:$0xf]
  %v1047 = vld [vmem:[%s1 + $0xf98] sm:$0xf]
  %v1048 = vld [vmem:[%s1 + $0xf9c] sm:$0xf]
  %v1049 = vld [vmem:[%s1 + $0xfa0] sm:$0xf]
  %v1050 = vld [vmem:[%s1 + $0xfa4] sm:$0xf]
  %v1051 = vld [vmem:[%s1 + $0xfa8] sm:$0xf]
  %v1052 = vld [vmem:[%s1 + $0xfac] sm:$0xf]
  %v1053 = vld [vmem:[%s1 + $0xfb0] sm:$0xf]
  %v1054 = vld [vmem:[%s1 + $0xfb4] sm:$0xf]
  %v1055 = vld [vmem:[%s1 + $0xfb8] sm:$0xf]
  %v1056 = vld [vmem:[%s1 + $0xfbc] sm:$0xf]
  %v1057 = vld [vmem:[%s1 + $0xfc0] sm:$0xf]
  %v1058 = vld [vmem:[%s1 + $0xfc4] sm:$0xf]
  %v1059 = vld [vmem:[%s1 + $0xfc8] sm:$0xf]
  %v1060 = vld [vmem:[%s1 + $0xfcc] sm:$0xf]
  %v1061 = vld [vmem:[%s1 + $0xfd0] sm:$0xf]
  %v1062 = vld [vmem:[%s1 + $0xfd4] sm:$0xf]
  %v1063 = vld [vmem:[%s1 + $0xfd8] sm:$0xf]
  %v1064 = vld [vmem:[%s1 + $0xfdc] sm:$0xf]
  %v1065 = vld [vmem:[%s1 + $0xfe0] sm:$0xf]
  %v1066 = vld [vmem:[%s1 + $0xfe4] sm:$0xf]
  %v1067 = vld [vmem:[%s1 + $0xfe8] sm:$0xf]
  %v1068 = vld [vmem:[%s1 + $0xfec] sm:$0xf]
  %v1069 = vld [vmem:[%s1 + $0xff0] sm:$0xf]
  %v1070 = vld [vmem:[%s1 + $0xff4] sm:$0xf]
  %v1071 = vld [vmem:[%s1 + $0xff8] sm:$0xf]
  %v1072 = vld [vmem:[%s1 + $0xffc] sm:$0xf]
  %v1073 = vld [vmem:[#allocation2] sm:$0x1]
  %v1075 = vlaneseq
  %v1076 = vshrl.u32 %v1075, 7
  %v1077 = vsub.s32 0, %v1076
  %v1078 = vrot.slane %v1073, %v1077
  %v1112 = vunpack.c.l.b16 %v17
  %v1113 = vunpack.c.h.b16 %v17
  %v1114 = vunpack.c.l.b16 %v18
  %v1115 = vunpack.c.h.b16 %v18
  %v1116 = vunpack.c.l.b16 %v19
  %v1117 = vunpack.c.h.b16 %v19
  %v1118 = vunpack.c.l.b16 %v20
  %v1119 = vunpack.c.h.b16 %v20
  %v1120 = vunpack.c.l.b16 %v21
  %v1121 = vunpack.c.h.b16 %v21
  %v1122 = vunpack.c.l.b16 %v22
  %v1123 = vunpack.c.h.b16 %v22
  %v1124 = vunpack.c.l.b16 %v23
  %v1125 = vunpack.c.h.b16 %v23
  %v1126 = vunpack.c.l.b16 %v24
  %v1127 = vunpack.c.h.b16 %v24
  %v1128 = vunpack.c.l.b16 %v25
  %v1129 = vunpack.c.h.b16 %v25
  %v1130 = vunpack.c.l.b16 %v26
  %v1131 = vunpack.c.h.b16 %v26
  %v1132 = vunpack.c.l.b16 %v27
  %v1133 = vunpack.c.h.b16 %v27
  %v1134 = vunpack.c.l.b16 %v28
  %v1135 = vunpack.c.h.b16 %v28
  %v1136 = vunpack.c.l.b16 %v29
  %v1137 = vunpack.c.h.b16 %v29
  %v1138 = vunpack.c.l.b16 %v30
  %v1139 = vunpack.c.h.b16 %v30
  %v1140 = vunpack.c.l.b16 %v31
  %v1141 = vunpack.c.h.b16 %v31
  %v1142 = vunpack.c.l.b16 %v32
  %v1143 = vunpack.c.h.b16 %v32
  %v1144 = vunpack.c.l.b16 %v33
  %v1145 = vunpack.c.h.b16 %v33
  %v1146 = vunpack.c.l.b16 %v34
  %v1147 = vunpack.c.h.b16 %v34
  %v1148 = vunpack.c.l.b16 %v35
  %v1149 = vunpack.c.h.b16 %v35
  %v1150 = vunpack.c.l.b16 %v36
  %v1151 = vunpack.c.h.b16 %v36
  %v1152 = vunpack.c.l.b16 %v37
  %v1153 = vunpack.c.h.b16 %v37
  %v1154 = vunpack.c.l.b16 %v38
  %v1155 = vunpack.c.h.b16 %v38
  %v1156 = vunpack.c.l.b16 %v39
  %v1157 = vunpack.c.h.b16 %v39
  %v1158 = vunpack.c.l.b16 %v40
  %v1159 = vunpack.c.h.b16 %v40
  %v1160 = vunpack.c.l.b16 %v41
  %v1161 = vunpack.c.h.b16 %v41
  %v1162 = vunpack.c.l.b16 %v42
  %v1163 = vunpack.c.h.b16 %v42
  %v1164 = vunpack.c.l.b16 %v43
  %v1165 = vunpack.c.h.b16 %v43
  %v1166 = vunpack.c.l.b16 %v44
  %v1167 = vunpack.c.h.b16 %v44
  %v1168 = vunpack.c.l.b16 %v45
  %v1169 = vunpack.c.h.b16 %v45
  %v1170 = vunpack.c.l.b16 %v46
  %v1171 = vunpack.c.h.b16 %v46
  %v1172 = vunpack.c.l.b16 %v47
  %v1173 = vunpack.c.h.b16 %v47
  %v1174 = vunpack.c.l.b16 %v48
  %v1175 = vunpack.c.h.b16 %v48
  %v1176 = vpack.c.b16 %v1112, %v1112
  %v1177 = vpack.c.b16 %v1113, %v1113
  %v1178 = vpack.c.b16 %v1114, %v1114
  %v1179 = vpack.c.b16 %v1115, %v1115
  %v1180 = vpack.c.b16 %v1116, %v1116
  %v1181 = vpack.c.b16 %v1117, %v1117
  %v1182 = vpack.c.b16 %v1118, %v1118
  %v1183 = vpack.c.b16 %v1119, %v1119
  %v1184 = vpack.c.b16 %v1120, %v1120
  %v1185 = vpack.c.b16 %v1121, %v1121
  %v1186 = vpack.c.b16 %v1122, %v1122
  %v1187 = vpack.c.b16 %v1123, %v1123
  %v1188 = vpack.c.b16 %v1124, %v1124
  %v1189 = vpack.c.b16 %v1125, %v1125
  %v1190 = vpack.c.b16 %v1126, %v1126
  %v1191 = vpack.c.b16 %v1127, %v1127
  %v1192 = vpack.c.b16 %v1128, %v1128
  %v1193 = vpack.c.b16 %v1129, %v1129
  %v1194 = vpack.c.b16 %v1130, %v1130
  %v1195 = vpack.c.b16 %v1131, %v1131
  %v1196 = vpack.c.b16 %v1132, %v1132
  %v1197 = vpack.c.b16 %v1133, %v1133
  %v1198 = vpack.c.b16 %v1134, %v1134
  %v1199 = vpack.c.b16 %v1135, %v1135
  %v1200 = vpack.c.b16 %v1136, %v1136
  %v1201 = vpack.c.b16 %v1137, %v1137
  %v1202 = vpack.c.b16 %v1138, %v1138
  %v1203 = vpack.c.b16 %v1139, %v1139
  %v1204 = vpack.c.b16 %v1140, %v1140
  %v1205 = vpack.c.b16 %v1141, %v1141
  %v1206 = vpack.c.b16 %v1142, %v1142
  %v1207 = vpack.c.b16 %v1143, %v1143
  %v1208 = vpack.c.b16 %v1144, %v1144
  %v1209 = vpack.c.b16 %v1145, %v1145
  %v1210 = vpack.c.b16 %v1146, %v1146
  %v1211 = vpack.c.b16 %v1147, %v1147
  %v1212 = vpack.c.b16 %v1148, %v1148
  %v1213 = vpack.c.b16 %v1149, %v1149
  %v1214 = vpack.c.b16 %v1150, %v1150
  %v1215 = vpack.c.b16 %v1151, %v1151
  %v1216 = vpack.c.b16 %v1152, %v1152
  %v1217 = vpack.c.b16 %v1153, %v1153
  %v1218 = vpack.c.b16 %v1154, %v1154
  %v1219 = vpack.c.b16 %v1155, %v1155
  %v1220 = vpack.c.b16 %v1156, %v1156
  %v1221 = vpack.c.b16 %v1157, %v1157
  %v1222 = vpack.c.b16 %v1158, %v1158
  %v1223 = vpack.c.b16 %v1159, %v1159
  %v1224 = vpack.c.b16 %v1160, %v1160
  %v1225 = vpack.c.b16 %v1161, %v1161
  %v1226 = vpack.c.b16 %v1162, %v1162
  %v1227 = vpack.c.b16 %v1163, %v1163
  %v1228 = vpack.c.b16 %v1164, %v1164
  %v1229 = vpack.c.b16 %v1165, %v1165
  %v1230 = vpack.c.b16 %v1166, %v1166
  %v1231 = vpack.c.b16 %v1167, %v1167
  %v1232 = vpack.c.b16 %v1168, %v1168
  %v1233 = vpack.c.b16 %v1169, %v1169
  %v1234 = vpack.c.b16 %v1170, %v1170
  %v1235 = vpack.c.b16 %v1171, %v1171
  %v1236 = vpack.c.b16 %v1172, %v1172
  %v1237 = vpack.c.b16 %v1173, %v1173
  %v1238 = vpack.c.b16 %v1174, %v1174
  %v1239 = vpack.c.b16 %v1175, %v1175
  %v2328 = vunpack.c.l.b16 %v49
  %v2329 = vunpack.c.l.b16 %v50
  %v2330 = vunpack.c.l.b16 %v51
  %v2331 = vunpack.c.l.b16 %v52
  %v2332 = vunpack.c.l.b16 %v53
  %v2333 = vunpack.c.l.b16 %v54
  %v2334 = vunpack.c.l.b16 %v55
  %v2335 = vunpack.c.l.b16 %v56
  %v2336 = vunpack.c.l.b16 %v57
  %v2337 = vunpack.c.l.b16 %v58
  %v2338 = vunpack.c.l.b16 %v59
  %v2339 = vunpack.c.l.b16 %v60
  %v2340 = vunpack.c.l.b16 %v61
  %v2341 = vunpack.c.l.b16 %v62
  %v2342 = vunpack.c.l.b16 %v63
  %v2343 = vunpack.c.l.b16 %v64
  %v2344 = vunpack.c.l.b16 %v65
  %v2345 = vunpack.c.l.b16 %v66
  %v2346 = vunpack.c.l.b16 %v67
  %v2347 = vunpack.c.l.b16 %v68
  %v2348 = vunpack.c.l.b16 %v69
  %v2349 = vunpack.c.l.b16 %v70
  %v2350 = vunpack.c.l.b16 %v71
  %v2351 = vunpack.c.l.b16 %v72
  %v2352 = vunpack.c.l.b16 %v73
  %v2353 = vunpack.c.l.b16 %v74
  %v2354 = vunpack.c.l.b16 %v75
  %v2355 = vunpack.c.l.b16 %v76
  %v2356 = vunpack.c.l.b16 %v77
  %v2357 = vunpack.c.l.b16 %v78
  %v2358 = vunpack.c.l.b16 %v79
  %v2359 = vunpack.c.l.b16 %v80
  %v2360 = vunpack.c.l.b16 %v81
  %v2361 = vunpack.c.l.b16 %v82
  %v2362 = vunpack.c.l.b16 %v83
  %v2363 = vunpack.c.l.b16 %v84
  %v2364 = vunpack.c.l.b16 %v85
  %v2365 = vunpack.c.l.b16 %v86
  %v2366 = vunpack.c.l.b16 %v87
  %v2367 = vunpack.c.l.b16 %v88
  %v2368 = vunpack.c.l.b16 %v89
  %v2369 = vunpack.c.l.b16 %v90
  %v2370 = vunpack.c.l.b16 %v91
  %v2371 = vunpack.c.l.b16 %v92
  %v2372 = vunpack.c.l.b16 %v93
  %v2373 = vunpack.c.l.b16 %v94
  %v2374 = vunpack.c.l.b16 %v95
  %v2375 = vunpack.c.l.b16 %v96
  %v2376 = vunpack.c.l.b16 %v97
  %v2377 = vunpack.c.l.b16 %v98
  %v2378 = vunpack.c.l.b16 %v99
  %v2379 = vunpack.c.l.b16 %v100
  %v2380 = vunpack.c.l.b16 %v101
  %v2381 = vunpack.c.l.b16 %v102
  %v2382 = vunpack.c.l.b16 %v103
  %v2383 = vunpack.c.l.b16 %v104
  %v2384 = vunpack.c.l.b16 %v105
  %v2385 = vunpack.c.l.b16 %v106
  %v2386 = vunpack.c.l.b16 %v107
  %v2387 = vunpack.c.l.b16 %v108
  %v2388 = vunpack.c.l.b16 %v109
  %v2389 = vunpack.c.l.b16 %v110
  %v2390 = vunpack.c.l.b16 %v111
  %v2391 = vunpack.c.l.b16 %v112
  %v2392 = vunpack.c.l.b16 %v113
  %v2393 = vunpack.c.l.b16 %v114
  %v2394 = vunpack.c.l.b16 %v115
  %v2395 = vunpack.c.l.b16 %v116
  %v2396 = vunpack.c.l.b16 %v117
  %v2397 = vunpack.c.l.b16 %v118
  %v2398 = vunpack.c.l.b16 %v119
  %v2399 = vunpack.c.l.b16 %v120
  %v2400 = vunpack.c.l.b16 %v121
  %v2401 = vunpack.c.l.b16 %v122
  %v2402 = vunpack.c.l.b16 %v123
  %v2403 = vunpack.c.l.b16 %v124
  %v2404 = vunpack.c.l.b16 %v125
  %v2405 = vunpack.c.l.b16 %v126
  %v2406 = vunpack.c.l.b16 %v127
  %v2407 = vunpack.c.l.b16 %v128
  %v2408 = vunpack.c.l.b16 %v129
  %v2409 = vunpack.c.l.b16 %v130
  %v2410 = vunpack.c.l.b16 %v131
  %v2411 = vunpack.c.l.b16 %v132
  %v2412 = vunpack.c.l.b16 %v133
  %v2413 = vunpack.c.l.b16 %v134
  %v2414 = vunpack.c.l.b16 %v135
  %v2415 = vunpack.c.l.b16 %v136
  %v2416 = vunpack.c.l.b16 %v137
  %v2417 = vunpack.c.l.b16 %v138
  %v2418 = vunpack.c.l.b16 %v139
  %v2419 = vunpack.c.l.b16 %v140
  %v2420 = vunpack.c.l.b16 %v141
  %v2421 = vunpack.c.l.b16 %v142
  %v2422 = vunpack.c.l.b16 %v143
  %v2423 = vunpack.c.l.b16 %v144
  %v2424 = vunpack.c.l.b16 %v145
  %v2425 = vunpack.c.l.b16 %v146
  %v2426 = vunpack.c.l.b16 %v147
  %v2427 = vunpack.c.l.b16 %v148
  %v2428 = vunpack.c.l.b16 %v149
  %v2429 = vunpack.c.l.b16 %v150
  %v2430 = vunpack.c.l.b16 %v151
  %v2431 = vunpack.c.l.b16 %v152
  %v2432 = vunpack.c.l.b16 %v153
  %v2433 = vunpack.c.l.b16 %v154
  %v2434 = vunpack.c.l.b16 %v155
  %v2435 = vunpack.c.l.b16 %v156
  %v2436 = vunpack.c.l.b16 %v157
  %v2437 = vunpack.c.l.b16 %v158
  %v2438 = vunpack.c.l.b16 %v159
  %v2439 = vunpack.c.l.b16 %v160
  %v2440 = vunpack.c.l.b16 %v161
  %v2441 = vunpack.c.l.b16 %v162
  %v2442 = vunpack.c.l.b16 %v163
  %v2443 = vunpack.c.l.b16 %v164
  %v2444 = vunpack.c.l.b16 %v165
  %v2445 = vunpack.c.l.b16 %v166
  %v2446 = vunpack.c.l.b16 %v167
  %v2447 = vunpack.c.l.b16 %v168
  %v2448 = vunpack.c.l.b16 %v169
  %v2449 = vunpack.c.l.b16 %v170
  %v2450 = vunpack.c.l.b16 %v171
  %v2451 = vunpack.c.l.b16 %v172
  %v2452 = vunpack.c.l.b16 %v173
  %v2453 = vunpack.c.l.b16 %v174
  %v2454 = vunpack.c.l.b16 %v175
  %v2455 = vunpack.c.l.b16 %v176
  %v2456 = vunpack.c.l.b16 %v177
  %v2457 = vunpack.c.l.b16 %v178
  %v2458 = vunpack.c.l.b16 %v179
  %v2459 = vunpack.c.l.b16 %v180
  %v2460 = vunpack.c.l.b16 %v181
  %v2461 = vunpack.c.l.b16 %v182
  %v2462 = vunpack.c.l.b16 %v183
  %v2463 = vunpack.c.l.b16 %v184
  %v2464 = vunpack.c.l.b16 %v185
  %v2465 = vunpack.c.l.b16 %v186
  %v2466 = vunpack.c.l.b16 %v187
  %v2467 = vunpack.c.l.b16 %v188
  %v2468 = vunpack.c.l.b16 %v189
  %v2469 = vunpack.c.l.b16 %v190
  %v2470 = vunpack.c.l.b16 %v191
  %v2471 = vunpack.c.l.b16 %v192
  %v2472 = vunpack.c.l.b16 %v193
  %v2473 = vunpack.c.l.b16 %v194
  %v2474 = vunpack.c.l.b16 %v195
  %v2475 = vunpack.c.l.b16 %v196
  %v2476 = vunpack.c.l.b16 %v197
  %v2477 = vunpack.c.l.b16 %v198
  %v2478 = vunpack.c.l.b16 %v199
  %v2479 = vunpack.c.l.b16 %v200
  %v2480 = vunpack.c.l.b16 %v201
  %v2481 = vunpack.c.l.b16 %v202
  %v2482 = vunpack.c.l.b16 %v203
  %v2483 = vunpack.c.l.b16 %v204
  %v2484 = vunpack.c.l.b16 %v205
  %v2485 = vunpack.c.l.b16 %v206
  %v2486 = vunpack.c.l.b16 %v207
  %v2487 = vunpack.c.l.b16 %v208
  %v2488 = vunpack.c.l.b16 %v209
  %v2489 = vunpack.c.l.b16 %v210
  %v2490 = vunpack.c.l.b16 %v211
  %v2491 = vunpack.c.l.b16 %v212
  %v2492 = vunpack.c.l.b16 %v213
  %v2493 = vunpack.c.l.b16 %v214
  %v2494 = vunpack.c.l.b16 %v215
  %v2495 = vunpack.c.l.b16 %v216
  %v2496 = vunpack.c.l.b16 %v217
  %v2497 = vunpack.c.l.b16 %v218
  %v2498 = vunpack.c.l.b16 %v219
  %v2499 = vunpack.c.l.b16 %v220
  %v2500 = vunpack.c.l.b16 %v221
  %v2501 = vunpack.c.l.b16 %v222
  %v2502 = vunpack.c.l.b16 %v223
  %v2503 = vunpack.c.l.b16 %v224
  %v2504 = vunpack.c.l.b16 %v225
  %v2505 = vunpack.c.l.b16 %v226
  %v2506 = vunpack.c.l.b16 %v227
  %v2507 = vunpack.c.l.b16 %v228
  %v2508 = vunpack.c.l.b16 %v229
  %v2509 = vunpack.c.l.b16 %v230
  %v2510 = vunpack.c.l.b16 %v231
  %v2511 = vunpack.c.l.b16 %v232
  %v2512 = vunpack.c.l.b16 %v233
  %v2513 = vunpack.c.l.b16 %v234
  %v2514 = vunpack.c.l.b16 %v235
  %v2515 = vunpack.c.l.b16 %v236
  %v2516 = vunpack.c.l.b16 %v237
  %v2517 = vunpack.c.l.b16 %v238
  %v2518 = vunpack.c.l.b16 %v239
  %v2519 = vunpack.c.l.b16 %v240
  %v2520 = vunpack.c.l.b16 %v241
  %v2521 = vunpack.c.l.b16 %v242
  %v2522 = vunpack.c.l.b16 %v243
  %v2523 = vunpack.c.l.b16 %v244
  %v2524 = vunpack.c.l.b16 %v245
  %v2525 = vunpack.c.l.b16 %v246
  %v2526 = vunpack.c.l.b16 %v247
  %v2527 = vunpack.c.l.b16 %v248
  %v2528 = vunpack.c.l.b16 %v249
  %v2529 = vunpack.c.l.b16 %v250
  %v2530 = vunpack.c.l.b16 %v251
  %v2531 = vunpack.c.l.b16 %v252
  %v2532 = vunpack.c.l.b16 %v253
  %v2533 = vunpack.c.l.b16 %v254
  %v2534 = vunpack.c.l.b16 %v255
  %v2535 = vunpack.c.l.b16 %v256
  %v2536 = vunpack.c.l.b16 %v257
  %v2537 = vunpack.c.l.b16 %v258
  %v2538 = vunpack.c.l.b16 %v259
  %v2539 = vunpack.c.l.b16 %v260
  %v2540 = vunpack.c.l.b16 %v261
  %v2541 = vunpack.c.l.b16 %v262
  %v2542 = vunpack.c.l.b16 %v263
  %v2543 = vunpack.c.l.b16 %v264
  %v2544 = vunpack.c.l.b16 %v265
  %v2545 = vunpack.c.l.b16 %v266
  %v2546 = vunpack.c.l.b16 %v267
  %v2547 = vunpack.c.l.b16 %v268
  %v2548 = vunpack.c.l.b16 %v269
  %v2549 = vunpack.c.l.b16 %v270
  %v2550 = vunpack.c.l.b16 %v271
  %v2551 = vunpack.c.l.b16 %v272
  %v2552 = vunpack.c.l.b16 %v273
  %v2553 = vunpack.c.l.b16 %v274
  %v2554 = vunpack.c.l.b16 %v275
  %v2555 = vunpack.c.l.b16 %v276
  %v2556 = vunpack.c.l.b16 %v277
  %v2557 = vunpack.c.l.b16 %v278
  %v2558 = vunpack.c.l.b16 %v279
  %v2559 = vunpack.c.l.b16 %v280
  %v2560 = vunpack.c.l.b16 %v281
  %v2561 = vunpack.c.l.b16 %v282
  %v2562 = vunpack.c.l.b16 %v283
  %v2563 = vunpack.c.l.b16 %v284
  %v2564 = vunpack.c.l.b16 %v285
  %v2565 = vunpack.c.l.b16 %v286
  %v2566 = vunpack.c.l.b16 %v287
  %v2567 = vunpack.c.l.b16 %v288
  %v2568 = vunpack.c.l.b16 %v289
  %v2569 = vunpack.c.l.b16 %v290
  %v2570 = vunpack.c.l.b16 %v291
  %v2571 = vunpack.c.l.b16 %v292
  %v2572 = vunpack.c.l.b16 %v293
  %v2573 = vunpack.c.l.b16 %v294
  %v2574 = vunpack.c.l.b16 %v295
  %v2575 = vunpack.c.l.b16 %v296
  %v2576 = vunpack.c.l.b16 %v297
  %v2577 = vunpack.c.l.b16 %v298
  %v2578 = vunpack.c.l.b16 %v299
  %v2579 = vunpack.c.l.b16 %v300
  %v2580 = vunpack.c.l.b16 %v301
  %v2581 = vunpack.c.l.b16 %v302
  %v2582 = vunpack.c.l.b16 %v303
  %v2583 = vunpack.c.l.b16 %v304
  %v2584 = vunpack.c.l.b16 %v305
  %v2585 = vunpack.c.l.b16 %v306
  %v2586 = vunpack.c.l.b16 %v307
  %v2587 = vunpack.c.l.b16 %v308
  %v2588 = vunpack.c.l.b16 %v309
  %v2589 = vunpack.c.l.b16 %v310
  %v2590 = vunpack.c.l.b16 %v311
  %v2591 = vunpack.c.l.b16 %v312
  %v2592 = vunpack.c.l.b16 %v313
  %v2593 = vunpack.c.l.b16 %v314
  %v2594 = vunpack.c.l.b16 %v315
  %v2595 = vunpack.c.l.b16 %v316
  %v2596 = vunpack.c.l.b16 %v317
  %v2597 = vunpack.c.l.b16 %v318
  %v2598 = vunpack.c.l.b16 %v319
  %v2599 = vunpack.c.l.b16 %v320
  %v2600 = vunpack.c.l.b16 %v321
  %v2601 = vunpack.c.l.b16 %v322
  %v2602 = vunpack.c.l.b16 %v323
  %v2603 = vunpack.c.l.b16 %v324
  %v2604 = vunpack.c.l.b16 %v325
  %v2605 = vunpack.c.l.b16 %v326
  %v2606 = vunpack.c.l.b16 %v327
  %v2607 = vunpack.c.l.b16 %v328
  %v2608 = vunpack.c.l.b16 %v329
  %v2609 = vunpack.c.l.b16 %v330
  %v2610 = vunpack.c.l.b16 %v331
  %v2611 = vunpack.c.l.b16 %v332
  %v2612 = vunpack.c.l.b16 %v333
  %v2613 = vunpack.c.l.b16 %v334
  %v2614 = vunpack.c.l.b16 %v335
  %v2615 = vunpack.c.l.b16 %v336
  %v2616 = vunpack.c.l.b16 %v337
  %v2617 = vunpack.c.l.b16 %v338
  %v2618 = vunpack.c.l.b16 %v339
  %v2619 = vunpack.c.l.b16 %v340
  %v2620 = vunpack.c.l.b16 %v341
  %v2621 = vunpack.c.l.b16 %v342
  %v2622 = vunpack.c.l.b16 %v343
  %v2623 = vunpack.c.l.b16 %v344
  %v2624 = vunpack.c.l.b16 %v345
  %v2625 = vunpack.c.l.b16 %v346
  %v2626 = vunpack.c.l.b16 %v347
  %v2627 = vunpack.c.l.b16 %v348
  %v2628 = vunpack.c.l.b16 %v349
  %v2629 = vunpack.c.l.b16 %v350
  %v2630 = vunpack.c.l.b16 %v351
  %v2631 = vunpack.c.l.b16 %v352
  %v2632 = vunpack.c.l.b16 %v353
  %v2633 = vunpack.c.l.b16 %v354
  %v2634 = vunpack.c.l.b16 %v355
  %v2635 = vunpack.c.l.b16 %v356
  %v2636 = vunpack.c.l.b16 %v357
  %v2637 = vunpack.c.l.b16 %v358
  %v2638 = vunpack.c.l.b16 %v359
  %v2639 = vunpack.c.l.b16 %v360
  %v2640 = vunpack.c.l.b16 %v361
  %v2641 = vunpack.c.l.b16 %v362
  %v2642 = vunpack.c.l.b16 %v363
  %v2643 = vunpack.c.l.b16 %v364
  %v2644 = vunpack.c.l.b16 %v365
  %v2645 = vunpack.c.l.b16 %v366
  %v2646 = vunpack.c.l.b16 %v367
  %v2647 = vunpack.c.l.b16 %v368
  %v2648 = vunpack.c.l.b16 %v369
  %v2649 = vunpack.c.l.b16 %v370
  %v2650 = vunpack.c.l.b16 %v371
  %v2651 = vunpack.c.l.b16 %v372
  %v2652 = vunpack.c.l.b16 %v373
  %v2653 = vunpack.c.l.b16 %v374
  %v2654 = vunpack.c.l.b16 %v375
  %v2655 = vunpack.c.l.b16 %v376
  %v2656 = vunpack.c.l.b16 %v377
  %v2657 = vunpack.c.l.b16 %v378
  %v2658 = vunpack.c.l.b16 %v379
  %v2659 = vunpack.c.l.b16 %v380
  %v2660 = vunpack.c.l.b16 %v381
  %v2661 = vunpack.c.l.b16 %v382
  %v2662 = vunpack.c.l.b16 %v383
  %v2663 = vunpack.c.l.b16 %v384
  %v2664 = vunpack.c.l.b16 %v385
  %v2665 = vunpack.c.l.b16 %v386
  %v2666 = vunpack.c.l.b16 %v387
  %v2667 = vunpack.c.l.b16 %v388
  %v2668 = vunpack.c.l.b16 %v389
  %v2669 = vunpack.c.l.b16 %v390
  %v2670 = vunpack.c.l.b16 %v391
  %v2671 = vunpack.c.l.b16 %v392
  %v2672 = vunpack.c.l.b16 %v393
  %v2673 = vunpack.c.l.b16 %v394
  %v2674 = vunpack.c.l.b16 %v395
  %v2675 = vunpack.c.l.b16 %v396
  %v2676 = vunpack.c.l.b16 %v397
  %v2677 = vunpack.c.l.b16 %v398
  %v2678 = vunpack.c.l.b16 %v399
  %v2679 = vunpack.c.l.b16 %v400
  %v2680 = vunpack.c.l.b16 %v401
  %v2681 = vunpack.c.l.b16 %v402
  %v2682 = vunpack.c.l.b16 %v403
  %v2683 = vunpack.c.l.b16 %v404
  %v2684 = vunpack.c.l.b16 %v405
  %v2685 = vunpack.c.l.b16 %v406
  %v2686 = vunpack.c.l.b16 %v407
  %v2687 = vunpack.c.l.b16 %v408
  %v2688 = vunpack.c.l.b16 %v409
  %v2689 = vunpack.c.l.b16 %v410
  %v2690 = vunpack.c.l.b16 %v411
  %v2691 = vunpack.c.l.b16 %v412
  %v2692 = vunpack.c.l.b16 %v413
  %v2693 = vunpack.c.l.b16 %v414
  %v2694 = vunpack.c.l.b16 %v415
  %v2695 = vunpack.c.l.b16 %v416
  %v2696 = vunpack.c.l.b16 %v417
  %v2697 = vunpack.c.l.b16 %v418
  %v2698 = vunpack.c.l.b16 %v419
  %v2699 = vunpack.c.l.b16 %v420
  %v2700 = vunpack.c.l.b16 %v421
  %v2701 = vunpack.c.l.b16 %v422
  %v2702 = vunpack.c.l.b16 %v423
  %v2703 = vunpack.c.l.b16 %v424
  %v2704 = vunpack.c.l.b16 %v425
  %v2705 = vunpack.c.l.b16 %v426
  %v2706 = vunpack.c.l.b16 %v427
  %v2707 = vunpack.c.l.b16 %v428
  %v2708 = vunpack.c.l.b16 %v429
  %v2709 = vunpack.c.l.b16 %v430
  %v2710 = vunpack.c.l.b16 %v431
  %v2711 = vunpack.c.l.b16 %v432
  %v2712 = vunpack.c.l.b16 %v433
  %v2713 = vunpack.c.l.b16 %v434
  %v2714 = vunpack.c.l.b16 %v435
  %v2715 = vunpack.c.l.b16 %v436
  %v2716 = vunpack.c.l.b16 %v437
  %v2717 = vunpack.c.l.b16 %v438
  %v2718 = vunpack.c.l.b16 %v439
  %v2719 = vunpack.c.l.b16 %v440
  %v2720 = vunpack.c.l.b16 %v441
  %v2721 = vunpack.c.l.b16 %v442
  %v2722 = vunpack.c.l.b16 %v443
  %v2723 = vunpack.c.l.b16 %v444
  %v2724 = vunpack.c.l.b16 %v445
  %v2725 = vunpack.c.l.b16 %v446
  %v2726 = vunpack.c.l.b16 %v447
  %v2727 = vunpack.c.l.b16 %v448
  %v2728 = vunpack.c.l.b16 %v449
  %v2729 = vunpack.c.l.b16 %v450
  %v2730 = vunpack.c.l.b16 %v451
  %v2731 = vunpack.c.l.b16 %v452
  %v2732 = vunpack.c.l.b16 %v453
  %v2733 = vunpack.c.l.b16 %v454
  %v2734 = vunpack.c.l.b16 %v455
  %v2735 = vunpack.c.l.b16 %v456
  %v2736 = vunpack.c.l.b16 %v457
  %v2737 = vunpack.c.l.b16 %v458
  %v2738 = vunpack.c.l.b16 %v459
  %v2739 = vunpack.c.l.b16 %v460
  %v2740 = vunpack.c.l.b16 %v461
  %v2741 = vunpack.c.l.b16 %v462
  %v2742 = vunpack.c.l.b16 %v463
  %v2743 = vunpack.c.l.b16 %v464
  %v2744 = vunpack.c.l.b16 %v465
  %v2745 = vunpack.c.l.b16 %v466
  %v2746 = vunpack.c.l.b16 %v467
  %v2747 = vunpack.c.l.b16 %v468
  %v2748 = vunpack.c.l.b16 %v469
  %v2749 = vunpack.c.l.b16 %v470
  %v2750 = vunpack.c.l.b16 %v471
  %v2751 = vunpack.c.l.b16 %v472
  %v2752 = vunpack.c.l.b16 %v473
  %v2753 = vunpack.c.l.b16 %v474
  %v2754 = vunpack.c.l.b16 %v475
  %v2755 = vunpack.c.l.b16 %v476
  %v2756 = vunpack.c.l.b16 %v477
  %v2757 = vunpack.c.l.b16 %v478
  %v2758 = vunpack.c.l.b16 %v479
  %v2759 = vunpack.c.l.b16 %v480
  %v2760 = vunpack.c.l.b16 %v481
  %v2761 = vunpack.c.l.b16 %v482
  %v2762 = vunpack.c.l.b16 %v483
  %v2763 = vunpack.c.l.b16 %v484
  %v2764 = vunpack.c.l.b16 %v485
  %v2765 = vunpack.c.l.b16 %v486
  %v2766 = vunpack.c.l.b16 %v487
  %v2767 = vunpack.c.l.b16 %v488
  %v2768 = vunpack.c.l.b16 %v489
  %v2769 = vunpack.c.l.b16 %v490
  %v2770 = vunpack.c.l.b16 %v491
  %v2771 = vunpack.c.l.b16 %v492
  %v2772 = vunpack.c.l.b16 %v493
  %v2773 = vunpack.c.l.b16 %v494
  %v2774 = vunpack.c.l.b16 %v495
  %v2775 = vunpack.c.l.b16 %v496
  %v2776 = vunpack.c.l.b16 %v497
  %v2777 = vunpack.c.l.b16 %v498
  %v2778 = vunpack.c.l.b16 %v499
  %v2779 = vunpack.c.l.b16 %v500
  %v2780 = vunpack.c.l.b16 %v501
  %v2781 = vunpack.c.l.b16 %v502
  %v2782 = vunpack.c.l.b16 %v503
  %v2783 = vunpack.c.l.b16 %v504
  %v2784 = vunpack.c.l.b16 %v505
  %v2785 = vunpack.c.l.b16 %v506
  %v2786 = vunpack.c.l.b16 %v507
  %v2787 = vunpack.c.l.b16 %v508
  %v2788 = vunpack.c.l.b16 %v509
  %v2789 = vunpack.c.l.b16 %v510
  %v2790 = vunpack.c.l.b16 %v511
  %v2791 = vunpack.c.l.b16 %v512
  %v2792 = vunpack.c.l.b16 %v513
  %v2793 = vunpack.c.l.b16 %v514
  %v2794 = vunpack.c.l.b16 %v515
  %v2795 = vunpack.c.l.b16 %v516
  %v2796 = vunpack.c.l.b16 %v517
  %v2797 = vunpack.c.l.b16 %v518
  %v2798 = vunpack.c.l.b16 %v519
  %v2799 = vunpack.c.l.b16 %v520
  %v2800 = vunpack.c.l.b16 %v521
  %v2801 = vunpack.c.l.b16 %v522
  %v2802 = vunpack.c.l.b16 %v523
  %v2803 = vunpack.c.l.b16 %v524
  %v2804 = vunpack.c.l.b16 %v525
  %v2805 = vunpack.c.l.b16 %v526
  %v2806 = vunpack.c.l.b16 %v527
  %v2807 = vunpack.c.l.b16 %v528
  %v2808 = vunpack.c.l.b16 %v529
  %v2809 = vunpack.c.l.b16 %v530
  %v2810 = vunpack.c.l.b16 %v531
  %v2811 = vunpack.c.l.b16 %v532
  %v2812 = vunpack.c.l.b16 %v533
  %v2813 = vunpack.c.l.b16 %v534
  %v2814 = vunpack.c.l.b16 %v535
  %v2815 = vunpack.c.l.b16 %v536
  %v2816 = vunpack.c.l.b16 %v537
  %v2817 = vunpack.c.l.b16 %v538
  %v2818 = vunpack.c.l.b16 %v539
  %v2819 = vunpack.c.l.b16 %v540
  %v2820 = vunpack.c.l.b16 %v541
  %v2821 = vunpack.c.l.b16 %v542
  %v2822 = vunpack.c.l.b16 %v543
  %v2823 = vunpack.c.l.b16 %v544
  %v2824 = vunpack.c.l.b16 %v545
  %v2825 = vunpack.c.l.b16 %v546
  %v2826 = vunpack.c.l.b16 %v547
  %v2827 = vunpack.c.l.b16 %v548
  %v2828 = vunpack.c.l.b16 %v549
  %v2829 = vunpack.c.l.b16 %v550
  %v2830 = vunpack.c.l.b16 %v551
  %v2831 = vunpack.c.l.b16 %v552
  %v2832 = vunpack.c.l.b16 %v553
  %v2833 = vunpack.c.l.b16 %v554
  %v2834 = vunpack.c.l.b16 %v555
  %v2835 = vunpack.c.l.b16 %v556
  %v2836 = vunpack.c.l.b16 %v557
  %v2837 = vunpack.c.l.b16 %v558
  %v2838 = vunpack.c.l.b16 %v559
  %v2839 = vunpack.c.l.b16 %v560
  %v2840 = vunpack.c.l.b16 %v561
  %v2841 = vunpack.c.l.b16 %v562
  %v2842 = vunpack.c.l.b16 %v563
  %v2843 = vunpack.c.l.b16 %v564
  %v2844 = vunpack.c.l.b16 %v565
  %v2845 = vunpack.c.l.b16 %v566
  %v2846 = vunpack.c.l.b16 %v567
  %v2847 = vunpack.c.l.b16 %v568
  %v2848 = vunpack.c.l.b16 %v569
  %v2849 = vunpack.c.l.b16 %v570
  %v2850 = vunpack.c.l.b16 %v571
  %v2851 = vunpack.c.l.b16 %v572
  %v2852 = vunpack.c.l.b16 %v573
  %v2853 = vunpack.c.l.b16 %v574
  %v2854 = vunpack.c.l.b16 %v575
  %v2855 = vunpack.c.l.b16 %v576
  %v2856 = vunpack.c.l.b16 %v577
  %v2857 = vunpack.c.l.b16 %v578
  %v2858 = vunpack.c.l.b16 %v579
  %v2859 = vunpack.c.l.b16 %v580
  %v2860 = vunpack.c.l.b16 %v581
  %v2861 = vunpack.c.l.b16 %v582
  %v2862 = vunpack.c.l.b16 %v583
  %v2863 = vunpack.c.l.b16 %v584
  %v2864 = vunpack.c.l.b16 %v585
  %v2865 = vunpack.c.l.b16 %v586
  %v2866 = vunpack.c.l.b16 %v587
  %v2867 = vunpack.c.l.b16 %v588
  %v2868 = vunpack.c.l.b16 %v589
  %v2869 = vunpack.c.l.b16 %v590
  %v2870 = vunpack.c.l.b16 %v591
  %v2871 = vunpack.c.l.b16 %v592
  %v2872 = vunpack.c.l.b16 %v593
  %v2873 = vunpack.c.l.b16 %v594
  %v2874 = vunpack.c.l.b16 %v595
  %v2875 = vunpack.c.l.b16 %v596
  %v2876 = vunpack.c.l.b16 %v597
  %v2877 = vunpack.c.l.b16 %v598
  %v2878 = vunpack.c.l.b16 %v599
  %v2879 = vunpack.c.l.b16 %v600
  %v2880 = vunpack.c.l.b16 %v601
  %v2881 = vunpack.c.l.b16 %v602
  %v2882 = vunpack.c.l.b16 %v603
  %v2883 = vunpack.c.l.b16 %v604
  %v2884 = vunpack.c.l.b16 %v605
  %v2885 = vunpack.c.l.b16 %v606
  %v2886 = vunpack.c.l.b16 %v607
  %v2887 = vunpack.c.l.b16 %v608
  %v2888 = vunpack.c.l.b16 %v609
  %v2889 = vunpack.c.l.b16 %v610
  %v2890 = vunpack.c.l.b16 %v611
  %v2891 = vunpack.c.l.b16 %v612
  %v2892 = vunpack.c.l.b16 %v613
  %v2893 = vunpack.c.l.b16 %v614
  %v2894 = vunpack.c.l.b16 %v615
  %v2895 = vunpack.c.l.b16 %v616
  %v2896 = vunpack.c.l.b16 %v617
  %v2897 = vunpack.c.l.b16 %v618
  %v2898 = vunpack.c.l.b16 %v619
  %v2899 = vunpack.c.l.b16 %v620
  %v2900 = vunpack.c.l.b16 %v621
  %v2901 = vunpack.c.l.b16 %v622
  %v2902 = vunpack.c.l.b16 %v623
  %v2903 = vunpack.c.l.b16 %v624
  %v2904 = vunpack.c.l.b16 %v625
  %v2905 = vunpack.c.l.b16 %v626
  %v2906 = vunpack.c.l.b16 %v627
  %v2907 = vunpack.c.l.b16 %v628
  %v2908 = vunpack.c.l.b16 %v629
  %v2909 = vunpack.c.l.b16 %v630
  %v2910 = vunpack.c.l.b16 %v631
  %v2911 = vunpack.c.l.b16 %v632
  %v2912 = vunpack.c.l.b16 %v633
  %v2913 = vunpack.c.l.b16 %v634
  %v2914 = vunpack.c.l.b16 %v635
  %v2915 = vunpack.c.l.b16 %v636
  %v2916 = vunpack.c.l.b16 %v637
  %v2917 = vunpack.c.l.b16 %v638
  %v2918 = vunpack.c.l.b16 %v639
  %v2919 = vunpack.c.l.b16 %v640
  %v2920 = vunpack.c.l.b16 %v641
  %v2921 = vunpack.c.l.b16 %v642
  %v2922 = vunpack.c.l.b16 %v643
  %v2923 = vunpack.c.l.b16 %v644
  %v2924 = vunpack.c.l.b16 %v645
  %v2925 = vunpack.c.l.b16 %v646
  %v2926 = vunpack.c.l.b16 %v647
  %v2927 = vunpack.c.l.b16 %v648
  %v2928 = vunpack.c.l.b16 %v649
  %v2929 = vunpack.c.l.b16 %v650
  %v2930 = vunpack.c.l.b16 %v651
  %v2931 = vunpack.c.l.b16 %v652
  %v2932 = vunpack.c.l.b16 %v653
  %v2933 = vunpack.c.l.b16 %v654
  %v2934 = vunpack.c.l.b16 %v655
  %v2935 = vunpack.c.l.b16 %v656
  %v2936 = vunpack.c.l.b16 %v657
  %v2937 = vunpack.c.l.b16 %v658
  %v2938 = vunpack.c.l.b16 %v659
  %v2939 = vunpack.c.l.b16 %v660
  %v2940 = vunpack.c.l.b16 %v661
  %v2941 = vunpack.c.l.b16 %v662
  %v2942 = vunpack.c.l.b16 %v663
  %v2943 = vunpack.c.l.b16 %v664
  %v2944 = vunpack.c.l.b16 %v665
  %v2945 = vunpack.c.l.b16 %v666
  %v2946 = vunpack.c.l.b16 %v667
  %v2947 = vunpack.c.l.b16 %v668
  %v2948 = vunpack.c.l.b16 %v669
  %v2949 = vunpack.c.l.b16 %v670
  %v2950 = vunpack.c.l.b16 %v671
  %v2951 = vunpack.c.l.b16 %v672
  %v2952 = vunpack.c.l.b16 %v673
  %v2953 = vunpack.c.l.b16 %v674
  %v2954 = vunpack.c.l.b16 %v675
  %v2955 = vunpack.c.l.b16 %v676
  %v2956 = vunpack.c.l.b16 %v677
  %v2957 = vunpack.c.l.b16 %v678
  %v2958 = vunpack.c.l.b16 %v679
  %v2959 = vunpack.c.l.b16 %v680
  %v2960 = vunpack.c.l.b16 %v681
  %v2961 = vunpack.c.l.b16 %v682
  %v2962 = vunpack.c.l.b16 %v683
  %v2963 = vunpack.c.l.b16 %v684
  %v2964 = vunpack.c.l.b16 %v685
  %v2965 = vunpack.c.l.b16 %v686
  %v2966 = vunpack.c.l.b16 %v687
  %v2967 = vunpack.c.l.b16 %v688
  %v2968 = vunpack.c.l.b16 %v689
  %v2969 = vunpack.c.l.b16 %v690
  %v2970 = vunpack.c.l.b16 %v691
  %v2971 = vunpack.c.l.b16 %v692
  %v2972 = vunpack.c.l.b16 %v693
  %v2973 = vunpack.c.l.b16 %v694
  %v2974 = vunpack.c.l.b16 %v695
  %v2975 = vunpack.c.l.b16 %v696
  %v2976 = vunpack.c.l.b16 %v697
  %v2977 = vunpack.c.l.b16 %v698
  %v2978 = vunpack.c.l.b16 %v699
  %v2979 = vunpack.c.l.b16 %v700
  %v2980 = vunpack.c.l.b16 %v701
  %v2981 = vunpack.c.l.b16 %v702
  %v2982 = vunpack.c.l.b16 %v703
  %v2983 = vunpack.c.l.b16 %v704
  %v2984 = vunpack.c.l.b16 %v705
  %v2985 = vunpack.c.l.b16 %v706
  %v2986 = vunpack.c.l.b16 %v707
  %v2987 = vunpack.c.l.b16 %v708
  %v2988 = vunpack.c.l.b16 %v709
  %v2989 = vunpack.c.l.b16 %v710
  %v2990 = vunpack.c.l.b16 %v711
  %v2991 = vunpack.c.l.b16 %v712
  %v2992 = vunpack.c.l.b16 %v713
  %v2993 = vunpack.c.l.b16 %v714
  %v2994 = vunpack.c.l.b16 %v715
  %v2995 = vunpack.c.l.b16 %v716
  %v2996 = vunpack.c.l.b16 %v717
  %v2997 = vunpack.c.l.b16 %v718
  %v2998 = vunpack.c.l.b16 %v719
  %v2999 = vunpack.c.l.b16 %v720
  %v3000 = vunpack.c.l.b16 %v721
  %v3001 = vunpack.c.l.b16 %v722
  %v3002 = vunpack.c.l.b16 %v723
  %v3003 = vunpack.c.l.b16 %v724
  %v3004 = vunpack.c.l.b16 %v725
  %v3005 = vunpack.c.l.b16 %v726
  %v3006 = vunpack.c.l.b16 %v727
  %v3007 = vunpack.c.l.b16 %v728
  %v3008 = vunpack.c.l.b16 %v729
  %v3009 = vunpack.c.l.b16 %v730
  %v3010 = vunpack.c.l.b16 %v731
  %v3011 = vunpack.c.l.b16 %v732
  %v3012 = vunpack.c.l.b16 %v733
  %v3013 = vunpack.c.l.b16 %v734
  %v3014 = vunpack.c.l.b16 %v735
  %v3015 = vunpack.c.l.b16 %v736
  %v3016 = vunpack.c.l.b16 %v737
  %v3017 = vunpack.c.l.b16 %v738
  %v3018 = vunpack.c.l.b16 %v739
  %v3019 = vunpack.c.l.b16 %v740
  %v3020 = vunpack.c.l.b16 %v741
  %v3021 = vunpack.c.l.b16 %v742
  %v3022 = vunpack.c.l.b16 %v743
  %v3023 = vunpack.c.l.b16 %v744
  %v3024 = vunpack.c.l.b16 %v745
  %v3025 = vunpack.c.l.b16 %v746
  %v3026 = vunpack.c.l.b16 %v747
  %v3027 = vunpack.c.l.b16 %v748
  %v3028 = vunpack.c.l.b16 %v749
  %v3029 = vunpack.c.l.b16 %v750
  %v3030 = vunpack.c.l.b16 %v751
  %v3031 = vunpack.c.l.b16 %v752
  %v3032 = vunpack.c.l.b16 %v753
  %v3033 = vunpack.c.l.b16 %v754
  %v3034 = vunpack.c.l.b16 %v755
  %v3035 = vunpack.c.l.b16 %v756
  %v3036 = vunpack.c.l.b16 %v757
  %v3037 = vunpack.c.l.b16 %v758
  %v3038 = vunpack.c.l.b16 %v759
  %v3039 = vunpack.c.l.b16 %v760
  %v3040 = vunpack.c.l.b16 %v761
  %v3041 = vunpack.c.l.b16 %v762
  %v3042 = vunpack.c.l.b16 %v763
  %v3043 = vunpack.c.l.b16 %v764
  %v3044 = vunpack.c.l.b16 %v765
  %v3045 = vunpack.c.l.b16 %v766
  %v3046 = vunpack.c.l.b16 %v767
  %v3047 = vunpack.c.l.b16 %v768
  %v3048 = vunpack.c.l.b16 %v769
  %v3049 = vunpack.c.l.b16 %v770
  %v3050 = vunpack.c.l.b16 %v771
  %v3051 = vunpack.c.l.b16 %v772
  %v3052 = vunpack.c.l.b16 %v773
  %v3053 = vunpack.c.l.b16 %v774
  %v3054 = vunpack.c.l.b16 %v775
  %v3055 = vunpack.c.l.b16 %v776
  %v3056 = vunpack.c.l.b16 %v777
  %v3057 = vunpack.c.l.b16 %v778
  %v3058 = vunpack.c.l.b16 %v779
  %v3059 = vunpack.c.l.b16 %v780
  %v3060 = vunpack.c.l.b16 %v781
  %v3061 = vunpack.c.l.b16 %v782
  %v3062 = vunpack.c.l.b16 %v783
  %v3063 = vunpack.c.l.b16 %v784
  %v3064 = vunpack.c.l.b16 %v785
  %v3065 = vunpack.c.l.b16 %v786
  %v3066 = vunpack.c.l.b16 %v787
  %v3067 = vunpack.c.l.b16 %v788
  %v3068 = vunpack.c.l.b16 %v789
  %v3069 = vunpack.c.l.b16 %v790
  %v3070 = vunpack.c.l.b16 %v791
  %v3071 = vunpack.c.l.b16 %v792
  %v3072 = vunpack.c.l.b16 %v793
  %v3073 = vunpack.c.l.b16 %v794
  %v3074 = vunpack.c.l.b16 %v795
  %v3075 = vunpack.c.l.b16 %v796
  %v3076 = vunpack.c.l.b16 %v797
  %v3077 = vunpack.c.l.b16 %v798
  %v3078 = vunpack.c.l.b16 %v799
  %v3079 = vunpack.c.l.b16 %v800
  %v3080 = vunpack.c.l.b16 %v801
  %v3081 = vunpack.c.l.b16 %v802
  %v3082 = vunpack.c.l.b16 %v803
  %v3083 = vunpack.c.l.b16 %v804
  %v3084 = vunpack.c.l.b16 %v805
  %v3085 = vunpack.c.l.b16 %v806
  %v3086 = vunpack.c.l.b16 %v807
  %v3087 = vunpack.c.l.b16 %v808
  %v3088 = vunpack.c.l.b16 %v809
  %v3089 = vunpack.c.l.b16 %v810
  %v3090 = vunpack.c.l.b16 %v811
  %v3091 = vunpack.c.l.b16 %v812
  %v3092 = vunpack.c.l.b16 %v813
  %v3093 = vunpack.c.l.b16 %v814
  %v3094 = vunpack.c.l.b16 %v815
  %v3095 = vunpack.c.l.b16 %v816
  %v3096 = vunpack.c.l.b16 %v817
  %v3097 = vunpack.c.l.b16 %v818
  %v3098 = vunpack.c.l.b16 %v819
  %v3099 = vunpack.c.l.b16 %v820
  %v3100 = vunpack.c.l.b16 %v821
  %v3101 = vunpack.c.l.b16 %v822
  %v3102 = vunpack.c.l.b16 %v823
  %v3103 = vunpack.c.l.b16 %v824
  %v3104 = vunpack.c.l.b16 %v825
  %v3105 = vunpack.c.l.b16 %v826
  %v3106 = vunpack.c.l.b16 %v827
  %v3107 = vunpack.c.l.b16 %v828
  %v3108 = vunpack.c.l.b16 %v829
  %v3109 = vunpack.c.l.b16 %v830
  %v3110 = vunpack.c.l.b16 %v831
  %v3111 = vunpack.c.l.b16 %v832
  %v3112 = vunpack.c.l.b16 %v833
  %v3113 = vunpack.c.l.b16 %v834
  %v3114 = vunpack.c.l.b16 %v835
  %v3115 = vunpack.c.l.b16 %v836
  %v3116 = vunpack.c.l.b16 %v837
  %v3117 = vunpack.c.l.b16 %v838
  %v3118 = vunpack.c.l.b16 %v839
  %v3119 = vunpack.c.l.b16 %v840
  %v3120 = vunpack.c.l.b16 %v841
  %v3121 = vunpack.c.l.b16 %v842
  %v3122 = vunpack.c.l.b16 %v843
  %v3123 = vunpack.c.l.b16 %v844
  %v3124 = vunpack.c.l.b16 %v845
  %v3125 = vunpack.c.l.b16 %v846
  %v3126 = vunpack.c.l.b16 %v847
  %v3127 = vunpack.c.l.b16 %v848
  %v3128 = vunpack.c.l.b16 %v849
  %v3129 = vunpack.c.l.b16 %v850
  %v3130 = vunpack.c.l.b16 %v851
  %v3131 = vunpack.c.l.b16 %v852
  %v3132 = vunpack.c.l.b16 %v853
  %v3133 = vunpack.c.l.b16 %v854
  %v3134 = vunpack.c.l.b16 %v855
  %v3135 = vunpack.c.l.b16 %v856
  %v3136 = vunpack.c.l.b16 %v857
  %v3137 = vunpack.c.l.b16 %v858
  %v3138 = vunpack.c.l.b16 %v859
  %v3139 = vunpack.c.l.b16 %v860
  %v3140 = vunpack.c.l.b16 %v861
  %v3141 = vunpack.c.l.b16 %v862
  %v3142 = vunpack.c.l.b16 %v863
  %v3143 = vunpack.c.l.b16 %v864
  %v3144 = vunpack.c.l.b16 %v865
  %v3145 = vunpack.c.l.b16 %v866
  %v3146 = vunpack.c.l.b16 %v867
  %v3147 = vunpack.c.l.b16 %v868
  %v3148 = vunpack.c.l.b16 %v869
  %v3149 = vunpack.c.l.b16 %v870
  %v3150 = vunpack.c.l.b16 %v871
  %v3151 = vunpack.c.l.b16 %v872
  %v3152 = vunpack.c.l.b16 %v873
  %v3153 = vunpack.c.l.b16 %v874
  %v3154 = vunpack.c.l.b16 %v875
  %v3155 = vunpack.c.l.b16 %v876
  %v3156 = vunpack.c.l.b16 %v877
  %v3157 = vunpack.c.l.b16 %v878
  %v3158 = vunpack.c.l.b16 %v879
  %v3159 = vunpack.c.l.b16 %v880
  %v3160 = vunpack.c.l.b16 %v881
  %v3161 = vunpack.c.l.b16 %v882
  %v3162 = vunpack.c.l.b16 %v883
  %v3163 = vunpack.c.l.b16 %v884
  %v3164 = vunpack.c.l.b16 %v885
  %v3165 = vunpack.c.l.b16 %v886
  %v3166 = vunpack.c.l.b16 %v887
  %v3167 = vunpack.c.l.b16 %v888
  %v3168 = vunpack.c.l.b16 %v889
  %v3169 = vunpack.c.l.b16 %v890
  %v3170 = vunpack.c.l.b16 %v891
  %v3171 = vunpack.c.l.b16 %v892
  %v3172 = vunpack.c.l.b16 %v893
  %v3173 = vunpack.c.l.b16 %v894
  %v3174 = vunpack.c.l.b16 %v895
  %v3175 = vunpack.c.l.b16 %v896
  %v3176 = vunpack.c.l.b16 %v897
  %v3177 = vunpack.c.l.b16 %v898
  %v3178 = vunpack.c.l.b16 %v899
  %v3179 = vunpack.c.l.b16 %v900
  %v3180 = vunpack.c.l.b16 %v901
  %v3181 = vunpack.c.l.b16 %v902
  %v3182 = vunpack.c.l.b16 %v903
  %v3183 = vunpack.c.l.b16 %v904
  %v3184 = vunpack.c.l.b16 %v905
  %v3185 = vunpack.c.l.b16 %v906
  %v3186 = vunpack.c.l.b16 %v907
  %v3187 = vunpack.c.l.b16 %v908
  %v3188 = vunpack.c.l.b16 %v909
  %v3189 = vunpack.c.l.b16 %v910
  %v3190 = vunpack.c.l.b16 %v911
  %v3191 = vunpack.c.l.b16 %v912
  %v3192 = vunpack.c.l.b16 %v913
  %v3193 = vunpack.c.l.b16 %v914
  %v3194 = vunpack.c.l.b16 %v915
  %v3195 = vunpack.c.l.b16 %v916
  %v3196 = vunpack.c.l.b16 %v917
  %v3197 = vunpack.c.l.b16 %v918
  %v3198 = vunpack.c.l.b16 %v919
  %v3199 = vunpack.c.l.b16 %v920
  %v3200 = vunpack.c.l.b16 %v921
  %v3201 = vunpack.c.l.b16 %v922
  %v3202 = vunpack.c.l.b16 %v923
  %v3203 = vunpack.c.l.b16 %v924
  %v3204 = vunpack.c.l.b16 %v925
  %v3205 = vunpack.c.l.b16 %v926
  %v3206 = vunpack.c.l.b16 %v927
  %v3207 = vunpack.c.l.b16 %v928
  %v3208 = vunpack.c.l.b16 %v929
  %v3209 = vunpack.c.l.b16 %v930
  %v3210 = vunpack.c.l.b16 %v931
  %v3211 = vunpack.c.l.b16 %v932
  %v3212 = vunpack.c.l.b16 %v933
  %v3213 = vunpack.c.l.b16 %v934
  %v3214 = vunpack.c.l.b16 %v935
  %v3215 = vunpack.c.l.b16 %v936
  %v3216 = vunpack.c.l.b16 %v937
  %v3217 = vunpack.c.l.b16 %v938
  %v3218 = vunpack.c.l.b16 %v939
  %v3219 = vunpack.c.l.b16 %v940
  %v3220 = vunpack.c.l.b16 %v941
  %v3221 = vunpack.c.l.b16 %v942
  %v3222 = vunpack.c.l.b16 %v943
  %v3223 = vunpack.c.l.b16 %v944
  %v3224 = vunpack.c.l.b16 %v945
  %v3225 = vunpack.c.l.b16 %v946
  %v3226 = vunpack.c.l.b16 %v947
  %v3227 = vunpack.c.l.b16 %v948
  %v3228 = vunpack.c.l.b16 %v949
  %v3229 = vunpack.c.l.b16 %v950
  %v3230 = vunpack.c.l.b16 %v951
  %v3231 = vunpack.c.l.b16 %v952
  %v3232 = vunpack.c.l.b16 %v953
  %v3233 = vunpack.c.l.b16 %v954
  %v3234 = vunpack.c.l.b16 %v955
  %v3235 = vunpack.c.l.b16 %v956
  %v3236 = vunpack.c.l.b16 %v957
  %v3237 = vunpack.c.l.b16 %v958
  %v3238 = vunpack.c.l.b16 %v959
  %v3239 = vunpack.c.l.b16 %v960
  %v3240 = vunpack.c.l.b16 %v961
  %v3241 = vunpack.c.l.b16 %v962
  %v3242 = vunpack.c.l.b16 %v963
  %v3243 = vunpack.c.l.b16 %v964
  %v3244 = vunpack.c.l.b16 %v965
  %v3245 = vunpack.c.l.b16 %v966
  %v3246 = vunpack.c.l.b16 %v967
  %v3247 = vunpack.c.l.b16 %v968
  %v3248 = vunpack.c.l.b16 %v969
  %v3249 = vunpack.c.l.b16 %v970
  %v3250 = vunpack.c.l.b16 %v971
  %v3251 = vunpack.c.l.b16 %v972
  %v3252 = vunpack.c.l.b16 %v973
  %v3253 = vunpack.c.l.b16 %v974
  %v3254 = vunpack.c.l.b16 %v975
  %v3255 = vunpack.c.l.b16 %v976
  %v3256 = vunpack.c.l.b16 %v977
  %v3257 = vunpack.c.l.b16 %v978
  %v3258 = vunpack.c.l.b16 %v979
  %v3259 = vunpack.c.l.b16 %v980
  %v3260 = vunpack.c.l.b16 %v981
  %v3261 = vunpack.c.l.b16 %v982
  %v3262 = vunpack.c.l.b16 %v983
  %v3263 = vunpack.c.l.b16 %v984
  %v3264 = vunpack.c.l.b16 %v985
  %v3265 = vunpack.c.l.b16 %v986
  %v3266 = vunpack.c.l.b16 %v987
  %v3267 = vunpack.c.l.b16 %v988
  %v3268 = vunpack.c.l.b16 %v989
  %v3269 = vunpack.c.l.b16 %v990
  %v3270 = vunpack.c.l.b16 %v991
  %v3271 = vunpack.c.l.b16 %v992
  %v3272 = vunpack.c.l.b16 %v993
  %v3273 = vunpack.c.l.b16 %v994
  %v3274 = vunpack.c.l.b16 %v995
  %v3275 = vunpack.c.l.b16 %v996
  %v3276 = vunpack.c.l.b16 %v997
  %v3277 = vunpack.c.l.b16 %v998
  %v3278 = vunpack.c.l.b16 %v999
  %v3279 = vunpack.c.l.b16 %v1000
  %v3280 = vunpack.c.l.b16 %v1001
  %v3281 = vunpack.c.l.b16 %v1002
  %v3282 = vunpack.c.l.b16 %v1003
  %v3283 = vunpack.c.l.b16 %v1004
  %v3284 = vunpack.c.l.b16 %v1005
  %v3285 = vunpack.c.l.b16 %v1006
  %v3286 = vunpack.c.l.b16 %v1007
  %v3287 = vunpack.c.l.b16 %v1008
  %v3288 = vunpack.c.l.b16 %v1009
  %v3289 = vunpack.c.l.b16 %v1010
  %v3290 = vunpack.c.l.b16 %v1011
  %v3291 = vunpack.c.l.b16 %v1012
  %v3292 = vunpack.c.l.b16 %v1013
  %v3293 = vunpack.c.l.b16 %v1014
  %v3294 = vunpack.c.l.b16 %v1015
  %v3295 = vunpack.c.l.b16 %v1016
  %v3296 = vunpack.c.l.b16 %v1017
  %v3297 = vunpack.c.l.b16 %v1018
  %v3298 = vunpack.c.l.b16 %v1019
  %v3299 = vunpack.c.l.b16 %v1020
  %v3300 = vunpack.c.l.b16 %v1021
  %v3301 = vunpack.c.l.b16 %v1022
  %v3302 = vunpack.c.l.b16 %v1023
  %v3303 = vunpack.c.l.b16 %v1024
  %v3304 = vunpack.c.l.b16 %v1025
  %v3305 = vunpack.c.l.b16 %v1026
  %v3306 = vunpack.c.l.b16 %v1027
  %v3307 = vunpack.c.l.b16 %v1028
  %v3308 = vunpack.c.l.b16 %v1029
  %v3309 = vunpack.c.l.b16 %v1030
  %v3310 = vunpack.c.l.b16 %v1031
  %v3311 = vunpack.c.l.b16 %v1032
  %v3312 = vunpack.c.l.b16 %v1033
  %v3313 = vunpack.c.l.b16 %v1034
  %v3314 = vunpack.c.l.b16 %v1035
  %v3315 = vunpack.c.l.b16 %v1036
  %v3316 = vunpack.c.l.b16 %v1037
  %v3317 = vunpack.c.l.b16 %v1038
  %v3318 = vunpack.c.l.b16 %v1039
  %v3319 = vunpack.c.l.b16 %v1040
  %v3320 = vunpack.c.l.b16 %v1041
  %v3321 = vunpack.c.l.b16 %v1042
  %v3322 = vunpack.c.l.b16 %v1043
  %v3323 = vunpack.c.l.b16 %v1044
  %v3324 = vunpack.c.l.b16 %v1045
  %v3325 = vunpack.c.l.b16 %v1046
  %v3326 = vunpack.c.l.b16 %v1047
  %v3327 = vunpack.c.l.b16 %v1048
  %v3328 = vunpack.c.l.b16 %v1049
  %v3329 = vunpack.c.l.b16 %v1050
  %v3330 = vunpack.c.l.b16 %v1051
  %v3331 = vunpack.c.l.b16 %v1052
  %v3332 = vunpack.c.l.b16 %v1053
  %v3333 = vunpack.c.l.b16 %v1054
  %v3334 = vunpack.c.l.b16 %v1055
  %v3335 = vunpack.c.l.b16 %v1056
  %v3336 = vunpack.c.l.b16 %v1057
  %v3337 = vunpack.c.l.b16 %v1058
  %v3338 = vunpack.c.l.b16 %v1059
  %v3339 = vunpack.c.l.b16 %v1060
  %v3340 = vunpack.c.l.b16 %v1061
  %v3341 = vunpack.c.l.b16 %v1062
  %v3342 = vunpack.c.l.b16 %v1063
  %v3343 = vunpack.c.l.b16 %v1064
  %v3344 = vunpack.c.l.b16 %v1065
  %v3345 = vunpack.c.l.b16 %v1066
  %v3346 = vunpack.c.l.b16 %v1067
  %v3347 = vunpack.c.l.b16 %v1068
  %v3348 = vunpack.c.l.b16 %v1069
  %v3349 = vunpack.c.l.b16 %v1070
  %v3350 = vunpack.c.l.b16 %v1071
  %v3351 = vunpack.c.l.b16 %v1072
  %v3352 = vpack.c.b16 %v2329, %v2328
  %v3353 = vpack.c.b16 %v2331, %v2330
  %v3354 = vpack.c.b16 %v2333, %v2332
  %v3355 = vpack.c.b16 %v2335, %v2334
  %v3356 = vpack.c.b16 %v2337, %v2336
  %v3357 = vpack.c.b16 %v2339, %v2338
  %v3358 = vpack.c.b16 %v2341, %v2340
  %v3359 = vpack.c.b16 %v2343, %v2342
  %v3360 = vpack.c.b16 %v2345, %v2344
  %v3361 = vpack.c.b16 %v2347, %v2346
  %v3362 = vpack.c.b16 %v2349, %v2348
  %v3363 = vpack.c.b16 %v2351, %v2350
  %v3364 = vpack.c.b16 %v2353, %v2352
  %v3365 = vpack.c.b16 %v2355, %v2354
  %v3366 = vpack.c.b16 %v2357, %v2356
  %v3367 = vpack.c.b16 %v2359, %v2358
  %v3368 = vpack.c.b16 %v2361, %v2360
  %v3369 = vpack.c.b16 %v2363, %v2362
  %v3370 = vpack.c.b16 %v2365, %v2364
  %v3371 = vpack.c.b16 %v2367, %v2366
  %v3372 = vpack.c.b16 %v2369, %v2368
  %v3373 = vpack.c.b16 %v2371, %v2370
  %v3374 = vpack.c.b16 %v2373, %v2372
  %v3375 = vpack.c.b16 %v2375, %v2374
  %v3376 = vpack.c.b16 %v2377, %v2376
  %v3377 = vpack.c.b16 %v2379, %v2378
  %v3378 = vpack.c.b16 %v2381, %v2380
  %v3379 = vpack.c.b16 %v2383, %v2382
  %v3380 = vpack.c.b16 %v2385, %v2384
  %v3381 = vpack.c.b16 %v2387, %v2386
  %v3382 = vpack.c.b16 %v2389, %v2388
  %v3383 = vpack.c.b16 %v2391, %v2390
  %v3384 = vpack.c.b16 %v2393, %v2392
  %v3385 = vpack.c.b16 %v2395, %v2394
  %v3386 = vpack.c.b16 %v2397, %v2396
  %v3387 = vpack.c.b16 %v2399, %v2398
  %v3388 = vpack.c.b16 %v2401, %v2400
  %v3389 = vpack.c.b16 %v2403, %v2402
  %v3390 = vpack.c.b16 %v2405, %v2404
  %v3391 = vpack.c.b16 %v2407, %v2406
  %v3392 = vpack.c.b16 %v2409, %v2408
  %v3393 = vpack.c.b16 %v2411, %v2410
  %v3394 = vpack.c.b16 %v2413, %v2412
  %v3395 = vpack.c.b16 %v2415, %v2414
  %v3396 = vpack.c.b16 %v2417, %v2416
  %v3397 = vpack.c.b16 %v2419, %v2418
  %v3398 = vpack.c.b16 %v2421, %v2420
  %v3399 = vpack.c.b16 %v2423, %v2422
  %v3400 = vpack.c.b16 %v2425, %v2424
  %v3401 = vpack.c.b16 %v2427, %v2426
  %v3402 = vpack.c.b16 %v2429, %v2428
  %v3403 = vpack.c.b16 %v2431, %v2430
  %v3404 = vpack.c.b16 %v2433, %v2432
  %v3405 = vpack.c.b16 %v2435, %v2434
  %v3406 = vpack.c.b16 %v2437, %v2436
  %v3407 = vpack.c.b16 %v2439, %v2438
  %v3408 = vpack.c.b16 %v2441, %v2440
  %v3409 = vpack.c.b16 %v2443, %v2442
  %v3410 = vpack.c.b16 %v2445, %v2444
  %v3411 = vpack.c.b16 %v2447, %v2446
  %v3412 = vpack.c.b16 %v2449, %v2448
  %v3413 = vpack.c.b16 %v2451, %v2450
  %v3414 = vpack.c.b16 %v2453, %v2452
  %v3415 = vpack.c.b16 %v2455, %v2454
  %v3416 = vpack.c.b16 %v2457, %v2456
  %v3417 = vpack.c.b16 %v2459, %v2458
  %v3418 = vpack.c.b16 %v2461, %v2460
  %v3419 = vpack.c.b16 %v2463, %v2462
  %v3420 = vpack.c.b16 %v2465, %v2464
  %v3421 = vpack.c.b16 %v2467, %v2466
  %v3422 = vpack.c.b16 %v2469, %v2468
  %v3423 = vpack.c.b16 %v2471, %v2470
  %v3424 = vpack.c.b16 %v2473, %v2472
  %v3425 = vpack.c.b16 %v2475, %v2474
  %v3426 = vpack.c.b16 %v2477, %v2476
  %v3427 = vpack.c.b16 %v2479, %v2478
  %v3428 = vpack.c.b16 %v2481, %v2480
  %v3429 = vpack.c.b16 %v2483, %v2482
  %v3430 = vpack.c.b16 %v2485, %v2484
  %v3431 = vpack.c.b16 %v2487, %v2486
  %v3432 = vpack.c.b16 %v2489, %v2488
  %v3433 = vpack.c.b16 %v2491, %v2490
  %v3434 = vpack.c.b16 %v2493, %v2492
  %v3435 = vpack.c.b16 %v2495, %v2494
  %v3436 = vpack.c.b16 %v2497, %v2496
  %v3437 = vpack.c.b16 %v2499, %v2498
  %v3438 = vpack.c.b16 %v2501, %v2500
  %v3439 = vpack.c.b16 %v2503, %v2502
  %v3440 = vpack.c.b16 %v2505, %v2504
  %v3441 = vpack.c.b16 %v2507, %v2506
  %v3442 = vpack.c.b16 %v2509, %v2508
  %v3443 = vpack.c.b16 %v2511, %v2510
  %v3444 = vpack.c.b16 %v2513, %v2512
  %v3445 = vpack.c.b16 %v2515, %v2514
  %v3446 = vpack.c.b16 %v2517, %v2516
  %v3447 = vpack.c.b16 %v2519, %v2518
  %v3448 = vpack.c.b16 %v2521, %v2520
  %v3449 = vpack.c.b16 %v2523, %v2522
  %v3450 = vpack.c.b16 %v2525, %v2524
  %v3451 = vpack.c.b16 %v2527, %v2526
  %v3452 = vpack.c.b16 %v2529, %v2528
  %v3453 = vpack.c.b16 %v2531, %v2530
  %v3454 = vpack.c.b16 %v2533, %v2532
  %v3455 = vpack.c.b16 %v2535, %v2534
  %v3456 = vpack.c.b16 %v2537, %v2536
  %v3457 = vpack.c.b16 %v2539, %v2538
  %v3458 = vpack.c.b16 %v2541, %v2540
  %v3459 = vpack.c.b16 %v2543, %v2542
  %v3460 = vpack.c.b16 %v2545, %v2544
  %v3461 = vpack.c.b16 %v2547, %v2546
  %v3462 = vpack.c.b16 %v2549, %v2548
  %v3463 = vpack.c.b16 %v2551, %v2550
  %v3464 = vpack.c.b16 %v2553, %v2552
  %v3465 = vpack.c.b16 %v2555, %v2554
  %v3466 = vpack.c.b16 %v2557, %v2556
  %v3467 = vpack.c.b16 %v2559, %v2558
  %v3468 = vpack.c.b16 %v2561, %v2560
  %v3469 = vpack.c.b16 %v2563, %v2562
  %v3470 = vpack.c.b16 %v2565, %v2564
  %v3471 = vpack.c.b16 %v2567, %v2566
  %v3472 = vpack.c.b16 %v2569, %v2568
  %v3473 = vpack.c.b16 %v2571, %v2570
  %v3474 = vpack.c.b16 %v2573, %v2572
  %v3475 = vpack.c.b16 %v2575, %v2574
  %v3476 = vpack.c.b16 %v2577, %v2576
  %v3477 = vpack.c.b16 %v2579, %v2578
  %v3478 = vpack.c.b16 %v2581, %v2580
  %v3479 = vpack.c.b16 %v2583, %v2582
  %v3480 = vpack.c.b16 %v2585, %v2584
  %v3481 = vpack.c.b16 %v2587, %v2586
  %v3482 = vpack.c.b16 %v2589, %v2588
  %v3483 = vpack.c.b16 %v2591, %v2590
  %v3484 = vpack.c.b16 %v2593, %v2592
  %v3485 = vpack.c.b16 %v2595, %v2594
  %v3486 = vpack.c.b16 %v2597, %v2596
  %v3487 = vpack.c.b16 %v2599, %v2598
  %v3488 = vpack.c.b16 %v2601, %v2600
  %v3489 = vpack.c.b16 %v2603, %v2602
  %v3490 = vpack.c.b16 %v2605, %v2604
  %v3491 = vpack.c.b16 %v2607, %v2606
  %v3492 = vpack.c.b16 %v2609, %v2608
  %v3493 = vpack.c.b16 %v2611, %v2610
  %v3494 = vpack.c.b16 %v2613, %v2612
  %v3495 = vpack.c.b16 %v2615, %v2614
  %v3496 = vpack.c.b16 %v2617, %v2616
  %v3497 = vpack.c.b16 %v2619, %v2618
  %v3498 = vpack.c.b16 %v2621, %v2620
  %v3499 = vpack.c.b16 %v2623, %v2622
  %v3500 = vpack.c.b16 %v2625, %v2624
  %v3501 = vpack.c.b16 %v2627, %v2626
  %v3502 = vpack.c.b16 %v2629, %v2628
  %v3503 = vpack.c.b16 %v2631, %v2630
  %v3504 = vpack.c.b16 %v2633, %v2632
  %v3505 = vpack.c.b16 %v2635, %v2634
  %v3506 = vpack.c.b16 %v2637, %v2636
  %v3507 = vpack.c.b16 %v2639, %v2638
  %v3508 = vpack.c.b16 %v2641, %v2640
  %v3509 = vpack.c.b16 %v2643, %v2642
  %v3510 = vpack.c.b16 %v2645, %v2644
  %v3511 = vpack.c.b16 %v2647, %v2646
  %v3512 = vpack.c.b16 %v2649, %v2648
  %v3513 = vpack.c.b16 %v2651, %v2650
  %v3514 = vpack.c.b16 %v2653, %v2652
  %v3515 = vpack.c.b16 %v2655, %v2654
  %v3516 = vpack.c.b16 %v2657, %v2656
  %v3517 = vpack.c.b16 %v2659, %v2658
  %v3518 = vpack.c.b16 %v2661, %v2660
  %v3519 = vpack.c.b16 %v2663, %v2662
  %v3520 = vpack.c.b16 %v2665, %v2664
  %v3521 = vpack.c.b16 %v2667, %v2666
  %v3522 = vpack.c.b16 %v2669, %v2668
  %v3523 = vpack.c.b16 %v2671, %v2670
  %v3524 = vpack.c.b16 %v2673, %v2672
  %v3525 = vpack.c.b16 %v2675, %v2674
  %v3526 = vpack.c.b16 %v2677, %v2676
  %v3527 = vpack.c.b16 %v2679, %v2678
  %v3528 = vpack.c.b16 %v2681, %v2680
  %v3529 = vpack.c.b16 %v2683, %v2682
  %v3530 = vpack.c.b16 %v2685, %v2684
  %v3531 = vpack.c.b16 %v2687, %v2686
  %v3532 = vpack.c.b16 %v2689, %v2688
  %v3533 = vpack.c.b16 %v2691, %v2690
  %v3534 = vpack.c.b16 %v2693, %v2692
  %v3535 = vpack.c.b16 %v2695, %v2694
  %v3536 = vpack.c.b16 %v2697, %v2696
  %v3537 = vpack.c.b16 %v2699, %v2698
  %v3538 = vpack.c.b16 %v2701, %v2700
  %v3539 = vpack.c.b16 %v2703, %v2702
  %v3540 = vpack.c.b16 %v2705, %v2704
  %v3541 = vpack.c.b16 %v2707, %v2706
  %v3542 = vpack.c.b16 %v2709, %v2708
  %v3543 = vpack.c.b16 %v2711, %v2710
  %v3544 = vpack.c.b16 %v2713, %v2712
  %v3545 = vpack.c.b16 %v2715, %v2714
  %v3546 = vpack.c.b16 %v2717, %v2716
  %v3547 = vpack.c.b16 %v2719, %v2718
  %v3548 = vpack.c.b16 %v2721, %v2720
  %v3549 = vpack.c.b16 %v2723, %v2722
  %v3550 = vpack.c.b16 %v2725, %v2724
  %v3551 = vpack.c.b16 %v2727, %v2726
  %v3552 = vpack.c.b16 %v2729, %v2728
  %v3553 = vpack.c.b16 %v2731, %v2730
  %v3554 = vpack.c.b16 %v2733, %v2732
  %v3555 = vpack.c.b16 %v2735, %v2734
  %v3556 = vpack.c.b16 %v2737, %v2736
  %v3557 = vpack.c.b16 %v2739, %v2738
  %v3558 = vpack.c.b16 %v2741, %v2740
  %v3559 = vpack.c.b16 %v2743, %v2742
  %v3560 = vpack.c.b16 %v2745, %v2744
  %v3561 = vpack.c.b16 %v2747, %v2746
  %v3562 = vpack.c.b16 %v2749, %v2748
  %v3563 = vpack.c.b16 %v2751, %v2750
  %v3564 = vpack.c.b16 %v2753, %v2752
  %v3565 = vpack.c.b16 %v2755, %v2754
  %v3566 = vpack.c.b16 %v2757, %v2756
  %v3567 = vpack.c.b16 %v2759, %v2758
  %v3568 = vpack.c.b16 %v2761, %v2760
  %v3569 = vpack.c.b16 %v2763, %v2762
  %v3570 = vpack.c.b16 %v2765, %v2764
  %v3571 = vpack.c.b16 %v2767, %v2766
  %v3572 = vpack.c.b16 %v2769, %v2768
  %v3573 = vpack.c.b16 %v2771, %v2770
  %v3574 = vpack.c.b16 %v2773, %v2772
  %v3575 = vpack.c.b16 %v2775, %v2774
  %v3576 = vpack.c.b16 %v2777, %v2776
  %v3577 = vpack.c.b16 %v2779, %v2778
  %v3578 = vpack.c.b16 %v2781, %v2780
  %v3579 = vpack.c.b16 %v2783, %v2782
  %v3580 = vpack.c.b16 %v2785, %v2784
  %v3581 = vpack.c.b16 %v2787, %v2786
  %v3582 = vpack.c.b16 %v2789, %v2788
  %v3583 = vpack.c.b16 %v2791, %v2790
  %v3584 = vpack.c.b16 %v2793, %v2792
  %v3585 = vpack.c.b16 %v2795, %v2794
  %v3586 = vpack.c.b16 %v2797, %v2796
  %v3587 = vpack.c.b16 %v2799, %v2798
  %v3588 = vpack.c.b16 %v2801, %v2800
  %v3589 = vpack.c.b16 %v2803, %v2802
  %v3590 = vpack.c.b16 %v2805, %v2804
  %v3591 = vpack.c.b16 %v2807, %v2806
  %v3592 = vpack.c.b16 %v2809, %v2808
  %v3593 = vpack.c.b16 %v2811, %v2810
  %v3594 = vpack.c.b16 %v2813, %v2812
  %v3595 = vpack.c.b16 %v2815, %v2814
  %v3596 = vpack.c.b16 %v2817, %v2816
  %v3597 = vpack.c.b16 %v2819, %v2818
  %v3598 = vpack.c.b16 %v2821, %v2820
  %v3599 = vpack.c.b16 %v2823, %v2822
  %v3600 = vpack.c.b16 %v2825, %v2824
  %v3601 = vpack.c.b16 %v2827, %v2826
  %v3602 = vpack.c.b16 %v2829, %v2828
  %v3603 = vpack.c.b16 %v2831, %v2830
  %v3604 = vpack.c.b16 %v2833, %v2832
  %v3605 = vpack.c.b16 %v2835, %v2834
  %v3606 = vpack.c.b16 %v2837, %v2836
  %v3607 = vpack.c.b16 %v2839, %v2838
  %v3608 = vpack.c.b16 %v2841, %v2840
  %v3609 = vpack.c.b16 %v2843, %v2842
  %v3610 = vpack.c.b16 %v2845, %v2844
  %v3611 = vpack.c.b16 %v2847, %v2846
  %v3612 = vpack.c.b16 %v2849, %v2848
  %v3613 = vpack.c.b16 %v2851, %v2850
  %v3614 = vpack.c.b16 %v2853, %v2852
  %v3615 = vpack.c.b16 %v2855, %v2854
  %v3616 = vpack.c.b16 %v2857, %v2856
  %v3617 = vpack.c.b16 %v2859, %v2858
  %v3618 = vpack.c.b16 %v2861, %v2860
  %v3619 = vpack.c.b16 %v2863, %v2862
  %v3620 = vpack.c.b16 %v2865, %v2864
  %v3621 = vpack.c.b16 %v2867, %v2866
  %v3622 = vpack.c.b16 %v2869, %v2868
  %v3623 = vpack.c.b16 %v2871, %v2870
  %v3624 = vpack.c.b16 %v2873, %v2872
  %v3625 = vpack.c.b16 %v2875, %v2874
  %v3626 = vpack.c.b16 %v2877, %v2876
  %v3627 = vpack.c.b16 %v2879, %v2878
  %v3628 = vpack.c.b16 %v2881, %v2880
  %v3629 = vpack.c.b16 %v2883, %v2882
  %v3630 = vpack.c.b16 %v2885, %v2884
  %v3631 = vpack.c.b16 %v2887, %v2886
  %v3632 = vpack.c.b16 %v2889, %v2888
  %v3633 = vpack.c.b16 %v2891, %v2890
  %v3634 = vpack.c.b16 %v2893, %v2892
  %v3635 = vpack.c.b16 %v2895, %v2894
  %v3636 = vpack.c.b16 %v2897, %v2896
  %v3637 = vpack.c.b16 %v2899, %v2898
  %v3638 = vpack.c.b16 %v2901, %v2900
  %v3639 = vpack.c.b16 %v2903, %v2902
  %v3640 = vpack.c.b16 %v2905, %v2904
  %v3641 = vpack.c.b16 %v2907, %v2906
  %v3642 = vpack.c.b16 %v2909, %v2908
  %v3643 = vpack.c.b16 %v2911, %v2910
  %v3644 = vpack.c.b16 %v2913, %v2912
  %v3645 = vpack.c.b16 %v2915, %v2914
  %v3646 = vpack.c.b16 %v2917, %v2916
  %v3647 = vpack.c.b16 %v2919, %v2918
  %v3648 = vpack.c.b16 %v2921, %v2920
  %v3649 = vpack.c.b16 %v2923, %v2922
  %v3650 = vpack.c.b16 %v2925, %v2924
  %v3651 = vpack.c.b16 %v2927, %v2926
  %v3652 = vpack.c.b16 %v2929, %v2928
  %v3653 = vpack.c.b16 %v2931, %v2930
  %v3654 = vpack.c.b16 %v2933, %v2932
  %v3655 = vpack.c.b16 %v2935, %v2934
  %v3656 = vpack.c.b16 %v2937, %v2936
  %v3657 = vpack.c.b16 %v2939, %v2938
  %v3658 = vpack.c.b16 %v2941, %v2940
  %v3659 = vpack.c.b16 %v2943, %v2942
  %v3660 = vpack.c.b16 %v2945, %v2944
  %v3661 = vpack.c.b16 %v2947, %v2946
  %v3662 = vpack.c.b16 %v2949, %v2948
  %v3663 = vpack.c.b16 %v2951, %v2950
  %v3664 = vpack.c.b16 %v2953, %v2952
  %v3665 = vpack.c.b16 %v2955, %v2954
  %v3666 = vpack.c.b16 %v2957, %v2956
  %v3667 = vpack.c.b16 %v2959, %v2958
  %v3668 = vpack.c.b16 %v2961, %v2960
  %v3669 = vpack.c.b16 %v2963, %v2962
  %v3670 = vpack.c.b16 %v2965, %v2964
  %v3671 = vpack.c.b16 %v2967, %v2966
  %v3672 = vpack.c.b16 %v2969, %v2968
  %v3673 = vpack.c.b16 %v2971, %v2970
  %v3674 = vpack.c.b16 %v2973, %v2972
  %v3675 = vpack.c.b16 %v2975, %v2974
  %v3676 = vpack.c.b16 %v2977, %v2976
  %v3677 = vpack.c.b16 %v2979, %v2978
  %v3678 = vpack.c.b16 %v2981, %v2980
  %v3679 = vpack.c.b16 %v2983, %v2982
  %v3680 = vpack.c.b16 %v2985, %v2984
  %v3681 = vpack.c.b16 %v2987, %v2986
  %v3682 = vpack.c.b16 %v2989, %v2988
  %v3683 = vpack.c.b16 %v2991, %v2990
  %v3684 = vpack.c.b16 %v2993, %v2992
  %v3685 = vpack.c.b16 %v2995, %v2994
  %v3686 = vpack.c.b16 %v2997, %v2996
  %v3687 = vpack.c.b16 %v2999, %v2998
  %v3688 = vpack.c.b16 %v3001, %v3000
  %v3689 = vpack.c.b16 %v3003, %v3002
  %v3690 = vpack.c.b16 %v3005, %v3004
  %v3691 = vpack.c.b16 %v3007, %v3006
  %v3692 = vpack.c.b16 %v3009, %v3008
  %v3693 = vpack.c.b16 %v3011, %v3010
  %v3694 = vpack.c.b16 %v3013, %v3012
  %v3695 = vpack.c.b16 %v3015, %v3014
  %v3696 = vpack.c.b16 %v3017, %v3016
  %v3697 = vpack.c.b16 %v3019, %v3018
  %v3698 = vpack.c.b16 %v3021, %v3020
  %v3699 = vpack.c.b16 %v3023, %v3022
  %v3700 = vpack.c.b16 %v3025, %v3024
  %v3701 = vpack.c.b16 %v3027, %v3026
  %v3702 = vpack.c.b16 %v3029, %v3028
  %v3703 = vpack.c.b16 %v3031, %v3030
  %v3704 = vpack.c.b16 %v3033, %v3032
  %v3705 = vpack.c.b16 %v3035, %v3034
  %v3706 = vpack.c.b16 %v3037, %v3036
  %v3707 = vpack.c.b16 %v3039, %v3038
  %v3708 = vpack.c.b16 %v3041, %v3040
  %v3709 = vpack.c.b16 %v3043, %v3042
  %v3710 = vpack.c.b16 %v3045, %v3044
  %v3711 = vpack.c.b16 %v3047, %v3046
  %v3712 = vpack.c.b16 %v3049, %v3048
  %v3713 = vpack.c.b16 %v3051, %v3050
  %v3714 = vpack.c.b16 %v3053, %v3052
  %v3715 = vpack.c.b16 %v3055, %v3054
  %v3716 = vpack.c.b16 %v3057, %v3056
  %v3717 = vpack.c.b16 %v3059, %v3058
  %v3718 = vpack.c.b16 %v3061, %v3060
  %v3719 = vpack.c.b16 %v3063, %v3062
  %v3720 = vpack.c.b16 %v3065, %v3064
  %v3721 = vpack.c.b16 %v3067, %v3066
  %v3722 = vpack.c.b16 %v3069, %v3068
  %v3723 = vpack.c.b16 %v3071, %v3070
  %v3724 = vpack.c.b16 %v3073, %v3072
  %v3725 = vpack.c.b16 %v3075, %v3074
  %v3726 = vpack.c.b16 %v3077, %v3076
  %v3727 = vpack.c.b16 %v3079, %v3078
  %v3728 = vpack.c.b16 %v3081, %v3080
  %v3729 = vpack.c.b16 %v3083, %v3082
  %v3730 = vpack.c.b16 %v3085, %v3084
  %v3731 = vpack.c.b16 %v3087, %v3086
  %v3732 = vpack.c.b16 %v3089, %v3088
  %v3733 = vpack.c.b16 %v3091, %v3090
  %v3734 = vpack.c.b16 %v3093, %v3092
  %v3735 = vpack.c.b16 %v3095, %v3094
  %v3736 = vpack.c.b16 %v3097, %v3096
  %v3737 = vpack.c.b16 %v3099, %v3098
  %v3738 = vpack.c.b16 %v3101, %v3100
  %v3739 = vpack.c.b16 %v3103, %v3102
  %v3740 = vpack.c.b16 %v3105, %v3104
  %v3741 = vpack.c.b16 %v3107, %v3106
  %v3742 = vpack.c.b16 %v3109, %v3108
  %v3743 = vpack.c.b16 %v3111, %v3110
  %v3744 = vpack.c.b16 %v3113, %v3112
  %v3745 = vpack.c.b16 %v3115, %v3114
  %v3746 = vpack.c.b16 %v3117, %v3116
  %v3747 = vpack.c.b16 %v3119, %v3118
  %v3748 = vpack.c.b16 %v3121, %v3120
  %v3749 = vpack.c.b16 %v3123, %v3122
  %v3750 = vpack.c.b16 %v3125, %v3124
  %v3751 = vpack.c.b16 %v3127, %v3126
  %v3752 = vpack.c.b16 %v3129, %v3128
  %v3753 = vpack.c.b16 %v3131, %v3130
  %v3754 = vpack.c.b16 %v3133, %v3132
  %v3755 = vpack.c.b16 %v3135, %v3134
  %v3756 = vpack.c.b16 %v3137, %v3136
  %v3757 = vpack.c.b16 %v3139, %v3138
  %v3758 = vpack.c.b16 %v3141, %v3140
  %v3759 = vpack.c.b16 %v3143, %v3142
  %v3760 = vpack.c.b16 %v3145, %v3144
  %v3761 = vpack.c.b16 %v3147, %v3146
  %v3762 = vpack.c.b16 %v3149, %v3148
  %v3763 = vpack.c.b16 %v3151, %v3150
  %v3764 = vpack.c.b16 %v3153, %v3152
  %v3765 = vpack.c.b16 %v3155, %v3154
  %v3766 = vpack.c.b16 %v3157, %v3156
  %v3767 = vpack.c.b16 %v3159, %v3158
  %v3768 = vpack.c.b16 %v3161, %v3160
  %v3769 = vpack.c.b16 %v3163, %v3162
  %v3770 = vpack.c.b16 %v3165, %v3164
  %v3771 = vpack.c.b16 %v3167, %v3166
  %v3772 = vpack.c.b16 %v3169, %v3168
  %v3773 = vpack.c.b16 %v3171, %v3170
  %v3774 = vpack.c.b16 %v3173, %v3172
  %v3775 = vpack.c.b16 %v3175, %v3174
  %v3776 = vpack.c.b16 %v3177, %v3176
  %v3777 = vpack.c.b16 %v3179, %v3178
  %v3778 = vpack.c.b16 %v3181, %v3180
  %v3779 = vpack.c.b16 %v3183, %v3182
  %v3780 = vpack.c.b16 %v3185, %v3184
  %v3781 = vpack.c.b16 %v3187, %v3186
  %v3782 = vpack.c.b16 %v3189, %v3188
  %v3783 = vpack.c.b16 %v3191, %v3190
  %v3784 = vpack.c.b16 %v3193, %v3192
  %v3785 = vpack.c.b16 %v3195, %v3194
  %v3786 = vpack.c.b16 %v3197, %v3196
  %v3787 = vpack.c.b16 %v3199, %v3198
  %v3788 = vpack.c.b16 %v3201, %v3200
  %v3789 = vpack.c.b16 %v3203, %v3202
  %v3790 = vpack.c.b16 %v3205, %v3204
  %v3791 = vpack.c.b16 %v3207, %v3206
  %v3792 = vpack.c.b16 %v3209, %v3208
  %v3793 = vpack.c.b16 %v3211, %v3210
  %v3794 = vpack.c.b16 %v3213, %v3212
  %v3795 = vpack.c.b16 %v3215, %v3214
  %v3796 = vpack.c.b16 %v3217, %v3216
  %v3797 = vpack.c.b16 %v3219, %v3218
  %v3798 = vpack.c.b16 %v3221, %v3220
  %v3799 = vpack.c.b16 %v3223, %v3222
  %v3800 = vpack.c.b16 %v3225, %v3224
  %v3801 = vpack.c.b16 %v3227, %v3226
  %v3802 = vpack.c.b16 %v3229, %v3228
  %v3803 = vpack.c.b16 %v3231, %v3230
  %v3804 = vpack.c.b16 %v3233, %v3232
  %v3805 = vpack.c.b16 %v3235, %v3234
  %v3806 = vpack.c.b16 %v3237, %v3236
  %v3807 = vpack.c.b16 %v3239, %v3238
  %v3808 = vpack.c.b16 %v3241, %v3240
  %v3809 = vpack.c.b16 %v3243, %v3242
  %v3810 = vpack.c.b16 %v3245, %v3244
  %v3811 = vpack.c.b16 %v3247, %v3246
  %v3812 = vpack.c.b16 %v3249, %v3248
  %v3813 = vpack.c.b16 %v3251, %v3250
  %v3814 = vpack.c.b16 %v3253, %v3252
  %v3815 = vpack.c.b16 %v3255, %v3254
  %v3816 = vpack.c.b16 %v3257, %v3256
  %v3817 = vpack.c.b16 %v3259, %v3258
  %v3818 = vpack.c.b16 %v3261, %v3260
  %v3819 = vpack.c.b16 %v3263, %v3262
  %v3820 = vpack.c.b16 %v3265, %v3264
  %v3821 = vpack.c.b16 %v3267, %v3266
  %v3822 = vpack.c.b16 %v3269, %v3268
  %v3823 = vpack.c.b16 %v3271, %v3270
  %v3824 = vpack.c.b16 %v3273, %v3272
  %v3825 = vpack.c.b16 %v3275, %v3274
  %v3826 = vpack.c.b16 %v3277, %v3276
  %v3827 = vpack.c.b16 %v3279, %v3278
  %v3828 = vpack.c.b16 %v3281, %v3280
  %v3829 = vpack.c.b16 %v3283, %v3282
  %v3830 = vpack.c.b16 %v3285, %v3284
  %v3831 = vpack.c.b16 %v3287, %v3286
  %v3832 = vpack.c.b16 %v3289, %v3288
  %v3833 = vpack.c.b16 %v3291, %v3290
  %v3834 = vpack.c.b16 %v3293, %v3292
  %v3835 = vpack.c.b16 %v3295, %v3294
  %v3836 = vpack.c.b16 %v3297, %v3296
  %v3837 = vpack.c.b16 %v3299, %v3298
  %v3838 = vpack.c.b16 %v3301, %v3300
  %v3839 = vpack.c.b16 %v3303, %v3302
  %v3840 = vpack.c.b16 %v3305, %v3304
  %v3841 = vpack.c.b16 %v3307, %v3306
  %v3842 = vpack.c.b16 %v3309, %v3308
  %v3843 = vpack.c.b16 %v3311, %v3310
  %v3844 = vpack.c.b16 %v3313, %v3312
  %v3845 = vpack.c.b16 %v3315, %v3314
  %v3846 = vpack.c.b16 %v3317, %v3316
  %v3847 = vpack.c.b16 %v3319, %v3318
  %v3848 = vpack.c.b16 %v3321, %v3320
  %v3849 = vpack.c.b16 %v3323, %v3322
  %v3850 = vpack.c.b16 %v3325, %v3324
  %v3851 = vpack.c.b16 %v3327, %v3326
  %v3852 = vpack.c.b16 %v3329, %v3328
  %v3853 = vpack.c.b16 %v3331, %v3330
  %v3854 = vpack.c.b16 %v3333, %v3332
  %v3855 = vpack.c.b16 %v3335, %v3334
  %v3856 = vpack.c.b16 %v3337, %v3336
  %v3857 = vpack.c.b16 %v3339, %v3338
  %v3858 = vpack.c.b16 %v3341, %v3340
  %v3859 = vpack.c.b16 %v3343, %v3342
  %v3860 = vpack.c.b16 %v3345, %v3344
  %v3861 = vpack.c.b16 %v3347, %v3346
  %v3862 = vpack.c.b16 %v3349, %v3348
  %v3863 = vpack.c.b16 %v3351, %v3350
  %4376 = vmatprep.subr.bf16.mxu0 0
  %4377 = vmatpush1.bf16.msra.mxu0 %v3352
  %4378 = vmatprep.subr.bf16.mxu0 0
  %4379 = vmatpush1.bf16.msra.mxu0 %v3353
  %4380 = vmatprep.subr.bf16.mxu0 0
  %4381 = vmatpush1.bf16.msra.mxu0 %v3354
  %4382 = vmatprep.subr.bf16.mxu0 0
  %4383 = vmatpush1.bf16.msra.mxu0 %v3355
  %4384 = vmatprep.subr.bf16.mxu0 0
  %4385 = vmatpush1.bf16.msra.mxu0 %v3356
  %4386 = vmatprep.subr.bf16.mxu0 0
  %4387 = vmatpush1.bf16.msra.mxu0 %v3357
  %4388 = vmatprep.subr.bf16.mxu0 0
  %4389 = vmatpush1.bf16.msra.mxu0 %v3358
  %4390 = vmatprep.subr.bf16.mxu0 0
  %4391 = vmatpush1.bf16.msra.mxu0 %v3359
  %4392 = vmatprep.subr.bf16.mxu0 0
  %4393 = vmatpush1.bf16.msra.mxu0 %v3360
  %4394 = vmatprep.subr.bf16.mxu0 0
  %4395 = vmatpush1.bf16.msra.mxu0 %v3361
  %4396 = vmatprep.subr.bf16.mxu0 0
  %4397 = vmatpush1.bf16.msra.mxu0 %v3362
  %4398 = vmatprep.subr.bf16.mxu0 0
  %4399 = vmatpush1.bf16.msra.mxu0 %v3363
  %4400 = vmatprep.subr.bf16.mxu0 0
  %4401 = vmatpush1.bf16.msra.mxu0 %v3364
  %4402 = vmatprep.subr.bf16.mxu0 0
  %4403 = vmatpush1.bf16.msra.mxu0 %v3365
  %4404 = vmatprep.subr.bf16.mxu0 0
  %4405 = vmatpush1.bf16.msra.mxu0 %v3366
  %4406 = vmatprep.subr.bf16.mxu0 0
  %4407 = vmatpush1.bf16.msra.mxu0 %v3367
  %4408 = vmatprep.mubr.bf16.mxu0 %v1177
  %4409 = vmatmul.mubr.bf16.gmra.mrb[0].mxu0 %v1176
  %v4410 = vpop.f32.mrb[0].mxu0
  %v4411 = vadd.f32 %v1078, %v4410
  %v4412 = vpop.f32.mrb[0].mxu0
  %v4413 = vpop.f32.mrb[0].mxu0
  %v4414 = vpop.f32.mrb[0].mxu0
  %4415 = vdwg.mxu0
  %4416 = vmatprep.subr.bf16.mxu0 0
  %4417 = vmatpush1.bf16.msra.mxu0 %v3368
  %4418 = vmatprep.subr.bf16.mxu0 0
  %4419 = vmatpush1.bf16.msra.mxu0 %v3369
  %4420 = vmatprep.subr.bf16.mxu0 0
  %4421 = vmatpush1.bf16.msra.mxu0 %v3370
  %4422 = vmatprep.subr.bf16.mxu0 0
  %4423 = vmatpush1.bf16.msra.mxu0 %v3371
  %4424 = vmatprep.subr.bf16.mxu0 0
  %4425 = vmatpush1.bf16.msra.mxu0 %v3372
  %4426 = vmatprep.subr.bf16.mxu0 0
  %4427 = vmatpush1.bf16.msra.mxu0 %v3373
  %4428 = vmatprep.subr.bf16.mxu0 0
  %4429 = vmatpush1.bf16.msra.mxu0 %v3374
  %4430 = vmatprep.subr.bf16.mxu0 0
  %4431 = vmatpush1.bf16.msra.mxu0 %v3375
  %4432 = vmatprep.subr.bf16.mxu0 0
  %4433 = vmatpush1.bf16.msra.mxu0 %v3376
  %4434 = vmatprep.subr.bf16.mxu0 0
  %4435 = vmatpush1.bf16.msra.mxu0 %v3377
  %4436 = vmatprep.subr.bf16.mxu0 0
  %4437 = vmatpush1.bf16.msra.mxu0 %v3378
  %4438 = vmatprep.subr.bf16.mxu0 0
  %4439 = vmatpush1.bf16.msra.mxu0 %v3379
  %4440 = vmatprep.subr.bf16.mxu0 0
  %4441 = vmatpush1.bf16.msra.mxu0 %v3380
  %4442 = vmatprep.subr.bf16.mxu0 0
  %4443 = vmatpush1.bf16.msra.mxu0 %v3381
  %4444 = vmatprep.subr.bf16.mxu0 0
  %4445 = vmatpush1.bf16.msra.mxu0 %v3382
  %4446 = vmatprep.subr.bf16.mxu0 0
  %4447 = vmatpush1.bf16.msra.mxu0 %v3383
  %4448 = vmatprep.mubr.bf16.mxu0 %v1179
  %4449 = vmatmul.mubr.bf16.gmra.mrb[0].mxu0 %v1178
  %v4450 = vpop.f32.mrb[0].mxu0
  %v4451 = vadd.f32 %v4411, %v4450
  %v4452 = vpop.f32.mrb[0].mxu0
  %v4453 = vpop.f32.mrb[0].mxu0
  %v4454 = vpop.f32.mrb[0].mxu0
  %4455 = vdwg.mxu0
  %4456 = vmatprep.subr.bf16.mxu0 0
  %4457 = vmatpush1.bf16.msra.mxu0 %v3384
  %4458 = vmatprep.subr.bf16.mxu0 0
  %4459 = vmatpush1.bf16.msra.mxu0 %v3385
  %4460 = vmatprep.subr.bf16.mxu0 0
  %4461 = vmatpush1.bf16.msra.mxu0 %v3386
  %4462 = vmatprep.subr.bf16.mxu0 0
  %4463 = vmatpush1.bf16.msra.mxu0 %v3387
  %4464 = vmatprep.subr.bf16.mxu0 0
  %4465 = vmatpush1.bf16.msra.mxu0 %v3388
  %4466 = vmatprep.subr.bf16.mxu0 0
  %4467 = vmatpush1.bf16.msra.mxu0 %v3389
  %4468 = vmatprep.subr.bf16.mxu0 0
  %4469 = vmatpush1.bf16.msra.mxu0 %v3390
  %4470 = vmatprep.subr.bf16.mxu0 0
  %4471 = vmatpush1.bf16.msra.mxu0 %v3391
  %4472 = vmatprep.subr.bf16.mxu0 0
  %4473 = vmatpush1.bf16.msra.mxu0 %v3392
  %4474 = vmatprep.subr.bf16.mxu0 0
  %4475 = vmatpush1.bf16.msra.mxu0 %v3393
  %4476 = vmatprep.subr.bf16.mxu0 0
  %4477 = vmatpush1.bf16.msra.mxu0 %v3394
  %4478 = vmatprep.subr.bf16.mxu0 0
  %4479 = vmatpush1.bf16.msra.mxu0 %v3395
  %4480 = vmatprep.subr.bf16.mxu0 0
  %4481 = vmatpush1.bf16.msra.mxu0 %v3396
  %4482 = vmatprep.subr.bf16.mxu0 0
  %4483 = vmatpush1.bf16.msra.mxu0 %v3397
  %4484 = vmatprep.subr.bf16.mxu0 0
  %4485 = vmatpush1.bf16.msra.mxu0 %v3398
  %4486 = vmatprep.subr.bf16.mxu0 0
  %4487 = vmatpush1.bf16.msra.mxu0 %v3399
  %4488 = vmatprep.mubr.bf16.mxu0 %v1181
  %4489 = vmatmul.mubr.bf16.gmra.mrb[0].mxu0 %v1180
  %v4490 = vpop.f32.mrb[0].mxu0
  %v4491 = vadd.f32 %v4451, %v4490
  %v4492 = vpop.f32.mrb[0].mxu0
  %v4493 = vpop.f32.mrb[0].mxu0
  %v4494 = vpop.f32.mrb[0].mxu0
  %4495 = vdwg.mxu0
  %4496 = vmatprep.subr.bf16.mxu0 0
  %4497 = vmatpush1.bf16.msra.mxu0 %v3400
  %4498 = vmatprep.subr.bf16.mxu0 0
  %4499 = vmatpush1.bf16.msra.mxu0 %v3401
  %4500 = vmatprep.subr.bf16.mxu0 0
  %4501 = vmatpush1.bf16.msra.mxu0 %v3402
  %4502 = vmatprep.subr.bf16.mxu0 0
  %4503 = vmatpush1.bf16.msra.mxu0 %v3403
  %4504 = vmatprep.subr.bf16.mxu0 0
  %4505 = vmatpush1.bf16.msra.mxu0 %v3404
  %4506 = vmatprep.subr.bf16.mxu0 0
  %4507 = vmatpush1.bf16.msra.mxu0 %v3405
  %4508 = vmatprep.subr.bf16.mxu0 0
  %4509 = vmatpush1.bf16.msra.mxu0 %v3406
  %4510 = vmatprep.subr.bf16.mxu0 0
  %4511 = vmatpush1.bf16.msra.mxu0 %v3407
  %4512 = vmatprep.subr.bf16.mxu0 0
  %4513 = vmatpush1.bf16.msra.mxu0 %v3408
  %4514 = vmatprep.subr.bf16.mxu0 0
  %4515 = vmatpush1.bf16.msra.mxu0 %v3409
  %4516 = vmatprep.subr.bf16.mxu0 0
  %4517 = vmatpush1.bf16.msra.mxu0 %v3410
  %4518 = vmatprep.subr.bf16.mxu0 0
  %4519 = vmatpush1.bf16.msra.mxu0 %v3411
  %4520 = vmatprep.subr.bf16.mxu0 0
  %4521 = vmatpush1.bf16.msra.mxu0 %v3412
  %4522 = vmatprep.subr.bf16.mxu0 0
  %4523 = vmatpush1.bf16.msra.mxu0 %v3413
  %4524 = vmatprep.subr.bf16.mxu0 0
  %4525 = vmatpush1.bf16.msra.mxu0 %v3414
  %4526 = vmatprep.subr.bf16.mxu0 0
  %4527 = vmatpush1.bf16.msra.mxu0 %v3415
  %4528 = vmatprep.mubr.bf16.mxu0 %v1183
  %4529 = vmatmul.mubr.bf16.gmra.mrb[0].mxu0 %v1182
  %v4530 = vpop.f32.mrb[0].mxu0
  %v4531 = vadd.f32 %v4491, %v4530
  %v4532 = vpop.f32.mrb[0].mxu0
  %v4533 = vpop.f32.mrb[0].mxu0
  %v4534 = vpop.f32.mrb[0].mxu0
  %4535 = vdwg.mxu0
  %4536 = vmatprep.subr.bf16.mxu0 0
  %4537 = vmatpush1.bf16.msra.mxu0 %v3416
  %4538 = vmatprep.subr.bf16.mxu0 0
  %4539 = vmatpush1.bf16.msra.mxu0 %v3417
  %4540 = vmatprep.subr.bf16.mxu0 0
  %4541 = vmatpush1.bf16.msra.mxu0 %v3418
  %4542 = vmatprep.subr.bf16.mxu0 0
  %4543 = vmatpush1.bf16.msra.mxu0 %v3419
  %4544 = vmatprep.subr.bf16.mxu0 0
  %4545 = vmatpush1.bf16.msra.mxu0 %v3420
  %4546 = vmatprep.subr.bf16.mxu0 0
  %4547 = vmatpush1.bf16.msra.mxu0 %v3421
  %4548 = vmatprep.subr.bf16.mxu0 0
  %4549 = vmatpush1.bf16.msra.mxu0 %v3422
  %4550 = vmatprep.subr.bf16.mxu0 0
  %4551 = vmatpush1.bf16.msra.mxu0 %v3423
  %4552 = vmatprep.subr.bf16.mxu0 0
  %4553 = vmatpush1.bf16.msra.mxu0 %v3424
  %4554 = vmatprep.subr.bf16.mxu0 0
  %4555 = vmatpush1.bf16.msra.mxu0 %v3425
  %4556 = vmatprep.subr.bf16.mxu0 0
  %4557 = vmatpush1.bf16.msra.mxu0 %v3426
  %4558 = vmatprep.subr.bf16.mxu0 0
  %4559 = vmatpush1.bf16.msra.mxu0 %v3427
  %4560 = vmatprep.subr.bf16.mxu0 0
  %4561 = vmatpush1.bf16.msra.mxu0 %v3428
  %4562 = vmatprep.subr.bf16.mxu0 0
  %4563 = vmatpush1.bf16.msra.mxu0 %v3429
  %4564 = vmatprep.subr.bf16.mxu0 0
  %4565 = vmatpush1.bf16.msra.mxu0 %v3430
  %4566 = vmatprep.subr.bf16.mxu0 0
  %4567 = vmatpush1.bf16.msra.mxu0 %v3431
  %4568 = vmatprep.mubr.bf16.mxu0 %v1185
  %4569 = vmatmul.mubr.bf16.gmra.mrb[0].mxu0 %v1184
  %v4570 = vpop.f32.mrb[0].mxu0
  %v4571 = vadd.f32 %v4531, %v4570
  %v4572 = vpop.f32.mrb[0].mxu0
  %v4573 = vpop.f32.mrb[0].mxu0
  %v4574 = vpop.f32.mrb[0].mxu0
  %4575 = vdwg.mxu0
  %4576 = vmatprep.subr.bf16.mxu0 0
  %4577 = vmatpush1.bf16.msra.mxu0 %v3432
  %4578 = vmatprep.subr.bf16.mxu0 0
  %4579 = vmatpush1.bf16.msra.mxu0 %v3433
  %4580 = vmatprep.subr.bf16.mxu0 0
  %4581 = vmatpush1.bf16.msra.mxu0 %v3434
  %4582 = vmatprep.subr.bf16.mxu0 0
  %4583 = vmatpush1.bf16.msra.mxu0 %v3435
  %4584 = vmatprep.subr.bf16.mxu0 0
  %4585 = vmatpush1.bf16.msra.mxu0 %v3436
  %4586 = vmatprep.subr.bf16.mxu0 0
  %4587 = vmatpush1.bf16.msra.mxu0 %v3437
  %4588 = vmatprep.subr.bf16.mxu0 0
  %4589 = vmatpush1.bf16.msra.mxu0 %v3438
  %4590 = vmatprep.subr.bf16.mxu0 0
  %4591 = vmatpush1.bf16.msra.mxu0 %v3439
  %4592 = vmatprep.subr.bf16.mxu0 0
  %4593 = vmatpush1.bf16.msra.mxu0 %v3440
  %4594 = vmatprep.subr.bf16.mxu0 0
  %4595 = vmatpush1.bf16.msra.mxu0 %v3441
  %4596 = vmatprep.subr.bf16.mxu0 0
  %4597 = vmatpush1.bf16.msra.mxu0 %v3442
  %4598 = vmatprep.subr.bf16.mxu0 0
  %4599 = vmatpush1.bf16.msra.mxu0 %v3443
  %4600 = vmatprep.subr.bf16.mxu0 0
  %4601 = vmatpush1.bf16.msra.mxu0 %v3444
  %4602 = vmatprep.subr.bf16.mxu0 0
  %4603 = vmatpush1.bf16.msra.mxu0 %v3445
  %4604 = vmatprep.subr.bf16.mxu0 0
  %4605 = vmatpush1.bf16.msra.mxu0 %v3446
  %4606 = vmatprep.subr.bf16.mxu0 0
  %4607 = vmatpush1.bf16.msra.mxu0 %v3447
  %4608 = vmatprep.mubr.bf16.mxu0 %v1187
  %4609 = vmatmul.mubr.bf16.gmra.mrb[0].mxu0 %v1186
  %v4610 = vpop.f32.mrb[0].mxu0
  %v4611 = vadd.f32 %v4571, %v4610
  %v4612 = vpop.f32.mrb[0].mxu0
  %v4613 = vpop.f32.mrb[0].mxu0
  %v4614 = vpop.f32.mrb[0].mxu0
  %4615 = vdwg.mxu0
  %4616 = vmatprep.subr.bf16.mxu0 0
  %4617 = vmatpush1.bf16.msra.mxu0 %v3448
  %4618 = vmatprep.subr.bf16.mxu0 0
  %4619 = vmatpush1.bf16.msra.mxu0 %v3449
  %4620 = vmatprep.subr.bf16.mxu0 0
  %4621 = vmatpush1.bf16.msra.mxu0 %v3450
  %4622 = vmatprep.subr.bf16.mxu0 0
  %4623 = vmatpush1.bf16.msra.mxu0 %v3451
  %4624 = vmatprep.subr.bf16.mxu0 0
  %4625 = vmatpush1.bf16.msra.mxu0 %v3452
  %4626 = vmatprep.subr.bf16.mxu0 0
  %4627 = vmatpush1.bf16.msra.mxu0 %v3453
  %4628 = vmatprep.subr.bf16.mxu0 0
  %4629 = vmatpush1.bf16.msra.mxu0 %v3454
  %4630 = vmatprep.subr.bf16.mxu0 0
  %4631 = vmatpush1.bf16.msra.mxu0 %v3455
  %4632 = vmatprep.subr.bf16.mxu0 0
  %4633 = vmatpush1.bf16.msra.mxu0 %v3456
  %4634 = vmatprep.subr.bf16.mxu0 0
  %4635 = vmatpush1.bf16.msra.mxu0 %v3457
  %4636 = vmatprep.subr.bf16.mxu0 0
  %4637 = vmatpush1.bf16.msra.mxu0 %v3458
  %4638 = vmatprep.subr.bf16.mxu0 0
  %4639 = vmatpush1.bf16.msra.mxu0 %v3459
  %4640 = vmatprep.subr.bf16.mxu0 0
  %4641 = vmatpush1.bf16.msra.mxu0 %v3460
  %4642 = vmatprep.subr.bf16.mxu0 0
  %4643 = vmatpush1.bf16.msra.mxu0 %v3461
  %4644 = vmatprep.subr.bf16.mxu0 0
  %4645 = vmatpush1.bf16.msra.mxu0 %v3462
  %4646 = vmatprep.subr.bf16.mxu0 0
  %4647 = vmatpush1.bf16.msra.mxu0 %v3463
  %4648 = vmatprep.mubr.bf16.mxu0 %v1189
  %4649 = vmatmul.mubr.bf16.gmra.mrb[0].mxu0 %v1188
  %v4650 = vpop.f32.mrb[0].mxu0
  %v4651 = vadd.f32 %v4611, %v4650
  %v4652 = vpop.f32.mrb[0].mxu0
  %v4653 = vpop.f32.mrb[0].mxu0
  %v4654 = vpop.f32.mrb[0].mxu0
  %4655 = vdwg.mxu0
  %4656 = vmatprep.subr.bf16.mxu0 0
  %4657 = vmatpush1.bf16.msra.mxu0 %v3464
  %4658 = vmatprep.subr.bf16.mxu0 0
  %4659 = vmatpush1.bf16.msra.mxu0 %v3465
  %4660 = vmatprep.subr.bf16.mxu0 0
  %4661 = vmatpush1.bf16.msra.mxu0 %v3466
  %4662 = vmatprep.subr.bf16.mxu0 0
  %4663 = vmatpush1.bf16.msra.mxu0 %v3467
  %4664 = vmatprep.subr.bf16.mxu0 0
  %4665 = vmatpush1.bf16.msra.mxu0 %v3468
  %4666 = vmatprep.subr.bf16.mxu0 0
  %4667 = vmatpush1.bf16.msra.mxu0 %v3469
  %4668 = vmatprep.subr.bf16.mxu0 0
  %4669 = vmatpush1.bf16.msra.mxu0 %v3470
  %4670 = vmatprep.subr.bf16.mxu0 0
  %4671 = vmatpush1.bf16.msra.mxu0 %v3471
  %4672 = vmatprep.subr.bf16.mxu0 0
  %4673 = vmatpush1.bf16.msra.mxu0 %v3472
  %4674 = vmatprep.subr.bf16.mxu0 0
  %4675 = vmatpush1.bf16.msra.mxu0 %v3473
  %4676 = vmatprep.subr.bf16.mxu0 0
  %4677 = vmatpush1.bf16.msra.mxu0 %v3474
  %4678 = vmatprep.subr.bf16.mxu0 0
  %4679 = vmatpush1.bf16.msra.mxu0 %v3475
  %4680 = vmatprep.subr.bf16.mxu0 0
  %4681 = vmatpush1.bf16.msra.mxu0 %v3476
  %4682 = vmatprep.subr.bf16.mxu0 0
  %4683 = vmatpush1.bf16.msra.mxu0 %v3477
  %4684 = vmatprep.subr.bf16.mxu0 0
  %4685 = vmatpush1.bf16.msra.mxu0 %v3478
  %4686 = vmatprep.subr.bf16.mxu0 0
  %4687 = vmatpush1.bf16.msra.mxu0 %v3479
  %4688 = vmatprep.mubr.bf16.mxu0 %v1191
  %4689 = vmatmul.mubr.bf16.gmra.mrb[0].mxu0 %v1190
  %v4690 = vpop.f32.mrb[0].mxu0
  %v4691 = vadd.f32 %v4651, %v4690
  %v4692 = vpop.f32.mrb[0].mxu0
  %v4693 = vpop.f32.mrb[0].mxu0
  %v4694 = vpop.f32.mrb[0].mxu0
  %4695 = vdwg.mxu0
  %4696 = vmatprep.subr.bf16.mxu0 0
  %4697 = vmatpush1.bf16.msra.mxu0 %v3480
  %4698 = vmatprep.subr.bf16.mxu0 0
  %4699 = vmatpush1.bf16.msra.mxu0 %v3481
  %4700 = vmatprep.subr.bf16.mxu0 0
  %4701 = vmatpush1.bf16.msra.mxu0 %v3482
  %4702 = vmatprep.subr.bf16.mxu0 0
  %4703 = vmatpush1.bf16.msra.mxu0 %v3483
  %4704 = vmatprep.subr.bf16.mxu0 0
  %4705 = vmatpush1.bf16.msra.mxu0 %v3484
  %4706 = vmatprep.subr.bf16.mxu0 0
  %4707 = vmatpush1.bf16.msra.mxu0 %v3485
  %4708 = vmatprep.subr.bf16.mxu0 0
  %4709 = vmatpush1.bf16.msra.mxu0 %v3486
  %4710 = vmatprep.subr.bf16.mxu0 0
  %4711 = vmatpush1.bf16.msra.mxu0 %v3487
  %4712 = vmatprep.subr.bf16.mxu0 0
  %4713 = vmatpush1.bf16.msra.mxu0 %v3488
  %4714 = vmatprep.subr.bf16.mxu0 0
  %4715 = vmatpush1.bf16.msra.mxu0 %v3489
  %4716 = vmatprep.subr.bf16.mxu0 0
  %4717 = vmatpush1.bf16.msra.mxu0 %v3490
  %4718 = vmatprep.subr.bf16.mxu0 0
  %4719 = vmatpush1.bf16.msra.mxu0 %v3491
  %4720 = vmatprep.subr.bf16.mxu0 0
  %4721 = vmatpush1.bf16.msra.mxu0 %v3492
  %4722 = vmatprep.subr.bf16.mxu0 0
  %4723 = vmatpush1.bf16.msra.mxu0 %v3493
  %4724 = vmatprep.subr.bf16.mxu0 0
  %4725 = vmatpush1.bf16.msra.mxu0 %v3494
  %4726 = vmatprep.subr.bf16.mxu0 0
  %4727 = vmatpush1.bf16.msra.mxu0 %v3495
  %4728 = vmatprep.mubr.bf16.mxu0 %v1193
  %4729 = vmatmul.mubr.bf16.gmra.mrb[0].mxu0 %v1192
  %v4730 = vpop.f32.mrb[0].mxu0
  %v4731 = vadd.f32 %v4691, %v4730
  %v4732 = vpop.f32.mrb[0].mxu0
  %v4733 = vpop.f32.mrb[0].mxu0
  %v4734 = vpop.f32.mrb[0].mxu0
  %4735 = vdwg.mxu0
  %4736 = vmatprep.subr.bf16.mxu0 0
  %4737 = vmatpush1.bf16.msra.mxu0 %v3496
  %4738 = vmatprep.subr.bf16.mxu0 0
  %4739 = vmatpush1.bf16.msra.mxu0 %v3497
  %4740 = vmatprep.subr.bf16.mxu0 0
  %4741 = vmatpush1.bf16.msra.mxu0 %v3498
  %4742 = vmatprep.subr.bf16.mxu0 0
  %4743 = vmatpush1.bf16.msra.mxu0 %v3499
  %4744 = vmatprep.subr.bf16.mxu0 0
  %4745 = vmatpush1.bf16.msra.mxu0 %v3500
  %4746 = vmatprep.subr.bf16.mxu0 0
  %4747 = vmatpush1.bf16.msra.mxu0 %v3501
  %4748 = vmatprep.subr.bf16.mxu0 0
  %4749 = vmatpush1.bf16.msra.mxu0 %v3502
  %4750 = vmatprep.subr.bf16.mxu0 0
  %4751 = vmatpush1.bf16.msra.mxu0 %v3503
  %4752 = vmatprep.subr.bf16.mxu0 0
  %4753 = vmatpush1.bf16.msra.mxu0 %v3504
  %4754 = vmatprep.subr.bf16.mxu0 0
  %4755 = vmatpush1.bf16.msra.mxu0 %v3505
  %4756 = vmatprep.subr.bf16.mxu0 0
  %4757 = vmatpush1.bf16.msra.mxu0 %v3506
  %4758 = vmatprep.subr.bf16.mxu0 0
  %4759 = vmatpush1.bf16.msra.mxu0 %v3507
  %4760 = vmatprep.subr.bf16.mxu0 0
  %4761 = vmatpush1.bf16.msra.mxu0 %v3508
  %4762 = vmatprep.subr.bf16.mxu0 0
  %4763 = vmatpush1.bf16.msra.mxu0 %v3509
  %4764 = vmatprep.subr.bf16.mxu0 0
  %4765 = vmatpush1.bf16.msra.mxu0 %v3510
  %4766 = vmatprep.subr.bf16.mxu0 0
  %4767 = vmatpush1.bf16.msra.mxu0 %v3511
  %4768 = vmatprep.mubr.bf16.mxu0 %v1195
  %4769 = vmatmul.mubr.bf16.gmra.mrb[0].mxu0 %v1194
  %v4770 = vpop.f32.mrb[0].mxu0
  %v4771 = vadd.f32 %v4731, %v4770
  %v4772 = vpop.f32.mrb[0].mxu0
  %v4773 = vpop.f32.mrb[0].mxu0
  %v4774 = vpop.f32.mrb[0].mxu0
  %4775 = vdwg.mxu0
  %4776 = vmatprep.subr.bf16.mxu0 0
  %4777 = vmatpush1.bf16.msra.mxu0 %v3512
  %4778 = vmatprep.subr.bf16.mxu0 0
  %4779 = vmatpush1.bf16.msra.mxu0 %v3513
  %4780 = vmatprep.subr.bf16.mxu0 0
  %4781 = vmatpush1.bf16.msra.mxu0 %v3514
  %4782 = vmatprep.subr.bf16.mxu0 0
  %4783 = vmatpush1.bf16.msra.mxu0 %v3515
  %4784 = vmatprep.subr.bf16.mxu0 0
  %4785 = vmatpush1.bf16.msra.mxu0 %v3516
  %4786 = vmatprep.subr.bf16.mxu0 0
  %4787 = vmatpush1.bf16.msra.mxu0 %v3517
  %4788 = vmatprep.subr.bf16.mxu0 0
  %4789 = vmatpush1.bf16.msra.mxu0 %v3518
  %4790 = vmatprep.subr.bf16.mxu0 0
  %4791 = vmatpush1.bf16.msra.mxu0 %v3519
  %4792 = vmatprep.subr.bf16.mxu0 0
  %4793 = vmatpush1.bf16.msra.mxu0 %v3520
  %4794 = vmatprep.subr.bf16.mxu0 0
  %4795 = vmatpush1.bf16.msra.mxu0 %v3521
  %4796 = vmatprep.subr.bf16.mxu0 0
  %4797 = vmatpush1.bf16.msra.mxu0 %v3522
  %4798 = vmatprep.subr.bf16.mxu0 0
  %4799 = vmatpush1.bf16.msra.mxu0 %v3523
  %4800 = vmatprep.subr.bf16.mxu0 0
  %4801 = vmatpush1.bf16.msra.mxu0 %v3524
  %4802 = vmatprep.subr.bf16.mxu0 0
  %4803 = vmatpush1.bf16.msra.mxu0 %v3525
  %4804 = vmatprep.subr.bf16.mxu0 0
  %4805 = vmatpush1.bf16.msra.mxu0 %v3526
  %4806 = vmatprep.subr.bf16.mxu0 0
  %4807 = vmatpush1.bf16.msra.mxu0 %v3527
  %4808 = vmatprep.mubr.bf16.mxu0 %v1197
  %4809 = vmatmul.mubr.bf16.gmra.mrb[0].mxu0 %v1196
  %v4810 = vpop.f32.mrb[0].mxu0
  %v4811 = vadd.f32 %v4771, %v4810
  %v4812 = vpop.f32.mrb[0].mxu0
  %v4813 = vpop.f32.mrb[0].mxu0
  %v4814 = vpop.f32.mrb[0].mxu0
  %4815 = vdwg.mxu0
  %4816 = vmatprep.subr.bf16.mxu0 0
  %4817 = vmatpush1.bf16.msra.mxu0 %v3528
  %4818 = vmatprep.subr.bf16.mxu0 0
  %4819 = vmatpush1.bf16.msra.mxu0 %v3529
  %4820 = vmatprep.subr.bf16.mxu0 0
  %4821 = vmatpush1.bf16.msra.mxu0 %v3530
  %4822 = vmatprep.subr.bf16.mxu0 0
  %4823 = vmatpush1.bf16.msra.mxu0 %v3531
  %4824 = vmatprep.subr.bf16.mxu0 0
  %4825 = vmatpush1.bf16.msra.mxu0 %v3532
  %4826 = vmatprep.subr.bf16.mxu0 0
  %4827 = vmatpush1.bf16.msra.mxu0 %v3533
  %4828 = vmatprep.subr.bf16.mxu0 0
  %4829 = vmatpush1.bf16.msra.mxu0 %v3534
  %4830 = vmatprep.subr.bf16.mxu0 0
  %4831 = vmatpush1.bf16.msra.mxu0 %v3535
  %4832 = vmatprep.subr.bf16.mxu0 0
  %4833 = vmatpush1.bf16.msra.mxu0 %v3536
  %4834 = vmatprep.subr.bf16.mxu0 0
  %4835 = vmatpush1.bf16.msra.mxu0 %v3537
  %4836 = vmatprep.subr.bf16.mxu0 0
  %4837 = vmatpush1.bf16.msra.mxu0 %v3538
  %4838 = vmatprep.subr.bf16.mxu0 0
  %4839 = vmatpush1.bf16.msra.mxu0 %v3539
  %4840 = vmatprep.subr.bf16.mxu0 0
  %4841 = vmatpush1.bf16.msra.mxu0 %v3540
  %4842 = vmatprep.subr.bf16.mxu0 0
  %4843 = vmatpush1.bf16.msra.mxu0 %v3541
  %4844 = vmatprep.subr.bf16.mxu0 0
  %4845 = vmatpush1.bf16.msra.mxu0 %v3542
  %4846 = vmatprep.subr.bf16.mxu0 0
  %4847 = vmatpush1.bf16.msra.mxu0 %v3543
  %4848 = vmatprep.mubr.bf16.mxu0 %v1199
  %4849 = vmatmul.mubr.bf16.gmra.mrb[0].mxu0 %v1198
  %v4850 = vpop.f32.mrb[0].mxu0
  %v4851 = vadd.f32 %v4811, %v4850
  %v4852 = vpop.f32.mrb[0].mxu0
  %v4853 = vpop.f32.mrb[0].mxu0
  %v4854 = vpop.f32.mrb[0].mxu0
  %4855 = vdwg.mxu0
  %4856 = vmatprep.subr.bf16.mxu0 0
  %4857 = vmatpush1.bf16.msra.mxu0 %v3544
  %4858 = vmatprep.subr.bf16.mxu0 0
  %4859 = vmatpush1.bf16.msra.mxu0 %v3545
  %4860 = vmatprep.subr.bf16.mxu0 0
  %4861 = vmatpush1.bf16.msra.mxu0 %v3546
  %4862 = vmatprep.subr.bf16.mxu0 0
  %4863 = vmatpush1.bf16.msra.mxu0 %v3547
  %4864 = vmatprep.subr.bf16.mxu0 0
  %4865 = vmatpush1.bf16.msra.mxu0 %v3548
  %4866 = vmatprep.subr.bf16.mxu0 0
  %4867 = vmatpush1.bf16.msra.mxu0 %v3549
  %4868 = vmatprep.subr.bf16.mxu0 0
  %4869 = vmatpush1.bf16.msra.mxu0 %v3550
  %4870 = vmatprep.subr.bf16.mxu0 0
  %4871 = vmatpush1.bf16.msra.mxu0 %v3551
  %4872 = vmatprep.subr.bf16.mxu0 0
  %4873 = vmatpush1.bf16.msra.mxu0 %v3552
  %4874 = vmatprep.subr.bf16.mxu0 0
  %4875 = vmatpush1.bf16.msra.mxu0 %v3553
  %4876 = vmatprep.subr.bf16.mxu0 0
  %4877 = vmatpush1.bf16.msra.mxu0 %v3554
  %4878 = vmatprep.subr.bf16.mxu0 0
  %4879 = vmatpush1.bf16.msra.mxu0 %v3555
  %4880 = vmatprep.subr.bf16.mxu0 0
  %4881 = vmatpush1.bf16.msra.mxu0 %v3556
  %4882 = vmatprep.subr.bf16.mxu0 0
  %4883 = vmatpush1.bf16.msra.mxu0 %v3557
  %4884 = vmatprep.subr.bf16.mxu0 0
  %4885 = vmatpush1.bf16.msra.mxu0 %v3558
  %4886 = vmatprep.subr.bf16.mxu0 0
  %4887 = vmatpush1.bf16.msra.mxu0 %v3559
  %4888 = vmatprep.mubr.bf16.mxu0 %v1201
  %4889 = vmatmul.mubr.bf16.gmra.mrb[0].mxu0 %v1200
  %v4890 = vpop.f32.mrb[0].mxu0
  %v4891 = vadd.f32 %v4851, %v4890
  %v4892 = vpop.f32.mrb[0].mxu0
  %v4893 = vpop.f32.mrb[0].mxu0
  %v4894 = vpop.f32.mrb[0].mxu0
  %4895 = vdwg.mxu0
  %4896 = vmatprep.subr.bf16.mxu0 0
  %4897 = vmatpush1.bf16.msra.mxu0 %v3560
  %4898 = vmatprep.subr.bf16.mxu0 0
  %4899 = vmatpush1.bf16.msra.mxu0 %v3561
  %4900 = vmatprep.subr.bf16.mxu0 0
  %4901 = vmatpush1.bf16.msra.mxu0 %v3562
  %4902 = vmatprep.subr.bf16.mxu0 0
  %4903 = vmatpush1.bf16.msra.mxu0 %v3563
  %4904 = vmatprep.subr.bf16.mxu0 0
  %4905 = vmatpush1.bf16.msra.mxu0 %v3564
  %4906 = vmatprep.subr.bf16.mxu0 0
  %4907 = vmatpush1.bf16.msra.mxu0 %v3565
  %4908 = vmatprep.subr.bf16.mxu0 0
  %4909 = vmatpush1.bf16.msra.mxu0 %v3566
  %4910 = vmatprep.subr.bf16.mxu0 0
  %4911 = vmatpush1.bf16.msra.mxu0 %v3567
  %4912 = vmatprep.subr.bf16.mxu0 0
  %4913 = vmatpush1.bf16.msra.mxu0 %v3568
  %4914 = vmatprep.subr.bf16.mxu0 0
  %4915 = vmatpush1.bf16.msra.mxu0 %v3569
  %4916 = vmatprep.subr.bf16.mxu0 0
  %4917 = vmatpush1.bf16.msra.mxu0 %v3570
  %4918 = vmatprep.subr.bf16.mxu0 0
  %4919 = vmatpush1.bf16.msra.mxu0 %v3571
  %4920 = vmatprep.subr.bf16.mxu0 0
  %4921 = vmatpush1.bf16.msra.mxu0 %v3572
  %4922 = vmatprep.subr.bf16.mxu0 0
  %4923 = vmatpush1.bf16.msra.mxu0 %v3573
  %4924 = vmatprep.subr.bf16.mxu0 0
  %4925 = vmatpush1.bf16.msra.mxu0 %v3574
  %4926 = vmatprep.subr.bf16.mxu0 0
  %4927 = vmatpush1.bf16.msra.mxu0 %v3575
  %4928 = vmatprep.mubr.bf16.mxu0 %v1203
  %4929 = vmatmul.mubr.bf16.gmra.mrb[0].mxu0 %v1202
  %v4930 = vpop.f32.mrb[0].mxu0
  %v4931 = vadd.f32 %v4891, %v4930
  %v4932 = vpop.f32.mrb[0].mxu0
  %v4933 = vpop.f32.mrb[0].mxu0
  %v4934 = vpop.f32.mrb[0].mxu0
  %4935 = vdwg.mxu0
  %4936 = vmatprep.subr.bf16.mxu0 0
  %4937 = vmatpush1.bf16.msra.mxu0 %v3576
  %4938 = vmatprep.subr.bf16.mxu0 0
  %4939 = vmatpush1.bf16.msra.mxu0 %v3577
  %4940 = vmatprep.subr.bf16.mxu0 0
  %4941 = vmatpush1.bf16.msra.mxu0 %v3578
  %4942 = vmatprep.subr.bf16.mxu0 0
  %4943 = vmatpush1.bf16.msra.mxu0 %v3579
  %4944 = vmatprep.subr.bf16.mxu0 0
  %4945 = vmatpush1.bf16.msra.mxu0 %v3580
  %4946 = vmatprep.subr.bf16.mxu0 0
  %4947 = vmatpush1.bf16.msra.mxu0 %v3581
  %4948 = vmatprep.subr.bf16.mxu0 0
  %4949 = vmatpush1.bf16.msra.mxu0 %v3582
  %4950 = vmatprep.subr.bf16.mxu0 0
  %4951 = vmatpush1.bf16.msra.mxu0 %v3583
  %4952 = vmatprep.subr.bf16.mxu0 0
  %4953 = vmatpush1.bf16.msra.mxu0 %v3584
  %4954 = vmatprep.subr.bf16.mxu0 0
  %4955 = vmatpush1.bf16.msra.mxu0 %v3585
  %4956 = vmatprep.subr.bf16.mxu0 0
  %4957 = vmatpush1.bf16.msra.mxu0 %v3586
  %4958 = vmatprep.subr.bf16.mxu0 0
  %4959 = vmatpush1.bf16.msra.mxu0 %v3587
  %4960 = vmatprep.subr.bf16.mxu0 0
  %4961 = vmatpush1.bf16.msra.mxu0 %v3588
  %4962 = vmatprep.subr.bf16.mxu0 0
  %4963 = vmatpush1.bf16.msra.mxu0 %v3589
  %4964 = vmatprep.subr.bf16.mxu0 0
  %4965 = vmatpush1.bf16.msra.mxu0 %v3590
  %4966 = vmatprep.subr.bf16.mxu0 0
  %4967 = vmatpush1.bf16.msra.mxu0 %v3591
  %4968 = vmatprep.mubr.bf16.mxu0 %v1205
  %4969 = vmatmul.mubr.bf16.gmra.mrb[0].mxu0 %v1204
  %v4970 = vpop.f32.mrb[0].mxu0
  %v4971 = vadd.f32 %v4931, %v4970
  %v4972 = vpop.f32.mrb[0].mxu0
  %v4973 = vpop.f32.mrb[0].mxu0
  %v4974 = vpop.f32.mrb[0].mxu0
  %4975 = vdwg.mxu0
  %4976 = vmatprep.subr.bf16.mxu0 0
  %4977 = vmatpush1.bf16.msra.mxu0 %v3592
  %4978 = vmatprep.subr.bf16.mxu0 0
  %4979 = vmatpush1.bf16.msra.mxu0 %v3593
  %4980 = vmatprep.subr.bf16.mxu0 0
  %4981 = vmatpush1.bf16.msra.mxu0 %v3594
  %4982 = vmatprep.subr.bf16.mxu0 0
  %4983 = vmatpush1.bf16.msra.mxu0 %v3595
  %4984 = vmatprep.subr.bf16.mxu0 0
  %4985 = vmatpush1.bf16.msra.mxu0 %v3596
  %4986 = vmatprep.subr.bf16.mxu0 0
  %4987 = vmatpush1.bf16.msra.mxu0 %v3597
  %4988 = vmatprep.subr.bf16.mxu0 0
  %4989 = vmatpush1.bf16.msra.mxu0 %v3598
  %4990 = vmatprep.subr.bf16.mxu0 0
  %4991 = vmatpush1.bf16.msra.mxu0 %v3599
  %4992 = vmatprep.subr.bf16.mxu0 0
  %4993 = vmatpush1.bf16.msra.mxu0 %v3600
  %4994 = vmatprep.subr.bf16.mxu0 0
  %4995 = vmatpush1.bf16.msra.mxu0 %v3601
  %4996 = vmatprep.subr.bf16.mxu0 0
  %4997 = vmatpush1.bf16.msra.mxu0 %v3602
  %4998 = vmatprep.subr.bf16.mxu0 0
  %4999 = vmatpush1.bf16.msra.mxu0 %v3603
  %5000 = vmatprep.subr.bf16.mxu0 0
  %5001 = vmatpush1.bf16.msra.mxu0 %v3604
  %5002 = vmatprep.subr.bf16.mxu0 0
  %5003 = vmatpush1.bf16.msra.mxu0 %v3605
  %5004 = vmatprep.subr.bf16.mxu0 0
  %5005 = vmatpush1.bf16.msra.mxu0 %v3606
  %5006 = vmatprep.subr.bf16.mxu0 0
  %5007 = vmatpush1.bf16.msra.mxu0 %v3607
  %5008 = vmatprep.mubr.bf16.mxu0 %v1207
  %5009 = vmatmul.mubr.bf16.gmra.mrb[0].mxu0 %v1206
  %v5010 = vpop.f32.mrb[0].mxu0
  %v5011 = vadd.f32 %v4971, %v5010
  %v5012 = vpop.f32.mrb[0].mxu0
  %v5013 = vpop.f32.mrb[0].mxu0
  %v5014 = vpop.f32.mrb[0].mxu0
  %5015 = vdwg.mxu0
  %5016 = vmatprep.subr.bf16.mxu0 0
  %5017 = vmatpush1.bf16.msra.mxu0 %v3608
  %5018 = vmatprep.subr.bf16.mxu0 0
  %5019 = vmatpush1.bf16.msra.mxu0 %v3609
  %5020 = vmatprep.subr.bf16.mxu0 0
  %5021 = vmatpush1.bf16.msra.mxu0 %v3610
  %5022 = vmatprep.subr.bf16.mxu0 0
  %5023 = vmatpush1.bf16.msra.mxu0 %v3611
  %5024 = vmatprep.subr.bf16.mxu0 0
  %5025 = vmatpush1.bf16.msra.mxu0 %v3612
  %5026 = vmatprep.subr.bf16.mxu0 0
  %5027 = vmatpush1.bf16.msra.mxu0 %v3613
  %5028 = vmatprep.subr.bf16.mxu0 0
  %5029 = vmatpush1.bf16.msra.mxu0 %v3614
  %5030 = vmatprep.subr.bf16.mxu0 0
  %5031 = vmatpush1.bf16.msra.mxu0 %v3615
  %5032 = vmatprep.subr.bf16.mxu0 0
  %5033 = vmatpush1.bf16.msra.mxu0 %v3616
  %5034 = vmatprep.subr.bf16.mxu0 0
  %5035 = vmatpush1.bf16.msra.mxu0 %v3617
  %5036 = vmatprep.subr.bf16.mxu0 0
  %5037 = vmatpush1.bf16.msra.mxu0 %v3618
  %5038 = vmatprep.subr.bf16.mxu0 0
  %5039 = vmatpush1.bf16.msra.mxu0 %v3619
  %5040 = vmatprep.subr.bf16.mxu0 0
  %5041 = vmatpush1.bf16.msra.mxu0 %v3620
  %5042 = vmatprep.subr.bf16.mxu0 0
  %5043 = vmatpush1.bf16.msra.mxu0 %v3621
  %5044 = vmatprep.subr.bf16.mxu0 0
  %5045 = vmatpush1.bf16.msra.mxu0 %v3622
  %5046 = vmatprep.subr.bf16.mxu0 0
  %5047 = vmatpush1.bf16.msra.mxu0 %v3623
  %5048 = vmatprep.mubr.bf16.mxu0 %v1209
  %5049 = vmatmul.mubr.bf16.gmra.mrb[0].mxu0 %v1208
  %v5050 = vpop.f32.mrb[0].mxu0
  %v5051 = vadd.f32 %v5011, %v5050
  %v5052 = vpop.f32.mrb[0].mxu0
  %v5053 = vpop.f32.mrb[0].mxu0
  %v5054 = vpop.f32.mrb[0].mxu0
  %5055 = vdwg.mxu0
  %5056 = vmatprep.subr.bf16.mxu0 0
  %5057 = vmatpush1.bf16.msra.mxu0 %v3624
  %5058 = vmatprep.subr.bf16.mxu0 0
  %5059 = vmatpush1.bf16.msra.mxu0 %v3625
  %5060 = vmatprep.subr.bf16.mxu0 0
  %5061 = vmatpush1.bf16.msra.mxu0 %v3626
  %5062 = vmatprep.subr.bf16.mxu0 0
  %5063 = vmatpush1.bf16.msra.mxu0 %v3627
  %5064 = vmatprep.subr.bf16.mxu0 0
  %5065 = vmatpush1.bf16.msra.mxu0 %v3628
  %5066 = vmatprep.subr.bf16.mxu0 0
  %5067 = vmatpush1.bf16.msra.mxu0 %v3629
  %5068 = vmatprep.subr.bf16.mxu0 0
  %5069 = vmatpush1.bf16.msra.mxu0 %v3630
  %5070 = vmatprep.subr.bf16.mxu0 0
  %5071 = vmatpush1.bf16.msra.mxu0 %v3631
  %5072 = vmatprep.subr.bf16.mxu0 0
  %5073 = vmatpush1.bf16.msra.mxu0 %v3632
  %5074 = vmatprep.subr.bf16.mxu0 0
  %5075 = vmatpush1.bf16.msra.mxu0 %v3633
  %5076 = vmatprep.subr.bf16.mxu0 0
  %5077 = vmatpush1.bf16.msra.mxu0 %v3634
  %5078 = vmatprep.subr.bf16.mxu0 0
  %5079 = vmatpush1.bf16.msra.mxu0 %v3635
  %5080 = vmatprep.subr.bf16.mxu0 0
  %5081 = vmatpush1.bf16.msra.mxu0 %v3636
  %5082 = vmatprep.subr.bf16.mxu0 0
  %5083 = vmatpush1.bf16.msra.mxu0 %v3637
  %5084 = vmatprep.subr.bf16.mxu0 0
  %5085 = vmatpush1.bf16.msra.mxu0 %v3638
  %5086 = vmatprep.subr.bf16.mxu0 0
  %5087 = vmatpush1.bf16.msra.mxu0 %v3639
  %5088 = vmatprep.mubr.bf16.mxu0 %v1211
  %5089 = vmatmul.mubr.bf16.gmra.mrb[0].mxu0 %v1210
  %v5090 = vpop.f32.mrb[0].mxu0
  %v5091 = vadd.f32 %v5051, %v5090
  %v5092 = vpop.f32.mrb[0].mxu0
  %v5093 = vpop.f32.mrb[0].mxu0
  %v5094 = vpop.f32.mrb[0].mxu0
  %5095 = vdwg.mxu0
  %5096 = vmatprep.subr.bf16.mxu0 0
  %5097 = vmatpush1.bf16.msra.mxu0 %v3640
  %5098 = vmatprep.subr.bf16.mxu0 0
  %5099 = vmatpush1.bf16.msra.mxu0 %v3641
  %5100 = vmatprep.subr.bf16.mxu0 0
  %5101 = vmatpush1.bf16.msra.mxu0 %v3642
  %5102 = vmatprep.subr.bf16.mxu0 0
  %5103 = vmatpush1.bf16.msra.mxu0 %v3643
  %5104 = vmatprep.subr.bf16.mxu0 0
  %5105 = vmatpush1.bf16.msra.mxu0 %v3644
  %5106 = vmatprep.subr.bf16.mxu0 0
  %5107 = vmatpush1.bf16.msra.mxu0 %v3645
  %5108 = vmatprep.subr.bf16.mxu0 0
  %5109 = vmatpush1.bf16.msra.mxu0 %v3646
  %5110 = vmatprep.subr.bf16.mxu0 0
  %5111 = vmatpush1.bf16.msra.mxu0 %v3647
  %5112 = vmatprep.subr.bf16.mxu0 0
  %5113 = vmatpush1.bf16.msra.mxu0 %v3648
  %5114 = vmatprep.subr.bf16.mxu0 0
  %5115 = vmatpush1.bf16.msra.mxu0 %v3649
  %5116 = vmatprep.subr.bf16.mxu0 0
  %5117 = vmatpush1.bf16.msra.mxu0 %v3650
  %5118 = vmatprep.subr.bf16.mxu0 0
  %5119 = vmatpush1.bf16.msra.mxu0 %v3651
  %5120 = vmatprep.subr.bf16.mxu0 0
  %5121 = vmatpush1.bf16.msra.mxu0 %v3652
  %5122 = vmatprep.subr.bf16.mxu0 0
  %5123 = vmatpush1.bf16.msra.mxu0 %v3653
  %5124 = vmatprep.subr.bf16.mxu0 0
  %5125 = vmatpush1.bf16.msra.mxu0 %v3654
  %5126 = vmatprep.subr.bf16.mxu0 0
  %5127 = vmatpush1.bf16.msra.mxu0 %v3655
  %5128 = vmatprep.mubr.bf16.mxu0 %v1213
  %5129 = vmatmul.mubr.bf16.gmra.mrb[0].mxu0 %v1212
  %v5130 = vpop.f32.mrb[0].mxu0
  %v5131 = vadd.f32 %v5091, %v5130
  %v5132 = vpop.f32.mrb[0].mxu0
  %v5133 = vpop.f32.mrb[0].mxu0
  %v5134 = vpop.f32.mrb[0].mxu0
  %5135 = vdwg.mxu0
  %5136 = vmatprep.subr.bf16.mxu0 0
  %5137 = vmatpush1.bf16.msra.mxu0 %v3656
  %5138 = vmatprep.subr.bf16.mxu0 0
  %5139 = vmatpush1.bf16.msra.mxu0 %v3657
  %5140 = vmatprep.subr.bf16.mxu0 0
  %5141 = vmatpush1.bf16.msra.mxu0 %v3658
  %5142 = vmatprep.subr.bf16.mxu0 0
  %5143 = vmatpush1.bf16.msra.mxu0 %v3659
  %5144 = vmatprep.subr.bf16.mxu0 0
  %5145 = vmatpush1.bf16.msra.mxu0 %v3660
  %5146 = vmatprep.subr.bf16.mxu0 0
  %5147 = vmatpush1.bf16.msra.mxu0 %v3661
  %5148 = vmatprep.subr.bf16.mxu0 0
  %5149 = vmatpush1.bf16.msra.mxu0 %v3662
  %5150 = vmatprep.subr.bf16.mxu0 0
  %5151 = vmatpush1.bf16.msra.mxu0 %v3663
  %5152 = vmatprep.subr.bf16.mxu0 0
  %5153 = vmatpush1.bf16.msra.mxu0 %v3664
  %5154 = vmatprep.subr.bf16.mxu0 0
  %5155 = vmatpush1.bf16.msra.mxu0 %v3665
  %5156 = vmatprep.subr.bf16.mxu0 0
  %5157 = vmatpush1.bf16.msra.mxu0 %v3666
  %5158 = vmatprep.subr.bf16.mxu0 0
  %5159 = vmatpush1.bf16.msra.mxu0 %v3667
  %5160 = vmatprep.subr.bf16.mxu0 0
  %5161 = vmatpush1.bf16.msra.mxu0 %v3668
  %5162 = vmatprep.subr.bf16.mxu0 0
  %5163 = vmatpush1.bf16.msra.mxu0 %v3669
  %5164 = vmatprep.subr.bf16.mxu0 0
  %5165 = vmatpush1.bf16.msra.mxu0 %v3670
  %5166 = vmatprep.subr.bf16.mxu0 0
  %5167 = vmatpush1.bf16.msra.mxu0 %v3671
  %5168 = vmatprep.mubr.bf16.mxu0 %v1215
  %5169 = vmatmul.mubr.bf16.gmra.mrb[0].mxu0 %v1214
  %v5170 = vpop.f32.mrb[0].mxu0
  %v5171 = vadd.f32 %v5131, %v5170
  %v5172 = vpop.f32.mrb[0].mxu0
  %v5173 = vpop.f32.mrb[0].mxu0
  %v5174 = vpop.f32.mrb[0].mxu0
  %5175 = vdwg.mxu0
  %5176 = vmatprep.subr.bf16.mxu0 0
  %5177 = vmatpush1.bf16.msra.mxu0 %v3672
  %5178 = vmatprep.subr.bf16.mxu0 0
  %5179 = vmatpush1.bf16.msra.mxu0 %v3673
  %5180 = vmatprep.subr.bf16.mxu0 0
  %5181 = vmatpush1.bf16.msra.mxu0 %v3674
  %5182 = vmatprep.subr.bf16.mxu0 0
  %5183 = vmatpush1.bf16.msra.mxu0 %v3675
  %5184 = vmatprep.subr.bf16.mxu0 0
  %5185 = vmatpush1.bf16.msra.mxu0 %v3676
  %5186 = vmatprep.subr.bf16.mxu0 0
  %5187 = vmatpush1.bf16.msra.mxu0 %v3677
  %5188 = vmatprep.subr.bf16.mxu0 0
  %5189 = vmatpush1.bf16.msra.mxu0 %v3678
  %5190 = vmatprep.subr.bf16.mxu0 0
  %5191 = vmatpush1.bf16.msra.mxu0 %v3679
  %5192 = vmatprep.subr.bf16.mxu0 0
  %5193 = vmatpush1.bf16.msra.mxu0 %v3680
  %5194 = vmatprep.subr.bf16.mxu0 0
  %5195 = vmatpush1.bf16.msra.mxu0 %v3681
  %5196 = vmatprep.subr.bf16.mxu0 0
  %5197 = vmatpush1.bf16.msra.mxu0 %v3682
  %5198 = vmatprep.subr.bf16.mxu0 0
  %5199 = vmatpush1.bf16.msra.mxu0 %v3683
  %5200 = vmatprep.subr.bf16.mxu0 0
  %5201 = vmatpush1.bf16.msra.mxu0 %v3684
  %5202 = vmatprep.subr.bf16.mxu0 0
  %5203 = vmatpush1.bf16.msra.mxu0 %v3685
  %5204 = vmatprep.subr.bf16.mxu0 0
  %5205 = vmatpush1.bf16.msra.mxu0 %v3686
  %5206 = vmatprep.subr.bf16.mxu0 0
  %5207 = vmatpush1.bf16.msra.mxu0 %v3687
  %5208 = vmatprep.mubr.bf16.mxu0 %v1217
  %5209 = vmatmul.mubr.bf16.gmra.mrb[0].mxu0 %v1216
  %v5210 = vpop.f32.mrb[0].mxu0
  %v5211 = vadd.f32 %v5171, %v5210
  %v5212 = vpop.f32.mrb[0].mxu0
  %v5213 = vpop.f32.mrb[0].mxu0
  %v5214 = vpop.f32.mrb[0].mxu0
  %5215 = vdwg.mxu0
  %5216 = vmatprep.subr.bf16.mxu0 0
  %5217 = vmatpush1.bf16.msra.mxu0 %v3688
  %5218 = vmatprep.subr.bf16.mxu0 0
  %5219 = vmatpush1.bf16.msra.mxu0 %v3689
  %5220 = vmatprep.subr.bf16.mxu0 0
  %5221 = vmatpush1.bf16.msra.mxu0 %v3690
  %5222 = vmatprep.subr.bf16.mxu0 0
  %5223 = vmatpush1.bf16.msra.mxu0 %v3691
  %5224 = vmatprep.subr.bf16.mxu0 0
  %5225 = vmatpush1.bf16.msra.mxu0 %v3692
  %5226 = vmatprep.subr.bf16.mxu0 0
  %5227 = vmatpush1.bf16.msra.mxu0 %v3693
  %5228 = vmatprep.subr.bf16.mxu0 0
  %5229 = vmatpush1.bf16.msra.mxu0 %v3694
  %5230 = vmatprep.subr.bf16.mxu0 0
  %5231 = vmatpush1.bf16.msra.mxu0 %v3695
  %5232 = vmatprep.subr.bf16.mxu0 0
  %5233 = vmatpush1.bf16.msra.mxu0 %v3696
  %5234 = vmatprep.subr.bf16.mxu0 0
  %5235 = vmatpush1.bf16.msra.mxu0 %v3697
  %5236 = vmatprep.subr.bf16.mxu0 0
  %5237 = vmatpush1.bf16.msra.mxu0 %v3698
  %5238 = vmatprep.subr.bf16.mxu0 0
  %5239 = vmatpush1.bf16.msra.mxu0 %v3699
  %5240 = vmatprep.subr.bf16.mxu0 0
  %5241 = vmatpush1.bf16.msra.mxu0 %v3700
  %5242 = vmatprep.subr.bf16.mxu0 0
  %5243 = vmatpush1.bf16.msra.mxu0 %v3701
  %5244 = vmatprep.subr.bf16.mxu0 0
  %5245 = vmatpush1.bf16.msra.mxu0 %v3702
  %5246 = vmatprep.subr.bf16.mxu0 0
  %5247 = vmatpush1.bf16.msra.mxu0 %v3703
  %5248 = vmatprep.mubr.bf16.mxu0 %v1219
  %5249 = vmatmul.mubr.bf16.gmra.mrb[0].mxu0 %v1218
  %v5250 = vpop.f32.mrb[0].mxu0
  %v5251 = vadd.f32 %v5211, %v5250
  %v5252 = vpop.f32.mrb[0].mxu0
  %v5253 = vpop.f32.mrb[0].mxu0
  %v5254 = vpop.f32.mrb[0].mxu0
  %5255 = vdwg.mxu0
  %5256 = vmatprep.subr.bf16.mxu0 0
  %5257 = vmatpush1.bf16.msra.mxu0 %v3704
  %5258 = vmatprep.subr.bf16.mxu0 0
  %5259 = vmatpush1.bf16.msra.mxu0 %v3705
  %5260 = vmatprep.subr.bf16.mxu0 0
  %5261 = vmatpush1.bf16.msra.mxu0 %v3706
  %5262 = vmatprep.subr.bf16.mxu0 0
  %5263 = vmatpush1.bf16.msra.mxu0 %v3707
  %5264 = vmatprep.subr.bf16.mxu0 0
  %5265 = vmatpush1.bf16.msra.mxu0 %v3708
  %5266 = vmatprep.subr.bf16.mxu0 0
  %5267 = vmatpush1.bf16.msra.mxu0 %v3709
  %5268 = vmatprep.subr.bf16.mxu0 0
  %5269 = vmatpush1.bf16.msra.mxu0 %v3710
  %5270 = vmatprep.subr.bf16.mxu0 0
  %5271 = vmatpush1.bf16.msra.mxu0 %v3711
  %5272 = vmatprep.subr.bf16.mxu0 0
  %5273 = vmatpush1.bf16.msra.mxu0 %v3712
  %5274 = vmatprep.subr.bf16.mxu0 0
  %5275 = vmatpush1.bf16.msra.mxu0 %v3713
  %5276 = vmatprep.subr.bf16.mxu0 0
  %5277 = vmatpush1.bf16.msra.mxu0 %v3714
  %5278 = vmatprep.subr.bf16.mxu0 0
  %5279 = vmatpush1.bf16.msra.mxu0 %v3715
  %5280 = vmatprep.subr.bf16.mxu0 0
  %5281 = vmatpush1.bf16.msra.mxu0 %v3716
  %5282 = vmatprep.subr.bf16.mxu0 0
  %5283 = vmatpush1.bf16.msra.mxu0 %v3717
  %5284 = vmatprep.subr.bf16.mxu0 0
  %5285 = vmatpush1.bf16.msra.mxu0 %v3718
  %5286 = vmatprep.subr.bf16.mxu0 0
  %5287 = vmatpush1.bf16.msra.mxu0 %v3719
  %5288 = vmatprep.mubr.bf16.mxu0 %v1221
  %5289 = vmatmul.mubr.bf16.gmra.mrb[0].mxu0 %v1220
  %v5290 = vpop.f32.mrb[0].mxu0
  %v5291 = vadd.f32 %v5251, %v5290
  %v5292 = vpop.f32.mrb[0].mxu0
  %v5293 = vpop.f32.mrb[0].mxu0
  %v5294 = vpop.f32.mrb[0].mxu0
  %5295 = vdwg.mxu0
  %5296 = vmatprep.subr.bf16.mxu0 0
  %5297 = vmatpush1.bf16.msra.mxu0 %v3720
  %5298 = vmatprep.subr.bf16.mxu0 0
  %5299 = vmatpush1.bf16.msra.mxu0 %v3721
  %5300 = vmatprep.subr.bf16.mxu0 0
  %5301 = vmatpush1.bf16.msra.mxu0 %v3722
  %5302 = vmatprep.subr.bf16.mxu0 0
  %5303 = vmatpush1.bf16.msra.mxu0 %v3723
  %5304 = vmatprep.subr.bf16.mxu0 0
  %5305 = vmatpush1.bf16.msra.mxu0 %v3724
  %5306 = vmatprep.subr.bf16.mxu0 0
  %5307 = vmatpush1.bf16.msra.mxu0 %v3725
  %5308 = vmatprep.subr.bf16.mxu0 0
  %5309 = vmatpush1.bf16.msra.mxu0 %v3726
  %5310 = vmatprep.subr.bf16.mxu0 0
  %5311 = vmatpush1.bf16.msra.mxu0 %v3727
  %5312 = vmatprep.subr.bf16.mxu0 0
  %5313 = vmatpush1.bf16.msra.mxu0 %v3728
  %5314 = vmatprep.subr.bf16.mxu0 0
  %5315 = vmatpush1.bf16.msra.mxu0 %v3729
  %5316 = vmatprep.subr.bf16.mxu0 0
  %5317 = vmatpush1.bf16.msra.mxu0 %v3730
  %5318 = vmatprep.subr.bf16.mxu0 0
  %5319 = vmatpush1.bf16.msra.mxu0 %v3731
  %5320 = vmatprep.subr.bf16.mxu0 0
  %5321 = vmatpush1.bf16.msra.mxu0 %v3732
  %5322 = vmatprep.subr.bf16.mxu0 0
  %5323 = vmatpush1.bf16.msra.mxu0 %v3733
  %5324 = vmatprep.subr.bf16.mxu0 0
  %5325 = vmatpush1.bf16.msra.mxu0 %v3734
  %5326 = vmatprep.subr.bf16.mxu0 0
  %5327 = vmatpush1.bf16.msra.mxu0 %v3735
  %5328 = vmatprep.mubr.bf16.mxu0 %v1223
  %5329 = vmatmul.mubr.bf16.gmra.mrb[0].mxu0 %v1222
  %v5330 = vpop.f32.mrb[0].mxu0
  %v5331 = vadd.f32 %v5291, %v5330
  %v5332 = vpop.f32.mrb[0].mxu0
  %v5333 = vpop.f32.mrb[0].mxu0
  %v5334 = vpop.f32.mrb[0].mxu0
  %5335 = vdwg.mxu0
  %5336 = vmatprep.subr.bf16.mxu0 0
  %5337 = vmatpush1.bf16.msra.mxu0 %v3736
  %5338 = vmatprep.subr.bf16.mxu0 0
  %5339 = vmatpush1.bf16.msra.mxu0 %v3737
  %5340 = vmatprep.subr.bf16.mxu0 0
  %5341 = vmatpush1.bf16.msra.mxu0 %v3738
  %5342 = vmatprep.subr.bf16.mxu0 0
  %5343 = vmatpush1.bf16.msra.mxu0 %v3739
  %5344 = vmatprep.subr.bf16.mxu0 0
  %5345 = vmatpush1.bf16.msra.mxu0 %v3740
  %5346 = vmatprep.subr.bf16.mxu0 0
  %5347 = vmatpush1.bf16.msra.mxu0 %v3741
  %5348 = vmatprep.subr.bf16.mxu0 0
  %5349 = vmatpush1.bf16.msra.mxu0 %v3742
  %5350 = vmatprep.subr.bf16.mxu0 0
  %5351 = vmatpush1.bf16.msra.mxu0 %v3743
  %5352 = vmatprep.subr.bf16.mxu0 0
  %5353 = vmatpush1.bf16.msra.mxu0 %v3744
  %5354 = vmatprep.subr.bf16.mxu0 0
  %5355 = vmatpush1.bf16.msra.mxu0 %v3745
  %5356 = vmatprep.subr.bf16.mxu0 0
  %5357 = vmatpush1.bf16.msra.mxu0 %v3746
  %5358 = vmatprep.subr.bf16.mxu0 0
  %5359 = vmatpush1.bf16.msra.mxu0 %v3747
  %5360 = vmatprep.subr.bf16.mxu0 0
  %5361 = vmatpush1.bf16.msra.mxu0 %v3748
  %5362 = vmatprep.subr.bf16.mxu0 0
  %5363 = vmatpush1.bf16.msra.mxu0 %v3749
  %5364 = vmatprep.subr.bf16.mxu0 0
  %5365 = vmatpush1.bf16.msra.mxu0 %v3750
  %5366 = vmatprep.subr.bf16.mxu0 0
  %5367 = vmatpush1.bf16.msra.mxu0 %v3751
  %5368 = vmatprep.mubr.bf16.mxu0 %v1225
  %5369 = vmatmul.mubr.bf16.gmra.mrb[0].mxu0 %v1224
  %v5370 = vpop.f32.mrb[0].mxu0
  %v5371 = vadd.f32 %v5331, %v5370
  %v5372 = vpop.f32.mrb[0].mxu0
  %v5373 = vpop.f32.mrb[0].mxu0
  %v5374 = vpop.f32.mrb[0].mxu0
  %5375 = vdwg.mxu0
  %5376 = vmatprep.subr.bf16.mxu0 0
  %5377 = vmatpush1.bf16.msra.mxu0 %v3752
  %5378 = vmatprep.subr.bf16.mxu0 0
  %5379 = vmatpush1.bf16.msra.mxu0 %v3753
  %5380 = vmatprep.subr.bf16.mxu0 0
  %5381 = vmatpush1.bf16.msra.mxu0 %v3754
  %5382 = vmatprep.subr.bf16.mxu0 0
  %5383 = vmatpush1.bf16.msra.mxu0 %v3755
  %5384 = vmatprep.subr.bf16.mxu0 0
  %5385 = vmatpush1.bf16.msra.mxu0 %v3756
  %5386 = vmatprep.subr.bf16.mxu0 0
  %5387 = vmatpush1.bf16.msra.mxu0 %v3757
  %5388 = vmatprep.subr.bf16.mxu0 0
  %5389 = vmatpush1.bf16.msra.mxu0 %v3758
  %5390 = vmatprep.subr.bf16.mxu0 0
  %5391 = vmatpush1.bf16.msra.mxu0 %v3759
  %5392 = vmatprep.subr.bf16.mxu0 0
  %5393 = vmatpush1.bf16.msra.mxu0 %v3760
  %5394 = vmatprep.subr.bf16.mxu0 0
  %5395 = vmatpush1.bf16.msra.mxu0 %v3761
  %5396 = vmatprep.subr.bf16.mxu0 0
  %5397 = vmatpush1.bf16.msra.mxu0 %v3762
  %5398 = vmatprep.subr.bf16.mxu0 0
  %5399 = vmatpush1.bf16.msra.mxu0 %v3763
  %5400 = vmatprep.subr.bf16.mxu0 0
  %5401 = vmatpush1.bf16.msra.mxu0 %v3764
  %5402 = vmatprep.subr.bf16.mxu0 0
  %5403 = vmatpush1.bf16.msra.mxu0 %v3765
  %5404 = vmatprep.subr.bf16.mxu0 0
  %5405 = vmatpush1.bf16.msra.mxu0 %v3766
  %5406 = vmatprep.subr.bf16.mxu0 0
  %5407 = vmatpush1.bf16.msra.mxu0 %v3767
  %5408 = vmatprep.mubr.bf16.mxu0 %v1227
  %5409 = vmatmul.mubr.bf16.gmra.mrb[0].mxu0 %v1226
  %v5410 = vpop.f32.mrb[0].mxu0
  %v5411 = vadd.f32 %v5371, %v5410
  %v5412 = vpop.f32.mrb[0].mxu0
  %v5413 = vpop.f32.mrb[0].mxu0
  %v5414 = vpop.f32.mrb[0].mxu0
  %5415 = vdwg.mxu0
  %5416 = vmatprep.subr.bf16.mxu0 0
  %5417 = vmatpush1.bf16.msra.mxu0 %v3768
  %5418 = vmatprep.subr.bf16.mxu0 0
  %5419 = vmatpush1.bf16.msra.mxu0 %v3769
  %5420 = vmatprep.subr.bf16.mxu0 0
  %5421 = vmatpush1.bf16.msra.mxu0 %v3770
  %5422 = vmatprep.subr.bf16.mxu0 0
  %5423 = vmatpush1.bf16.msra.mxu0 %v3771
  %5424 = vmatprep.subr.bf16.mxu0 0
  %5425 = vmatpush1.bf16.msra.mxu0 %v3772
  %5426 = vmatprep.subr.bf16.mxu0 0
  %5427 = vmatpush1.bf16.msra.mxu0 %v3773
  %5428 = vmatprep.subr.bf16.mxu0 0
  %5429 = vmatpush1.bf16.msra.mxu0 %v3774
  %5430 = vmatprep.subr.bf16.mxu0 0
  %5431 = vmatpush1.bf16.msra.mxu0 %v3775
  %5432 = vmatprep.subr.bf16.mxu0 0
  %5433 = vmatpush1.bf16.msra.mxu0 %v3776
  %5434 = vmatprep.subr.bf16.mxu0 0
  %5435 = vmatpush1.bf16.msra.mxu0 %v3777
  %5436 = vmatprep.subr.bf16.mxu0 0
  %5437 = vmatpush1.bf16.msra.mxu0 %v3778
  %5438 = vmatprep.subr.bf16.mxu0 0
  %5439 = vmatpush1.bf16.msra.mxu0 %v3779
  %5440 = vmatprep.subr.bf16.mxu0 0
  %5441 = vmatpush1.bf16.msra.mxu0 %v3780
  %5442 = vmatprep.subr.bf16.mxu0 0
  %5443 = vmatpush1.bf16.msra.mxu0 %v3781
  %5444 = vmatprep.subr.bf16.mxu0 0
  %5445 = vmatpush1.bf16.msra.mxu0 %v3782
  %5446 = vmatprep.subr.bf16.mxu0 0
  %5447 = vmatpush1.bf16.msra.mxu0 %v3783
  %5448 = vmatprep.mubr.bf16.mxu0 %v1229
  %5449 = vmatmul.mubr.bf16.gmra.mrb[0].mxu0 %v1228
  %v5450 = vpop.f32.mrb[0].mxu0
  %v5451 = vadd.f32 %v5411, %v5450
  %v5452 = vpop.f32.mrb[0].mxu0
  %v5453 = vpop.f32.mrb[0].mxu0
  %v5454 = vpop.f32.mrb[0].mxu0
  %5455 = vdwg.mxu0
  %5456 = vmatprep.subr.bf16.mxu0 0
  %5457 = vmatpush1.bf16.msra.mxu0 %v3784
  %5458 = vmatprep.subr.bf16.mxu0 0
  %5459 = vmatpush1.bf16.msra.mxu0 %v3785
  %5460 = vmatprep.subr.bf16.mxu0 0
  %5461 = vmatpush1.bf16.msra.mxu0 %v3786
  %5462 = vmatprep.subr.bf16.mxu0 0
  %5463 = vmatpush1.bf16.msra.mxu0 %v3787
  %5464 = vmatprep.subr.bf16.mxu0 0
  %5465 = vmatpush1.bf16.msra.mxu0 %v3788
  %5466 = vmatprep.subr.bf16.mxu0 0
  %5467 = vmatpush1.bf16.msra.mxu0 %v3789
  %5468 = vmatprep.subr.bf16.mxu0 0
  %5469 = vmatpush1.bf16.msra.mxu0 %v3790
  %5470 = vmatprep.subr.bf16.mxu0 0
  %5471 = vmatpush1.bf16.msra.mxu0 %v3791
  %5472 = vmatprep.subr.bf16.mxu0 0
  %5473 = vmatpush1.bf16.msra.mxu0 %v3792
  %5474 = vmatprep.subr.bf16.mxu0 0
  %5475 = vmatpush1.bf16.msra.mxu0 %v3793
  %5476 = vmatprep.subr.bf16.mxu0 0
  %5477 = vmatpush1.bf16.msra.mxu0 %v3794
  %5478 = vmatprep.subr.bf16.mxu0 0
  %5479 = vmatpush1.bf16.msra.mxu0 %v3795
  %5480 = vmatprep.subr.bf16.mxu0 0
  %5481 = vmatpush1.bf16.msra.mxu0 %v3796
  %5482 = vmatprep.subr.bf16.mxu0 0
  %5483 = vmatpush1.bf16.msra.mxu0 %v3797
  %5484 = vmatprep.subr.bf16.mxu0 0
  %5485 = vmatpush1.bf16.msra.mxu0 %v3798
  %5486 = vmatprep.subr.bf16.mxu0 0
  %5487 = vmatpush1.bf16.msra.mxu0 %v3799
  %5488 = vmatprep.mubr.bf16.mxu0 %v1231
  %5489 = vmatmul.mubr.bf16.gmra.mrb[0].mxu0 %v1230
  %v5490 = vpop.f32.mrb[0].mxu0
  %v5491 = vadd.f32 %v5451, %v5490
  %v5492 = vpop.f32.mrb[0].mxu0
  %v5493 = vpop.f32.mrb[0].mxu0
  %v5494 = vpop.f32.mrb[0].mxu0
  %5495 = vdwg.mxu0
  %5496 = vmatprep.subr.bf16.mxu0 0
  %5497 = vmatpush1.bf16.msra.mxu0 %v3800
  %5498 = vmatprep.subr.bf16.mxu0 0
  %5499 = vmatpush1.bf16.msra.mxu0 %v3801
  %5500 = vmatprep.subr.bf16.mxu0 0
  %5501 = vmatpush1.bf16.msra.mxu0 %v3802
  %5502 = vmatprep.subr.bf16.mxu0 0
  %5503 = vmatpush1.bf16.msra.mxu0 %v3803
  %5504 = vmatprep.subr.bf16.mxu0 0
  %5505 = vmatpush1.bf16.msra.mxu0 %v3804
  %5506 = vmatprep.subr.bf16.mxu0 0
  %5507 = vmatpush1.bf16.msra.mxu0 %v3805
  %5508 = vmatprep.subr.bf16.mxu0 0
  %5509 = vmatpush1.bf16.msra.mxu0 %v3806
  %5510 = vmatprep.subr.bf16.mxu0 0
  %5511 = vmatpush1.bf16.msra.mxu0 %v3807
  %5512 = vmatprep.subr.bf16.mxu0 0
  %5513 = vmatpush1.bf16.msra.mxu0 %v3808
  %5514 = vmatprep.subr.bf16.mxu0 0
  %5515 = vmatpush1.bf16.msra.mxu0 %v3809
  %5516 = vmatprep.subr.bf16.mxu0 0
  %5517 = vmatpush1.bf16.msra.mxu0 %v3810
  %5518 = vmatprep.subr.bf16.mxu0 0
  %5519 = vmatpush1.bf16.msra.mxu0 %v3811
  %5520 = vmatprep.subr.bf16.mxu0 0
  %5521 = vmatpush1.bf16.msra.mxu0 %v3812
  %5522 = vmatprep.subr.bf16.mxu0 0
  %5523 = vmatpush1.bf16.msra.mxu0 %v3813
  %5524 = vmatprep.subr.bf16.mxu0 0
  %5525 = vmatpush1.bf16.msra.mxu0 %v3814
  %5526 = vmatprep.subr.bf16.mxu0 0
  %5527 = vmatpush1.bf16.msra.mxu0 %v3815
  %5528 = vmatprep.mubr.bf16.mxu0 %v1233
  %5529 = vmatmul.mubr.bf16.gmra.mrb[0].mxu0 %v1232
  %v5530 = vpop.f32.mrb[0].mxu0
  %v5531 = vadd.f32 %v5491, %v5530
  %v5532 = vpop.f32.mrb[0].mxu0
  %v5533 = vpop.f32.mrb[0].mxu0
  %v5534 = vpop.f32.mrb[0].mxu0
  %5535 = vdwg.mxu0
  %5536 = vmatprep.subr.bf16.mxu0 0
  %5537 = vmatpush1.bf16.msra.mxu0 %v3816
  %5538 = vmatprep.subr.bf16.mxu0 0
  %5539 = vmatpush1.bf16.msra.mxu0 %v3817
  %5540 = vmatprep.subr.bf16.mxu0 0
  %5541 = vmatpush1.bf16.msra.mxu0 %v3818
  %5542 = vmatprep.subr.bf16.mxu0 0
  %5543 = vmatpush1.bf16.msra.mxu0 %v3819
  %5544 = vmatprep.subr.bf16.mxu0 0
  %5545 = vmatpush1.bf16.msra.mxu0 %v3820
  %5546 = vmatprep.subr.bf16.mxu0 0
  %5547 = vmatpush1.bf16.msra.mxu0 %v3821
  %5548 = vmatprep.subr.bf16.mxu0 0
  %5549 = vmatpush1.bf16.msra.mxu0 %v3822
  %5550 = vmatprep.subr.bf16.mxu0 0
  %5551 = vmatpush1.bf16.msra.mxu0 %v3823
  %5552 = vmatprep.subr.bf16.mxu0 0
  %5553 = vmatpush1.bf16.msra.mxu0 %v3824
  %5554 = vmatprep.subr.bf16.mxu0 0
  %5555 = vmatpush1.bf16.msra.mxu0 %v3825
  %5556 = vmatprep.subr.bf16.mxu0 0
  %5557 = vmatpush1.bf16.msra.mxu0 %v3826
  %5558 = vmatprep.subr.bf16.mxu0 0
  %5559 = vmatpush1.bf16.msra.mxu0 %v3827
  %5560 = vmatprep.subr.bf16.mxu0 0
  %5561 = vmatpush1.bf16.msra.mxu0 %v3828
  %5562 = vmatprep.subr.bf16.mxu0 0
  %5563 = vmatpush1.bf16.msra.mxu0 %v3829
  %5564 = vmatprep.subr.bf16.mxu0 0
  %5565 = vmatpush1.bf16.msra.mxu0 %v3830
  %5566 = vmatprep.subr.bf16.mxu0 0
  %5567 = vmatpush1.bf16.msra.mxu0 %v3831
  %5568 = vmatprep.mubr.bf16.mxu0 %v1235
  %5569 = vmatmul.mubr.bf16.gmra.mrb[0].mxu0 %v1234
  %v5570 = vpop.f32.mrb[0].mxu0
  %v5571 = vadd.f32 %v5531, %v5570
  %v5572 = vpop.f32.mrb[0].mxu0
  %v5573 = vpop.f32.mrb[0].mxu0
  %v5574 = vpop.f32.mrb[0].mxu0
  %5575 = vdwg.mxu0
  %5576 = vmatprep.subr.bf16.mxu0 0
  %5577 = vmatpush1.bf16.msra.mxu0 %v3832
  %5578 = vmatprep.subr.bf16.mxu0 0
  %5579 = vmatpush1.bf16.msra.mxu0 %v3833
  %5580 = vmatprep.subr.bf16.mxu0 0
  %5581 = vmatpush1.bf16.msra.mxu0 %v3834
  %5582 = vmatprep.subr.bf16.mxu0 0
  %5583 = vmatpush1.bf16.msra.mxu0 %v3835
  %5584 = vmatprep.subr.bf16.mxu0 0
  %5585 = vmatpush1.bf16.msra.mxu0 %v3836
  %5586 = vmatprep.subr.bf16.mxu0 0
  %5587 = vmatpush1.bf16.msra.mxu0 %v3837
  %5588 = vmatprep.subr.bf16.mxu0 0
  %5589 = vmatpush1.bf16.msra.mxu0 %v3838
  %5590 = vmatprep.subr.bf16.mxu0 0
  %5591 = vmatpush1.bf16.msra.mxu0 %v3839
  %5592 = vmatprep.subr.bf16.mxu0 0
  %5593 = vmatpush1.bf16.msra.mxu0 %v3840
  %5594 = vmatprep.subr.bf16.mxu0 0
  %5595 = vmatpush1.bf16.msra.mxu0 %v3841
  %5596 = vmatprep.subr.bf16.mxu0 0
  %5597 = vmatpush1.bf16.msra.mxu0 %v3842
  %5598 = vmatprep.subr.bf16.mxu0 0
  %5599 = vmatpush1.bf16.msra.mxu0 %v3843
  %5600 = vmatprep.subr.bf16.mxu0 0
  %5601 = vmatpush1.bf16.msra.mxu0 %v3844
  %5602 = vmatprep.subr.bf16.mxu0 0
  %5603 = vmatpush1.bf16.msra.mxu0 %v3845
  %5604 = vmatprep.subr.bf16.mxu0 0
  %5605 = vmatpush1.bf16.msra.mxu0 %v3846
  %5606 = vmatprep.subr.bf16.mxu0 0
  %5607 = vmatpush1.bf16.msra.mxu0 %v3847
  %5608 = vmatprep.mubr.bf16.mxu0 %v1237
  %5609 = vmatmul.mubr.bf16.gmra.mrb[0].mxu0 %v1236
  %v5610 = vpop.f32.mrb[0].mxu0
  %v5611 = vadd.f32 %v5571, %v5610
  %v5612 = vpop.f32.mrb[0].mxu0
  %v5613 = vpop.f32.mrb[0].mxu0
  %v5614 = vpop.f32.mrb[0].mxu0
  %5615 = vdwg.mxu0
  %5616 = vmatprep.subr.bf16.mxu0 0
  %5617 = vmatpush1.bf16.msra.mxu0 %v3848
  %5618 = vmatprep.subr.bf16.mxu0 0
  %5619 = vmatpush1.bf16.msra.mxu0 %v3849
  %5620 = vmatprep.subr.bf16.mxu0 0
  %5621 = vmatpush1.bf16.msra.mxu0 %v3850
  %5622 = vmatprep.subr.bf16.mxu0 0
  %5623 = vmatpush1.bf16.msra.mxu0 %v3851
  %5624 = vmatprep.subr.bf16.mxu0 0
  %5625 = vmatpush1.bf16.msra.mxu0 %v3852
  %5626 = vmatprep.subr.bf16.mxu0 0
  %5627 = vmatpush1.bf16.msra.mxu0 %v3853
  %5628 = vmatprep.subr.bf16.mxu0 0
  %5629 = vmatpush1.bf16.msra.mxu0 %v3854
  %5630 = vmatprep.subr.bf16.mxu0 0
  %5631 = vmatpush1.bf16.msra.mxu0 %v3855
  %5632 = vmatprep.subr.bf16.mxu0 0
  %5633 = vmatpush1.bf16.msra.mxu0 %v3856
  %5634 = vmatprep.subr.bf16.mxu0 0
  %5635 = vmatpush1.bf16.msra.mxu0 %v3857
  %5636 = vmatprep.subr.bf16.mxu0 0
  %5637 = vmatpush1.bf16.msra.mxu0 %v3858
  %5638 = vmatprep.subr.bf16.mxu0 0
  %5639 = vmatpush1.bf16.msra.mxu0 %v3859
  %5640 = vmatprep.subr.bf16.mxu0 0
  %5641 = vmatpush1.bf16.msra.mxu0 %v3860
  %5642 = vmatprep.subr.bf16.mxu0 0
  %5643 = vmatpush1.bf16.msra.mxu0 %v3861
  %5644 = vmatprep.subr.bf16.mxu0 0
  %5645 = vmatpush1.bf16.msra.mxu0 %v3862
  %5646 = vmatprep.subr.bf16.mxu0 0
  %5647 = vmatpush1.bf16.msra.mxu0 %v3863
  %5648 = vmatprep.mubr.bf16.mxu0 %v1239
  %5649 = vmatmul.mubr.bf16.gmra.mrb[0].mxu0 %v1238
  %v5650 = vpop.f32.mrb[0].mxu0
  %v5651 = vadd.f32 %v5611, %v5650
  %v5652 = vpop.f32.mrb[0].mxu0
  %v5653 = vpop.f32.mrb[0].mxu0
  %v5654 = vpop.f32.mrb[0].mxu0
  %5655 = vdwg.mxu0
  %v5656 = vsub.f32 0.0, %v5651
  %v5657 = vmul.f32 %v5656, 1.442695
  %v5658 = vpow.pop %v5657
  %v5659 = vadd.f32 %v5658, 1.0
  %v5660 = vrcp.pop %v5659
  %v5661 = vmin.f32 %v5660, 1.0
  %vm5662 = vcmask 7168
  %5663 = vst.msk [vmem:[%s3] sm:$0xff] %vm5662, %v5661
  // Predicated region
  $region14: #{_lambda_.15} parent=0 // pred_check
    _
  $region15: #{_lambda_.15} parent=0 // pred_check_branch
    %5665 = sbr.rel (0) target = $region17
  $region16: #{_lambda_.15} parent=0 // pred_region
    _
  $region17: #{_lambda_.15} parent=0 // pred_fallthru
    _
  // Predicated region
  $region18: #{_lambda_.15} parent=0 // pred_check
    _
  $region19: #{_lambda_.15} parent=0 // pred_check_branch
    %5667 = sbr.rel (0) target = $region21
  $region20: #{_lambda_.15} parent=0 // pred_region
    _
  $region21: #{_lambda_.15} parent=0 // pred_fallthru
    _

</llo_original>
